<compile_context>
chip_gen: v7x
topology: tpu7x:2x2x1
jax: 0.10.0
libtpu: 0.0.40
codegen_flags: <defaults>
</compile_context>

<pallas_src>
import functools

import jax
import jax.numpy as jnp
from jax.experimental import pallas as pl
from jax.experimental.pallas import tpu as pltpu

# ----------------------------- config (small) -------------------------------
VOCAB = 100
HIDDEN = 32          # ViLT hidden_size (scaled down from 768)
NUM_HEADS = 4
HEAD_DIM = HIDDEN // NUM_HEADS
NUM_LAYERS = 2
INTERMEDIATE = 64
NUM_CLASSES = 5
PATCH = 8            # scaled down from 32
IMG_C, IMG_H, IMG_W = 3, 16, 16
TEXT_LEN = 8
BATCH = 2
LN_EPS = 1e-12

N_PATCHES = (IMG_H // PATCH) * (IMG_W // PATCH)          # 4
SEQ = TEXT_LEN + N_PATCHES + 1                           # 13
SEQ_PAD = ((SEQ + 7) // 8) * 8                           # 16 (sublane aligned)

_VMEM = pl.BlockSpec(memory_space=pltpu.MemorySpace.VMEM)


# --------------------------- in-kernel math helpers --------------------------
def _ln(x, g, b, eps):
    mu = jnp.mean(x, axis=-1, keepdims=True)
    xc = x - mu
    var = jnp.mean(xc * xc, axis=-1, keepdims=True)
    return xc * jax.lax.rsqrt(var + eps) * g + b


def _gelu(y):
    return 0.5 * y * (1.0 + jnp.tanh(0.7978845608028654 * (y + 0.044715 * y * y * y)))


# ------------------------------ fused Pallas kernel --------------------------
def _vilt_fused_kernel(
        # data
        te_ref, patches_ref, img_cls_bias_ref, img_patch_bias_ref, mask_ref,
        # embedding params
        emb_g_ref, emb_b_ref, patch_w_ref, patch_b_ref,
        # stacked encoder-layer params (leading dim = layer)
        ln1_g_ref, ln1_b_ref, wqkv_ref, bqkv_ref, wo_ref, bo_ref,
        ln2_g_ref, ln2_b_ref, wi_ref, bi_ref, wo2_ref, bo2_ref,
        # pooler / classifier params
        fin_g_ref, fin_b_ref, pool_w_ref, pool_b_ref,
        fc1_w_ref, fc1_b_ref, fc2_w_ref, fc2_b_ref,
        # outputs (logits, probs per layer) then scratch
        logits_ref, *rest,
        batch, text_len, n_patches, seq, scale, eps):
    probs_refs = rest[:-1]        # NUM_LAYERS refs, each (H, B, S, S)
    h_scr = rest[-1]              # VMEM scratch (B, S, D)
    D = HIDDEN
    n_layers = wqkv_ref.shape[0]

    # ---- embeddings: text LayerNorm + patch projection (one MXU matmul) ----
    te_ln = _ln(te_ref[...], emb_g_ref[...], emb_b_ref[...], eps)        # (B*T, D)
    pe = (jnp.dot(patches_ref[...], patch_w_ref[...],
                  preferred_element_type=jnp.float32)
          + patch_b_ref[...])                                            # (B*Np, D)

    # ---- assemble padded sequence [text | cls | patches | pad] in VMEM ----
    h_scr[...] = jnp.zeros_like(h_scr)                                   # pad rows -> 0
    h_scr[:, 0:text_len, :] = te_ln.reshape(batch, text_len, D)
    h_scr[:, text_len:text_len + 1, :] = jnp.broadcast_to(
        img_cls_bias_ref[...].reshape(1, 1, D), (batch, 1, D))
    h_scr[:, text_len + 1:text_len + 1 + n_patches, :] = (
        pe.reshape(batch, n_patches, D) + img_patch_bias_ref[...][None])

    mask = mask_ref[...]                                                 # (B, 1, S) additive
    h2 = h_scr[...].reshape(batch * seq, D)                              # (B*S, D)

    # ---- encoder layers, fully unrolled; everything stays in vregs/VMEM ----
    for l in range(n_layers):
        ln1 = _ln(h2, ln1_g_ref[l], ln1_b_ref[l], eps)
        qkv = (jnp.dot(ln1, wqkv_ref[l], preferred_element_type=jnp.float32)
               + bqkv_ref[l])                                            # (B*S, 3D)

        ctx_heads = []
        for hd in range(NUM_HEADS):
            lo = hd * HEAD_DIM
            qh = qkv[:, lo:lo + HEAD_DIM].reshape(batch, seq, HEAD_DIM)
            kh = qkv[:, D + lo:D + lo + HEAD_DIM].reshape(batch, seq, HEAD_DIM)
            vh = qkv[:, 2 * D + lo:2 * D + lo + HEAD_DIM].reshape(batch, seq, HEAD_DIM)

            s = jnp.einsum("bqd,bkd->bqk", qh, kh,
                           preferred_element_type=jnp.float32) * scale
            s = s + mask                                  # broadcast over queries
            s = s - jnp.max(s, axis=-1, keepdims=True)
            e = jnp.exp(s)
            inv = pl.reciprocal(jnp.sum(e, axis=-1, keepdims=True), approx=True)
            p = e * inv                                   # (B, S, S)
            probs_refs[l][hd, ...] = p
            ctx_heads.append(jnp.einsum("bqk,bkd->bqd", p, vh,
                                        preferred_element_type=jnp.float32))

        ctx = jnp.concatenate(ctx_heads, axis=-1).reshape(batch * seq, D)

        attn_out = (jnp.dot(ctx, wo_ref[l], preferred_element_type=jnp.float32)
                    + bo_ref[l])
        h2 = h2 + attn_out

        ln2 = _ln(h2, ln2_g_ref[l], ln2_b_ref[l], eps)
        inter = _gelu(jnp.dot(ln2, wi_ref[l], preferred_element_type=jnp.float32)
                      + bi_ref[l])
        mlp_out = (jnp.dot(inter, wo2_ref[l], preferred_element_type=jnp.float32)
                   + bo2_ref[l])
        h2 = h2 + mlp_out

    # ---- tail: final LN of token 0 -> pooler tanh -> fc1 GELU -> fc2 ----
    # (dropout layers are identity at inference)
    h0 = h2.reshape(batch, seq, D)[:, 0:1, :].reshape(batch, D)
    x = _ln(h0, fin_g_ref[...], fin_b_ref[...], eps)
    pooled = jnp.tanh(jnp.dot(x, pool_w_ref[...], preferred_element_type=jnp.float32)
                      + pool_b_ref[...])
    z = _gelu(jnp.dot(pooled, fc1_w_ref[...], preferred_element_type=jnp.float32)
              + fc1_b_ref[...])
    logits_ref[...] = (jnp.dot(z, fc2_w_ref[...], preferred_element_type=jnp.float32)
                       + fc2_b_ref[...])


# ------------------------------ kernel wrapper -------------------------------
def vilt_fused(te_sum2d, patches2d, img_cls_bias, img_patch_bias, mask_add, params):
    D = HIDDEN
    batch = mask_add.shape[0]
    out_shape = tuple(
        [jax.ShapeDtypeStruct((batch, NUM_CLASSES), jnp.float32)]
        + [jax.ShapeDtypeStruct((NUM_HEADS, batch, SEQ_PAD, SEQ_PAD), jnp.float32)]
        * NUM_LAYERS)

    outs = pl.pallas_call(
        functools.partial(_vilt_fused_kernel, batch=batch, text_len=TEXT_LEN,
                          n_patches=N_PATCHES, seq=SEQ_PAD,
                          scale=1.0 / (HEAD_DIM ** 0.5), eps=LN_EPS),
        out_shape=out_shape,
        in_specs=[_VMEM] * 29,
        out_specs=tuple([_VMEM] * (1 + NUM_LAYERS)),
        scratch_shapes=[pltpu.VMEM((batch, SEQ_PAD, HIDDEN), jnp.float32)],
    )(te_sum2d, patches2d, img_cls_bias, img_patch_bias, mask_add,
      params["emb_ln_g"].reshape(1, D), params["emb_ln_b"].reshape(1, D),
      params["patch_w"], params["patch_b"].reshape(1, D),
      params["L_ln1_g"], params["L_ln1_b"], params["L_wqkv"], params["L_bqkv"],
      params["L_wo"], params["L_bo"], params["L_ln2_g"], params["L_ln2_b"],
      params["L_wi"], params["L_bi"], params["L_wo2"], params["L_bo2"],
      params["final_ln_g"].reshape(1, D), params["final_ln_b"].reshape(1, D),
      params["pooler_w"], params["pooler_b"].reshape(1, D),
      params["fc1_w"], params["fc1_b"].reshape(1, 64),
      params["fc2_w"], params["fc2_b"].reshape(1, NUM_CLASSES))

    logits = outs[0]
    probs = tuple(outs[1:])
    return logits, probs


# --------------------------- parameter construction -------------------------
def _init(key, shape, scale=0.02):
    return scale * jax.random.normal(key, shape, dtype=jnp.float32)


def init_params(key):
    keys = iter(jax.random.split(key, 64))
    D = HIDDEN
    p = {
        "word_emb": _init(next(keys), (VOCAB, D)),
        "text_pos_emb": _init(next(keys), (TEXT_LEN, D)),
        "tok_type": _init(next(keys), (2, D)),
        "emb_ln_g": jnp.ones((D,), jnp.float32),
        "emb_ln_b": jnp.zeros((D,), jnp.float32),
        # patch "conv": torch weight (D, C, P, P) flattened to (C*P*P, D)
        "patch_w": _init(next(keys), (IMG_C * PATCH * PATCH, D)),
        "patch_b": jnp.zeros((D,), jnp.float32),
        "img_cls": _init(next(keys), (D,)),
        "img_pos_emb": _init(next(keys), (N_PATCHES + 1, D)),
        "final_ln_g": jnp.ones((D,), jnp.float32),
        "final_ln_b": jnp.zeros((D,), jnp.float32),
        "pooler_w": _init(next(keys), (D, D)),
        "pooler_b": jnp.zeros((D,), jnp.float32),
        # HateNet head
        "fc1_w": _init(next(keys), (D, 64)),
        "fc1_b": jnp.zeros((64,), jnp.float32),
        "fc2_w": _init(next(keys), (D and 64, NUM_CLASSES)) if False else _init(next(keys), (64, NUM_CLASSES)),
        "fc2_b": jnp.zeros((NUM_CLASSES,), jnp.float32),
    }
    # per-layer params, stacked along a leading layer axis so the single fused
    # kernel can index them as wqkv_ref[l], etc.  wq/wk/wv pre-fused -> (D,3D).
    ln1_g, ln1_b, wqkv, bqkv, wo, bo = [], [], [], [], [], []
    ln2_g, ln2_b, wi, bi, wo2, bo2 = [], [], [], [], [], []
    for _ in range(NUM_LAYERS):
        wq = _init(next(keys), (D, D))
        wk = _init(next(keys), (D, D))
        wv = _init(next(keys), (D, D))
        wqkv.append(jnp.concatenate([wq, wk, wv], axis=1))
        bqkv.append(jnp.zeros((1, 3 * D), jnp.float32))
        ln1_g.append(jnp.ones((1, D), jnp.float32))
        ln1_b.append(jnp.zeros((1, D), jnp.float32))
        wo.append(_init(next(keys), (D, D)))
        bo.append(jnp.zeros((1, D), jnp.float32))
        ln2_g.append(jnp.ones((1, D), jnp.float32))
        ln2_b.append(jnp.zeros((1, D), jnp.float32))
        wi.append(_init(next(keys), (D, INTERMEDIATE)))
        bi.append(jnp.zeros((1, INTERMEDIATE), jnp.float32))
        wo2.append(_init(next(keys), (INTERMEDIATE, D)))
        bo2.append(jnp.zeros((1, D), jnp.float32))
    p.update({
        "L_ln1_g": jnp.stack(ln1_g), "L_ln1_b": jnp.stack(ln1_b),
        "L_wqkv": jnp.stack(wqkv), "L_bqkv": jnp.stack(bqkv),
        "L_wo": jnp.stack(wo), "L_bo": jnp.stack(bo),
        "L_ln2_g": jnp.stack(ln2_g), "L_ln2_b": jnp.stack(ln2_b),
        "L_wi": jnp.stack(wi), "L_bi": jnp.stack(bi),
        "L_wo2": jnp.stack(wo2), "L_bo2": jnp.stack(bo2),
    })
    return p


# ------------------------------- model glue ---------------------------------
def patchify(pix):
    """NCHW -> (B, Np, C*P*P) non-overlapping patches (== stride-P conv im2col)."""
    B, C, H, W = pix.shape
    gh, gw = H // PATCH, W // PATCH
    x = pix.reshape(B, C, gh, PATCH, gw, PATCH)
    x = x.transpose(0, 2, 4, 1, 3, 5)          # (B, gh, gw, C, P, P)
    return x.reshape(B, gh * gw, C * PATCH * PATCH), gh, gw


def vilt_forward(params, input_ids, pixel_values, text_mask):
    """Returns (logits, attentions_tuple, patch_index) like ViLT(output_attentions=True)."""
    B, T = input_ids.shape
    D = HIDDEN

    # ---- text embeddings (gather glue): word + position + token-type 0 ----
    te_sum = (params["word_emb"][input_ids]
              + params["text_pos_emb"][None, :T, :]
              + params["tok_type"][0][None, None, :])              # (B,T,D)

    # ---- image patches (im2col glue) ----
    patches, gh, gw = patchify(pixel_values)
    Np = gh * gw

    # additive bias of the image tokens: row 0 = cls + pos[0] + type1;
    # rows 1..Np = pos[i] + type1 (patch projection is added in-kernel)
    img_cls_bias = (params["img_cls"] + params["img_pos_emb"][0]
                    + params["tok_type"][1]).reshape(1, D)
    img_patch_bias = params["img_pos_emb"][1:Np + 1] + params["tok_type"][1][None, :]

    # ---- attention mask (text mask | image ones | pad zeros), additive form ----
    S = T + Np + 1
    pad = SEQ_PAD - S
    img_mask = jnp.ones((B, Np + 1), jnp.float32)
    full_mask = jnp.concatenate(
        [text_mask.astype(jnp.float32), img_mask, jnp.zeros((B, pad), jnp.float32)],
        axis=1)                                                    # (B, SEQ_PAD)
    mask_add = ((1.0 - full_mask) * -1e9)[:, None, :]              # (B,1,SEQ_PAD)

    # ---- ONE fused kernel for the whole forward pass ----
    logits, probs = vilt_fused(te_sum.reshape(B * T, D),
                               patches.reshape(B * Np, -1),
                               img_cls_bias, img_patch_bias, mask_add, params)

    # (H, B, S_pad, S_pad) per layer -> (B, H, S, S), dropping pad rows/cols
    attentions = tuple(p.transpose(1, 0, 2, 3)[:, :, :S, :S] for p in probs)

    # ---- patch_index (row/col grid coordinate of each image patch) ----
    rows = jnp.repeat(jnp.arange(gh, dtype=jnp.int32), gw)
    cols = jnp.tile(jnp.arange(gw, dtype=jnp.int32), gh)
    patch_index = jnp.broadcast_to(jnp.stack([rows, cols], axis=-1)[None], (B, Np, 2))

    return logits, attentions, patch_index


# ---------------------------------- main -------------------------------------
if __name__ == "__main__":
    key = jax.random.PRNGKey(0)
    k_param, k_ids, k_pix = jax.random.split(key, 3)

    params = init_params(k_param)
    input_ids = jax.random.randint(k_ids, (BATCH, TEXT_LEN), 0, VOCAB, dtype=jnp.int32)
    pixel_values = jax.random.normal(k_pix, (BATCH, IMG_C, IMG_H, IMG_W), dtype=jnp.float32)
    text_mask = jnp.ones((BATCH, TEXT_LEN), dtype=jnp.float32)

    fwd = jax.jit(vilt_forward)
    logits, attentions, patch_index = fwd(params, input_ids, pixel_values, text_mask)
    jax.block_until_ready(logits)
    for a in attentions:
        jax.block_until_ready(a)
    jax.block_until_ready(patch_index)

    seq = TEXT_LEN + N_PATCHES + 1
    assert logits.shape == (BATCH, NUM_CLASSES)
    assert len(attentions) == NUM_LAYERS
    assert attentions[0].shape == (BATCH, NUM_HEADS, seq, seq)
    assert patch_index.shape == (BATCH, N_PATCHES, 2)
    assert bool(jnp.all(jnp.isfinite(logits)))
    for a in attentions:
        assert bool(jnp.all(jnp.isfinite(a)))
    print("KERNEL_OK")
</pallas_src>

<mosaic_0001>
module attributes {stable_mosaic.version = 11 : i64} {
  func.func @_vilt_fused_kernel(%arg0: memref<16x32xf32, #tpu.memory_space<vmem>>, %arg1: memref<8x192xf32, #tpu.memory_space<vmem>>, %arg2: memref<1x32xf32, #tpu.memory_space<vmem>>, %arg3: memref<4x32xf32, #tpu.memory_space<vmem>>, %arg4: memref<2x1x16xf32, #tpu.memory_space<vmem>>, %arg5: memref<1x32xf32, #tpu.memory_space<vmem>>, %arg6: memref<1x32xf32, #tpu.memory_space<vmem>>, %arg7: memref<192x32xf32, #tpu.memory_space<vmem>>, %arg8: memref<1x32xf32, #tpu.memory_space<vmem>>, %arg9: memref<2x1x32xf32, #tpu.memory_space<vmem>>, %arg10: memref<2x1x32xf32, #tpu.memory_space<vmem>>, %arg11: memref<2x32x96xf32, #tpu.memory_space<vmem>>, %arg12: memref<2x1x96xf32, #tpu.memory_space<vmem>>, %arg13: memref<2x32x32xf32, #tpu.memory_space<vmem>>, %arg14: memref<2x1x32xf32, #tpu.memory_space<vmem>>, %arg15: memref<2x1x32xf32, #tpu.memory_space<vmem>>, %arg16: memref<2x1x32xf32, #tpu.memory_space<vmem>>, %arg17: memref<2x32x64xf32, #tpu.memory_space<vmem>>, %arg18: memref<2x1x64xf32, #tpu.memory_space<vmem>>, %arg19: memref<2x64x32xf32, #tpu.memory_space<vmem>>, %arg20: memref<2x1x32xf32, #tpu.memory_space<vmem>>, %arg21: memref<1x32xf32, #tpu.memory_space<vmem>>, %arg22: memref<1x32xf32, #tpu.memory_space<vmem>>, %arg23: memref<32x32xf32, #tpu.memory_space<vmem>>, %arg24: memref<1x32xf32, #tpu.memory_space<vmem>>, %arg25: memref<32x64xf32, #tpu.memory_space<vmem>>, %arg26: memref<1x64xf32, #tpu.memory_space<vmem>>, %arg27: memref<64x5xf32, #tpu.memory_space<vmem>>, %arg28: memref<1x5xf32, #tpu.memory_space<vmem>>, %arg29: memref<2x5xf32, #tpu.memory_space<vmem>>, %arg30: memref<4x2x16x16xf32, #tpu.memory_space<vmem>>, %arg31: memref<4x2x16x16xf32, #tpu.memory_space<vmem>>, %arg32: memref<2x16x32xf32, #tpu.memory_space<vmem>>) attributes {dimension_semantics = [], scalar_prefetch = 0 : i64, scratch_operands = 1 : i64, tpu.core_type = #tpu.core_type<tc>} {
    %c0 = arith.constant 0 : index
    %c0_0 = arith.constant 0 : index
    %0 = vector.load %arg0[%c0, %c0_0] : memref<16x32xf32, #tpu.memory_space<vmem>>, vector<16x32xf32>
    %c0_1 = arith.constant 0 : index
    %c0_2 = arith.constant 0 : index
    %1 = vector.load %arg5[%c0_1, %c0_2] : memref<1x32xf32, #tpu.memory_space<vmem>>, vector<1x32xf32>
    %c0_3 = arith.constant 0 : index
    %c0_4 = arith.constant 0 : index
    %2 = vector.load %arg6[%c0_3, %c0_4] : memref<1x32xf32, #tpu.memory_space<vmem>>, vector<1x32xf32>
    %cst = arith.constant dense<0.000000e+00> : vector<16xf32>
    %3 = vector.multi_reduction <add>, %0, %cst [1] : vector<16x32xf32> to vector<16xf32>
    %4 = vector.shape_cast %3 : vector<16xf32> to vector<16x1xf32>
    %cst_5 = arith.constant 3.200000e+01 : f32
    %5 = vector.broadcast %cst_5 : f32 to vector<16x1xf32>
    %6 = arith.divf %4, %5 : vector<16x1xf32>
    %7 = vector.broadcast %6 : vector<16x1xf32> to vector<16x32xf32>
    %8 = arith.subf %0, %7 : vector<16x32xf32>
    %9 = arith.mulf %8, %8 : vector<16x32xf32>
    %cst_6 = arith.constant dense<0.000000e+00> : vector<16xf32>
    %10 = vector.multi_reduction <add>, %9, %cst_6 [1] : vector<16x32xf32> to vector<16xf32>
    %11 = vector.shape_cast %10 : vector<16xf32> to vector<16x1xf32>
    %cst_7 = arith.constant 3.200000e+01 : f32
    %12 = vector.broadcast %cst_7 : f32 to vector<16x1xf32>
    %13 = arith.divf %11, %12 : vector<16x1xf32>
    %cst_8 = arith.constant 9.99999996E-13 : f32
    %14 = vector.broadcast %cst_8 : f32 to vector<16x1xf32>
    %15 = arith.addf %13, %14 : vector<16x1xf32>
    %16 = math.rsqrt %15 : vector<16x1xf32>
    %17 = vector.broadcast %16 : vector<16x1xf32> to vector<16x32xf32>
    %18 = arith.mulf %8, %17 : vector<16x32xf32>
    %19 = vector.broadcast %1 : vector<1x32xf32> to vector<16x32xf32>
    %20 = arith.mulf %18, %19 : vector<16x32xf32>
    %21 = vector.broadcast %2 : vector<1x32xf32> to vector<16x32xf32>
    %22 = arith.addf %20, %21 : vector<16x32xf32>
    %c0_9 = arith.constant 0 : index
    %c0_10 = arith.constant 0 : index
    %23 = vector.load %arg1[%c0_9, %c0_10] : memref<8x192xf32, #tpu.memory_space<vmem>>, vector<8x192xf32>
    %c0_11 = arith.constant 0 : index
    %c0_12 = arith.constant 0 : index
    %24 = vector.load %arg7[%c0_11, %c0_12] : memref<192x32xf32, #tpu.memory_space<vmem>>, vector<192x32xf32>
    %cst_13 = arith.constant dense<0.000000e+00> : vector<8x32xf32>
    %25 = tpu.matmul %23, %24, %cst_13 {dimension_numbers = #tpu.dot_dimension_numbers<[1], [0], [0], [1], [0, 0, 1, 1], [], []>} : vector<8x192xf32>, vector<192x32xf32>, vector<8x32xf32> -> vector<8x32xf32>
    %c0_14 = arith.constant 0 : index
    %c0_15 = arith.constant 0 : index
    %26 = vector.load %arg8[%c0_14, %c0_15] : memref<1x32xf32, #tpu.memory_space<vmem>>, vector<1x32xf32>
    %27 = vector.broadcast %26 : vector<1x32xf32> to vector<8x32xf32>
    %28 = arith.addf %25, %27 : vector<8x32xf32>
    %cst_16 = arith.constant 0.000000e+00 : f32
    %29 = vector.broadcast %cst_16 : f32 to vector<2x16x32xf32>
    %c0_17 = arith.constant 0 : index
    %c0_18 = arith.constant 0 : index
    %c0_19 = arith.constant 0 : index
    %30 = vector.load %arg32[%c0_17, %c0_18, %c0_19] : memref<2x16x32xf32, #tpu.memory_space<vmem>>, vector<2x16x32xf32>
    tpu.vector_store %arg32[%c0_17, %c0_18, %c0_19], %29 {strides = array<i32>} : memref<2x16x32xf32, #tpu.memory_space<vmem>>, vector<2x16x32xf32>,
    %31 = vector.shape_cast %22 : vector<16x32xf32> to vector<2x8x32xf32>
    %c0_20 = arith.constant 0 : index
    %c0_21 = arith.constant 0 : index
    %c0_22 = arith.constant 0 : index
    %32 = vector.load %arg32[%c0_20, %c0_21, %c0_22] : memref<2x16x32xf32, #tpu.memory_space<vmem>>, vector<2x8x32xf32>
    tpu.vector_store %arg32[%c0_20, %c0_21, %c0_22], %31 {strides = array<i32>} : memref<2x16x32xf32, #tpu.memory_space<vmem>>, vector<2x8x32xf32>,
    %c0_23 = arith.constant 0 : index
    %c0_24 = arith.constant 0 : index
    %33 = vector.load %arg2[%c0_23, %c0_24] : memref<1x32xf32, #tpu.memory_space<vmem>>, vector<1x32xf32>
    %34 = vector.shape_cast %33 : vector<1x32xf32> to vector<1x1x32xf32>
    %35 = vector.shape_cast %34 : vector<1x1x32xf32> to vector<1x1x32xf32>
    %36 = vector.broadcast %35 : vector<1x1x32xf32> to vector<2x1x32xf32>
    %c0_25 = arith.constant 0 : index
    %c8 = arith.constant 8 : index
    %c0_26 = arith.constant 0 : index
    %37 = vector.load %arg32[%c0_25, %c8, %c0_26] : memref<2x16x32xf32, #tpu.memory_space<vmem>>, vector<2x1x32xf32>
    tpu.vector_store %arg32[%c0_25, %c8, %c0_26], %36 {strides = array<i32>} : memref<2x16x32xf32, #tpu.memory_space<vmem>>, vector<2x1x32xf32>,
    %38 = vector.shape_cast %28 : vector<8x32xf32> to vector<2x4x32xf32>
    %c0_27 = arith.constant 0 : index
    %c0_28 = arith.constant 0 : index
    %39 = vector.load %arg3[%c0_27, %c0_28] : memref<4x32xf32, #tpu.memory_space<vmem>>, vector<4x32xf32>
    %40 = vector.shape_cast %39 : vector<4x32xf32> to vector<1x4x32xf32>
    %41 = vector.broadcast %40 : vector<1x4x32xf32> to vector<2x4x32xf32>
    %42 = arith.addf %38, %41 : vector<2x4x32xf32>
    %c0_29 = arith.constant 0 : index
    %c9 = arith.constant 9 : index
    %c0_30 = arith.constant 0 : index
    %43 = vector.load %arg32[%c0_29, %c9, %c0_30] : memref<2x16x32xf32, #tpu.memory_space<vmem>>, vector<2x4x32xf32>
    tpu.vector_store %arg32[%c0_29, %c9, %c0_30], %42 {strides = array<i32>} : memref<2x16x32xf32, #tpu.memory_space<vmem>>, vector<2x4x32xf32>,
    %c0_31 = arith.constant 0 : index
    %c0_32 = arith.constant 0 : index
    %c0_33 = arith.constant 0 : index
    %44 = vector.load %arg4[%c0_31, %c0_32, %c0_33] : memref<2x1x16xf32, #tpu.memory_space<vmem>>, vector<2x1x16xf32>
    %c0_34 = arith.constant 0 : index
    %c0_35 = arith.constant 0 : index
    %c0_36 = arith.constant 0 : index
    %45 = vector.load %arg32[%c0_34, %c0_35, %c0_36] : memref<2x16x32xf32, #tpu.memory_space<vmem>>, vector<2x16x32xf32>
    %46 = vector.shape_cast %45 : vector<2x16x32xf32> to vector<32x32xf32>
    %c0_37 = arith.constant 0 : index
    %c0_38 = arith.constant 0 : index
    %c0_39 = arith.constant 0 : index
    %47 = vector.load %arg9[%c0_37, %c0_38, %c0_39] : memref<2x1x32xf32, #tpu.memory_space<vmem>>, vector<1x1x32xf32>
    %48 = vector.shape_cast %47 : vector<1x1x32xf32> to vector<1x32xf32>
    %c0_40 = arith.constant 0 : index
    %c0_41 = arith.constant 0 : index
    %c0_42 = arith.constant 0 : index
    %49 = vector.load %arg10[%c0_40, %c0_41, %c0_42] : memref<2x1x32xf32, #tpu.memory_space<vmem>>, vector<1x1x32xf32>
    %50 = vector.shape_cast %49 : vector<1x1x32xf32> to vector<1x32xf32>
    %cst_43 = arith.constant dense<0.000000e+00> : vector<32xf32>
    %51 = vector.multi_reduction <add>, %46, %cst_43 [1] : vector<32x32xf32> to vector<32xf32>
    %52 = vector.shape_cast %51 : vector<32xf32> to vector<32x1xf32>
    %cst_44 = arith.constant 3.200000e+01 : f32
    %53 = vector.broadcast %cst_44 : f32 to vector<32x1xf32>
    %54 = arith.divf %52, %53 : vector<32x1xf32>
    %55 = vector.broadcast %54 : vector<32x1xf32> to vector<32x32xf32>
    %56 = arith.subf %46, %55 : vector<32x32xf32>
    %57 = arith.mulf %56, %56 : vector<32x32xf32>
    %cst_45 = arith.constant dense<0.000000e+00> : vector<32xf32>
    %58 = vector.multi_reduction <add>, %57, %cst_45 [1] : vector<32x32xf32> to vector<32xf32>
    %59 = vector.shape_cast %58 : vector<32xf32> to vector<32x1xf32>
    %cst_46 = arith.constant 3.200000e+01 : f32
    %60 = vector.broadcast %cst_46 : f32 to vector<32x1xf32>
    %61 = arith.divf %59, %60 : vector<32x1xf32>
    %cst_47 = arith.constant 9.99999996E-13 : f32
    %62 = vector.broadcast %cst_47 : f32 to vector<32x1xf32>
    %63 = arith.addf %61, %62 : vector<32x1xf32>
    %64 = math.rsqrt %63 : vector<32x1xf32>
    %65 = vector.broadcast %64 : vector<32x1xf32> to vector<32x32xf32>
    %66 = arith.mulf %56, %65 : vector<32x32xf32>
    %67 = vector.broadcast %48 : vector<1x32xf32> to vector<32x32xf32>
    %68 = arith.mulf %66, %67 : vector<32x32xf32>
    %69 = vector.broadcast %50 : vector<1x32xf32> to vector<32x32xf32>
    %70 = arith.addf %68, %69 : vector<32x32xf32>
    %c0_48 = arith.constant 0 : index
    %c0_49 = arith.constant 0 : index
    %c0_50 = arith.constant 0 : index
    %71 = vector.load %arg11[%c0_48, %c0_49, %c0_50] : memref<2x32x96xf32, #tpu.memory_space<vmem>>, vector<1x32x96xf32>
    %72 = vector.shape_cast %71 : vector<1x32x96xf32> to vector<32x96xf32>
    %cst_51 = arith.constant dense<0.000000e+00> : vector<32x96xf32>
    %73 = tpu.matmul %70, %72, %cst_51 {dimension_numbers = #tpu.dot_dimension_numbers<[1], [0], [0], [1], [0, 0, 1, 1], [], []>} : vector<32x32xf32>, vector<32x96xf32>, vector<32x96xf32> -> vector<32x96xf32>
    %c0_52 = arith.constant 0 : index
    %c0_53 = arith.constant 0 : index
    %c0_54 = arith.constant 0 : index
    %74 = vector.load %arg12[%c0_52, %c0_53, %c0_54] : memref<2x1x96xf32, #tpu.memory_space<vmem>>, vector<1x1x96xf32>
    %75 = vector.shape_cast %74 : vector<1x1x96xf32> to vector<1x96xf32>
    %76 = vector.broadcast %75 : vector<1x96xf32> to vector<32x96xf32>
    %77 = arith.addf %73, %76 : vector<32x96xf32>
    %78 = vector.extract_strided_slice %77 {offsets = [0, 0], sizes = [32, 8], strides = [1, 1]} : vector<32x96xf32> to vector<32x8xf32>
    %79 = vector.shape_cast %78 : vector<32x8xf32> to vector<2x16x8xf32>
    %80 = vector.extract_strided_slice %77 {offsets = [0, 32], sizes = [32, 8], strides = [1, 1]} : vector<32x96xf32> to vector<32x8xf32>
    %81 = vector.shape_cast %80 : vector<32x8xf32> to vector<2x16x8xf32>
    %82 = vector.extract_strided_slice %77 {offsets = [0, 64], sizes = [32, 8], strides = [1, 1]} : vector<32x96xf32> to vector<32x8xf32>
    %83 = vector.shape_cast %82 : vector<32x8xf32> to vector<2x16x8xf32>
    "tpu.trace_start"() <{level = 10 : i32, message = "bqd,bkd->bqk"}> : () -> ()
    %cst_55 = arith.constant dense<0.000000e+00> : vector<2x16x16xf32>
    %84 = tpu.matmul %79, %81, %cst_55 {dimension_numbers = #tpu.dot_dimension_numbers<[2], [2], [1], [1], [0, 0, 0, 1, 1, 1], [0], [0]>} : vector<2x16x8xf32>, vector<2x16x8xf32>, vector<2x16x16xf32> -> vector<2x16x16xf32>
    "tpu.trace_stop"() : () -> ()
    %cst_56 = arith.constant 0.353553385 : f32
    %85 = vector.broadcast %cst_56 : f32 to vector<2x16x16xf32>
    %86 = arith.mulf %84, %85 : vector<2x16x16xf32>
    %87 = vector.broadcast %44 : vector<2x1x16xf32> to vector<2x16x16xf32>
    %88 = arith.addf %86, %87 : vector<2x16x16xf32>
    %cst_57 = arith.constant dense<0xFF800000> : vector<2x16xf32>
    %89 = vector.multi_reduction <maximumf>, %88, %cst_57 [2] : vector<2x16x16xf32> to vector<2x16xf32>
    %90 = vector.shape_cast %89 : vector<2x16xf32> to vector<2x16x1xf32>
    %91 = vector.broadcast %90 : vector<2x16x1xf32> to vector<2x16x16xf32>
    %92 = arith.subf %88, %91 : vector<2x16x16xf32>
    %93 = math.exp %92 : vector<2x16x16xf32>
    %cst_58 = arith.constant dense<0.000000e+00> : vector<2x16xf32>
    %94 = vector.multi_reduction <add>, %93, %cst_58 [2] : vector<2x16x16xf32> to vector<2x16xf32>
    %95 = vector.shape_cast %94 : vector<2x16xf32> to vector<2x16x1xf32>
    %96 = tpu.reciprocal %95 {approx = true} : vector<2x16x1xf32> -> vector<2x16x1xf32>
    %97 = vector.broadcast %96 : vector<2x16x1xf32> to vector<2x16x16xf32>
    %98 = arith.mulf %93, %97 : vector<2x16x16xf32>
    %c0_59 = arith.constant 0 : index
    %c0_60 = arith.constant 0 : index
    %c0_61 = arith.constant 0 : index
    %c0_62 = arith.constant 0 : index
    %99 = vector.load %arg30[%c0_59, %c0_60, %c0_61, %c0_62] : memref<4x2x16x16xf32, #tpu.memory_space<vmem>>, vector<1x2x16x16xf32>
    %100 = vector.shape_cast %99 : vector<1x2x16x16xf32> to vector<2x16x16xf32>
    %101 = vector.shape_cast %98 : vector<2x16x16xf32> to vector<1x2x16x16xf32>
    tpu.vector_store %arg30[%c0_59, %c0_60, %c0_61, %c0_62], %101 {strides = array<i32>} : memref<4x2x16x16xf32, #tpu.memory_space<vmem>>, vector<1x2x16x16xf32>,
    "tpu.trace_start"() <{level = 10 : i32, message = "bqk,bkd->bqd"}> : () -> ()
    %cst_63 = arith.constant dense<0.000000e+00> : vector<2x16x8xf32>
    %102 = tpu.matmul %98, %83, %cst_63 {dimension_numbers = #tpu.dot_dimension_numbers<[2], [1], [1], [2], [0, 0, 0, 1, 1, 2], [0], [0]>} : vector<2x16x16xf32>, vector<2x16x8xf32>, vector<2x16x8xf32> -> vector<2x16x8xf32>
    "tpu.trace_stop"() : () -> ()
    %103 = vector.extract_strided_slice %77 {offsets = [0, 8], sizes = [32, 8], strides = [1, 1]} : vector<32x96xf32> to vector<32x8xf32>
    %104 = vector.shape_cast %103 : vector<32x8xf32> to vector<2x16x8xf32>
    %105 = vector.extract_strided_slice %77 {offsets = [0, 40], sizes = [32, 8], strides = [1, 1]} : vector<32x96xf32> to vector<32x8xf32>
    %106 = vector.shape_cast %105 : vector<32x8xf32> to vector<2x16x8xf32>
    %107 = vector.extract_strided_slice %77 {offsets = [0, 72], sizes = [32, 8], strides = [1, 1]} : vector<32x96xf32> to vector<32x8xf32>
    %108 = vector.shape_cast %107 : vector<32x8xf32> to vector<2x16x8xf32>
    "tpu.trace_start"() <{level = 10 : i32, message = "bqd,bkd->bqk"}> : () -> ()
    %cst_64 = arith.constant dense<0.000000e+00> : vector<2x16x16xf32>
    %109 = tpu.matmul %104, %106, %cst_64 {dimension_numbers = #tpu.dot_dimension_numbers<[2], [2], [1], [1], [0, 0, 0, 1, 1, 1], [0], [0]>} : vector<2x16x8xf32>, vector<2x16x8xf32>, vector<2x16x16xf32> -> vector<2x16x16xf32>
    "tpu.trace_stop"() : () -> ()
    %cst_65 = arith.constant 0.353553385 : f32
    %110 = vector.broadcast %cst_65 : f32 to vector<2x16x16xf32>
    %111 = arith.mulf %109, %110 : vector<2x16x16xf32>
    %112 = vector.broadcast %44 : vector<2x1x16xf32> to vector<2x16x16xf32>
    %113 = arith.addf %111, %112 : vector<2x16x16xf32>
    %cst_66 = arith.constant dense<0xFF800000> : vector<2x16xf32>
    %114 = vector.multi_reduction <maximumf>, %113, %cst_66 [2] : vector<2x16x16xf32> to vector<2x16xf32>
    %115 = vector.shape_cast %114 : vector<2x16xf32> to vector<2x16x1xf32>
    %116 = vector.broadcast %115 : vector<2x16x1xf32> to vector<2x16x16xf32>
    %117 = arith.subf %113, %116 : vector<2x16x16xf32>
    %118 = math.exp %117 : vector<2x16x16xf32>
    %cst_67 = arith.constant dense<0.000000e+00> : vector<2x16xf32>
    %119 = vector.multi_reduction <add>, %118, %cst_67 [2] : vector<2x16x16xf32> to vector<2x16xf32>
    %120 = vector.shape_cast %119 : vector<2x16xf32> to vector<2x16x1xf32>
    %121 = tpu.reciprocal %120 {approx = true} : vector<2x16x1xf32> -> vector<2x16x1xf32>
    %122 = vector.broadcast %121 : vector<2x16x1xf32> to vector<2x16x16xf32>
    %123 = arith.mulf %118, %122 : vector<2x16x16xf32>
    %c1 = arith.constant 1 : index
    %c0_68 = arith.constant 0 : index
    %c0_69 = arith.constant 0 : index
    %c0_70 = arith.constant 0 : index
    %124 = vector.load %arg30[%c1, %c0_68, %c0_69, %c0_70] : memref<4x2x16x16xf32, #tpu.memory_space<vmem>>, vector<1x2x16x16xf32>
    %125 = vector.shape_cast %124 : vector<1x2x16x16xf32> to vector<2x16x16xf32>
    %126 = vector.shape_cast %123 : vector<2x16x16xf32> to vector<1x2x16x16xf32>
    tpu.vector_store %arg30[%c1, %c0_68, %c0_69, %c0_70], %126 {strides = array<i32>} : memref<4x2x16x16xf32, #tpu.memory_space<vmem>>, vector<1x2x16x16xf32>,
    "tpu.trace_start"() <{level = 10 : i32, message = "bqk,bkd->bqd"}> : () -> ()
    %cst_71 = arith.constant dense<0.000000e+00> : vector<2x16x8xf32>
    %127 = tpu.matmul %123, %108, %cst_71 {dimension_numbers = #tpu.dot_dimension_numbers<[2], [1], [1], [2], [0, 0, 0, 1, 1, 2], [0], [0]>} : vector<2x16x16xf32>, vector<2x16x8xf32>, vector<2x16x8xf32> -> vector<2x16x8xf32>
    "tpu.trace_stop"() : () -> ()
    %128 = vector.extract_strided_slice %77 {offsets = [0, 16], sizes = [32, 8], strides = [1, 1]} : vector<32x96xf32> to vector<32x8xf32>
    %129 = vector.shape_cast %128 : vector<32x8xf32> to vector<2x16x8xf32>
    %130 = vector.extract_strided_slice %77 {offsets = [0, 48], sizes = [32, 8], strides = [1, 1]} : vector<32x96xf32> to vector<32x8xf32>
    %131 = vector.shape_cast %130 : vector<32x8xf32> to vector<2x16x8xf32>
    %132 = vector.extract_strided_slice %77 {offsets = [0, 80], sizes = [32, 8], strides = [1, 1]} : vector<32x96xf32> to vector<32x8xf32>
    %133 = vector.shape_cast %132 : vector<32x8xf32> to vector<2x16x8xf32>
    "tpu.trace_start"() <{level = 10 : i32, message = "bqd,bkd->bqk"}> : () -> ()
    %cst_72 = arith.constant dense<0.000000e+00> : vector<2x16x16xf32>
    %134 = tpu.matmul %129, %131, %cst_72 {dimension_numbers = #tpu.dot_dimension_numbers<[2], [2], [1], [1], [0, 0, 0, 1, 1, 1], [0], [0]>} : vector<2x16x8xf32>, vector<2x16x8xf32>, vector<2x16x16xf32> -> vector<2x16x16xf32>
    "tpu.trace_stop"() : () -> ()
    %cst_73 = arith.constant 0.353553385 : f32
    %135 = vector.broadcast %cst_73 : f32 to vector<2x16x16xf32>
    %136 = arith.mulf %134, %135 : vector<2x16x16xf32>
    %137 = vector.broadcast %44 : vector<2x1x16xf32> to vector<2x16x16xf32>
    %138 = arith.addf %136, %137 : vector<2x16x16xf32>
    %cst_74 = arith.constant dense<0xFF800000> : vector<2x16xf32>
    %139 = vector.multi_reduction <maximumf>, %138, %cst_74 [2] : vector<2x16x16xf32> to vector<2x16xf32>
    %140 = vector.shape_cast %139 : vector<2x16xf32> to vector<2x16x1xf32>
    %141 = vector.broadcast %140 : vector<2x16x1xf32> to vector<2x16x16xf32>
    %142 = arith.subf %138, %141 : vector<2x16x16xf32>
    %143 = math.exp %142 : vector<2x16x16xf32>
    %cst_75 = arith.constant dense<0.000000e+00> : vector<2x16xf32>
    %144 = vector.multi_reduction <add>, %143, %cst_75 [2] : vector<2x16x16xf32> to vector<2x16xf32>
    %145 = vector.shape_cast %144 : vector<2x16xf32> to vector<2x16x1xf32>
    %146 = tpu.reciprocal %145 {approx = true} : vector<2x16x1xf32> -> vector<2x16x1xf32>
    %147 = vector.broadcast %146 : vector<2x16x1xf32> to vector<2x16x16xf32>
    %148 = arith.mulf %143, %147 : vector<2x16x16xf32>
    %c2 = arith.constant 2 : index
    %c0_76 = arith.constant 0 : index
    %c0_77 = arith.constant 0 : index
    %c0_78 = arith.constant 0 : index
    %149 = vector.load %arg30[%c2, %c0_76, %c0_77, %c0_78] : memref<4x2x16x16xf32, #tpu.memory_space<vmem>>, vector<1x2x16x16xf32>
    %150 = vector.shape_cast %149 : vector<1x2x16x16xf32> to vector<2x16x16xf32>
    %151 = vector.shape_cast %148 : vector<2x16x16xf32> to vector<1x2x16x16xf32>
    tpu.vector_store %arg30[%c2, %c0_76, %c0_77, %c0_78], %151 {strides = array<i32>} : memref<4x2x16x16xf32, #tpu.memory_space<vmem>>, vector<1x2x16x16xf32>,
    "tpu.trace_start"() <{level = 10 : i32, message = "bqk,bkd->bqd"}> : () -> ()
    %cst_79 = arith.constant dense<0.000000e+00> : vector<2x16x8xf32>
    %152 = tpu.matmul %148, %133, %cst_79 {dimension_numbers = #tpu.dot_dimension_numbers<[2], [1], [1], [2], [0, 0, 0, 1, 1, 2], [0], [0]>} : vector<2x16x16xf32>, vector<2x16x8xf32>, vector<2x16x8xf32> -> vector<2x16x8xf32>
    "tpu.trace_stop"() : () -> ()
    %153 = vector.extract_strided_slice %77 {offsets = [0, 24], sizes = [32, 8], strides = [1, 1]} : vector<32x96xf32> to vector<32x8xf32>
    %154 = vector.shape_cast %153 : vector<32x8xf32> to vector<2x16x8xf32>
    %155 = vector.extract_strided_slice %77 {offsets = [0, 56], sizes = [32, 8], strides = [1, 1]} : vector<32x96xf32> to vector<32x8xf32>
    %156 = vector.shape_cast %155 : vector<32x8xf32> to vector<2x16x8xf32>
    %157 = vector.extract_strided_slice %77 {offsets = [0, 88], sizes = [32, 8], strides = [1, 1]} : vector<32x96xf32> to vector<32x8xf32>
    %158 = vector.shape_cast %157 : vector<32x8xf32> to vector<2x16x8xf32>
    "tpu.trace_start"() <{level = 10 : i32, message = "bqd,bkd->bqk"}> : () -> ()
    %cst_80 = arith.constant dense<0.000000e+00> : vector<2x16x16xf32>
    %159 = tpu.matmul %154, %156, %cst_80 {dimension_numbers = #tpu.dot_dimension_numbers<[2], [2], [1], [1], [0, 0, 0, 1, 1, 1], [0], [0]>} : vector<2x16x8xf32>, vector<2x16x8xf32>, vector<2x16x16xf32> -> vector<2x16x16xf32>
    "tpu.trace_stop"() : () -> ()
    %cst_81 = arith.constant 0.353553385 : f32
    %160 = vector.broadcast %cst_81 : f32 to vector<2x16x16xf32>
    %161 = arith.mulf %159, %160 : vector<2x16x16xf32>
    %162 = vector.broadcast %44 : vector<2x1x16xf32> to vector<2x16x16xf32>
    %163 = arith.addf %161, %162 : vector<2x16x16xf32>
    %cst_82 = arith.constant dense<0xFF800000> : vector<2x16xf32>
    %164 = vector.multi_reduction <maximumf>, %163, %cst_82 [2] : vector<2x16x16xf32> to vector<2x16xf32>
    %165 = vector.shape_cast %164 : vector<2x16xf32> to vector<2x16x1xf32>
    %166 = vector.broadcast %165 : vector<2x16x1xf32> to vector<2x16x16xf32>
    %167 = arith.subf %163, %166 : vector<2x16x16xf32>
    %168 = math.exp %167 : vector<2x16x16xf32>
    %cst_83 = arith.constant dense<0.000000e+00> : vector<2x16xf32>
    %169 = vector.multi_reduction <add>, %168, %cst_83 [2] : vector<2x16x16xf32> to vector<2x16xf32>
    %170 = vector.shape_cast %169 : vector<2x16xf32> to vector<2x16x1xf32>
    %171 = tpu.reciprocal %170 {approx = true} : vector<2x16x1xf32> -> vector<2x16x1xf32>
    %172 = vector.broadcast %171 : vector<2x16x1xf32> to vector<2x16x16xf32>
    %173 = arith.mulf %168, %172 : vector<2x16x16xf32>
    %c3 = arith.constant 3 : index
    %c0_84 = arith.constant 0 : index
    %c0_85 = arith.constant 0 : index
    %c0_86 = arith.constant 0 : index
    %174 = vector.load %arg30[%c3, %c0_84, %c0_85, %c0_86] : memref<4x2x16x16xf32, #tpu.memory_space<vmem>>, vector<1x2x16x16xf32>
    %175 = vector.shape_cast %174 : vector<1x2x16x16xf32> to vector<2x16x16xf32>
    %176 = vector.shape_cast %173 : vector<2x16x16xf32> to vector<1x2x16x16xf32>
    tpu.vector_store %arg30[%c3, %c0_84, %c0_85, %c0_86], %176 {strides = array<i32>} : memref<4x2x16x16xf32, #tpu.memory_space<vmem>>, vector<1x2x16x16xf32>,
    "tpu.trace_start"() <{level = 10 : i32, message = "bqk,bkd->bqd"}> : () -> ()
    %cst_87 = arith.constant dense<0.000000e+00> : vector<2x16x8xf32>
    %177 = tpu.matmul %173, %158, %cst_87 {dimension_numbers = #tpu.dot_dimension_numbers<[2], [1], [1], [2], [0, 0, 0, 1, 1, 2], [0], [0]>} : vector<2x16x16xf32>, vector<2x16x8xf32>, vector<2x16x8xf32> -> vector<2x16x8xf32>
    "tpu.trace_stop"() : () -> ()
    %178 = tpu.concatenate %102, %127, %152, %177 in 2 : vector<2x16x8xf32>, vector<2x16x8xf32>, vector<2x16x8xf32>, vector<2x16x8xf32> -> vector<2x16x32xf32>
    %179 = vector.shape_cast %178 : vector<2x16x32xf32> to vector<32x32xf32>
    %c0_88 = arith.constant 0 : index
    %c0_89 = arith.constant 0 : index
    %c0_90 = arith.constant 0 : index
    %180 = vector.load %arg13[%c0_88, %c0_89, %c0_90] : memref<2x32x32xf32, #tpu.memory_space<vmem>>, vector<1x32x32xf32>
    %181 = vector.shape_cast %180 : vector<1x32x32xf32> to vector<32x32xf32>
    %cst_91 = arith.constant dense<0.000000e+00> : vector<32x32xf32>
    %182 = tpu.matmul %179, %181, %cst_91 {dimension_numbers = #tpu.dot_dimension_numbers<[1], [0], [0], [1], [0, 0, 1, 1], [], []>} : vector<32x32xf32>, vector<32x32xf32>, vector<32x32xf32> -> vector<32x32xf32>
    %c0_92 = arith.constant 0 : index
    %c0_93 = arith.constant 0 : index
    %c0_94 = arith.constant 0 : index
    %183 = vector.load %arg14[%c0_92, %c0_93, %c0_94] : memref<2x1x32xf32, #tpu.memory_space<vmem>>, vector<1x1x32xf32>
    %184 = vector.shape_cast %183 : vector<1x1x32xf32> to vector<1x32xf32>
    %185 = vector.broadcast %184 : vector<1x32xf32> to vector<32x32xf32>
    %186 = arith.addf %182, %185 : vector<32x32xf32>
    %187 = arith.addf %46, %186 : vector<32x32xf32>
    %c0_95 = arith.constant 0 : index
    %c0_96 = arith.constant 0 : index
    %c0_97 = arith.constant 0 : index
    %188 = vector.load %arg15[%c0_95, %c0_96, %c0_97] : memref<2x1x32xf32, #tpu.memory_space<vmem>>, vector<1x1x32xf32>
    %189 = vector.shape_cast %188 : vector<1x1x32xf32> to vector<1x32xf32>
    %c0_98 = arith.constant 0 : index
    %c0_99 = arith.constant 0 : index
    %c0_100 = arith.constant 0 : index
    %190 = vector.load %arg16[%c0_98, %c0_99, %c0_100] : memref<2x1x32xf32, #tpu.memory_space<vmem>>, vector<1x1x32xf32>
    %191 = vector.shape_cast %190 : vector<1x1x32xf32> to vector<1x32xf32>
    %cst_101 = arith.constant dense<0.000000e+00> : vector<32xf32>
    %192 = vector.multi_reduction <add>, %187, %cst_101 [1] : vector<32x32xf32> to vector<32xf32>
    %193 = vector.shape_cast %192 : vector<32xf32> to vector<32x1xf32>
    %cst_102 = arith.constant 3.200000e+01 : f32
    %194 = vector.broadcast %cst_102 : f32 to vector<32x1xf32>
    %195 = arith.divf %193, %194 : vector<32x1xf32>
    %196 = vector.broadcast %195 : vector<32x1xf32> to vector<32x32xf32>
    %197 = arith.subf %187, %196 : vector<32x32xf32>
    %198 = arith.mulf %197, %197 : vector<32x32xf32>
    %cst_103 = arith.constant dense<0.000000e+00> : vector<32xf32>
    %199 = vector.multi_reduction <add>, %198, %cst_103 [1] : vector<32x32xf32> to vector<32xf32>
    %200 = vector.shape_cast %199 : vector<32xf32> to vector<32x1xf32>
    %cst_104 = arith.constant 3.200000e+01 : f32
    %201 = vector.broadcast %cst_104 : f32 to vector<32x1xf32>
    %202 = arith.divf %200, %201 : vector<32x1xf32>
    %cst_105 = arith.constant 9.99999996E-13 : f32
    %203 = vector.broadcast %cst_105 : f32 to vector<32x1xf32>
    %204 = arith.addf %202, %203 : vector<32x1xf32>
    %205 = math.rsqrt %204 : vector<32x1xf32>
    %206 = vector.broadcast %205 : vector<32x1xf32> to vector<32x32xf32>
    %207 = arith.mulf %197, %206 : vector<32x32xf32>
    %208 = vector.broadcast %189 : vector<1x32xf32> to vector<32x32xf32>
    %209 = arith.mulf %207, %208 : vector<32x32xf32>
    %210 = vector.broadcast %191 : vector<1x32xf32> to vector<32x32xf32>
    %211 = arith.addf %209, %210 : vector<32x32xf32>
    %c0_106 = arith.constant 0 : index
    %c0_107 = arith.constant 0 : index
    %c0_108 = arith.constant 0 : index
    %212 = vector.load %arg17[%c0_106, %c0_107, %c0_108] : memref<2x32x64xf32, #tpu.memory_space<vmem>>, vector<1x32x64xf32>
    %213 = vector.shape_cast %212 : vector<1x32x64xf32> to vector<32x64xf32>
    %cst_109 = arith.constant dense<0.000000e+00> : vector<32x64xf32>
    %214 = tpu.matmul %211, %213, %cst_109 {dimension_numbers = #tpu.dot_dimension_numbers<[1], [0], [0], [1], [0, 0, 1, 1], [], []>} : vector<32x32xf32>, vector<32x64xf32>, vector<32x64xf32> -> vector<32x64xf32>
    %c0_110 = arith.constant 0 : index
    %c0_111 = arith.constant 0 : index
    %c0_112 = arith.constant 0 : index
    %215 = vector.load %arg18[%c0_110, %c0_111, %c0_112] : memref<2x1x64xf32, #tpu.memory_space<vmem>>, vector<1x1x64xf32>
    %216 = vector.shape_cast %215 : vector<1x1x64xf32> to vector<1x64xf32>
    %217 = vector.broadcast %216 : vector<1x64xf32> to vector<32x64xf32>
    %218 = arith.addf %214, %217 : vector<32x64xf32>
    %cst_113 = arith.constant 5.000000e-01 : f32
    %219 = vector.broadcast %cst_113 : f32 to vector<32x64xf32>
    %220 = arith.mulf %219, %218 : vector<32x64xf32>
    %cst_114 = arith.constant 4.471500e-02 : f32
    %221 = vector.broadcast %cst_114 : f32 to vector<32x64xf32>
    %222 = arith.mulf %221, %218 : vector<32x64xf32>
    %223 = arith.mulf %222, %218 : vector<32x64xf32>
    %224 = arith.mulf %223, %218 : vector<32x64xf32>
    %225 = arith.addf %218, %224 : vector<32x64xf32>
    %cst_115 = arith.constant 0.797884583 : f32
    %226 = vector.broadcast %cst_115 : f32 to vector<32x64xf32>
    %227 = arith.mulf %226, %225 : vector<32x64xf32>
    %228 = math.tanh %227 : vector<32x64xf32>
    %cst_116 = arith.constant 1.000000e+00 : f32
    %229 = vector.broadcast %cst_116 : f32 to vector<32x64xf32>
    %230 = arith.addf %229, %228 : vector<32x64xf32>
    %231 = arith.mulf %220, %230 : vector<32x64xf32>
    %c0_117 = arith.constant 0 : index
    %c0_118 = arith.constant 0 : index
    %c0_119 = arith.constant 0 : index
    %232 = vector.load %arg19[%c0_117, %c0_118, %c0_119] : memref<2x64x32xf32, #tpu.memory_space<vmem>>, vector<1x64x32xf32>
    %233 = vector.shape_cast %232 : vector<1x64x32xf32> to vector<64x32xf32>
    %cst_120 = arith.constant dense<0.000000e+00> : vector<32x32xf32>
    %234 = tpu.matmul %231, %233, %cst_120 {dimension_numbers = #tpu.dot_dimension_numbers<[1], [0], [0], [1], [0, 0, 1, 1], [], []>} : vector<32x64xf32>, vector<64x32xf32>, vector<32x32xf32> -> vector<32x32xf32>
    %c0_121 = arith.constant 0 : index
    %c0_122 = arith.constant 0 : index
    %c0_123 = arith.constant 0 : index
    %235 = vector.load %arg20[%c0_121, %c0_122, %c0_123] : memref<2x1x32xf32, #tpu.memory_space<vmem>>, vector<1x1x32xf32>
    %236 = vector.shape_cast %235 : vector<1x1x32xf32> to vector<1x32xf32>
    %237 = vector.broadcast %236 : vector<1x32xf32> to vector<32x32xf32>
    %238 = arith.addf %234, %237 : vector<32x32xf32>
    %239 = arith.addf %187, %238 : vector<32x32xf32>
    %c1_124 = arith.constant 1 : index
    %c0_125 = arith.constant 0 : index
    %c0_126 = arith.constant 0 : index
    %240 = vector.load %arg9[%c1_124, %c0_125, %c0_126] : memref<2x1x32xf32, #tpu.memory_space<vmem>>, vector<1x1x32xf32>
    %241 = vector.shape_cast %240 : vector<1x1x32xf32> to vector<1x32xf32>
    %c1_127 = arith.constant 1 : index
    %c0_128 = arith.constant 0 : index
    %c0_129 = arith.constant 0 : index
    %242 = vector.load %arg10[%c1_127, %c0_128, %c0_129] : memref<2x1x32xf32, #tpu.memory_space<vmem>>, vector<1x1x32xf32>
    %243 = vector.shape_cast %242 : vector<1x1x32xf32> to vector<1x32xf32>
    %cst_130 = arith.constant dense<0.000000e+00> : vector<32xf32>
    %244 = vector.multi_reduction <add>, %239, %cst_130 [1] : vector<32x32xf32> to vector<32xf32>
    %245 = vector.shape_cast %244 : vector<32xf32> to vector<32x1xf32>
    %cst_131 = arith.constant 3.200000e+01 : f32
    %246 = vector.broadcast %cst_131 : f32 to vector<32x1xf32>
    %247 = arith.divf %245, %246 : vector<32x1xf32>
    %248 = vector.broadcast %247 : vector<32x1xf32> to vector<32x32xf32>
    %249 = arith.subf %239, %248 : vector<32x32xf32>
    %250 = arith.mulf %249, %249 : vector<32x32xf32>
    %cst_132 = arith.constant dense<0.000000e+00> : vector<32xf32>
    %251 = vector.multi_reduction <add>, %250, %cst_132 [1] : vector<32x32xf32> to vector<32xf32>
    %252 = vector.shape_cast %251 : vector<32xf32> to vector<32x1xf32>
    %cst_133 = arith.constant 3.200000e+01 : f32
    %253 = vector.broadcast %cst_133 : f32 to vector<32x1xf32>
    %254 = arith.divf %252, %253 : vector<32x1xf32>
    %cst_134 = arith.constant 9.99999996E-13 : f32
    %255 = vector.broadcast %cst_134 : f32 to vector<32x1xf32>
    %256 = arith.addf %254, %255 : vector<32x1xf32>
    %257 = math.rsqrt %256 : vector<32x1xf32>
    %258 = vector.broadcast %257 : vector<32x1xf32> to vector<32x32xf32>
    %259 = arith.mulf %249, %258 : vector<32x32xf32>
    %260 = vector.broadcast %241 : vector<1x32xf32> to vector<32x32xf32>
    %261 = arith.mulf %259, %260 : vector<32x32xf32>
    %262 = vector.broadcast %243 : vector<1x32xf32> to vector<32x32xf32>
    %263 = arith.addf %261, %262 : vector<32x32xf32>
    %c1_135 = arith.constant 1 : index
    %c0_136 = arith.constant 0 : index
    %c0_137 = arith.constant 0 : index
    %264 = vector.load %arg11[%c1_135, %c0_136, %c0_137] : memref<2x32x96xf32, #tpu.memory_space<vmem>>, vector<1x32x96xf32>
    %265 = vector.shape_cast %264 : vector<1x32x96xf32> to vector<32x96xf32>
    %cst_138 = arith.constant dense<0.000000e+00> : vector<32x96xf32>
    %266 = tpu.matmul %263, %265, %cst_138 {dimension_numbers = #tpu.dot_dimension_numbers<[1], [0], [0], [1], [0, 0, 1, 1], [], []>} : vector<32x32xf32>, vector<32x96xf32>, vector<32x96xf32> -> vector<32x96xf32>
    %c1_139 = arith.constant 1 : index
    %c0_140 = arith.constant 0 : index
    %c0_141 = arith.constant 0 : index
    %267 = vector.load %arg12[%c1_139, %c0_140, %c0_141] : memref<2x1x96xf32, #tpu.memory_space<vmem>>, vector<1x1x96xf32>
    %268 = vector.shape_cast %267 : vector<1x1x96xf32> to vector<1x96xf32>
    %269 = vector.broadcast %268 : vector<1x96xf32> to vector<32x96xf32>
    %270 = arith.addf %266, %269 : vector<32x96xf32>
    %271 = vector.extract_strided_slice %270 {offsets = [0, 0], sizes = [32, 8], strides = [1, 1]} : vector<32x96xf32> to vector<32x8xf32>
    %272 = vector.shape_cast %271 : vector<32x8xf32> to vector<2x16x8xf32>
    %273 = vector.extract_strided_slice %270 {offsets = [0, 32], sizes = [32, 8], strides = [1, 1]} : vector<32x96xf32> to vector<32x8xf32>
    %274 = vector.shape_cast %273 : vector<32x8xf32> to vector<2x16x8xf32>
    %275 = vector.extract_strided_slice %270 {offsets = [0, 64], sizes = [32, 8], strides = [1, 1]} : vector<32x96xf32> to vector<32x8xf32>
    %276 = vector.shape_cast %275 : vector<32x8xf32> to vector<2x16x8xf32>
    "tpu.trace_start"() <{level = 10 : i32, message = "bqd,bkd->bqk"}> : () -> ()
    %cst_142 = arith.constant dense<0.000000e+00> : vector<2x16x16xf32>
    %277 = tpu.matmul %272, %274, %cst_142 {dimension_numbers = #tpu.dot_dimension_numbers<[2], [2], [1], [1], [0, 0, 0, 1, 1, 1], [0], [0]>} : vector<2x16x8xf32>, vector<2x16x8xf32>, vector<2x16x16xf32> -> vector<2x16x16xf32>
    "tpu.trace_stop"() : () -> ()
    %cst_143 = arith.constant 0.353553385 : f32
    %278 = vector.broadcast %cst_143 : f32 to vector<2x16x16xf32>
    %279 = arith.mulf %277, %278 : vector<2x16x16xf32>
    %280 = vector.broadcast %44 : vector<2x1x16xf32> to vector<2x16x16xf32>
    %281 = arith.addf %279, %280 : vector<2x16x16xf32>
    %cst_144 = arith.constant dense<0xFF800000> : vector<2x16xf32>
    %282 = vector.multi_reduction <maximumf>, %281, %cst_144 [2] : vector<2x16x16xf32> to vector<2x16xf32>
    %283 = vector.shape_cast %282 : vector<2x16xf32> to vector<2x16x1xf32>
    %284 = vector.broadcast %283 : vector<2x16x1xf32> to vector<2x16x16xf32>
    %285 = arith.subf %281, %284 : vector<2x16x16xf32>
    %286 = math.exp %285 : vector<2x16x16xf32>
    %cst_145 = arith.constant dense<0.000000e+00> : vector<2x16xf32>
    %287 = vector.multi_reduction <add>, %286, %cst_145 [2] : vector<2x16x16xf32> to vector<2x16xf32>
    %288 = vector.shape_cast %287 : vector<2x16xf32> to vector<2x16x1xf32>
    %289 = tpu.reciprocal %288 {approx = true} : vector<2x16x1xf32> -> vector<2x16x1xf32>
    %290 = vector.broadcast %289 : vector<2x16x1xf32> to vector<2x16x16xf32>
    %291 = arith.mulf %286, %290 : vector<2x16x16xf32>
    %c0_146 = arith.constant 0 : index
    %c0_147 = arith.constant 0 : index
    %c0_148 = arith.constant 0 : index
    %c0_149 = arith.constant 0 : index
    %292 = vector.load %arg31[%c0_146, %c0_147, %c0_148, %c0_149] : memref<4x2x16x16xf32, #tpu.memory_space<vmem>>, vector<1x2x16x16xf32>
    %293 = vector.shape_cast %292 : vector<1x2x16x16xf32> to vector<2x16x16xf32>
    %294 = vector.shape_cast %291 : vector<2x16x16xf32> to vector<1x2x16x16xf32>
    tpu.vector_store %arg31[%c0_146, %c0_147, %c0_148, %c0_149], %294 {strides = array<i32>} : memref<4x2x16x16xf32, #tpu.memory_space<vmem>>, vector<1x2x16x16xf32>,
    "tpu.trace_start"() <{level = 10 : i32, message = "bqk,bkd->bqd"}> : () -> ()
    %cst_150 = arith.constant dense<0.000000e+00> : vector<2x16x8xf32>
    %295 = tpu.matmul %291, %276, %cst_150 {dimension_numbers = #tpu.dot_dimension_numbers<[2], [1], [1], [2], [0, 0, 0, 1, 1, 2], [0], [0]>} : vector<2x16x16xf32>, vector<2x16x8xf32>, vector<2x16x8xf32> -> vector<2x16x8xf32>
    "tpu.trace_stop"() : () -> ()
    %296 = vector.extract_strided_slice %270 {offsets = [0, 8], sizes = [32, 8], strides = [1, 1]} : vector<32x96xf32> to vector<32x8xf32>
    %297 = vector.shape_cast %296 : vector<32x8xf32> to vector<2x16x8xf32>
    %298 = vector.extract_strided_slice %270 {offsets = [0, 40], sizes = [32, 8], strides = [1, 1]} : vector<32x96xf32> to vector<32x8xf32>
    %299 = vector.shape_cast %298 : vector<32x8xf32> to vector<2x16x8xf32>
    %300 = vector.extract_strided_slice %270 {offsets = [0, 72], sizes = [32, 8], strides = [1, 1]} : vector<32x96xf32> to vector<32x8xf32>
    %301 = vector.shape_cast %300 : vector<32x8xf32> to vector<2x16x8xf32>
    "tpu.trace_start"() <{level = 10 : i32, message = "bqd,bkd->bqk"}> : () -> ()
    %cst_151 = arith.constant dense<0.000000e+00> : vector<2x16x16xf32>
    %302 = tpu.matmul %297, %299, %cst_151 {dimension_numbers = #tpu.dot_dimension_numbers<[2], [2], [1], [1], [0, 0, 0, 1, 1, 1], [0], [0]>} : vector<2x16x8xf32>, vector<2x16x8xf32>, vector<2x16x16xf32> -> vector<2x16x16xf32>
    "tpu.trace_stop"() : () -> ()
    %cst_152 = arith.constant 0.353553385 : f32
    %303 = vector.broadcast %cst_152 : f32 to vector<2x16x16xf32>
    %304 = arith.mulf %302, %303 : vector<2x16x16xf32>
    %305 = vector.broadcast %44 : vector<2x1x16xf32> to vector<2x16x16xf32>
    %306 = arith.addf %304, %305 : vector<2x16x16xf32>
    %cst_153 = arith.constant dense<0xFF800000> : vector<2x16xf32>
    %307 = vector.multi_reduction <maximumf>, %306, %cst_153 [2] : vector<2x16x16xf32> to vector<2x16xf32>
    %308 = vector.shape_cast %307 : vector<2x16xf32> to vector<2x16x1xf32>
    %309 = vector.broadcast %308 : vector<2x16x1xf32> to vector<2x16x16xf32>
    %310 = arith.subf %306, %309 : vector<2x16x16xf32>
    %311 = math.exp %310 : vector<2x16x16xf32>
    %cst_154 = arith.constant dense<0.000000e+00> : vector<2x16xf32>
    %312 = vector.multi_reduction <add>, %311, %cst_154 [2] : vector<2x16x16xf32> to vector<2x16xf32>
    %313 = vector.shape_cast %312 : vector<2x16xf32> to vector<2x16x1xf32>
    %314 = tpu.reciprocal %313 {approx = true} : vector<2x16x1xf32> -> vector<2x16x1xf32>
    %315 = vector.broadcast %314 : vector<2x16x1xf32> to vector<2x16x16xf32>
    %316 = arith.mulf %311, %315 : vector<2x16x16xf32>
    %c1_155 = arith.constant 1 : index
    %c0_156 = arith.constant 0 : index
    %c0_157 = arith.constant 0 : index
    %c0_158 = arith.constant 0 : index
    %317 = vector.load %arg31[%c1_155, %c0_156, %c0_157, %c0_158] : memref<4x2x16x16xf32, #tpu.memory_space<vmem>>, vector<1x2x16x16xf32>
    %318 = vector.shape_cast %317 : vector<1x2x16x16xf32> to vector<2x16x16xf32>
    %319 = vector.shape_cast %316 : vector<2x16x16xf32> to vector<1x2x16x16xf32>
    tpu.vector_store %arg31[%c1_155, %c0_156, %c0_157, %c0_158], %319 {strides = array<i32>} : memref<4x2x16x16xf32, #tpu.memory_space<vmem>>, vector<1x2x16x16xf32>,
    "tpu.trace_start"() <{level = 10 : i32, message = "bqk,bkd->bqd"}> : () -> ()
    %cst_159 = arith.constant dense<0.000000e+00> : vector<2x16x8xf32>
    %320 = tpu.matmul %316, %301, %cst_159 {dimension_numbers = #tpu.dot_dimension_numbers<[2], [1], [1], [2], [0, 0, 0, 1, 1, 2], [0], [0]>} : vector<2x16x16xf32>, vector<2x16x8xf32>, vector<2x16x8xf32> -> vector<2x16x8xf32>
    "tpu.trace_stop"() : () -> ()
    %321 = vector.extract_strided_slice %270 {offsets = [0, 16], sizes = [32, 8], strides = [1, 1]} : vector<32x96xf32> to vector<32x8xf32>
    %322 = vector.shape_cast %321 : vector<32x8xf32> to vector<2x16x8xf32>
    %323 = vector.extract_strided_slice %270 {offsets = [0, 48], sizes = [32, 8], strides = [1, 1]} : vector<32x96xf32> to vector<32x8xf32>
    %324 = vector.shape_cast %323 : vector<32x8xf32> to vector<2x16x8xf32>
    %325 = vector.extract_strided_slice %270 {offsets = [0, 80], sizes = [32, 8], strides = [1, 1]} : vector<32x96xf32> to vector<32x8xf32>
    %326 = vector.shape_cast %325 : vector<32x8xf32> to vector<2x16x8xf32>
    "tpu.trace_start"() <{level = 10 : i32, message = "bqd,bkd->bqk"}> : () -> ()
    %cst_160 = arith.constant dense<0.000000e+00> : vector<2x16x16xf32>
    %327 = tpu.matmul %322, %324, %cst_160 {dimension_numbers = #tpu.dot_dimension_numbers<[2], [2], [1], [1], [0, 0, 0, 1, 1, 1], [0], [0]>} : vector<2x16x8xf32>, vector<2x16x8xf32>, vector<2x16x16xf32> -> vector<2x16x16xf32>
    "tpu.trace_stop"() : () -> ()
    %cst_161 = arith.constant 0.353553385 : f32
    %328 = vector.broadcast %cst_161 : f32 to vector<2x16x16xf32>
    %329 = arith.mulf %327, %328 : vector<2x16x16xf32>
    %330 = vector.broadcast %44 : vector<2x1x16xf32> to vector<2x16x16xf32>
    %331 = arith.addf %329, %330 : vector<2x16x16xf32>
    %cst_162 = arith.constant dense<0xFF800000> : vector<2x16xf32>
    %332 = vector.multi_reduction <maximumf>, %331, %cst_162 [2] : vector<2x16x16xf32> to vector<2x16xf32>
    %333 = vector.shape_cast %332 : vector<2x16xf32> to vector<2x16x1xf32>
    %334 = vector.broadcast %333 : vector<2x16x1xf32> to vector<2x16x16xf32>
    %335 = arith.subf %331, %334 : vector<2x16x16xf32>
    %336 = math.exp %335 : vector<2x16x16xf32>
    %cst_163 = arith.constant dense<0.000000e+00> : vector<2x16xf32>
    %337 = vector.multi_reduction <add>, %336, %cst_163 [2] : vector<2x16x16xf32> to vector<2x16xf32>
    %338 = vector.shape_cast %337 : vector<2x16xf32> to vector<2x16x1xf32>
    %339 = tpu.reciprocal %338 {approx = true} : vector<2x16x1xf32> -> vector<2x16x1xf32>
    %340 = vector.broadcast %339 : vector<2x16x1xf32> to vector<2x16x16xf32>
    %341 = arith.mulf %336, %340 : vector<2x16x16xf32>
    %c2_164 = arith.constant 2 : index
    %c0_165 = arith.constant 0 : index
    %c0_166 = arith.constant 0 : index
    %c0_167 = arith.constant 0 : index
    %342 = vector.load %arg31[%c2_164, %c0_165, %c0_166, %c0_167] : memref<4x2x16x16xf32, #tpu.memory_space<vmem>>, vector<1x2x16x16xf32>
    %343 = vector.shape_cast %342 : vector<1x2x16x16xf32> to vector<2x16x16xf32>
    %344 = vector.shape_cast %341 : vector<2x16x16xf32> to vector<1x2x16x16xf32>
    tpu.vector_store %arg31[%c2_164, %c0_165, %c0_166, %c0_167], %344 {strides = array<i32>} : memref<4x2x16x16xf32, #tpu.memory_space<vmem>>, vector<1x2x16x16xf32>,
    "tpu.trace_start"() <{level = 10 : i32, message = "bqk,bkd->bqd"}> : () -> ()
    %cst_168 = arith.constant dense<0.000000e+00> : vector<2x16x8xf32>
    %345 = tpu.matmul %341, %326, %cst_168 {dimension_numbers = #tpu.dot_dimension_numbers<[2], [1], [1], [2], [0, 0, 0, 1, 1, 2], [0], [0]>} : vector<2x16x16xf32>, vector<2x16x8xf32>, vector<2x16x8xf32> -> vector<2x16x8xf32>
    "tpu.trace_stop"() : () -> ()
    %346 = vector.extract_strided_slice %270 {offsets = [0, 24], sizes = [32, 8], strides = [1, 1]} : vector<32x96xf32> to vector<32x8xf32>
    %347 = vector.shape_cast %346 : vector<32x8xf32> to vector<2x16x8xf32>
    %348 = vector.extract_strided_slice %270 {offsets = [0, 56], sizes = [32, 8], strides = [1, 1]} : vector<32x96xf32> to vector<32x8xf32>
    %349 = vector.shape_cast %348 : vector<32x8xf32> to vector<2x16x8xf32>
    %350 = vector.extract_strided_slice %270 {offsets = [0, 88], sizes = [32, 8], strides = [1, 1]} : vector<32x96xf32> to vector<32x8xf32>
    %351 = vector.shape_cast %350 : vector<32x8xf32> to vector<2x16x8xf32>
    "tpu.trace_start"() <{level = 10 : i32, message = "bqd,bkd->bqk"}> : () -> ()
    %cst_169 = arith.constant dense<0.000000e+00> : vector<2x16x16xf32>
    %352 = tpu.matmul %347, %349, %cst_169 {dimension_numbers = #tpu.dot_dimension_numbers<[2], [2], [1], [1], [0, 0, 0, 1, 1, 1], [0], [0]>} : vector<2x16x8xf32>, vector<2x16x8xf32>, vector<2x16x16xf32> -> vector<2x16x16xf32>
    "tpu.trace_stop"() : () -> ()
    %cst_170 = arith.constant 0.353553385 : f32
    %353 = vector.broadcast %cst_170 : f32 to vector<2x16x16xf32>
    %354 = arith.mulf %352, %353 : vector<2x16x16xf32>
    %355 = vector.broadcast %44 : vector<2x1x16xf32> to vector<2x16x16xf32>
    %356 = arith.addf %354, %355 : vector<2x16x16xf32>
    %cst_171 = arith.constant dense<0xFF800000> : vector<2x16xf32>
    %357 = vector.multi_reduction <maximumf>, %356, %cst_171 [2] : vector<2x16x16xf32> to vector<2x16xf32>
    %358 = vector.shape_cast %357 : vector<2x16xf32> to vector<2x16x1xf32>
    %359 = vector.broadcast %358 : vector<2x16x1xf32> to vector<2x16x16xf32>
    %360 = arith.subf %356, %359 : vector<2x16x16xf32>
    %361 = math.exp %360 : vector<2x16x16xf32>
    %cst_172 = arith.constant dense<0.000000e+00> : vector<2x16xf32>
    %362 = vector.multi_reduction <add>, %361, %cst_172 [2] : vector<2x16x16xf32> to vector<2x16xf32>
    %363 = vector.shape_cast %362 : vector<2x16xf32> to vector<2x16x1xf32>
    %364 = tpu.reciprocal %363 {approx = true} : vector<2x16x1xf32> -> vector<2x16x1xf32>
    %365 = vector.broadcast %364 : vector<2x16x1xf32> to vector<2x16x16xf32>
    %366 = arith.mulf %361, %365 : vector<2x16x16xf32>
    %c3_173 = arith.constant 3 : index
    %c0_174 = arith.constant 0 : index
    %c0_175 = arith.constant 0 : index
    %c0_176 = arith.constant 0 : index
    %367 = vector.load %arg31[%c3_173, %c0_174, %c0_175, %c0_176] : memref<4x2x16x16xf32, #tpu.memory_space<vmem>>, vector<1x2x16x16xf32>
    %368 = vector.shape_cast %367 : vector<1x2x16x16xf32> to vector<2x16x16xf32>
    %369 = vector.shape_cast %366 : vector<2x16x16xf32> to vector<1x2x16x16xf32>
    tpu.vector_store %arg31[%c3_173, %c0_174, %c0_175, %c0_176], %369 {strides = array<i32>} : memref<4x2x16x16xf32, #tpu.memory_space<vmem>>, vector<1x2x16x16xf32>,
    "tpu.trace_start"() <{level = 10 : i32, message = "bqk,bkd->bqd"}> : () -> ()
    %cst_177 = arith.constant dense<0.000000e+00> : vector<2x16x8xf32>
    %370 = tpu.matmul %366, %351, %cst_177 {dimension_numbers = #tpu.dot_dimension_numbers<[2], [1], [1], [2], [0, 0, 0, 1, 1, 2], [0], [0]>} : vector<2x16x16xf32>, vector<2x16x8xf32>, vector<2x16x8xf32> -> vector<2x16x8xf32>
    "tpu.trace_stop"() : () -> ()
    %371 = tpu.concatenate %295, %320, %345, %370 in 2 : vector<2x16x8xf32>, vector<2x16x8xf32>, vector<2x16x8xf32>, vector<2x16x8xf32> -> vector<2x16x32xf32>
    %372 = vector.shape_cast %371 : vector<2x16x32xf32> to vector<32x32xf32>
    %c1_178 = arith.constant 1 : index
    %c0_179 = arith.constant 0 : index
    %c0_180 = arith.constant 0 : index
    %373 = vector.load %arg13[%c1_178, %c0_179, %c0_180] : memref<2x32x32xf32, #tpu.memory_space<vmem>>, vector<1x32x32xf32>
    %374 = vector.shape_cast %373 : vector<1x32x32xf32> to vector<32x32xf32>
    %cst_181 = arith.constant dense<0.000000e+00> : vector<32x32xf32>
    %375 = tpu.matmul %372, %374, %cst_181 {dimension_numbers = #tpu.dot_dimension_numbers<[1], [0], [0], [1], [0, 0, 1, 1], [], []>} : vector<32x32xf32>, vector<32x32xf32>, vector<32x32xf32> -> vector<32x32xf32>
    %c1_182 = arith.constant 1 : index
    %c0_183 = arith.constant 0 : index
    %c0_184 = arith.constant 0 : index
    %376 = vector.load %arg14[%c1_182, %c0_183, %c0_184] : memref<2x1x32xf32, #tpu.memory_space<vmem>>, vector<1x1x32xf32>
    %377 = vector.shape_cast %376 : vector<1x1x32xf32> to vector<1x32xf32>
    %378 = vector.broadcast %377 : vector<1x32xf32> to vector<32x32xf32>
    %379 = arith.addf %375, %378 : vector<32x32xf32>
    %380 = arith.addf %239, %379 : vector<32x32xf32>
    %c1_185 = arith.constant 1 : index
    %c0_186 = arith.constant 0 : index
    %c0_187 = arith.constant 0 : index
    %381 = vector.load %arg15[%c1_185, %c0_186, %c0_187] : memref<2x1x32xf32, #tpu.memory_space<vmem>>, vector<1x1x32xf32>
    %382 = vector.shape_cast %381 : vector<1x1x32xf32> to vector<1x32xf32>
    %c1_188 = arith.constant 1 : index
    %c0_189 = arith.constant 0 : index
    %c0_190 = arith.constant 0 : index
    %383 = vector.load %arg16[%c1_188, %c0_189, %c0_190] : memref<2x1x32xf32, #tpu.memory_space<vmem>>, vector<1x1x32xf32>
    %384 = vector.shape_cast %383 : vector<1x1x32xf32> to vector<1x32xf32>
    %cst_191 = arith.constant dense<0.000000e+00> : vector<32xf32>
    %385 = vector.multi_reduction <add>, %380, %cst_191 [1] : vector<32x32xf32> to vector<32xf32>
    %386 = vector.shape_cast %385 : vector<32xf32> to vector<32x1xf32>
    %cst_192 = arith.constant 3.200000e+01 : f32
    %387 = vector.broadcast %cst_192 : f32 to vector<32x1xf32>
    %388 = arith.divf %386, %387 : vector<32x1xf32>
    %389 = vector.broadcast %388 : vector<32x1xf32> to vector<32x32xf32>
    %390 = arith.subf %380, %389 : vector<32x32xf32>
    %391 = arith.mulf %390, %390 : vector<32x32xf32>
    %cst_193 = arith.constant dense<0.000000e+00> : vector<32xf32>
    %392 = vector.multi_reduction <add>, %391, %cst_193 [1] : vector<32x32xf32> to vector<32xf32>
    %393 = vector.shape_cast %392 : vector<32xf32> to vector<32x1xf32>
    %cst_194 = arith.constant 3.200000e+01 : f32
    %394 = vector.broadcast %cst_194 : f32 to vector<32x1xf32>
    %395 = arith.divf %393, %394 : vector<32x1xf32>
    %cst_195 = arith.constant 9.99999996E-13 : f32
    %396 = vector.broadcast %cst_195 : f32 to vector<32x1xf32>
    %397 = arith.addf %395, %396 : vector<32x1xf32>
    %398 = math.rsqrt %397 : vector<32x1xf32>
    %399 = vector.broadcast %398 : vector<32x1xf32> to vector<32x32xf32>
    %400 = arith.mulf %390, %399 : vector<32x32xf32>
    %401 = vector.broadcast %382 : vector<1x32xf32> to vector<32x32xf32>
    %402 = arith.mulf %400, %401 : vector<32x32xf32>
    %403 = vector.broadcast %384 : vector<1x32xf32> to vector<32x32xf32>
    %404 = arith.addf %402, %403 : vector<32x32xf32>
    %c1_196 = arith.constant 1 : index
    %c0_197 = arith.constant 0 : index
    %c0_198 = arith.constant 0 : index
    %405 = vector.load %arg17[%c1_196, %c0_197, %c0_198] : memref<2x32x64xf32, #tpu.memory_space<vmem>>, vector<1x32x64xf32>
    %406 = vector.shape_cast %405 : vector<1x32x64xf32> to vector<32x64xf32>
    %cst_199 = arith.constant dense<0.000000e+00> : vector<32x64xf32>
    %407 = tpu.matmul %404, %406, %cst_199 {dimension_numbers = #tpu.dot_dimension_numbers<[1], [0], [0], [1], [0, 0, 1, 1], [], []>} : vector<32x32xf32>, vector<32x64xf32>, vector<32x64xf32> -> vector<32x64xf32>
    %c1_200 = arith.constant 1 : index
    %c0_201 = arith.constant 0 : index
    %c0_202 = arith.constant 0 : index
    %408 = vector.load %arg18[%c1_200, %c0_201, %c0_202] : memref<2x1x64xf32, #tpu.memory_space<vmem>>, vector<1x1x64xf32>
    %409 = vector.shape_cast %408 : vector<1x1x64xf32> to vector<1x64xf32>
    %410 = vector.broadcast %409 : vector<1x64xf32> to vector<32x64xf32>
    %411 = arith.addf %407, %410 : vector<32x64xf32>
    %cst_203 = arith.constant 5.000000e-01 : f32
    %412 = vector.broadcast %cst_203 : f32 to vector<32x64xf32>
    %413 = arith.mulf %412, %411 : vector<32x64xf32>
    %cst_204 = arith.constant 4.471500e-02 : f32
    %414 = vector.broadcast %cst_204 : f32 to vector<32x64xf32>
    %415 = arith.mulf %414, %411 : vector<32x64xf32>
    %416 = arith.mulf %415, %411 : vector<32x64xf32>
    %417 = arith.mulf %416, %411 : vector<32x64xf32>
    %418 = arith.addf %411, %417 : vector<32x64xf32>
    %cst_205 = arith.constant 0.797884583 : f32
    %419 = vector.broadcast %cst_205 : f32 to vector<32x64xf32>
    %420 = arith.mulf %419, %418 : vector<32x64xf32>
    %421 = math.tanh %420 : vector<32x64xf32>
    %cst_206 = arith.constant 1.000000e+00 : f32
    %422 = vector.broadcast %cst_206 : f32 to vector<32x64xf32>
    %423 = arith.addf %422, %421 : vector<32x64xf32>
    %424 = arith.mulf %413, %423 : vector<32x64xf32>
    %c1_207 = arith.constant 1 : index
    %c0_208 = arith.constant 0 : index
    %c0_209 = arith.constant 0 : index
    %425 = vector.load %arg19[%c1_207, %c0_208, %c0_209] : memref<2x64x32xf32, #tpu.memory_space<vmem>>, vector<1x64x32xf32>
    %426 = vector.shape_cast %425 : vector<1x64x32xf32> to vector<64x32xf32>
    %cst_210 = arith.constant dense<0.000000e+00> : vector<32x32xf32>
    %427 = tpu.matmul %424, %426, %cst_210 {dimension_numbers = #tpu.dot_dimension_numbers<[1], [0], [0], [1], [0, 0, 1, 1], [], []>} : vector<32x64xf32>, vector<64x32xf32>, vector<32x32xf32> -> vector<32x32xf32>
    %c1_211 = arith.constant 1 : index
    %c0_212 = arith.constant 0 : index
    %c0_213 = arith.constant 0 : index
    %428 = vector.load %arg20[%c1_211, %c0_212, %c0_213] : memref<2x1x32xf32, #tpu.memory_space<vmem>>, vector<1x1x32xf32>
    %429 = vector.shape_cast %428 : vector<1x1x32xf32> to vector<1x32xf32>
    %430 = vector.broadcast %429 : vector<1x32xf32> to vector<32x32xf32>
    %431 = arith.addf %427, %430 : vector<32x32xf32>
    %432 = arith.addf %380, %431 : vector<32x32xf32>
    %433 = vector.shape_cast %432 : vector<32x32xf32> to vector<2x16x32xf32>
    %434 = vector.extract_strided_slice %433 {offsets = [0, 0, 0], sizes = [2, 1, 32], strides = [1, 1, 1]} : vector<2x16x32xf32> to vector<2x1x32xf32>
    %435 = vector.shape_cast %434 : vector<2x1x32xf32> to vector<2x32xf32>
    %c0_214 = arith.constant 0 : index
    %c0_215 = arith.constant 0 : index
    %436 = vector.load %arg21[%c0_214, %c0_215] : memref<1x32xf32, #tpu.memory_space<vmem>>, vector<1x32xf32>
    %c0_216 = arith.constant 0 : index
    %c0_217 = arith.constant 0 : index
    %437 = vector.load %arg22[%c0_216, %c0_217] : memref<1x32xf32, #tpu.memory_space<vmem>>, vector<1x32xf32>
    %cst_218 = arith.constant dense<0.000000e+00> : vector<2xf32>
    %438 = vector.multi_reduction <add>, %435, %cst_218 [1] : vector<2x32xf32> to vector<2xf32>
    %439 = vector.shape_cast %438 : vector<2xf32> to vector<2x1xf32>
    %cst_219 = arith.constant 3.200000e+01 : f32
    %440 = vector.broadcast %cst_219 : f32 to vector<2x1xf32>
    %441 = arith.divf %439, %440 : vector<2x1xf32>
    %442 = vector.broadcast %441 : vector<2x1xf32> to vector<2x32xf32>
    %443 = arith.subf %435, %442 : vector<2x32xf32>
    %444 = arith.mulf %443, %443 : vector<2x32xf32>
    %cst_220 = arith.constant dense<0.000000e+00> : vector<2xf32>
    %445 = vector.multi_reduction <add>, %444, %cst_220 [1] : vector<2x32xf32> to vector<2xf32>
    %446 = vector.shape_cast %445 : vector<2xf32> to vector<2x1xf32>
    %cst_221 = arith.constant 3.200000e+01 : f32
    %447 = vector.broadcast %cst_221 : f32 to vector<2x1xf32>
    %448 = arith.divf %446, %447 : vector<2x1xf32>
    %cst_222 = arith.constant 9.99999996E-13 : f32
    %449 = vector.broadcast %cst_222 : f32 to vector<2x1xf32>
    %450 = arith.addf %448, %449 : vector<2x1xf32>
    %451 = math.rsqrt %450 : vector<2x1xf32>
    %452 = vector.broadcast %451 : vector<2x1xf32> to vector<2x32xf32>
    %453 = arith.mulf %443, %452 : vector<2x32xf32>
    %454 = vector.broadcast %436 : vector<1x32xf32> to vector<2x32xf32>
    %455 = arith.mulf %453, %454 : vector<2x32xf32>
    %456 = vector.broadcast %437 : vector<1x32xf32> to vector<2x32xf32>
    %457 = arith.addf %455, %456 : vector<2x32xf32>
    %c0_223 = arith.constant 0 : index
    %c0_224 = arith.constant 0 : index
    %458 = vector.load %arg23[%c0_223, %c0_224] : memref<32x32xf32, #tpu.memory_space<vmem>>, vector<32x32xf32>
    %cst_225 = arith.constant dense<0.000000e+00> : vector<2x32xf32>
    %459 = tpu.matmul %457, %458, %cst_225 {dimension_numbers = #tpu.dot_dimension_numbers<[1], [0], [0], [1], [0, 0, 1, 1], [], []>} : vector<2x32xf32>, vector<32x32xf32>, vector<2x32xf32> -> vector<2x32xf32>
    %c0_226 = arith.constant 0 : index
    %c0_227 = arith.constant 0 : index
    %460 = vector.load %arg24[%c0_226, %c0_227] : memref<1x32xf32, #tpu.memory_space<vmem>>, vector<1x32xf32>
    %461 = vector.broadcast %460 : vector<1x32xf32> to vector<2x32xf32>
    %462 = arith.addf %459, %461 : vector<2x32xf32>
    %463 = math.tanh %462 : vector<2x32xf32>
    %c0_228 = arith.constant 0 : index
    %c0_229 = arith.constant 0 : index
    %464 = vector.load %arg25[%c0_228, %c0_229] : memref<32x64xf32, #tpu.memory_space<vmem>>, vector<32x64xf32>
    %cst_230 = arith.constant dense<0.000000e+00> : vector<2x64xf32>
    %465 = tpu.matmul %463, %464, %cst_230 {dimension_numbers = #tpu.dot_dimension_numbers<[1], [0], [0], [1], [0, 0, 1, 1], [], []>} : vector<2x32xf32>, vector<32x64xf32>, vector<2x64xf32> -> vector<2x64xf32>
    %c0_231 = arith.constant 0 : index
    %c0_232 = arith.constant 0 : index
    %466 = vector.load %arg26[%c0_231, %c0_232] : memref<1x64xf32, #tpu.memory_space<vmem>>, vector<1x64xf32>
    %467 = vector.broadcast %466 : vector<1x64xf32> to vector<2x64xf32>
    %468 = arith.addf %465, %467 : vector<2x64xf32>
    %cst_233 = arith.constant 5.000000e-01 : f32
    %469 = vector.broadcast %cst_233 : f32 to vector<2x64xf32>
    %470 = arith.mulf %469, %468 : vector<2x64xf32>
    %cst_234 = arith.constant 4.471500e-02 : f32
    %471 = vector.broadcast %cst_234 : f32 to vector<2x64xf32>
    %472 = arith.mulf %471, %468 : vector<2x64xf32>
    %473 = arith.mulf %472, %468 : vector<2x64xf32>
    %474 = arith.mulf %473, %468 : vector<2x64xf32>
    %475 = arith.addf %468, %474 : vector<2x64xf32>
    %cst_235 = arith.constant 0.797884583 : f32
    %476 = vector.broadcast %cst_235 : f32 to vector<2x64xf32>
    %477 = arith.mulf %476, %475 : vector<2x64xf32>
    %478 = math.tanh %477 : vector<2x64xf32>
    %cst_236 = arith.constant 1.000000e+00 : f32
    %479 = vector.broadcast %cst_236 : f32 to vector<2x64xf32>
    %480 = arith.addf %479, %478 : vector<2x64xf32>
    %481 = arith.mulf %470, %480 : vector<2x64xf32>
    %c0_237 = arith.constant 0 : index
    %c0_238 = arith.constant 0 : index
    %482 = vector.load %arg27[%c0_237, %c0_238] : memref<64x5xf32, #tpu.memory_space<vmem>>, vector<64x5xf32>
    %cst_239 = arith.constant dense<0.000000e+00> : vector<2x5xf32>
    %483 = tpu.matmul %481, %482, %cst_239 {dimension_numbers = #tpu.dot_dimension_numbers<[1], [0], [0], [1], [0, 0, 1, 1], [], []>} : vector<2x64xf32>, vector<64x5xf32>, vector<2x5xf32> -> vector<2x5xf32>
    %c0_240 = arith.constant 0 : index
    %c0_241 = arith.constant 0 : index
    %484 = vector.load %arg28[%c0_240, %c0_241] : memref<1x5xf32, #tpu.memory_space<vmem>>, vector<1x5xf32>
    %485 = vector.broadcast %484 : vector<1x5xf32> to vector<2x5xf32>
    %486 = arith.addf %483, %485 : vector<2x5xf32>
    %c0_242 = arith.constant 0 : index
    %c0_243 = arith.constant 0 : index
    %487 = vector.load %arg29[%c0_242, %c0_243] : memref<2x5xf32, #tpu.memory_space<vmem>>, vector<2x5xf32>
    tpu.vector_store %arg29[%c0_242, %c0_243], %486 {strides = array<i32>} : memref<2x5xf32, #tpu.memory_space<vmem>>, vector<2x5xf32>,
    return
  }
}

</mosaic_0001>

<llo_original>
// kernel: vilt_forward.1
$region0: #{vilt_forward.1}
  #allocation0 [shape = 'u32[]', space=smem, size = 0x4, offset = 0x4, fixed_abs, tag = 'smem constant byte address 0x4 - core index']
  #allocation1 [shape = 'u32[144,128]{1,0:T(1,128)}', space=vmem, size = 0x12000, scoped, tag = 'internal scratch']
  #allocation2 [shape = 'f32[2,16,32]{2,1,0:T(8,128)}', space=vmem, size = 0x4000, scoped, tag = 'scratch operand']
  %s0 = inlined_call_operand.smem [shape: u32[32], index: -1, kind: input, shape index: {}]
  %s1 = sld [smem:[%s0]]
  %s2 = scalar_lea.smem %s0, 1
  %s3 = sld [smem:[%s2]]
  %s4 = scalar_lea.smem %s0, 2
  %s5 = sld [smem:[%s4]]
  %s6 = scalar_lea.smem %s0, 3
  %s7 = sld [smem:[%s6]]
  %s8 = scalar_lea.smem %s0, 4
  %s9 = sld [smem:[%s8]]
  %s10 = scalar_lea.smem %s0, 5
  %s11 = sld [smem:[%s10]]
  %s12 = scalar_lea.smem %s0, 6
  %s13 = sld [smem:[%s12]]
  %s14 = scalar_lea.smem %s0, 7
  %s15 = sld [smem:[%s14]]
  %s16 = scalar_lea.smem %s0, 8
  %s17 = sld [smem:[%s16]]
  %s18 = scalar_lea.smem %s0, 9
  %s19 = sld [smem:[%s18]]
  %s20 = scalar_lea.smem %s0, 10
  %s21 = sld [smem:[%s20]]
  %s22 = scalar_lea.smem %s0, 11
  %s23 = sld [smem:[%s22]]
  %s24 = scalar_lea.smem %s0, 12
  %s25 = sld [smem:[%s24]]
  %s26 = scalar_lea.smem %s0, 13
  %s27 = sld [smem:[%s26]]
  %s28 = scalar_lea.smem %s0, 14
  %s29 = sld [smem:[%s28]]
  %s30 = scalar_lea.smem %s0, 15
  %s31 = sld [smem:[%s30]]
  %s32 = scalar_lea.smem %s0, 16
  %s33 = sld [smem:[%s32]]
  %s34 = scalar_lea.smem %s0, 17
  %s35 = sld [smem:[%s34]]
  %s36 = scalar_lea.smem %s0, 18
  %s37 = sld [smem:[%s36]]
  %s38 = scalar_lea.smem %s0, 19
  %s39 = sld [smem:[%s38]]
  %s40 = scalar_lea.smem %s0, 20
  %s41 = sld [smem:[%s40]]
  %s42 = scalar_lea.smem %s0, 21
  %s43 = sld [smem:[%s42]]
  %s44 = scalar_lea.smem %s0, 22
  %s45 = sld [smem:[%s44]]
  %s46 = scalar_lea.smem %s0, 23
  %s47 = sld [smem:[%s46]]
  %s48 = scalar_lea.smem %s0, 24
  %s49 = sld [smem:[%s48]]
  %s50 = scalar_lea.smem %s0, 25
  %s51 = sld [smem:[%s50]]
  %s52 = scalar_lea.smem %s0, 26
  %s53 = sld [smem:[%s52]]
  %s54 = scalar_lea.smem %s0, 27
  %s55 = sld [smem:[%s54]]
  %s56 = scalar_lea.smem %s0, 28
  %s57 = sld [smem:[%s56]]
  %s58 = scalar_lea.smem %s0, 29
  %s59 = sld [smem:[%s58]]
  %s60 = scalar_lea.smem %s0, 30
  %s61 = sld [smem:[%s60]]
  %s62 = scalar_lea.smem %s0, 31
  %s63 = sld [smem:[%s62]]
  %64 = xla_tuple %s59, %s61, %s63
  %s65 = sld [smem:[#allocation0]]
  $region142: #{vilt_forward.1} parent=0
    _
  %s67 = ssub.s32 1, %s65
  %s68 = scalar_select 0, %s67, %s65
  $region1: #{vilt_forward.1} parent=0
    #allocation3 [shape = 'u8[1024]{0}', space=vmem, size = 0x400, scoped, tag = 'output window, operand 0, single buffered']
    #allocation4 [shape = 's32[1]{0}', space=sflag, size = 0x4, scoped, tag = 'scoped memory for vilt_forward.1']
    %69 = vsyncpa [#allocation4], 0
    // Predicated region
    $region2: #{vilt_forward.1} parent=1 // pred_check
      _
    $region3: #{vilt_forward.1} parent=1 // pred_check_branch
      %71 = sbr.rel (0) target = $region5
    $region4: #{vilt_forward.1} parent=1 // pred_region
      _
    $region5: #{vilt_forward.1} parent=1 // pred_fallthru
      _
    // Predicated region
    $region6: #{vilt_forward.1} parent=1 // pred_check
      _
    $region7: #{vilt_forward.1} parent=1 // pred_check_branch
      %73 = sbr.rel (0) target = $region9
    $region8: #{vilt_forward.1} parent=1 // pred_region
      _
    $region9: #{vilt_forward.1} parent=1 // pred_fallthru
      _
    // Predicated region
    $region10: #{vilt_forward.1} parent=1 // pred_check
      _
    $region11: #{vilt_forward.1} parent=1 // pred_check_branch
      %75 = sbr.rel (0) target = $region13
    $region12: #{vilt_forward.1} parent=1 // pred_region
      _
    $region13: #{vilt_forward.1} parent=1 // pred_fallthru
      _
    // Predicated region
    $region14: #{vilt_forward.1} parent=1 // pred_check
      _
    $region15: #{vilt_forward.1} parent=1 // pred_check_branch
      %77 = sbr.rel (0) target = $region17
    $region16: #{vilt_forward.1} parent=1 // pred_region
      _
    $region17: #{vilt_forward.1} parent=1 // pred_fallthru
      _
    // Predicated region
    $region18: #{vilt_forward.1} parent=1 // pred_check
      _
    $region19: #{vilt_forward.1} parent=1 // pred_check_branch
      %79 = sbr.rel (0) target = $region21
    $region20: #{vilt_forward.1} parent=1 // pred_region
      _
    $region21: #{vilt_forward.1} parent=1 // pred_fallthru
      _
    // Predicated region
    $region22: #{vilt_forward.1} parent=1 // pred_check
      _
    $region23: #{vilt_forward.1} parent=1 // pred_check_branch
      %81 = sbr.rel (0) target = $region25
    $region24: #{vilt_forward.1} parent=1 // pred_region
      _
    $region25: #{vilt_forward.1} parent=1 // pred_fallthru
      _
    // Predicated region
    $region26: #{vilt_forward.1} parent=1 // pred_check
      _
    $region27: #{vilt_forward.1} parent=1 // pred_check_branch
      %83 = sbr.rel (0) target = $region29
    $region28: #{vilt_forward.1} parent=1 // pred_region
      _
    $region29: #{vilt_forward.1} parent=1 // pred_fallthru
      _
    // Predicated region
    $region30: #{vilt_forward.1} parent=1 // pred_check
      _
    $region31: #{vilt_forward.1} parent=1 // pred_check_branch
      %85 = sbr.rel (0) target = $region33
    $region32: #{vilt_forward.1} parent=1 // pred_region
      _
    $region33: #{vilt_forward.1} parent=1 // pred_fallthru
      _
    // Predicated region
    $region34: #{vilt_forward.1} parent=1 // pred_check
      _
    $region35: #{vilt_forward.1} parent=1 // pred_check_branch
      %87 = sbr.rel (0) target = $region37
    $region36: #{vilt_forward.1} parent=1 // pred_region
      _
    $region37: #{vilt_forward.1} parent=1 // pred_fallthru
      _
    // Predicated region
    $region38: #{vilt_forward.1} parent=1 // pred_check
      _
    $region39: #{vilt_forward.1} parent=1 // pred_check_branch
      %89 = sbr.rel (0) target = $region41
    $region40: #{vilt_forward.1} parent=1 // pred_region
      _
    $region41: #{vilt_forward.1} parent=1 // pred_fallthru
      _
    // Predicated region
    $region42: #{vilt_forward.1} parent=1 // pred_check
      _
    $region43: #{vilt_forward.1} parent=1 // pred_check_branch
      %91 = sbr.rel (0) target = $region45
    $region44: #{vilt_forward.1} parent=1 // pred_region
      _
    $region45: #{vilt_forward.1} parent=1 // pred_fallthru
      _
    // Predicated region
    $region46: #{vilt_forward.1} parent=1 // pred_check
      _
    $region47: #{vilt_forward.1} parent=1 // pred_check_branch
      %93 = sbr.rel (0) target = $region49
    $region48: #{vilt_forward.1} parent=1 // pred_region
      _
    $region49: #{vilt_forward.1} parent=1 // pred_fallthru
      _
    // Predicated region
    $region50: #{vilt_forward.1} parent=1 // pred_check
      _
    $region51: #{vilt_forward.1} parent=1 // pred_check_branch
      %95 = sbr.rel (0) target = $region53
    $region52: #{vilt_forward.1} parent=1 // pred_region
      _
    $region53: #{vilt_forward.1} parent=1 // pred_fallthru
      _
    // Predicated region
    $region54: #{vilt_forward.1} parent=1 // pred_check
      _
    $region55: #{vilt_forward.1} parent=1 // pred_check_branch
      %97 = sbr.rel (0) target = $region57
    $region56: #{vilt_forward.1} parent=1 // pred_region
      _
    $region57: #{vilt_forward.1} parent=1 // pred_fallthru
      _
    // Predicated region
    $region58: #{vilt_forward.1} parent=1 // pred_check
      _
    $region59: #{vilt_forward.1} parent=1 // pred_check_branch
      %99 = sbr.rel (0) target = $region61
    $region60: #{vilt_forward.1} parent=1 // pred_region
      _
    $region61: #{vilt_forward.1} parent=1 // pred_fallthru
      _
    // Predicated region
    $region62: #{vilt_forward.1} parent=1 // pred_check
      _
    $region63: #{vilt_forward.1} parent=1 // pred_check_branch
      %101 = sbr.rel (0) target = $region65
    $region64: #{vilt_forward.1} parent=1 // pred_region
      _
    $region65: #{vilt_forward.1} parent=1 // pred_fallthru
      _
    // Predicated region
    $region66: #{vilt_forward.1} parent=1 // pred_check
      _
    $region67: #{vilt_forward.1} parent=1 // pred_check_branch
      %103 = sbr.rel (0) target = $region69
    $region68: #{vilt_forward.1} parent=1 // pred_region
      _
    $region69: #{vilt_forward.1} parent=1 // pred_fallthru
      _
    // Predicated region
    $region70: #{vilt_forward.1} parent=1 // pred_check
      _
    $region71: #{vilt_forward.1} parent=1 // pred_check_branch
      %105 = sbr.rel (0) target = $region73
    $region72: #{vilt_forward.1} parent=1 // pred_region
      _
    $region73: #{vilt_forward.1} parent=1 // pred_fallthru
      _
    // Predicated region
    $region74: #{vilt_forward.1} parent=1 // pred_check
      _
    $region75: #{vilt_forward.1} parent=1 // pred_check_branch
      %107 = sbr.rel (0) target = $region77
    $region76: #{vilt_forward.1} parent=1 // pred_region
      _
    $region77: #{vilt_forward.1} parent=1 // pred_fallthru
      _
    // Predicated region
    $region78: #{vilt_forward.1} parent=1 // pred_check
      _
    $region79: #{vilt_forward.1} parent=1 // pred_check_branch
      %109 = sbr.rel (0) target = $region81
    $region80: #{vilt_forward.1} parent=1 // pred_region
      _
    $region81: #{vilt_forward.1} parent=1 // pred_fallthru
      _
    // Predicated region
    $region82: #{vilt_forward.1} parent=1 // pred_check
      _
    $region83: #{vilt_forward.1} parent=1 // pred_check_branch
      %111 = sbr.rel (0) target = $region85
    $region84: #{vilt_forward.1} parent=1 // pred_region
      _
    $region85: #{vilt_forward.1} parent=1 // pred_fallthru
      _
    // Predicated region
    $region86: #{vilt_forward.1} parent=1 // pred_check
      _
    $region87: #{vilt_forward.1} parent=1 // pred_check_branch
      %113 = sbr.rel (0) target = $region89
    $region88: #{vilt_forward.1} parent=1 // pred_region
      _
    $region89: #{vilt_forward.1} parent=1 // pred_fallthru
      _
    // Predicated region
    $region90: #{vilt_forward.1} parent=1 // pred_check
      _
    $region91: #{vilt_forward.1} parent=1 // pred_check_branch
      %115 = sbr.rel (0) target = $region93
    $region92: #{vilt_forward.1} parent=1 // pred_region
      _
    $region93: #{vilt_forward.1} parent=1 // pred_fallthru
      _
    // Predicated region
    $region94: #{vilt_forward.1} parent=1 // pred_check
      _
    $region95: #{vilt_forward.1} parent=1 // pred_check_branch
      %117 = sbr.rel (0) target = $region97
    $region96: #{vilt_forward.1} parent=1 // pred_region
      _
    $region97: #{vilt_forward.1} parent=1 // pred_fallthru
      _
    // Predicated region
    $region98: #{vilt_forward.1} parent=1 // pred_check
      _
    $region99: #{vilt_forward.1} parent=1 // pred_check_branch
      %119 = sbr.rel (0) target = $region101
    $region100: #{vilt_forward.1} parent=1 // pred_region
      _
    $region101: #{vilt_forward.1} parent=1 // pred_fallthru
      _
    // Predicated region
    $region102: #{vilt_forward.1} parent=1 // pred_check
      _
    $region103: #{vilt_forward.1} parent=1 // pred_check_branch
      %121 = sbr.rel (0) target = $region105
    $region104: #{vilt_forward.1} parent=1 // pred_region
      _
    $region105: #{vilt_forward.1} parent=1 // pred_fallthru
      _
    // Predicated region
    $region106: #{vilt_forward.1} parent=1 // pred_check
      _
    $region107: #{vilt_forward.1} parent=1 // pred_check_branch
      %123 = sbr.rel (0) target = $region109
    $region108: #{vilt_forward.1} parent=1 // pred_region
      _
    $region109: #{vilt_forward.1} parent=1 // pred_fallthru
      _
    // Predicated region
    $region110: #{vilt_forward.1} parent=1 // pred_check
      _
    $region111: #{vilt_forward.1} parent=1 // pred_check_branch
      %125 = sbr.rel (0) target = $region113
    $region112: #{vilt_forward.1} parent=1 // pred_region
      _
    $region113: #{vilt_forward.1} parent=1 // pred_fallthru
      _
    // Predicated region
    $region114: #{vilt_forward.1} parent=1 // pred_check
      _
    $region115: #{vilt_forward.1} parent=1 // pred_check_branch
      %127 = sbr.rel (0) target = $region117
    $region116: #{vilt_forward.1} parent=1 // pred_region
      _
    $region117: #{vilt_forward.1} parent=1 // pred_fallthru
      _
    %v128 = vld [vmem:[%s1] sm:$0xff]
    %v129 = vld [vmem:[%s1 + $0x8] sm:$0xff]
    %v130 = vld [vmem:[%s11] sm:$0x1]
    %v131 = vld [vmem:[%s13] sm:$0x1]
    %vm132 = vcmask 261120
    %v133 = vsel %vm132, %v128, 0.0
    %134 = vadd.xlane.f32.xlu0 %v133
    %v135 = vpop.xlane.xlu0 %134
    %v136 = vsel %vm132, %v129, 0.0
    %137 = vadd.xlane.f32.xlu0 %v136
    %v138 = vpop.xlane.xlu0 %137
    %v139 = vrcp.pop 32.0
    %v140 = vmul.f32 %v135, %v139
    %v141 = vmul.f32 %v138, %v139
    %v142 = vsub.f32 %v128, %v140
    %v143 = vsub.f32 %v129, %v141
    %v144 = vmul.f32 %v142, %v142
    %v145 = vmul.f32 %v143, %v143
    %v146 = vsel %vm132, %v144, 0.0
    %147 = vadd.xlane.f32.xlu0 %v146
    %v148 = vpop.xlane.xlu0 %147
    %v149 = vsel %vm132, %v145, 0.0
    %150 = vadd.xlane.f32.xlu0 %v149
    %v151 = vpop.xlane.xlu0 %150
    %v152 = vmul.f32 %v148, %v139
    %v153 = vmul.f32 %v151, %v139
    %v154 = vadd.f32 %v152, 1e-12
    %v155 = vadd.f32 %v153, 1e-12
    %v156 = vrsqrt.pop %v154
    %v157 = vrsqrt.pop %v155
    %v158 = vmul.f32 %v142, %v156
    %v159 = vmul.f32 %v143, %v157
    %v161 = vlaneseq
    %v162 = vshrl.u32 %v161, 7
    %v163 = vsub.s32 0, %v162
    %v164 = vrot.slane %v130, %v163
    %v166 = vmul.f32 %v158, %v164
    %v167 = vmul.f32 %v159, %v164
    %v169 = vlaneseq
    %v170 = vshrl.u32 %v169, 7
    %v171 = vsub.s32 0, %v170
    %v172 = vrot.slane %v131, %v171
    %v174 = vadd.f32 %v166, %v172
    %v175 = vadd.f32 %v167, %v172
    %v176 = vld [vmem:[%s3] sm:$0xff]
    %v177 = vld [vmem:[%s3 + $0x8] sm:$0xff]
    %v178 = vld [vmem:[%s15] sm:$0xff]
    %v179 = vld [vmem:[%s15 + $0x8] sm:$0xff]
    %v180 = vld [vmem:[%s15 + $0x10] sm:$0xff]
    %v181 = vld [vmem:[%s15 + $0x18] sm:$0xff]
    %v182 = vld [vmem:[%s15 + $0x20] sm:$0xff]
    %v183 = vld [vmem:[%s15 + $0x28] sm:$0xff]
    %v184 = vld [vmem:[%s15 + $0x30] sm:$0xff]
    %v185 = vld [vmem:[%s15 + $0x38] sm:$0xff]
    %v186 = vld [vmem:[%s15 + $0x40] sm:$0xff]
    %v187 = vld [vmem:[%s15 + $0x48] sm:$0xff]
    %v188 = vld [vmem:[%s15 + $0x50] sm:$0xff]
    %v189 = vld [vmem:[%s15 + $0x58] sm:$0xff]
    %v190 = vld [vmem:[%s15 + $0x60] sm:$0xff]
    %v191 = vld [vmem:[%s15 + $0x68] sm:$0xff]
    %v192 = vld [vmem:[%s15 + $0x70] sm:$0xff]
    %v193 = vld [vmem:[%s15 + $0x78] sm:$0xff]
    %v194 = vld [vmem:[%s15 + $0x80] sm:$0xff]
    %v195 = vld [vmem:[%s15 + $0x88] sm:$0xff]
    %v196 = vld [vmem:[%s15 + $0x90] sm:$0xff]
    %v197 = vld [vmem:[%s15 + $0x98] sm:$0xff]
    %v198 = vld [vmem:[%s15 + $0xa0] sm:$0xff]
    %v199 = vld [vmem:[%s15 + $0xa8] sm:$0xff]
    %v200 = vld [vmem:[%s15 + $0xb0] sm:$0xff]
    %v201 = vld [vmem:[%s15 + $0xb8] sm:$0xff]
    %v202 = vld [vmem:[%s17] sm:$0x1]
    %v204 = vlaneseq
    %v205 = vshrl.u32 %v204, 7
    %v206 = vsub.s32 0, %v205
    %v207 = vrot.slane %v202, %v206
    %vm209 = vcmask 523264
    %v211 = vsel %vm209, %v177, 0
    %213 = vmatprep.subr.mxu0 0.0
    %214 = vmatpush1.msra.mxu0 %v178
    %215 = vmatprep.subr.mxu0 0.0
    %216 = vmatpush1.msra.mxu0 %v179
    %217 = vmatprep.subr.mxu0 0.0
    %218 = vmatpush1.msra.mxu0 %v180
    %219 = vmatprep.subr.mxu0 0.0
    %220 = vmatpush1.msra.mxu0 %v181
    %221 = vmatprep.subr.mxu0 0.0
    %222 = vmatpush1.msra.mxu0 %v182
    %223 = vmatprep.subr.mxu0 0.0
    %224 = vmatpush1.msra.mxu0 %v183
    %225 = vmatprep.subr.mxu0 0.0
    %226 = vmatpush1.msra.mxu0 %v184
    %227 = vmatprep.subr.mxu0 0.0
    %228 = vmatpush1.msra.mxu0 %v185
    %229 = vmatprep.subr.mxu0 0.0
    %230 = vmatpush1.msra.mxu0 %v186
    %231 = vmatprep.subr.mxu0 0.0
    %232 = vmatpush1.msra.mxu0 %v187
    %233 = vmatprep.subr.mxu0 0.0
    %234 = vmatpush1.msra.mxu0 %v188
    %235 = vmatprep.subr.mxu0 0.0
    %236 = vmatpush1.msra.mxu0 %v189
    %237 = vmatprep.subr.mxu0 0.0
    %238 = vmatpush1.msra.mxu0 %v190
    %239 = vmatprep.subr.mxu0 0.0
    %240 = vmatpush1.msra.mxu0 %v191
    %241 = vmatprep.subr.mxu0 0.0
    %242 = vmatpush1.msra.mxu0 %v192
    %243 = vmatprep.subr.mxu0 0.0
    %244 = vmatpush1.msra.mxu0 %v193
    %245 = vmatprep.subr.mxu0 0.0
    %246 = vmatpush1.msra.mxu0 %v194
    %247 = vmatprep.subr.mxu0 0.0
    %248 = vmatpush1.msra.mxu0 %v195
    %249 = vmatprep.subr.mxu0 0.0
    %250 = vmatpush1.msra.mxu0 %v196
    %251 = vmatprep.subr.mxu0 0.0
    %252 = vmatpush1.msra.mxu0 %v197
    %253 = vmatprep.subr.mxu0 0.0
    %254 = vmatpush1.msra.mxu0 %v198
    %255 = vmatprep.subr.mxu0 0.0
    %256 = vmatpush1.msra.mxu0 %v199
    %257 = vmatprep.subr.mxu0 0.0
    %258 = vmatpush1.msra.mxu0 %v200
    %259 = vmatprep.subr.mxu0 0.0
    %260 = vmatpush1.msra.mxu0 %v201
    %261 = vmatprep.subr.mxu0 0.0
    %262 = vmatpush1.msra.mxu0 0.0
    %263 = vmatprep.subr.mxu0 0.0
    %264 = vmatpush1.msra.mxu0 0.0
    %265 = vmatprep.subr.mxu0 0.0
    %266 = vmatpush1.msra.mxu0 0.0
    %267 = vmatprep.subr.mxu0 0.0
    %268 = vmatpush1.msra.mxu0 0.0
    %269 = vmatprep.subr.mxu0 0.0
    %270 = vmatpush1.msra.mxu0 0.0
    %271 = vmatprep.subr.mxu0 0.0
    %272 = vmatpush1.msra.mxu0 0.0
    %273 = vmatprep.subr.mxu0 0.0
    %274 = vmatpush1.msra.mxu0 0.0
    %275 = vmatprep.subr.mxu0 0.0
    %276 = vmatpush1.msra.mxu0 0.0
    %277 = vmatprep.mubr.f32.mxu0 %v211
    %278 = vmatmul.mubr.f32.gmra.mrb[0].mxu0 %v176
    %v279 = vpop.f32.mrb[0].mxu0
    %v280 = vadd.f32 %v207, %v279
    %v281 = vpop.f32.mrb[0].mxu0
    %282 = vdwg.mxu0
    %283 = vst.msk [vmem:[#allocation2] sm:$0xff] %vm132, 0.0
    %284 = vst.msk [vmem:[#allocation2 + $0x8] sm:$0xff] %vm132, 0.0
    %285 = vst.msk [vmem:[#allocation2 + $0x10] sm:$0xff] %vm132, 0.0
    %286 = vst.msk [vmem:[#allocation2 + $0x18] sm:$0xff] %vm132, 0.0
    %287 = vst.msk [vmem:[#allocation2] sm:$0xff] %vm132, %v174
    %288 = vst.msk [vmem:[#allocation2 + $0x10] sm:$0xff] %vm132, %v175
    %v289 = vld [vmem:[%s5] sm:$0x1]
    %vm290 = vcmask 253952
    %291 = vst.msk [vmem:[#allocation2 + $0x8] sm:$0x1] %vm290, %v289
    %292 = vst.msk [vmem:[#allocation2 + $0x18] sm:$0x1] %vm290, %v289
    %v294 = vcombine.high %v280, %v280
    %v296 = vld [vmem:[%s7] sm:$0xf]
    %v297 = vadd.f32 %v280, %v296
    %v298 = vadd.f32 %v294, %v296
    %vm299 = vcmask 257024
    %300 = vst.msk [vmem:[#allocation2 + $0x9] sm:$0xf] %vm299, %v297
    %301 = vst.msk [vmem:[#allocation2 + $0x19] sm:$0xf] %vm299, %v298
    %v302 = vld [vmem:[%s9] sm:$0x1]
    %v303 = vld [vmem:[%s9 + $0x1] sm:$0x1]
    %v304 = vld [vmem:[#allocation2] sm:$0xff]
    %v305 = vld [vmem:[#allocation2 + $0x8] sm:$0xff]
    %v306 = vld [vmem:[#allocation2 + $0x10] sm:$0xff]
    %v307 = vld [vmem:[#allocation2 + $0x18] sm:$0xff]
    %v308 = vld [vmem:[%s19] sm:$0x1]
    %v309 = vld [vmem:[%s21] sm:$0x1]
    %v310 = vsel %vm132, %v304, 0.0
    %311 = vadd.xlane.f32.xlu0 %v310
    %v312 = vpop.xlane.xlu0 %311
    %v313 = vsel %vm132, %v305, 0.0
    %314 = vadd.xlane.f32.xlu0 %v313
    %v315 = vpop.xlane.xlu0 %314
    %v316 = vsel %vm132, %v306, 0.0
    %317 = vadd.xlane.f32.xlu0 %v316
    %v318 = vpop.xlane.xlu0 %317
    %v319 = vsel %vm132, %v307, 0.0
    %320 = vadd.xlane.f32.xlu0 %v319
    %v321 = vpop.xlane.xlu0 %320
    %v322 = vmul.f32 %v312, %v139
    %v323 = vmul.f32 %v315, %v139
    %v324 = vmul.f32 %v318, %v139
    %v325 = vmul.f32 %v321, %v139
    %v326 = vsub.f32 %v304, %v322
    %v327 = vsub.f32 %v305, %v323
    %v328 = vsub.f32 %v306, %v324
    %v329 = vsub.f32 %v307, %v325
    %v330 = vmul.f32 %v326, %v326
    %v331 = vmul.f32 %v327, %v327
    %v332 = vmul.f32 %v328, %v328
    %v333 = vmul.f32 %v329, %v329
    %v334 = vsel %vm132, %v330, 0.0
    %335 = vadd.xlane.f32.xlu0 %v334
    %v336 = vpop.xlane.xlu0 %335
    %v337 = vsel %vm132, %v331, 0.0
    %338 = vadd.xlane.f32.xlu0 %v337
    %v339 = vpop.xlane.xlu0 %338
    %v340 = vsel %vm132, %v332, 0.0
    %341 = vadd.xlane.f32.xlu0 %v340
    %v342 = vpop.xlane.xlu0 %341
    %v343 = vsel %vm132, %v333, 0.0
    %344 = vadd.xlane.f32.xlu0 %v343
    %v345 = vpop.xlane.xlu0 %344
    %v346 = vmul.f32 %v336, %v139
    %v347 = vmul.f32 %v339, %v139
    %v348 = vmul.f32 %v342, %v139
    %v349 = vmul.f32 %v345, %v139
    %v350 = vadd.f32 %v346, 1e-12
    %v351 = vadd.f32 %v347, 1e-12
    %v352 = vadd.f32 %v348, 1e-12
    %v353 = vadd.f32 %v349, 1e-12
    %v354 = vrsqrt.pop %v350
    %v355 = vrsqrt.pop %v351
    %v356 = vrsqrt.pop %v352
    %v357 = vrsqrt.pop %v353
    %v358 = vmul.f32 %v326, %v354
    %v359 = vmul.f32 %v327, %v355
    %v360 = vmul.f32 %v328, %v356
    %v361 = vmul.f32 %v329, %v357
    %v363 = vlaneseq
    %v364 = vshrl.u32 %v363, 7
    %v365 = vsub.s32 0, %v364
    %v366 = vrot.slane %v308, %v365
    %v368 = vmul.f32 %v358, %v366
    %v369 = vmul.f32 %v359, %v366
    %v370 = vmul.f32 %v360, %v366
    %v371 = vmul.f32 %v361, %v366
    %v373 = vlaneseq
    %v374 = vshrl.u32 %v373, 7
    %v375 = vsub.s32 0, %v374
    %v376 = vrot.slane %v309, %v375
    %v378 = vadd.f32 %v368, %v376
    %v379 = vadd.f32 %v369, %v376
    %v380 = vadd.f32 %v370, %v376
    %v381 = vadd.f32 %v371, %v376
    %v382 = vld [vmem:[%s23] sm:$0xff]
    %v383 = vld [vmem:[%s23 + $0x8] sm:$0xff]
    %v384 = vld [vmem:[%s23 + $0x10] sm:$0xff]
    %v385 = vld [vmem:[%s23 + $0x18] sm:$0xff]
    %v386 = vld [vmem:[%s25] sm:$0x1]
    %v388 = vlaneseq
    %v389 = vshrl.u32 %v388, 7
    %v390 = vsub.s32 0, %v389
    %v391 = vrot.slane %v386, %v390
    %v394 = vsel %vm132, %v378, 0
    %v397 = vsel %vm132, %v379, 0
    %v400 = vsel %vm132, %v380, 0
    %v403 = vsel %vm132, %v381, 0
    %405 = vmatprep.subr.mxu0 0.0
    %406 = vmatpush1.msra.mxu0 %v382
    %407 = vmatprep.subr.mxu0 0.0
    %408 = vmatpush1.msra.mxu0 %v383
    %409 = vmatprep.subr.mxu0 0.0
    %410 = vmatpush1.msra.mxu0 %v384
    %411 = vmatprep.subr.mxu0 0.0
    %412 = vmatpush1.msra.mxu0 %v385
    %413 = vmatprep.subr.mxu0 0.0
    %414 = vmatpush1.msra.mxu0 0.0
    %415 = vmatprep.subr.mxu0 0.0
    %416 = vmatpush1.msra.mxu0 0.0
    %417 = vmatprep.subr.mxu0 0.0
    %418 = vmatpush1.msra.mxu0 0.0
    %419 = vmatprep.subr.mxu0 0.0
    %420 = vmatpush1.msra.mxu0 0.0
    %421 = vmatprep.subr.mxu0 0.0
    %422 = vmatpush1.msra.mxu0 0.0
    %423 = vmatprep.subr.mxu0 0.0
    %424 = vmatpush1.msra.mxu0 0.0
    %425 = vmatprep.subr.mxu0 0.0
    %426 = vmatpush1.msra.mxu0 0.0
    %427 = vmatprep.subr.mxu0 0.0
    %428 = vmatpush1.msra.mxu0 0.0
    %429 = vmatprep.subr.mxu0 0.0
    %430 = vmatpush1.msra.mxu0 0.0
    %431 = vmatprep.subr.mxu0 0.0
    %432 = vmatpush1.msra.mxu0 0.0
    %433 = vmatprep.subr.mxu0 0.0
    %434 = vmatpush1.msra.mxu0 0.0
    %435 = vmatprep.subr.mxu0 0.0
    %436 = vmatpush1.msra.mxu0 0.0
    %437 = vmatprep.subr.mxu0 0.0
    %438 = vmatpush1.msra.mxu0 0.0
    %439 = vmatprep.subr.mxu0 0.0
    %440 = vmatpush1.msra.mxu0 0.0
    %441 = vmatprep.subr.mxu0 0.0
    %442 = vmatpush1.msra.mxu0 0.0
    %443 = vmatprep.subr.mxu0 0.0
    %444 = vmatpush1.msra.mxu0 0.0
    %445 = vmatprep.subr.mxu0 0.0
    %446 = vmatpush1.msra.mxu0 0.0
    %447 = vmatprep.subr.mxu0 0.0
    %448 = vmatpush1.msra.mxu0 0.0
    %449 = vmatprep.subr.mxu0 0.0
    %450 = vmatpush1.msra.mxu0 0.0
    %451 = vmatprep.subr.mxu0 0.0
    %452 = vmatpush1.msra.mxu0 0.0
    %453 = vmatprep.subr.mxu0 0.0
    %454 = vmatpush1.msra.mxu0 0.0
    %455 = vmatprep.subr.mxu0 0.0
    %456 = vmatpush1.msra.mxu0 0.0
    %457 = vmatprep.subr.mxu0 0.0
    %458 = vmatpush1.msra.mxu0 0.0
    %459 = vmatprep.subr.mxu0 0.0
    %460 = vmatpush1.msra.mxu0 0.0
    %461 = vmatprep.subr.mxu0 0.0
    %462 = vmatpush1.msra.mxu0 0.0
    %463 = vmatprep.subr.mxu0 0.0
    %464 = vmatpush1.msra.mxu0 0.0
    %465 = vmatprep.subr.mxu0 0.0
    %466 = vmatpush1.msra.mxu0 0.0
    %467 = vmatprep.subr.mxu0 0.0
    %468 = vmatpush1.msra.mxu0 0.0
    %469 = vmatprep.mubr.f32.mxu0 0.0
    %470 = vmatmul.mubr.f32.gmra.mrb[0].mxu0 %v394
    %v471 = vpop.f32.mrb[0].mxu0
    %v472 = vadd.f32 %v391, %v471
    %v473 = vpop.f32.mrb[0].mxu0
    %474 = vmatprep.mubr.f32.mxu0 0.0
    %475 = vmatmul.mubr.f32.gmra.mrb[0].mxu0 %v397
    %v476 = vpop.f32.mrb[0].mxu0
    %v477 = vadd.f32 %v391, %v476
    %v478 = vpop.f32.mrb[0].mxu0
    %479 = vmatprep.mubr.f32.mxu0 0.0
    %480 = vmatmul.mubr.f32.gmra.mrb[0].mxu0 %v400
    %v481 = vpop.f32.mrb[0].mxu0
    %v482 = vadd.f32 %v391, %v481
    %v483 = vpop.f32.mrb[0].mxu0
    %484 = vmatprep.mubr.f32.mxu0 0.0
    %485 = vmatmul.mubr.f32.gmra.mrb[0].mxu0 %v403
    %v486 = vpop.f32.mrb[0].mxu0
    %v487 = vadd.f32 %v391, %v486
    %v488 = vpop.f32.mrb[0].mxu0
    %489 = vdwg.mxu0
    %492 = vrot.lane.b32.xlu0 %v472, 96
    %v493 = vpop.permute.xlu0 %492
    %494 = vrot.lane.b32.xlu0 %v477, 96
    %v495 = vpop.permute.xlu0 %494
    %vm496 = vcmask 64512
    %v497 = vsel %vm496, %v472, 0
    %v499 = vsel %vm496, %v477, 0
    %v501 = vsel %vm496, %v493, 0
    %v503 = vsel %vm496, %v495, 0
    %505 = vmatprep.subr.mxu0 0.0
    %506 = vmatpush1.xpose.msra.mxu0 %v501
    %507 = vmatprep.subr.mxu0 0.0
    %508 = vmatpush1.xpose.msra.mxu0 %v503
    %509 = vmatprep.subr.mxu0 0.0
    %510 = vmatpush1.xpose.msra.mxu0 0.0
    %511 = vmatprep.subr.mxu0 0.0
    %512 = vmatpush1.xpose.msra.mxu0 0.0
    %513 = vmatprep.subr.mxu0 0.0
    %514 = vmatpush1.xpose.msra.mxu0 0.0
    %515 = vmatprep.subr.mxu0 0.0
    %516 = vmatpush1.xpose.msra.mxu0 0.0
    %517 = vmatprep.subr.mxu0 0.0
    %518 = vmatpush1.xpose.msra.mxu0 0.0
    %519 = vmatprep.subr.mxu0 0.0
    %520 = vmatpush1.xpose.msra.mxu0 0.0
    %521 = vmatprep.subr.mxu0 0.0
    %522 = vmatpush1.xpose.msra.mxu0 0.0
    %523 = vmatprep.subr.mxu0 0.0
    %524 = vmatpush1.xpose.msra.mxu0 0.0
    %525 = vmatprep.subr.mxu0 0.0
    %526 = vmatpush1.xpose.msra.mxu0 0.0
    %527 = vmatprep.subr.mxu0 0.0
    %528 = vmatpush1.xpose.msra.mxu0 0.0
    %529 = vmatprep.subr.mxu0 0.0
    %530 = vmatpush1.xpose.msra.mxu0 0.0
    %531 = vmatprep.subr.mxu0 0.0
    %532 = vmatpush1.xpose.msra.mxu0 0.0
    %533 = vmatprep.subr.mxu0 0.0
    %534 = vmatpush1.xpose.msra.mxu0 0.0
    %535 = vmatprep.subr.mxu0 0.0
    %536 = vmatpush1.xpose.msra.mxu0 0.0
    %537 = vmatprep.subr.mxu0 0.0
    %538 = vmatpush1.xpose.msra.mxu0 0.0
    %539 = vmatprep.subr.mxu0 0.0
    %540 = vmatpush1.xpose.msra.mxu0 0.0
    %541 = vmatprep.subr.mxu0 0.0
    %542 = vmatpush1.xpose.msra.mxu0 0.0
    %543 = vmatprep.subr.mxu0 0.0
    %544 = vmatpush1.xpose.msra.mxu0 0.0
    %545 = vmatprep.subr.mxu0 0.0
    %546 = vmatpush1.xpose.msra.mxu0 0.0
    %547 = vmatprep.subr.mxu0 0.0
    %548 = vmatpush1.xpose.msra.mxu0 0.0
    %549 = vmatprep.subr.mxu0 0.0
    %550 = vmatpush1.xpose.msra.mxu0 0.0
    %551 = vmatprep.subr.mxu0 0.0
    %552 = vmatpush1.xpose.msra.mxu0 0.0
    %553 = vmatprep.subr.mxu0 0.0
    %554 = vmatpush1.xpose.msra.mxu0 0.0
    %555 = vmatprep.subr.mxu0 0.0
    %556 = vmatpush1.xpose.msra.mxu0 0.0
    %557 = vmatprep.subr.mxu0 0.0
    %558 = vmatpush1.xpose.msra.mxu0 0.0
    %559 = vmatprep.subr.mxu0 0.0
    %560 = vmatpush1.xpose.msra.mxu0 0.0
    %561 = vmatprep.subr.mxu0 0.0
    %562 = vmatpush1.xpose.msra.mxu0 0.0
    %563 = vmatprep.subr.mxu0 0.0
    %564 = vmatpush1.xpose.msra.mxu0 0.0
    %565 = vmatprep.subr.mxu0 0.0
    %566 = vmatpush1.xpose.msra.mxu0 0.0
    %567 = vmatprep.subr.mxu0 0.0
    %568 = vmatpush1.xpose.msra.mxu0 0.0
    %569 = vmatprep.mubr.f32.mxu0 0.0
    %570 = vmatmul.mubr.f32.gmra.mrb[0].mxu0 %v497
    %v571 = vpop.f32.mrb[0].mxu0
    %v572 = vadd.f32 0.0, %v571
    %v573 = vpop.f32.mrb[0].mxu0
    %574 = vmatprep.mubr.f32.mxu0 0.0
    %575 = vmatmul.mubr.f32.gmra.mrb[0].mxu0 %v499
    %v576 = vpop.f32.mrb[0].mxu0
    %v577 = vadd.f32 0.0, %v576
    %v578 = vpop.f32.mrb[0].mxu0
    %579 = vdwg.mxu0
    %582 = vrot.lane.b32.xlu0 %v482, 96
    %v583 = vpop.permute.xlu0 %582
    %584 = vrot.lane.b32.xlu0 %v487, 96
    %v585 = vpop.permute.xlu0 %584
    %v586 = vsel %vm496, %v482, 0
    %v588 = vsel %vm496, %v487, 0
    %v590 = vsel %vm496, %v583, 0
    %v592 = vsel %vm496, %v585, 0
    %594 = vmatprep.subr.mxu0 0.0
    %595 = vmatpush1.xpose.msra.mxu0 %v590
    %596 = vmatprep.subr.mxu0 0.0
    %597 = vmatpush1.xpose.msra.mxu0 %v592
    %598 = vmatprep.subr.mxu0 0.0
    %599 = vmatpush1.xpose.msra.mxu0 0.0
    %600 = vmatprep.subr.mxu0 0.0
    %601 = vmatpush1.xpose.msra.mxu0 0.0
    %602 = vmatprep.subr.mxu0 0.0
    %603 = vmatpush1.xpose.msra.mxu0 0.0
    %604 = vmatprep.subr.mxu0 0.0
    %605 = vmatpush1.xpose.msra.mxu0 0.0
    %606 = vmatprep.subr.mxu0 0.0
    %607 = vmatpush1.xpose.msra.mxu0 0.0
    %608 = vmatprep.subr.mxu0 0.0
    %609 = vmatpush1.xpose.msra.mxu0 0.0
    %610 = vmatprep.subr.mxu0 0.0
    %611 = vmatpush1.xpose.msra.mxu0 0.0
    %612 = vmatprep.subr.mxu0 0.0
    %613 = vmatpush1.xpose.msra.mxu0 0.0
    %614 = vmatprep.subr.mxu0 0.0
    %615 = vmatpush1.xpose.msra.mxu0 0.0
    %616 = vmatprep.subr.mxu0 0.0
    %617 = vmatpush1.xpose.msra.mxu0 0.0
    %618 = vmatprep.subr.mxu0 0.0
    %619 = vmatpush1.xpose.msra.mxu0 0.0
    %620 = vmatprep.subr.mxu0 0.0
    %621 = vmatpush1.xpose.msra.mxu0 0.0
    %622 = vmatprep.subr.mxu0 0.0
    %623 = vmatpush1.xpose.msra.mxu0 0.0
    %624 = vmatprep.subr.mxu0 0.0
    %625 = vmatpush1.xpose.msra.mxu0 0.0
    %626 = vmatprep.subr.mxu0 0.0
    %627 = vmatpush1.xpose.msra.mxu0 0.0
    %628 = vmatprep.subr.mxu0 0.0
    %629 = vmatpush1.xpose.msra.mxu0 0.0
    %630 = vmatprep.subr.mxu0 0.0
    %631 = vmatpush1.xpose.msra.mxu0 0.0
    %632 = vmatprep.subr.mxu0 0.0
    %633 = vmatpush1.xpose.msra.mxu0 0.0
    %634 = vmatprep.subr.mxu0 0.0
    %635 = vmatpush1.xpose.msra.mxu0 0.0
    %636 = vmatprep.subr.mxu0 0.0
    %637 = vmatpush1.xpose.msra.mxu0 0.0
    %638 = vmatprep.subr.mxu0 0.0
    %639 = vmatpush1.xpose.msra.mxu0 0.0
    %640 = vmatprep.subr.mxu0 0.0
    %641 = vmatpush1.xpose.msra.mxu0 0.0
    %642 = vmatprep.subr.mxu0 0.0
    %643 = vmatpush1.xpose.msra.mxu0 0.0
    %644 = vmatprep.subr.mxu0 0.0
    %645 = vmatpush1.xpose.msra.mxu0 0.0
    %646 = vmatprep.subr.mxu0 0.0
    %647 = vmatpush1.xpose.msra.mxu0 0.0
    %648 = vmatprep.subr.mxu0 0.0
    %649 = vmatpush1.xpose.msra.mxu0 0.0
    %650 = vmatprep.subr.mxu0 0.0
    %651 = vmatpush1.xpose.msra.mxu0 0.0
    %652 = vmatprep.subr.mxu0 0.0
    %653 = vmatpush1.xpose.msra.mxu0 0.0
    %654 = vmatprep.subr.mxu0 0.0
    %655 = vmatpush1.xpose.msra.mxu0 0.0
    %656 = vmatprep.subr.mxu0 0.0
    %657 = vmatpush1.xpose.msra.mxu0 0.0
    %658 = vmatprep.mubr.f32.mxu0 0.0
    %659 = vmatmul.mubr.f32.gmra.mrb[0].mxu0 %v586
    %v660 = vpop.f32.mrb[0].mxu0
    %v661 = vadd.f32 0.0, %v660
    %v662 = vpop.f32.mrb[0].mxu0
    %663 = vmatprep.mubr.f32.mxu0 0.0
    %664 = vmatmul.mubr.f32.gmra.mrb[0].mxu0 %v588
    %v665 = vpop.f32.mrb[0].mxu0
    %v666 = vadd.f32 0.0, %v665
    %v667 = vpop.f32.mrb[0].mxu0
    %668 = vdwg.mxu0
    %v669 = vmul.f32 %v572, 0.35355338
    %v670 = vmul.f32 %v577, 0.35355338
    %v671 = vmul.f32 %v661, 0.35355338
    %v672 = vmul.f32 %v666, 0.35355338
    %v675 = vlaneseq
    %v676 = vshrl.u32 %v675, 7
    %v677 = vsub.s32 0, %v676
    %v678 = vrot.slane %v302, %v677
    %v679 = vlaneseq
    %v680 = vshrl.u32 %v679, 7
    %v681 = vsub.s32 0, %v680
    %v682 = vrot.slane %v303, %v681
    %v685 = vadd.f32 %v669, %v678
    %v686 = vadd.f32 %v670, %v678
    %v687 = vadd.f32 %v671, %v682
    %v688 = vadd.f32 %v672, %v682
    %vm689 = vcmask 130048
    %v690 = vsel %vm689, %v685, -inf
    %691 = vmax.xlane.f32.xlu0 %v690
    %v692 = vpop.xlane.xlu0 %691
    %v693 = vsel %vm689, %v686, -inf
    %694 = vmax.xlane.f32.xlu0 %v693
    %v695 = vpop.xlane.xlu0 %694
    %v696 = vsel %vm689, %v687, -inf
    %697 = vmax.xlane.f32.xlu0 %v696
    %v698 = vpop.xlane.xlu0 %697
    %v699 = vsel %vm689, %v688, -inf
    %700 = vmax.xlane.f32.xlu0 %v699
    %v701 = vpop.xlane.xlu0 %700
    %v702 = vsub.f32 %v685, %v692
    %v703 = vsub.f32 %v686, %v695
    %v704 = vsub.f32 %v687, %v698
    %v705 = vsub.f32 %v688, %v701
    %v706 = vmul.f32 %v702, 1.442695
    %v707 = vpow.pop %v706
    %v708 = vmul.f32 %v703, 1.442695
    %v709 = vpow.pop %v708
    %v710 = vmul.f32 %v704, 1.442695
    %v711 = vpow.pop %v710
    %v712 = vmul.f32 %v705, 1.442695
    %v713 = vpow.pop %v712
    %v714 = vsel %vm689, %v707, 0.0
    %715 = vadd.xlane.f32.xlu0 %v714
    %v716 = vpop.xlane.xlu0 %715
    %v717 = vsel %vm689, %v709, 0.0
    %718 = vadd.xlane.f32.xlu0 %v717
    %v719 = vpop.xlane.xlu0 %718
    %v720 = vsel %vm689, %v711, 0.0
    %721 = vadd.xlane.f32.xlu0 %v720
    %v722 = vpop.xlane.xlu0 %721
    %v723 = vsel %vm689, %v713, 0.0
    %724 = vadd.xlane.f32.xlu0 %v723
    %v725 = vpop.xlane.xlu0 %724
    %v726 = vrcp.pop %v716
    %v727 = vrcp.pop %v719
    %v728 = vrcp.pop %v722
    %v729 = vrcp.pop %v725
    %v730 = vmul.f32 %v707, %v726
    %v731 = vmul.f32 %v709, %v727
    %v732 = vmul.f32 %v711, %v728
    %v733 = vmul.f32 %v713, %v729
    %734 = vst.msk [vmem:[%s61] sm:$0xff] %vm689, %v730
    %735 = vst.msk [vmem:[%s61 + $0x8] sm:$0xff] %vm689, %v731
    %736 = vst.msk [vmem:[%s61 + $0x10] sm:$0xff] %vm689, %v732
    %737 = vst.msk [vmem:[%s61 + $0x18] sm:$0xff] %vm689, %v733
    %738 = vrot.lane.b32.xlu0 %v472, 64
    %v739 = vpop.permute.xlu0 %738
    %740 = vrot.lane.b32.xlu0 %v477, 64
    %v741 = vpop.permute.xlu0 %740
    %v745 = vsel %vm689, %v730, 0
    %v748 = vsel %vm689, %v731, 0
    %750 = vmatprep.subr.mxu0 0.0
    %751 = vmatpush1.msra.mxu0 %v739
    %752 = vmatprep.subr.mxu0 0.0
    %753 = vmatpush1.msra.mxu0 %v741
    %754 = vmatprep.subr.mxu0 0.0
    %755 = vmatpush1.msra.mxu0 0.0
    %756 = vmatprep.subr.mxu0 0.0
    %757 = vmatpush1.msra.mxu0 0.0
    %758 = vmatprep.subr.mxu0 0.0
    %759 = vmatpush1.msra.mxu0 0.0
    %760 = vmatprep.subr.mxu0 0.0
    %761 = vmatpush1.msra.mxu0 0.0
    %762 = vmatprep.subr.mxu0 0.0
    %763 = vmatpush1.msra.mxu0 0.0
    %764 = vmatprep.subr.mxu0 0.0
    %765 = vmatpush1.msra.mxu0 0.0
    %766 = vmatprep.subr.mxu0 0.0
    %767 = vmatpush1.msra.mxu0 0.0
    %768 = vmatprep.subr.mxu0 0.0
    %769 = vmatpush1.msra.mxu0 0.0
    %770 = vmatprep.subr.mxu0 0.0
    %771 = vmatpush1.msra.mxu0 0.0
    %772 = vmatprep.subr.mxu0 0.0
    %773 = vmatpush1.msra.mxu0 0.0
    %774 = vmatprep.subr.mxu0 0.0
    %775 = vmatpush1.msra.mxu0 0.0
    %776 = vmatprep.subr.mxu0 0.0
    %777 = vmatpush1.msra.mxu0 0.0
    %778 = vmatprep.subr.mxu0 0.0
    %779 = vmatpush1.msra.mxu0 0.0
    %780 = vmatprep.subr.mxu0 0.0
    %781 = vmatpush1.msra.mxu0 0.0
    %782 = vmatprep.subr.mxu0 0.0
    %783 = vmatpush1.msra.mxu0 0.0
    %784 = vmatprep.subr.mxu0 0.0
    %785 = vmatpush1.msra.mxu0 0.0
    %786 = vmatprep.subr.mxu0 0.0
    %787 = vmatpush1.msra.mxu0 0.0
    %788 = vmatprep.subr.mxu0 0.0
    %789 = vmatpush1.msra.mxu0 0.0
    %790 = vmatprep.subr.mxu0 0.0
    %791 = vmatpush1.msra.mxu0 0.0
    %792 = vmatprep.subr.mxu0 0.0
    %793 = vmatpush1.msra.mxu0 0.0
    %794 = vmatprep.subr.mxu0 0.0
    %795 = vmatpush1.msra.mxu0 0.0
    %796 = vmatprep.subr.mxu0 0.0
    %797 = vmatpush1.msra.mxu0 0.0
    %798 = vmatprep.subr.mxu0 0.0
    %799 = vmatpush1.msra.mxu0 0.0
    %800 = vmatprep.subr.mxu0 0.0
    %801 = vmatpush1.msra.mxu0 0.0
    %802 = vmatprep.subr.mxu0 0.0
    %803 = vmatpush1.msra.mxu0 0.0
    %804 = vmatprep.subr.mxu0 0.0
    %805 = vmatpush1.msra.mxu0 0.0
    %806 = vmatprep.subr.mxu0 0.0
    %807 = vmatpush1.msra.mxu0 0.0
    %808 = vmatprep.subr.mxu0 0.0
    %809 = vmatpush1.msra.mxu0 0.0
    %810 = vmatprep.subr.mxu0 0.0
    %811 = vmatpush1.msra.mxu0 0.0
    %812 = vmatprep.subr.mxu0 0.0
    %813 = vmatpush1.msra.mxu0 0.0
    %814 = vmatprep.mubr.f32.mxu0 0.0
    %815 = vmatmul.mubr.f32.gmra.mrb[0].mxu0 %v745
    %v816 = vpop.f32.mrb[0].mxu0
    %v817 = vadd.f32 0.0, %v816
    %v818 = vpop.f32.mrb[0].mxu0
    %819 = vmatprep.mubr.f32.mxu0 0.0
    %820 = vmatmul.mubr.f32.gmra.mrb[0].mxu0 %v748
    %v821 = vpop.f32.mrb[0].mxu0
    %v822 = vadd.f32 0.0, %v821
    %v823 = vpop.f32.mrb[0].mxu0
    %824 = vdwg.mxu0
    %825 = vrot.lane.b32.xlu0 %v482, 64
    %v826 = vpop.permute.xlu0 %825
    %827 = vrot.lane.b32.xlu0 %v487, 64
    %v828 = vpop.permute.xlu0 %827
    %v832 = vsel %vm689, %v732, 0
    %v835 = vsel %vm689, %v733, 0
    %837 = vmatprep.subr.mxu0 0.0
    %838 = vmatpush1.msra.mxu0 %v826
    %839 = vmatprep.subr.mxu0 0.0
    %840 = vmatpush1.msra.mxu0 %v828
    %841 = vmatprep.subr.mxu0 0.0
    %842 = vmatpush1.msra.mxu0 0.0
    %843 = vmatprep.subr.mxu0 0.0
    %844 = vmatpush1.msra.mxu0 0.0
    %845 = vmatprep.subr.mxu0 0.0
    %846 = vmatpush1.msra.mxu0 0.0
    %847 = vmatprep.subr.mxu0 0.0
    %848 = vmatpush1.msra.mxu0 0.0
    %849 = vmatprep.subr.mxu0 0.0
    %850 = vmatpush1.msra.mxu0 0.0
    %851 = vmatprep.subr.mxu0 0.0
    %852 = vmatpush1.msra.mxu0 0.0
    %853 = vmatprep.subr.mxu0 0.0
    %854 = vmatpush1.msra.mxu0 0.0
    %855 = vmatprep.subr.mxu0 0.0
    %856 = vmatpush1.msra.mxu0 0.0
    %857 = vmatprep.subr.mxu0 0.0
    %858 = vmatpush1.msra.mxu0 0.0
    %859 = vmatprep.subr.mxu0 0.0
    %860 = vmatpush1.msra.mxu0 0.0
    %861 = vmatprep.subr.mxu0 0.0
    %862 = vmatpush1.msra.mxu0 0.0
    %863 = vmatprep.subr.mxu0 0.0
    %864 = vmatpush1.msra.mxu0 0.0
    %865 = vmatprep.subr.mxu0 0.0
    %866 = vmatpush1.msra.mxu0 0.0
    %867 = vmatprep.subr.mxu0 0.0
    %868 = vmatpush1.msra.mxu0 0.0
    %869 = vmatprep.subr.mxu0 0.0
    %870 = vmatpush1.msra.mxu0 0.0
    %871 = vmatprep.subr.mxu0 0.0
    %872 = vmatpush1.msra.mxu0 0.0
    %873 = vmatprep.subr.mxu0 0.0
    %874 = vmatpush1.msra.mxu0 0.0
    %875 = vmatprep.subr.mxu0 0.0
    %876 = vmatpush1.msra.mxu0 0.0
    %877 = vmatprep.subr.mxu0 0.0
    %878 = vmatpush1.msra.mxu0 0.0
    %879 = vmatprep.subr.mxu0 0.0
    %880 = vmatpush1.msra.mxu0 0.0
    %881 = vmatprep.subr.mxu0 0.0
    %882 = vmatpush1.msra.mxu0 0.0
    %883 = vmatprep.subr.mxu0 0.0
    %884 = vmatpush1.msra.mxu0 0.0
    %885 = vmatprep.subr.mxu0 0.0
    %886 = vmatpush1.msra.mxu0 0.0
    %887 = vmatprep.subr.mxu0 0.0
    %888 = vmatpush1.msra.mxu0 0.0
    %889 = vmatprep.subr.mxu0 0.0
    %890 = vmatpush1.msra.mxu0 0.0
    %891 = vmatprep.subr.mxu0 0.0
    %892 = vmatpush1.msra.mxu0 0.0
    %893 = vmatprep.subr.mxu0 0.0
    %894 = vmatpush1.msra.mxu0 0.0
    %895 = vmatprep.subr.mxu0 0.0
    %896 = vmatpush1.msra.mxu0 0.0
    %897 = vmatprep.subr.mxu0 0.0
    %898 = vmatpush1.msra.mxu0 0.0
    %899 = vmatprep.subr.mxu0 0.0
    %900 = vmatpush1.msra.mxu0 0.0
    %901 = vmatprep.mubr.f32.mxu0 0.0
    %902 = vmatmul.mubr.f32.gmra.mrb[0].mxu0 %v832
    %v903 = vpop.f32.mrb[0].mxu0
    %v904 = vadd.f32 0.0, %v903
    %v905 = vpop.f32.mrb[0].mxu0
    %906 = vmatprep.mubr.f32.mxu0 0.0
    %907 = vmatmul.mubr.f32.gmra.mrb[0].mxu0 %v835
    %v908 = vpop.f32.mrb[0].mxu0
    %v909 = vadd.f32 0.0, %v908
    %v910 = vpop.f32.mrb[0].mxu0
    %911 = vdwg.mxu0
    %912 = vrot.lane.b32.xlu0 %v472, 120
    %v913 = vpop.permute.xlu0 %912
    %914 = vrot.lane.b32.xlu0 %v477, 120
    %v915 = vpop.permute.xlu0 %914
    %916 = vrot.lane.b32.xlu0 %v472, 88
    %v917 = vpop.permute.xlu0 %916
    %918 = vrot.lane.b32.xlu0 %v477, 88
    %v919 = vpop.permute.xlu0 %918
    %v920 = vsel %vm496, %v913, 0
    %v922 = vsel %vm496, %v915, 0
    %v924 = vsel %vm496, %v917, 0
    %v926 = vsel %vm496, %v919, 0
    %928 = vmatprep.subr.mxu0 0.0
    %929 = vmatpush1.xpose.msra.mxu0 %v924
    %930 = vmatprep.subr.mxu0 0.0
    %931 = vmatpush1.xpose.msra.mxu0 %v926
    %932 = vmatprep.subr.mxu0 0.0
    %933 = vmatpush1.xpose.msra.mxu0 0.0
    %934 = vmatprep.subr.mxu0 0.0
    %935 = vmatpush1.xpose.msra.mxu0 0.0
    %936 = vmatprep.subr.mxu0 0.0
    %937 = vmatpush1.xpose.msra.mxu0 0.0
    %938 = vmatprep.subr.mxu0 0.0
    %939 = vmatpush1.xpose.msra.mxu0 0.0
    %940 = vmatprep.subr.mxu0 0.0
    %941 = vmatpush1.xpose.msra.mxu0 0.0
    %942 = vmatprep.subr.mxu0 0.0
    %943 = vmatpush1.xpose.msra.mxu0 0.0
    %944 = vmatprep.subr.mxu0 0.0
    %945 = vmatpush1.xpose.msra.mxu0 0.0
    %946 = vmatprep.subr.mxu0 0.0
    %947 = vmatpush1.xpose.msra.mxu0 0.0
    %948 = vmatprep.subr.mxu0 0.0
    %949 = vmatpush1.xpose.msra.mxu0 0.0
    %950 = vmatprep.subr.mxu0 0.0
    %951 = vmatpush1.xpose.msra.mxu0 0.0
    %952 = vmatprep.subr.mxu0 0.0
    %953 = vmatpush1.xpose.msra.mxu0 0.0
    %954 = vmatprep.subr.mxu0 0.0
    %955 = vmatpush1.xpose.msra.mxu0 0.0
    %956 = vmatprep.subr.mxu0 0.0
    %957 = vmatpush1.xpose.msra.mxu0 0.0
    %958 = vmatprep.subr.mxu0 0.0
    %959 = vmatpush1.xpose.msra.mxu0 0.0
    %960 = vmatprep.subr.mxu0 0.0
    %961 = vmatpush1.xpose.msra.mxu0 0.0
    %962 = vmatprep.subr.mxu0 0.0
    %963 = vmatpush1.xpose.msra.mxu0 0.0
    %964 = vmatprep.subr.mxu0 0.0
    %965 = vmatpush1.xpose.msra.mxu0 0.0
    %966 = vmatprep.subr.mxu0 0.0
    %967 = vmatpush1.xpose.msra.mxu0 0.0
    %968 = vmatprep.subr.mxu0 0.0
    %969 = vmatpush1.xpose.msra.mxu0 0.0
    %970 = vmatprep.subr.mxu0 0.0
    %971 = vmatpush1.xpose.msra.mxu0 0.0
    %972 = vmatprep.subr.mxu0 0.0
    %973 = vmatpush1.xpose.msra.mxu0 0.0
    %974 = vmatprep.subr.mxu0 0.0
    %975 = vmatpush1.xpose.msra.mxu0 0.0
    %976 = vmatprep.subr.mxu0 0.0
    %977 = vmatpush1.xpose.msra.mxu0 0.0
    %978 = vmatprep.subr.mxu0 0.0
    %979 = vmatpush1.xpose.msra.mxu0 0.0
    %980 = vmatprep.subr.mxu0 0.0
    %981 = vmatpush1.xpose.msra.mxu0 0.0
    %982 = vmatprep.subr.mxu0 0.0
    %983 = vmatpush1.xpose.msra.mxu0 0.0
    %984 = vmatprep.subr.mxu0 0.0
    %985 = vmatpush1.xpose.msra.mxu0 0.0
    %986 = vmatprep.subr.mxu0 0.0
    %987 = vmatpush1.xpose.msra.mxu0 0.0
    %988 = vmatprep.subr.mxu0 0.0
    %989 = vmatpush1.xpose.msra.mxu0 0.0
    %990 = vmatprep.subr.mxu0 0.0
    %991 = vmatpush1.xpose.msra.mxu0 0.0
    %992 = vmatprep.mubr.f32.mxu0 0.0
    %993 = vmatmul.mubr.f32.gmra.mrb[0].mxu0 %v920
    %v994 = vpop.f32.mrb[0].mxu0
    %v995 = vadd.f32 0.0, %v994
    %v996 = vpop.f32.mrb[0].mxu0
    %997 = vmatprep.mubr.f32.mxu0 0.0
    %998 = vmatmul.mubr.f32.gmra.mrb[0].mxu0 %v922
    %v999 = vpop.f32.mrb[0].mxu0
    %v1000 = vadd.f32 0.0, %v999
    %v1001 = vpop.f32.mrb[0].mxu0
    %1002 = vdwg.mxu0
    %1003 = vrot.lane.b32.xlu0 %v482, 120
    %v1004 = vpop.permute.xlu0 %1003
    %1005 = vrot.lane.b32.xlu0 %v487, 120
    %v1006 = vpop.permute.xlu0 %1005
    %1007 = vrot.lane.b32.xlu0 %v482, 88
    %v1008 = vpop.permute.xlu0 %1007
    %1009 = vrot.lane.b32.xlu0 %v487, 88
    %v1010 = vpop.permute.xlu0 %1009
    %v1011 = vsel %vm496, %v1004, 0
    %v1013 = vsel %vm496, %v1006, 0
    %v1015 = vsel %vm496, %v1008, 0
    %v1017 = vsel %vm496, %v1010, 0
    %1019 = vmatprep.subr.mxu0 0.0
    %1020 = vmatpush1.xpose.msra.mxu0 %v1015
    %1021 = vmatprep.subr.mxu0 0.0
    %1022 = vmatpush1.xpose.msra.mxu0 %v1017
    %1023 = vmatprep.subr.mxu0 0.0
    %1024 = vmatpush1.xpose.msra.mxu0 0.0
    %1025 = vmatprep.subr.mxu0 0.0
    %1026 = vmatpush1.xpose.msra.mxu0 0.0
    %1027 = vmatprep.subr.mxu0 0.0
    %1028 = vmatpush1.xpose.msra.mxu0 0.0
    %1029 = vmatprep.subr.mxu0 0.0
    %1030 = vmatpush1.xpose.msra.mxu0 0.0
    %1031 = vmatprep.subr.mxu0 0.0
    %1032 = vmatpush1.xpose.msra.mxu0 0.0
    %1033 = vmatprep.subr.mxu0 0.0
    %1034 = vmatpush1.xpose.msra.mxu0 0.0
    %1035 = vmatprep.subr.mxu0 0.0
    %1036 = vmatpush1.xpose.msra.mxu0 0.0
    %1037 = vmatprep.subr.mxu0 0.0
    %1038 = vmatpush1.xpose.msra.mxu0 0.0
    %1039 = vmatprep.subr.mxu0 0.0
    %1040 = vmatpush1.xpose.msra.mxu0 0.0
    %1041 = vmatprep.subr.mxu0 0.0
    %1042 = vmatpush1.xpose.msra.mxu0 0.0
    %1043 = vmatprep.subr.mxu0 0.0
    %1044 = vmatpush1.xpose.msra.mxu0 0.0
    %1045 = vmatprep.subr.mxu0 0.0
    %1046 = vmatpush1.xpose.msra.mxu0 0.0
    %1047 = vmatprep.subr.mxu0 0.0
    %1048 = vmatpush1.xpose.msra.mxu0 0.0
    %1049 = vmatprep.subr.mxu0 0.0
    %1050 = vmatpush1.xpose.msra.mxu0 0.0
    %1051 = vmatprep.subr.mxu0 0.0
    %1052 = vmatpush1.xpose.msra.mxu0 0.0
    %1053 = vmatprep.subr.mxu0 0.0
    %1054 = vmatpush1.xpose.msra.mxu0 0.0
    %1055 = vmatprep.subr.mxu0 0.0
    %1056 = vmatpush1.xpose.msra.mxu0 0.0
    %1057 = vmatprep.subr.mxu0 0.0
    %1058 = vmatpush1.xpose.msra.mxu0 0.0
    %1059 = vmatprep.subr.mxu0 0.0
    %1060 = vmatpush1.xpose.msra.mxu0 0.0
    %1061 = vmatprep.subr.mxu0 0.0
    %1062 = vmatpush1.xpose.msra.mxu0 0.0
    %1063 = vmatprep.subr.mxu0 0.0
    %1064 = vmatpush1.xpose.msra.mxu0 0.0
    %1065 = vmatprep.subr.mxu0 0.0
    %1066 = vmatpush1.xpose.msra.mxu0 0.0
    %1067 = vmatprep.subr.mxu0 0.0
    %1068 = vmatpush1.xpose.msra.mxu0 0.0
    %1069 = vmatprep.subr.mxu0 0.0
    %1070 = vmatpush1.xpose.msra.mxu0 0.0
    %1071 = vmatprep.subr.mxu0 0.0
    %1072 = vmatpush1.xpose.msra.mxu0 0.0
    %1073 = vmatprep.subr.mxu0 0.0
    %1074 = vmatpush1.xpose.msra.mxu0 0.0
    %1075 = vmatprep.subr.mxu0 0.0
    %1076 = vmatpush1.xpose.msra.mxu0 0.0
    %1077 = vmatprep.subr.mxu0 0.0
    %1078 = vmatpush1.xpose.msra.mxu0 0.0
    %1079 = vmatprep.subr.mxu0 0.0
    %1080 = vmatpush1.xpose.msra.mxu0 0.0
    %1081 = vmatprep.subr.mxu0 0.0
    %1082 = vmatpush1.xpose.msra.mxu0 0.0
    %1083 = vmatprep.mubr.f32.mxu0 0.0
    %1084 = vmatmul.mubr.f32.gmra.mrb[0].mxu0 %v1011
    %v1085 = vpop.f32.mrb[0].mxu0
    %v1086 = vadd.f32 0.0, %v1085
    %v1087 = vpop.f32.mrb[0].mxu0
    %1088 = vmatprep.mubr.f32.mxu0 0.0
    %1089 = vmatmul.mubr.f32.gmra.mrb[0].mxu0 %v1013
    %v1090 = vpop.f32.mrb[0].mxu0
    %v1091 = vadd.f32 0.0, %v1090
    %v1092 = vpop.f32.mrb[0].mxu0
    %1093 = vdwg.mxu0
    %v1094 = vmul.f32 %v995, 0.35355338
    %v1095 = vmul.f32 %v1000, 0.35355338
    %v1096 = vmul.f32 %v1086, 0.35355338
    %v1097 = vmul.f32 %v1091, 0.35355338
    %v1098 = vadd.f32 %v1094, %v678
    %v1099 = vadd.f32 %v1095, %v678
    %v1100 = vadd.f32 %v1096, %v682
    %v1101 = vadd.f32 %v1097, %v682
    %v1102 = vsel %vm689, %v1098, -inf
    %1103 = vmax.xlane.f32.xlu0 %v1102
    %v1104 = vpop.xlane.xlu0 %1103
    %v1105 = vsel %vm689, %v1099, -inf
    %1106 = vmax.xlane.f32.xlu0 %v1105
    %v1107 = vpop.xlane.xlu0 %1106
    %v1108 = vsel %vm689, %v1100, -inf
    %1109 = vmax.xlane.f32.xlu0 %v1108
    %v1110 = vpop.xlane.xlu0 %1109
    %v1111 = vsel %vm689, %v1101, -inf
    %1112 = vmax.xlane.f32.xlu0 %v1111
    %v1113 = vpop.xlane.xlu0 %1112
    %v1114 = vsub.f32 %v1098, %v1104
    %v1115 = vsub.f32 %v1099, %v1107
    %v1116 = vsub.f32 %v1100, %v1110
    %v1117 = vsub.f32 %v1101, %v1113
    %v1118 = vmul.f32 %v1114, 1.442695
    %v1119 = vpow.pop %v1118
    %v1120 = vmul.f32 %v1115, 1.442695
    %v1121 = vpow.pop %v1120
    %v1122 = vmul.f32 %v1116, 1.442695
    %v1123 = vpow.pop %v1122
    %v1124 = vmul.f32 %v1117, 1.442695
    %v1125 = vpow.pop %v1124
    %v1126 = vsel %vm689, %v1119, 0.0
    %1127 = vadd.xlane.f32.xlu0 %v1126
    %v1128 = vpop.xlane.xlu0 %1127
    %v1129 = vsel %vm689, %v1121, 0.0
    %1130 = vadd.xlane.f32.xlu0 %v1129
    %v1131 = vpop.xlane.xlu0 %1130
    %v1132 = vsel %vm689, %v1123, 0.0
    %1133 = vadd.xlane.f32.xlu0 %v1132
    %v1134 = vpop.xlane.xlu0 %1133
    %v1135 = vsel %vm689, %v1125, 0.0
    %1136 = vadd.xlane.f32.xlu0 %v1135
    %v1137 = vpop.xlane.xlu0 %1136
    %v1138 = vrcp.pop %v1128
    %v1139 = vrcp.pop %v1131
    %v1140 = vrcp.pop %v1134
    %v1141 = vrcp.pop %v1137
    %v1142 = vmul.f32 %v1119, %v1138
    %v1143 = vmul.f32 %v1121, %v1139
    %v1144 = vmul.f32 %v1123, %v1140
    %v1145 = vmul.f32 %v1125, %v1141
    %s1146 = scalar_lea.vmem %s61, 32
    %1147 = vst.msk [vmem:[%s1146] sm:$0xff] %vm689, %v1142
    %1148 = vst.msk [vmem:[%s1146 + $0x8] sm:$0xff] %vm689, %v1143
    %1149 = vst.msk [vmem:[%s1146 + $0x10] sm:$0xff] %vm689, %v1144
    %1150 = vst.msk [vmem:[%s1146 + $0x18] sm:$0xff] %vm689, %v1145
    %1151 = vrot.lane.b32.xlu0 %v472, 56
    %v1152 = vpop.permute.xlu0 %1151
    %1153 = vrot.lane.b32.xlu0 %v477, 56
    %v1154 = vpop.permute.xlu0 %1153
    %v1158 = vsel %vm689, %v1142, 0
    %v1161 = vsel %vm689, %v1143, 0
    %1163 = vmatprep.subr.mxu0 0.0
    %1164 = vmatpush1.msra.mxu0 %v1152
    %1165 = vmatprep.subr.mxu0 0.0
    %1166 = vmatpush1.msra.mxu0 %v1154
    %1167 = vmatprep.subr.mxu0 0.0
    %1168 = vmatpush1.msra.mxu0 0.0
    %1169 = vmatprep.subr.mxu0 0.0
    %1170 = vmatpush1.msra.mxu0 0.0
    %1171 = vmatprep.subr.mxu0 0.0
    %1172 = vmatpush1.msra.mxu0 0.0
    %1173 = vmatprep.subr.mxu0 0.0
    %1174 = vmatpush1.msra.mxu0 0.0
    %1175 = vmatprep.subr.mxu0 0.0
    %1176 = vmatpush1.msra.mxu0 0.0
    %1177 = vmatprep.subr.mxu0 0.0
    %1178 = vmatpush1.msra.mxu0 0.0
    %1179 = vmatprep.subr.mxu0 0.0
    %1180 = vmatpush1.msra.mxu0 0.0
    %1181 = vmatprep.subr.mxu0 0.0
    %1182 = vmatpush1.msra.mxu0 0.0
    %1183 = vmatprep.subr.mxu0 0.0
    %1184 = vmatpush1.msra.mxu0 0.0
    %1185 = vmatprep.subr.mxu0 0.0
    %1186 = vmatpush1.msra.mxu0 0.0
    %1187 = vmatprep.subr.mxu0 0.0
    %1188 = vmatpush1.msra.mxu0 0.0
    %1189 = vmatprep.subr.mxu0 0.0
    %1190 = vmatpush1.msra.mxu0 0.0
    %1191 = vmatprep.subr.mxu0 0.0
    %1192 = vmatpush1.msra.mxu0 0.0
    %1193 = vmatprep.subr.mxu0 0.0
    %1194 = vmatpush1.msra.mxu0 0.0
    %1195 = vmatprep.subr.mxu0 0.0
    %1196 = vmatpush1.msra.mxu0 0.0
    %1197 = vmatprep.subr.mxu0 0.0
    %1198 = vmatpush1.msra.mxu0 0.0
    %1199 = vmatprep.subr.mxu0 0.0
    %1200 = vmatpush1.msra.mxu0 0.0
    %1201 = vmatprep.subr.mxu0 0.0
    %1202 = vmatpush1.msra.mxu0 0.0
    %1203 = vmatprep.subr.mxu0 0.0
    %1204 = vmatpush1.msra.mxu0 0.0
    %1205 = vmatprep.subr.mxu0 0.0
    %1206 = vmatpush1.msra.mxu0 0.0
    %1207 = vmatprep.subr.mxu0 0.0
    %1208 = vmatpush1.msra.mxu0 0.0
    %1209 = vmatprep.subr.mxu0 0.0
    %1210 = vmatpush1.msra.mxu0 0.0
    %1211 = vmatprep.subr.mxu0 0.0
    %1212 = vmatpush1.msra.mxu0 0.0
    %1213 = vmatprep.subr.mxu0 0.0
    %1214 = vmatpush1.msra.mxu0 0.0
    %1215 = vmatprep.subr.mxu0 0.0
    %1216 = vmatpush1.msra.mxu0 0.0
    %1217 = vmatprep.subr.mxu0 0.0
    %1218 = vmatpush1.msra.mxu0 0.0
    %1219 = vmatprep.subr.mxu0 0.0
    %1220 = vmatpush1.msra.mxu0 0.0
    %1221 = vmatprep.subr.mxu0 0.0
    %1222 = vmatpush1.msra.mxu0 0.0
    %1223 = vmatprep.subr.mxu0 0.0
    %1224 = vmatpush1.msra.mxu0 0.0
    %1225 = vmatprep.subr.mxu0 0.0
    %1226 = vmatpush1.msra.mxu0 0.0
    %1227 = vmatprep.mubr.f32.mxu0 0.0
    %1228 = vmatmul.mubr.f32.gmra.mrb[0].mxu0 %v1158
    %v1229 = vpop.f32.mrb[0].mxu0
    %v1230 = vadd.f32 0.0, %v1229
    %v1231 = vpop.f32.mrb[0].mxu0
    %1232 = vmatprep.mubr.f32.mxu0 0.0
    %1233 = vmatmul.mubr.f32.gmra.mrb[0].mxu0 %v1161
    %v1234 = vpop.f32.mrb[0].mxu0
    %v1235 = vadd.f32 0.0, %v1234
    %v1236 = vpop.f32.mrb[0].mxu0
    %1237 = vdwg.mxu0
    %1238 = vrot.lane.b32.xlu0 %v482, 56
    %v1239 = vpop.permute.xlu0 %1238
    %1240 = vrot.lane.b32.xlu0 %v487, 56
    %v1241 = vpop.permute.xlu0 %1240
    %v1245 = vsel %vm689, %v1144, 0
    %v1248 = vsel %vm689, %v1145, 0
    %1250 = vmatprep.subr.mxu0 0.0
    %1251 = vmatpush1.msra.mxu0 %v1239
    %1252 = vmatprep.subr.mxu0 0.0
    %1253 = vmatpush1.msra.mxu0 %v1241
    %1254 = vmatprep.subr.mxu0 0.0
    %1255 = vmatpush1.msra.mxu0 0.0
    %1256 = vmatprep.subr.mxu0 0.0
    %1257 = vmatpush1.msra.mxu0 0.0
    %1258 = vmatprep.subr.mxu0 0.0
    %1259 = vmatpush1.msra.mxu0 0.0
    %1260 = vmatprep.subr.mxu0 0.0
    %1261 = vmatpush1.msra.mxu0 0.0
    %1262 = vmatprep.subr.mxu0 0.0
    %1263 = vmatpush1.msra.mxu0 0.0
    %1264 = vmatprep.subr.mxu0 0.0
    %1265 = vmatpush1.msra.mxu0 0.0
    %1266 = vmatprep.subr.mxu0 0.0
    %1267 = vmatpush1.msra.mxu0 0.0
    %1268 = vmatprep.subr.mxu0 0.0
    %1269 = vmatpush1.msra.mxu0 0.0
    %1270 = vmatprep.subr.mxu0 0.0
    %1271 = vmatpush1.msra.mxu0 0.0
    %1272 = vmatprep.subr.mxu0 0.0
    %1273 = vmatpush1.msra.mxu0 0.0
    %1274 = vmatprep.subr.mxu0 0.0
    %1275 = vmatpush1.msra.mxu0 0.0
    %1276 = vmatprep.subr.mxu0 0.0
    %1277 = vmatpush1.msra.mxu0 0.0
    %1278 = vmatprep.subr.mxu0 0.0
    %1279 = vmatpush1.msra.mxu0 0.0
    %1280 = vmatprep.subr.mxu0 0.0
    %1281 = vmatpush1.msra.mxu0 0.0
    %1282 = vmatprep.subr.mxu0 0.0
    %1283 = vmatpush1.msra.mxu0 0.0
    %1284 = vmatprep.subr.mxu0 0.0
    %1285 = vmatpush1.msra.mxu0 0.0
    %1286 = vmatprep.subr.mxu0 0.0
    %1287 = vmatpush1.msra.mxu0 0.0
    %1288 = vmatprep.subr.mxu0 0.0
    %1289 = vmatpush1.msra.mxu0 0.0
    %1290 = vmatprep.subr.mxu0 0.0
    %1291 = vmatpush1.msra.mxu0 0.0
    %1292 = vmatprep.subr.mxu0 0.0
    %1293 = vmatpush1.msra.mxu0 0.0
    %1294 = vmatprep.subr.mxu0 0.0
    %1295 = vmatpush1.msra.mxu0 0.0
    %1296 = vmatprep.subr.mxu0 0.0
    %1297 = vmatpush1.msra.mxu0 0.0
    %1298 = vmatprep.subr.mxu0 0.0
    %1299 = vmatpush1.msra.mxu0 0.0
    %1300 = vmatprep.subr.mxu0 0.0
    %1301 = vmatpush1.msra.mxu0 0.0
    %1302 = vmatprep.subr.mxu0 0.0
    %1303 = vmatpush1.msra.mxu0 0.0
    %1304 = vmatprep.subr.mxu0 0.0
    %1305 = vmatpush1.msra.mxu0 0.0
    %1306 = vmatprep.subr.mxu0 0.0
    %1307 = vmatpush1.msra.mxu0 0.0
    %1308 = vmatprep.subr.mxu0 0.0
    %1309 = vmatpush1.msra.mxu0 0.0
    %1310 = vmatprep.subr.mxu0 0.0
    %1311 = vmatpush1.msra.mxu0 0.0
    %1312 = vmatprep.subr.mxu0 0.0
    %1313 = vmatpush1.msra.mxu0 0.0
    %1314 = vmatprep.mubr.f32.mxu0 0.0
    %1315 = vmatmul.mubr.f32.gmra.mrb[0].mxu0 %v1245
    %v1316 = vpop.f32.mrb[0].mxu0
    %v1317 = vadd.f32 0.0, %v1316
    %v1318 = vpop.f32.mrb[0].mxu0
    %1319 = vmatprep.mubr.f32.mxu0 0.0
    %1320 = vmatmul.mubr.f32.gmra.mrb[0].mxu0 %v1248
    %v1321 = vpop.f32.mrb[0].mxu0
    %v1322 = vadd.f32 0.0, %v1321
    %v1323 = vpop.f32.mrb[0].mxu0
    %1324 = vdwg.mxu0
    %1325 = vrot.lane.b32.xlu0 %v472, 112
    %v1326 = vpop.permute.xlu0 %1325
    %1327 = vrot.lane.b32.xlu0 %v477, 112
    %v1328 = vpop.permute.xlu0 %1327
    %1329 = vrot.lane.b32.xlu0 %v472, 80
    %v1330 = vpop.permute.xlu0 %1329
    %1331 = vrot.lane.b32.xlu0 %v477, 80
    %v1332 = vpop.permute.xlu0 %1331
    %v1333 = vsel %vm496, %v1326, 0
    %v1335 = vsel %vm496, %v1328, 0
    %v1337 = vsel %vm496, %v1330, 0
    %v1339 = vsel %vm496, %v1332, 0
    %1341 = vmatprep.subr.mxu0 0.0
    %1342 = vmatpush1.xpose.msra.mxu0 %v1337
    %1343 = vmatprep.subr.mxu0 0.0
    %1344 = vmatpush1.xpose.msra.mxu0 %v1339
    %1345 = vmatprep.subr.mxu0 0.0
    %1346 = vmatpush1.xpose.msra.mxu0 0.0
    %1347 = vmatprep.subr.mxu0 0.0
    %1348 = vmatpush1.xpose.msra.mxu0 0.0
    %1349 = vmatprep.subr.mxu0 0.0
    %1350 = vmatpush1.xpose.msra.mxu0 0.0
    %1351 = vmatprep.subr.mxu0 0.0
    %1352 = vmatpush1.xpose.msra.mxu0 0.0
    %1353 = vmatprep.subr.mxu0 0.0
    %1354 = vmatpush1.xpose.msra.mxu0 0.0
    %1355 = vmatprep.subr.mxu0 0.0
    %1356 = vmatpush1.xpose.msra.mxu0 0.0
    %1357 = vmatprep.subr.mxu0 0.0
    %1358 = vmatpush1.xpose.msra.mxu0 0.0
    %1359 = vmatprep.subr.mxu0 0.0
    %1360 = vmatpush1.xpose.msra.mxu0 0.0
    %1361 = vmatprep.subr.mxu0 0.0
    %1362 = vmatpush1.xpose.msra.mxu0 0.0
    %1363 = vmatprep.subr.mxu0 0.0
    %1364 = vmatpush1.xpose.msra.mxu0 0.0
    %1365 = vmatprep.subr.mxu0 0.0
    %1366 = vmatpush1.xpose.msra.mxu0 0.0
    %1367 = vmatprep.subr.mxu0 0.0
    %1368 = vmatpush1.xpose.msra.mxu0 0.0
    %1369 = vmatprep.subr.mxu0 0.0
    %1370 = vmatpush1.xpose.msra.mxu0 0.0
    %1371 = vmatprep.subr.mxu0 0.0
    %1372 = vmatpush1.xpose.msra.mxu0 0.0
    %1373 = vmatprep.subr.mxu0 0.0
    %1374 = vmatpush1.xpose.msra.mxu0 0.0
    %1375 = vmatprep.subr.mxu0 0.0
    %1376 = vmatpush1.xpose.msra.mxu0 0.0
    %1377 = vmatprep.subr.mxu0 0.0
    %1378 = vmatpush1.xpose.msra.mxu0 0.0
    %1379 = vmatprep.subr.mxu0 0.0
    %1380 = vmatpush1.xpose.msra.mxu0 0.0
    %1381 = vmatprep.subr.mxu0 0.0
    %1382 = vmatpush1.xpose.msra.mxu0 0.0
    %1383 = vmatprep.subr.mxu0 0.0
    %1384 = vmatpush1.xpose.msra.mxu0 0.0
    %1385 = vmatprep.subr.mxu0 0.0
    %1386 = vmatpush1.xpose.msra.mxu0 0.0
    %1387 = vmatprep.subr.mxu0 0.0
    %1388 = vmatpush1.xpose.msra.mxu0 0.0
    %1389 = vmatprep.subr.mxu0 0.0
    %1390 = vmatpush1.xpose.msra.mxu0 0.0
    %1391 = vmatprep.subr.mxu0 0.0
    %1392 = vmatpush1.xpose.msra.mxu0 0.0
    %1393 = vmatprep.subr.mxu0 0.0
    %1394 = vmatpush1.xpose.msra.mxu0 0.0
    %1395 = vmatprep.subr.mxu0 0.0
    %1396 = vmatpush1.xpose.msra.mxu0 0.0
    %1397 = vmatprep.subr.mxu0 0.0
    %1398 = vmatpush1.xpose.msra.mxu0 0.0
    %1399 = vmatprep.subr.mxu0 0.0
    %1400 = vmatpush1.xpose.msra.mxu0 0.0
    %1401 = vmatprep.subr.mxu0 0.0
    %1402 = vmatpush1.xpose.msra.mxu0 0.0
    %1403 = vmatprep.subr.mxu0 0.0
    %1404 = vmatpush1.xpose.msra.mxu0 0.0
    %1405 = vmatprep.mubr.f32.mxu0 0.0
    %1406 = vmatmul.mubr.f32.gmra.mrb[0].mxu0 %v1333
    %v1407 = vpop.f32.mrb[0].mxu0
    %v1408 = vadd.f32 0.0, %v1407
    %v1409 = vpop.f32.mrb[0].mxu0
    %1410 = vmatprep.mubr.f32.mxu0 0.0
    %1411 = vmatmul.mubr.f32.gmra.mrb[0].mxu0 %v1335
    %v1412 = vpop.f32.mrb[0].mxu0
    %v1413 = vadd.f32 0.0, %v1412
    %v1414 = vpop.f32.mrb[0].mxu0
    %1415 = vdwg.mxu0
    %1416 = vrot.lane.b32.xlu0 %v482, 112
    %v1417 = vpop.permute.xlu0 %1416
    %1418 = vrot.lane.b32.xlu0 %v487, 112
    %v1419 = vpop.permute.xlu0 %1418
    %1420 = vrot.lane.b32.xlu0 %v482, 80
    %v1421 = vpop.permute.xlu0 %1420
    %1422 = vrot.lane.b32.xlu0 %v487, 80
    %v1423 = vpop.permute.xlu0 %1422
    %v1424 = vsel %vm496, %v1417, 0
    %v1426 = vsel %vm496, %v1419, 0
    %v1428 = vsel %vm496, %v1421, 0
    %v1430 = vsel %vm496, %v1423, 0
    %1432 = vmatprep.subr.mxu0 0.0
    %1433 = vmatpush1.xpose.msra.mxu0 %v1428
    %1434 = vmatprep.subr.mxu0 0.0
    %1435 = vmatpush1.xpose.msra.mxu0 %v1430
    %1436 = vmatprep.subr.mxu0 0.0
    %1437 = vmatpush1.xpose.msra.mxu0 0.0
    %1438 = vmatprep.subr.mxu0 0.0
    %1439 = vmatpush1.xpose.msra.mxu0 0.0
    %1440 = vmatprep.subr.mxu0 0.0
    %1441 = vmatpush1.xpose.msra.mxu0 0.0
    %1442 = vmatprep.subr.mxu0 0.0
    %1443 = vmatpush1.xpose.msra.mxu0 0.0
    %1444 = vmatprep.subr.mxu0 0.0
    %1445 = vmatpush1.xpose.msra.mxu0 0.0
    %1446 = vmatprep.subr.mxu0 0.0
    %1447 = vmatpush1.xpose.msra.mxu0 0.0
    %1448 = vmatprep.subr.mxu0 0.0
    %1449 = vmatpush1.xpose.msra.mxu0 0.0
    %1450 = vmatprep.subr.mxu0 0.0
    %1451 = vmatpush1.xpose.msra.mxu0 0.0
    %1452 = vmatprep.subr.mxu0 0.0
    %1453 = vmatpush1.xpose.msra.mxu0 0.0
    %1454 = vmatprep.subr.mxu0 0.0
    %1455 = vmatpush1.xpose.msra.mxu0 0.0
    %1456 = vmatprep.subr.mxu0 0.0
    %1457 = vmatpush1.xpose.msra.mxu0 0.0
    %1458 = vmatprep.subr.mxu0 0.0
    %1459 = vmatpush1.xpose.msra.mxu0 0.0
    %1460 = vmatprep.subr.mxu0 0.0
    %1461 = vmatpush1.xpose.msra.mxu0 0.0
    %1462 = vmatprep.subr.mxu0 0.0
    %1463 = vmatpush1.xpose.msra.mxu0 0.0
    %1464 = vmatprep.subr.mxu0 0.0
    %1465 = vmatpush1.xpose.msra.mxu0 0.0
    %1466 = vmatprep.subr.mxu0 0.0
    %1467 = vmatpush1.xpose.msra.mxu0 0.0
    %1468 = vmatprep.subr.mxu0 0.0
    %1469 = vmatpush1.xpose.msra.mxu0 0.0
    %1470 = vmatprep.subr.mxu0 0.0
    %1471 = vmatpush1.xpose.msra.mxu0 0.0
    %1472 = vmatprep.subr.mxu0 0.0
    %1473 = vmatpush1.xpose.msra.mxu0 0.0
    %1474 = vmatprep.subr.mxu0 0.0
    %1475 = vmatpush1.xpose.msra.mxu0 0.0
    %1476 = vmatprep.subr.mxu0 0.0
    %1477 = vmatpush1.xpose.msra.mxu0 0.0
    %1478 = vmatprep.subr.mxu0 0.0
    %1479 = vmatpush1.xpose.msra.mxu0 0.0
    %1480 = vmatprep.subr.mxu0 0.0
    %1481 = vmatpush1.xpose.msra.mxu0 0.0
    %1482 = vmatprep.subr.mxu0 0.0
    %1483 = vmatpush1.xpose.msra.mxu0 0.0
    %1484 = vmatprep.subr.mxu0 0.0
    %1485 = vmatpush1.xpose.msra.mxu0 0.0
    %1486 = vmatprep.subr.mxu0 0.0
    %1487 = vmatpush1.xpose.msra.mxu0 0.0
    %1488 = vmatprep.subr.mxu0 0.0
    %1489 = vmatpush1.xpose.msra.mxu0 0.0
    %1490 = vmatprep.subr.mxu0 0.0
    %1491 = vmatpush1.xpose.msra.mxu0 0.0
    %1492 = vmatprep.subr.mxu0 0.0
    %1493 = vmatpush1.xpose.msra.mxu0 0.0
    %1494 = vmatprep.subr.mxu0 0.0
    %1495 = vmatpush1.xpose.msra.mxu0 0.0
    %1496 = vmatprep.mubr.f32.mxu0 0.0
    %1497 = vmatmul.mubr.f32.gmra.mrb[0].mxu0 %v1424
    %v1498 = vpop.f32.mrb[0].mxu0
    %v1499 = vadd.f32 0.0, %v1498
    %v1500 = vpop.f32.mrb[0].mxu0
    %1501 = vmatprep.mubr.f32.mxu0 0.0
    %1502 = vmatmul.mubr.f32.gmra.mrb[0].mxu0 %v1426
    %v1503 = vpop.f32.mrb[0].mxu0
    %v1504 = vadd.f32 0.0, %v1503
    %v1505 = vpop.f32.mrb[0].mxu0
    %1506 = vdwg.mxu0
    %v1507 = vmul.f32 %v1408, 0.35355338
    %v1508 = vmul.f32 %v1413, 0.35355338
    %v1509 = vmul.f32 %v1499, 0.35355338
    %v1510 = vmul.f32 %v1504, 0.35355338
    %v1511 = vadd.f32 %v1507, %v678
    %v1512 = vadd.f32 %v1508, %v678
    %v1513 = vadd.f32 %v1509, %v682
    %v1514 = vadd.f32 %v1510, %v682
    %v1515 = vsel %vm689, %v1511, -inf
    %1516 = vmax.xlane.f32.xlu0 %v1515
    %v1517 = vpop.xlane.xlu0 %1516
    %v1518 = vsel %vm689, %v1512, -inf
    %1519 = vmax.xlane.f32.xlu0 %v1518
    %v1520 = vpop.xlane.xlu0 %1519
    %v1521 = vsel %vm689, %v1513, -inf
    %1522 = vmax.xlane.f32.xlu0 %v1521
    %v1523 = vpop.xlane.xlu0 %1522
    %v1524 = vsel %vm689, %v1514, -inf
    %1525 = vmax.xlane.f32.xlu0 %v1524
    %v1526 = vpop.xlane.xlu0 %1525
    %v1527 = vsub.f32 %v1511, %v1517
    %v1528 = vsub.f32 %v1512, %v1520
    %v1529 = vsub.f32 %v1513, %v1523
    %v1530 = vsub.f32 %v1514, %v1526
    %v1531 = vmul.f32 %v1527, 1.442695
    %v1532 = vpow.pop %v1531
    %v1533 = vmul.f32 %v1528, 1.442695
    %v1534 = vpow.pop %v1533
    %v1535 = vmul.f32 %v1529, 1.442695
    %v1536 = vpow.pop %v1535
    %v1537 = vmul.f32 %v1530, 1.442695
    %v1538 = vpow.pop %v1537
    %v1539 = vsel %vm689, %v1532, 0.0
    %1540 = vadd.xlane.f32.xlu0 %v1539
    %v1541 = vpop.xlane.xlu0 %1540
    %v1542 = vsel %vm689, %v1534, 0.0
    %1543 = vadd.xlane.f32.xlu0 %v1542
    %v1544 = vpop.xlane.xlu0 %1543
    %v1545 = vsel %vm689, %v1536, 0.0
    %1546 = vadd.xlane.f32.xlu0 %v1545
    %v1547 = vpop.xlane.xlu0 %1546
    %v1548 = vsel %vm689, %v1538, 0.0
    %1549 = vadd.xlane.f32.xlu0 %v1548
    %v1550 = vpop.xlane.xlu0 %1549
    %v1551 = vrcp.pop %v1541
    %v1552 = vrcp.pop %v1544
    %v1553 = vrcp.pop %v1547
    %v1554 = vrcp.pop %v1550
    %v1555 = vmul.f32 %v1532, %v1551
    %v1556 = vmul.f32 %v1534, %v1552
    %v1557 = vmul.f32 %v1536, %v1553
    %v1558 = vmul.f32 %v1538, %v1554
    %s1559 = scalar_lea.vmem %s61, 64
    %1560 = vst.msk [vmem:[%s1559] sm:$0xff] %vm689, %v1555
    %1561 = vst.msk [vmem:[%s1559 + $0x8] sm:$0xff] %vm689, %v1556
    %1562 = vst.msk [vmem:[%s1559 + $0x10] sm:$0xff] %vm689, %v1557
    %1563 = vst.msk [vmem:[%s1559 + $0x18] sm:$0xff] %vm689, %v1558
    %1564 = vrot.lane.b32.xlu0 %v472, 48
    %v1565 = vpop.permute.xlu0 %1564
    %1566 = vrot.lane.b32.xlu0 %v477, 48
    %v1567 = vpop.permute.xlu0 %1566
    %v1571 = vsel %vm689, %v1555, 0
    %v1574 = vsel %vm689, %v1556, 0
    %1576 = vmatprep.subr.mxu0 0.0
    %1577 = vmatpush1.msra.mxu0 %v1565
    %1578 = vmatprep.subr.mxu0 0.0
    %1579 = vmatpush1.msra.mxu0 %v1567
    %1580 = vmatprep.subr.mxu0 0.0
    %1581 = vmatpush1.msra.mxu0 0.0
    %1582 = vmatprep.subr.mxu0 0.0
    %1583 = vmatpush1.msra.mxu0 0.0
    %1584 = vmatprep.subr.mxu0 0.0
    %1585 = vmatpush1.msra.mxu0 0.0
    %1586 = vmatprep.subr.mxu0 0.0
    %1587 = vmatpush1.msra.mxu0 0.0
    %1588 = vmatprep.subr.mxu0 0.0
    %1589 = vmatpush1.msra.mxu0 0.0
    %1590 = vmatprep.subr.mxu0 0.0
    %1591 = vmatpush1.msra.mxu0 0.0
    %1592 = vmatprep.subr.mxu0 0.0
    %1593 = vmatpush1.msra.mxu0 0.0
    %1594 = vmatprep.subr.mxu0 0.0
    %1595 = vmatpush1.msra.mxu0 0.0
    %1596 = vmatprep.subr.mxu0 0.0
    %1597 = vmatpush1.msra.mxu0 0.0
    %1598 = vmatprep.subr.mxu0 0.0
    %1599 = vmatpush1.msra.mxu0 0.0
    %1600 = vmatprep.subr.mxu0 0.0
    %1601 = vmatpush1.msra.mxu0 0.0
    %1602 = vmatprep.subr.mxu0 0.0
    %1603 = vmatpush1.msra.mxu0 0.0
    %1604 = vmatprep.subr.mxu0 0.0
    %1605 = vmatpush1.msra.mxu0 0.0
    %1606 = vmatprep.subr.mxu0 0.0
    %1607 = vmatpush1.msra.mxu0 0.0
    %1608 = vmatprep.subr.mxu0 0.0
    %1609 = vmatpush1.msra.mxu0 0.0
    %1610 = vmatprep.subr.mxu0 0.0
    %1611 = vmatpush1.msra.mxu0 0.0
    %1612 = vmatprep.subr.mxu0 0.0
    %1613 = vmatpush1.msra.mxu0 0.0
    %1614 = vmatprep.subr.mxu0 0.0
    %1615 = vmatpush1.msra.mxu0 0.0
    %1616 = vmatprep.subr.mxu0 0.0
    %1617 = vmatpush1.msra.mxu0 0.0
    %1618 = vmatprep.subr.mxu0 0.0
    %1619 = vmatpush1.msra.mxu0 0.0
    %1620 = vmatprep.subr.mxu0 0.0
    %1621 = vmatpush1.msra.mxu0 0.0
    %1622 = vmatprep.subr.mxu0 0.0
    %1623 = vmatpush1.msra.mxu0 0.0
    %1624 = vmatprep.subr.mxu0 0.0
    %1625 = vmatpush1.msra.mxu0 0.0
    %1626 = vmatprep.subr.mxu0 0.0
    %1627 = vmatpush1.msra.mxu0 0.0
    %1628 = vmatprep.subr.mxu0 0.0
    %1629 = vmatpush1.msra.mxu0 0.0
    %1630 = vmatprep.subr.mxu0 0.0
    %1631 = vmatpush1.msra.mxu0 0.0
    %1632 = vmatprep.subr.mxu0 0.0
    %1633 = vmatpush1.msra.mxu0 0.0
    %1634 = vmatprep.subr.mxu0 0.0
    %1635 = vmatpush1.msra.mxu0 0.0
    %1636 = vmatprep.subr.mxu0 0.0
    %1637 = vmatpush1.msra.mxu0 0.0
    %1638 = vmatprep.subr.mxu0 0.0
    %1639 = vmatpush1.msra.mxu0 0.0
    %1640 = vmatprep.mubr.f32.mxu0 0.0
    %1641 = vmatmul.mubr.f32.gmra.mrb[0].mxu0 %v1571
    %v1642 = vpop.f32.mrb[0].mxu0
    %v1643 = vadd.f32 0.0, %v1642
    %v1644 = vpop.f32.mrb[0].mxu0
    %1645 = vmatprep.mubr.f32.mxu0 0.0
    %1646 = vmatmul.mubr.f32.gmra.mrb[0].mxu0 %v1574
    %v1647 = vpop.f32.mrb[0].mxu0
    %v1648 = vadd.f32 0.0, %v1647
    %v1649 = vpop.f32.mrb[0].mxu0
    %1650 = vdwg.mxu0
    %1651 = vrot.lane.b32.xlu0 %v482, 48
    %v1652 = vpop.permute.xlu0 %1651
    %1653 = vrot.lane.b32.xlu0 %v487, 48
    %v1654 = vpop.permute.xlu0 %1653
    %v1658 = vsel %vm689, %v1557, 0
    %v1661 = vsel %vm689, %v1558, 0
    %1663 = vmatprep.subr.mxu0 0.0
    %1664 = vmatpush1.msra.mxu0 %v1652
    %1665 = vmatprep.subr.mxu0 0.0
    %1666 = vmatpush1.msra.mxu0 %v1654
    %1667 = vmatprep.subr.mxu0 0.0
    %1668 = vmatpush1.msra.mxu0 0.0
    %1669 = vmatprep.subr.mxu0 0.0
    %1670 = vmatpush1.msra.mxu0 0.0
    %1671 = vmatprep.subr.mxu0 0.0
    %1672 = vmatpush1.msra.mxu0 0.0
    %1673 = vmatprep.subr.mxu0 0.0
    %1674 = vmatpush1.msra.mxu0 0.0
    %1675 = vmatprep.subr.mxu0 0.0
    %1676 = vmatpush1.msra.mxu0 0.0
    %1677 = vmatprep.subr.mxu0 0.0
    %1678 = vmatpush1.msra.mxu0 0.0
    %1679 = vmatprep.subr.mxu0 0.0
    %1680 = vmatpush1.msra.mxu0 0.0
    %1681 = vmatprep.subr.mxu0 0.0
    %1682 = vmatpush1.msra.mxu0 0.0
    %1683 = vmatprep.subr.mxu0 0.0
    %1684 = vmatpush1.msra.mxu0 0.0
    %1685 = vmatprep.subr.mxu0 0.0
    %1686 = vmatpush1.msra.mxu0 0.0
    %1687 = vmatprep.subr.mxu0 0.0
    %1688 = vmatpush1.msra.mxu0 0.0
    %1689 = vmatprep.subr.mxu0 0.0
    %1690 = vmatpush1.msra.mxu0 0.0
    %1691 = vmatprep.subr.mxu0 0.0
    %1692 = vmatpush1.msra.mxu0 0.0
    %1693 = vmatprep.subr.mxu0 0.0
    %1694 = vmatpush1.msra.mxu0 0.0
    %1695 = vmatprep.subr.mxu0 0.0
    %1696 = vmatpush1.msra.mxu0 0.0
    %1697 = vmatprep.subr.mxu0 0.0
    %1698 = vmatpush1.msra.mxu0 0.0
    %1699 = vmatprep.subr.mxu0 0.0
    %1700 = vmatpush1.msra.mxu0 0.0
    %1701 = vmatprep.subr.mxu0 0.0
    %1702 = vmatpush1.msra.mxu0 0.0
    %1703 = vmatprep.subr.mxu0 0.0
    %1704 = vmatpush1.msra.mxu0 0.0
    %1705 = vmatprep.subr.mxu0 0.0
    %1706 = vmatpush1.msra.mxu0 0.0
    %1707 = vmatprep.subr.mxu0 0.0
    %1708 = vmatpush1.msra.mxu0 0.0
    %1709 = vmatprep.subr.mxu0 0.0
    %1710 = vmatpush1.msra.mxu0 0.0
    %1711 = vmatprep.subr.mxu0 0.0
    %1712 = vmatpush1.msra.mxu0 0.0
    %1713 = vmatprep.subr.mxu0 0.0
    %1714 = vmatpush1.msra.mxu0 0.0
    %1715 = vmatprep.subr.mxu0 0.0
    %1716 = vmatpush1.msra.mxu0 0.0
    %1717 = vmatprep.subr.mxu0 0.0
    %1718 = vmatpush1.msra.mxu0 0.0
    %1719 = vmatprep.subr.mxu0 0.0
    %1720 = vmatpush1.msra.mxu0 0.0
    %1721 = vmatprep.subr.mxu0 0.0
    %1722 = vmatpush1.msra.mxu0 0.0
    %1723 = vmatprep.subr.mxu0 0.0
    %1724 = vmatpush1.msra.mxu0 0.0
    %1725 = vmatprep.subr.mxu0 0.0
    %1726 = vmatpush1.msra.mxu0 0.0
    %1727 = vmatprep.mubr.f32.mxu0 0.0
    %1728 = vmatmul.mubr.f32.gmra.mrb[0].mxu0 %v1658
    %v1729 = vpop.f32.mrb[0].mxu0
    %v1730 = vadd.f32 0.0, %v1729
    %v1731 = vpop.f32.mrb[0].mxu0
    %1732 = vmatprep.mubr.f32.mxu0 0.0
    %1733 = vmatmul.mubr.f32.gmra.mrb[0].mxu0 %v1661
    %v1734 = vpop.f32.mrb[0].mxu0
    %v1735 = vadd.f32 0.0, %v1734
    %v1736 = vpop.f32.mrb[0].mxu0
    %1737 = vdwg.mxu0
    %1738 = vrot.lane.b32.xlu0 %v472, 104
    %v1739 = vpop.permute.xlu0 %1738
    %1740 = vrot.lane.b32.xlu0 %v477, 104
    %v1741 = vpop.permute.xlu0 %1740
    %1742 = vrot.lane.b32.xlu0 %v472, 72
    %v1743 = vpop.permute.xlu0 %1742
    %1744 = vrot.lane.b32.xlu0 %v477, 72
    %v1745 = vpop.permute.xlu0 %1744
    %v1746 = vsel %vm496, %v1739, 0
    %v1748 = vsel %vm496, %v1741, 0
    %v1750 = vsel %vm496, %v1743, 0
    %v1752 = vsel %vm496, %v1745, 0
    %1754 = vmatprep.subr.mxu0 0.0
    %1755 = vmatpush1.xpose.msra.mxu0 %v1750
    %1756 = vmatprep.subr.mxu0 0.0
    %1757 = vmatpush1.xpose.msra.mxu0 %v1752
    %1758 = vmatprep.subr.mxu0 0.0
    %1759 = vmatpush1.xpose.msra.mxu0 0.0
    %1760 = vmatprep.subr.mxu0 0.0
    %1761 = vmatpush1.xpose.msra.mxu0 0.0
    %1762 = vmatprep.subr.mxu0 0.0
    %1763 = vmatpush1.xpose.msra.mxu0 0.0
    %1764 = vmatprep.subr.mxu0 0.0
    %1765 = vmatpush1.xpose.msra.mxu0 0.0
    %1766 = vmatprep.subr.mxu0 0.0
    %1767 = vmatpush1.xpose.msra.mxu0 0.0
    %1768 = vmatprep.subr.mxu0 0.0
    %1769 = vmatpush1.xpose.msra.mxu0 0.0
    %1770 = vmatprep.subr.mxu0 0.0
    %1771 = vmatpush1.xpose.msra.mxu0 0.0
    %1772 = vmatprep.subr.mxu0 0.0
    %1773 = vmatpush1.xpose.msra.mxu0 0.0
    %1774 = vmatprep.subr.mxu0 0.0
    %1775 = vmatpush1.xpose.msra.mxu0 0.0
    %1776 = vmatprep.subr.mxu0 0.0
    %1777 = vmatpush1.xpose.msra.mxu0 0.0
    %1778 = vmatprep.subr.mxu0 0.0
    %1779 = vmatpush1.xpose.msra.mxu0 0.0
    %1780 = vmatprep.subr.mxu0 0.0
    %1781 = vmatpush1.xpose.msra.mxu0 0.0
    %1782 = vmatprep.subr.mxu0 0.0
    %1783 = vmatpush1.xpose.msra.mxu0 0.0
    %1784 = vmatprep.subr.mxu0 0.0
    %1785 = vmatpush1.xpose.msra.mxu0 0.0
    %1786 = vmatprep.subr.mxu0 0.0
    %1787 = vmatpush1.xpose.msra.mxu0 0.0
    %1788 = vmatprep.subr.mxu0 0.0
    %1789 = vmatpush1.xpose.msra.mxu0 0.0
    %1790 = vmatprep.subr.mxu0 0.0
    %1791 = vmatpush1.xpose.msra.mxu0 0.0
    %1792 = vmatprep.subr.mxu0 0.0
    %1793 = vmatpush1.xpose.msra.mxu0 0.0
    %1794 = vmatprep.subr.mxu0 0.0
    %1795 = vmatpush1.xpose.msra.mxu0 0.0
    %1796 = vmatprep.subr.mxu0 0.0
    %1797 = vmatpush1.xpose.msra.mxu0 0.0
    %1798 = vmatprep.subr.mxu0 0.0
    %1799 = vmatpush1.xpose.msra.mxu0 0.0
    %1800 = vmatprep.subr.mxu0 0.0
    %1801 = vmatpush1.xpose.msra.mxu0 0.0
    %1802 = vmatprep.subr.mxu0 0.0
    %1803 = vmatpush1.xpose.msra.mxu0 0.0
    %1804 = vmatprep.subr.mxu0 0.0
    %1805 = vmatpush1.xpose.msra.mxu0 0.0
    %1806 = vmatprep.subr.mxu0 0.0
    %1807 = vmatpush1.xpose.msra.mxu0 0.0
    %1808 = vmatprep.subr.mxu0 0.0
    %1809 = vmatpush1.xpose.msra.mxu0 0.0
    %1810 = vmatprep.subr.mxu0 0.0
    %1811 = vmatpush1.xpose.msra.mxu0 0.0
    %1812 = vmatprep.subr.mxu0 0.0
    %1813 = vmatpush1.xpose.msra.mxu0 0.0
    %1814 = vmatprep.subr.mxu0 0.0
    %1815 = vmatpush1.xpose.msra.mxu0 0.0
    %1816 = vmatprep.subr.mxu0 0.0
    %1817 = vmatpush1.xpose.msra.mxu0 0.0
    %1818 = vmatprep.mubr.f32.mxu0 0.0
    %1819 = vmatmul.mubr.f32.gmra.mrb[0].mxu0 %v1746
    %v1820 = vpop.f32.mrb[0].mxu0
    %v1821 = vadd.f32 0.0, %v1820
    %v1822 = vpop.f32.mrb[0].mxu0
    %1823 = vmatprep.mubr.f32.mxu0 0.0
    %1824 = vmatmul.mubr.f32.gmra.mrb[0].mxu0 %v1748
    %v1825 = vpop.f32.mrb[0].mxu0
    %v1826 = vadd.f32 0.0, %v1825
    %v1827 = vpop.f32.mrb[0].mxu0
    %1828 = vdwg.mxu0
    %1829 = vrot.lane.b32.xlu0 %v482, 104
    %v1830 = vpop.permute.xlu0 %1829
    %1831 = vrot.lane.b32.xlu0 %v487, 104
    %v1832 = vpop.permute.xlu0 %1831
    %1833 = vrot.lane.b32.xlu0 %v482, 72
    %v1834 = vpop.permute.xlu0 %1833
    %1835 = vrot.lane.b32.xlu0 %v487, 72
    %v1836 = vpop.permute.xlu0 %1835
    %v1837 = vsel %vm496, %v1830, 0
    %v1839 = vsel %vm496, %v1832, 0
    %v1841 = vsel %vm496, %v1834, 0
    %v1843 = vsel %vm496, %v1836, 0
    %1845 = vmatprep.subr.mxu0 0.0
    %1846 = vmatpush1.xpose.msra.mxu0 %v1841
    %1847 = vmatprep.subr.mxu0 0.0
    %1848 = vmatpush1.xpose.msra.mxu0 %v1843
    %1849 = vmatprep.subr.mxu0 0.0
    %1850 = vmatpush1.xpose.msra.mxu0 0.0
    %1851 = vmatprep.subr.mxu0 0.0
    %1852 = vmatpush1.xpose.msra.mxu0 0.0
    %1853 = vmatprep.subr.mxu0 0.0
    %1854 = vmatpush1.xpose.msra.mxu0 0.0
    %1855 = vmatprep.subr.mxu0 0.0
    %1856 = vmatpush1.xpose.msra.mxu0 0.0
    %1857 = vmatprep.subr.mxu0 0.0
    %1858 = vmatpush1.xpose.msra.mxu0 0.0
    %1859 = vmatprep.subr.mxu0 0.0
    %1860 = vmatpush1.xpose.msra.mxu0 0.0
    %1861 = vmatprep.subr.mxu0 0.0
    %1862 = vmatpush1.xpose.msra.mxu0 0.0
    %1863 = vmatprep.subr.mxu0 0.0
    %1864 = vmatpush1.xpose.msra.mxu0 0.0
    %1865 = vmatprep.subr.mxu0 0.0
    %1866 = vmatpush1.xpose.msra.mxu0 0.0
    %1867 = vmatprep.subr.mxu0 0.0
    %1868 = vmatpush1.xpose.msra.mxu0 0.0
    %1869 = vmatprep.subr.mxu0 0.0
    %1870 = vmatpush1.xpose.msra.mxu0 0.0
    %1871 = vmatprep.subr.mxu0 0.0
    %1872 = vmatpush1.xpose.msra.mxu0 0.0
    %1873 = vmatprep.subr.mxu0 0.0
    %1874 = vmatpush1.xpose.msra.mxu0 0.0
    %1875 = vmatprep.subr.mxu0 0.0
    %1876 = vmatpush1.xpose.msra.mxu0 0.0
    %1877 = vmatprep.subr.mxu0 0.0
    %1878 = vmatpush1.xpose.msra.mxu0 0.0
    %1879 = vmatprep.subr.mxu0 0.0
    %1880 = vmatpush1.xpose.msra.mxu0 0.0
    %1881 = vmatprep.subr.mxu0 0.0
    %1882 = vmatpush1.xpose.msra.mxu0 0.0
    %1883 = vmatprep.subr.mxu0 0.0
    %1884 = vmatpush1.xpose.msra.mxu0 0.0
    %1885 = vmatprep.subr.mxu0 0.0
    %1886 = vmatpush1.xpose.msra.mxu0 0.0
    %1887 = vmatprep.subr.mxu0 0.0
    %1888 = vmatpush1.xpose.msra.mxu0 0.0
    %1889 = vmatprep.subr.mxu0 0.0
    %1890 = vmatpush1.xpose.msra.mxu0 0.0
    %1891 = vmatprep.subr.mxu0 0.0
    %1892 = vmatpush1.xpose.msra.mxu0 0.0
    %1893 = vmatprep.subr.mxu0 0.0
    %1894 = vmatpush1.xpose.msra.mxu0 0.0
    %1895 = vmatprep.subr.mxu0 0.0
    %1896 = vmatpush1.xpose.msra.mxu0 0.0
    %1897 = vmatprep.subr.mxu0 0.0
    %1898 = vmatpush1.xpose.msra.mxu0 0.0
    %1899 = vmatprep.subr.mxu0 0.0
    %1900 = vmatpush1.xpose.msra.mxu0 0.0
    %1901 = vmatprep.subr.mxu0 0.0
    %1902 = vmatpush1.xpose.msra.mxu0 0.0
    %1903 = vmatprep.subr.mxu0 0.0
    %1904 = vmatpush1.xpose.msra.mxu0 0.0
    %1905 = vmatprep.subr.mxu0 0.0
    %1906 = vmatpush1.xpose.msra.mxu0 0.0
    %1907 = vmatprep.subr.mxu0 0.0
    %1908 = vmatpush1.xpose.msra.mxu0 0.0
    %1909 = vmatprep.mubr.f32.mxu0 0.0
    %1910 = vmatmul.mubr.f32.gmra.mrb[0].mxu0 %v1837
    %v1911 = vpop.f32.mrb[0].mxu0
    %v1912 = vadd.f32 0.0, %v1911
    %v1913 = vpop.f32.mrb[0].mxu0
    %1914 = vmatprep.mubr.f32.mxu0 0.0
    %1915 = vmatmul.mubr.f32.gmra.mrb[0].mxu0 %v1839
    %v1916 = vpop.f32.mrb[0].mxu0
    %v1917 = vadd.f32 0.0, %v1916
    %v1918 = vpop.f32.mrb[0].mxu0
    %1919 = vdwg.mxu0
    %v1920 = vmul.f32 %v1821, 0.35355338
    %v1921 = vmul.f32 %v1826, 0.35355338
    %v1922 = vmul.f32 %v1912, 0.35355338
    %v1923 = vmul.f32 %v1917, 0.35355338
    %v1924 = vadd.f32 %v1920, %v678
    %v1925 = vadd.f32 %v1921, %v678
    %v1926 = vadd.f32 %v1922, %v682
    %v1927 = vadd.f32 %v1923, %v682
    %v1928 = vsel %vm689, %v1924, -inf
    %1929 = vmax.xlane.f32.xlu0 %v1928
    %v1930 = vpop.xlane.xlu0 %1929
    %v1931 = vsel %vm689, %v1925, -inf
    %1932 = vmax.xlane.f32.xlu0 %v1931
    %v1933 = vpop.xlane.xlu0 %1932
    %v1934 = vsel %vm689, %v1926, -inf
    %1935 = vmax.xlane.f32.xlu0 %v1934
    %v1936 = vpop.xlane.xlu0 %1935
    %v1937 = vsel %vm689, %v1927, -inf
    %1938 = vmax.xlane.f32.xlu0 %v1937
    %v1939 = vpop.xlane.xlu0 %1938
    %v1940 = vsub.f32 %v1924, %v1930
    %v1941 = vsub.f32 %v1925, %v1933
    %v1942 = vsub.f32 %v1926, %v1936
    %v1943 = vsub.f32 %v1927, %v1939
    %v1944 = vmul.f32 %v1940, 1.442695
    %v1945 = vpow.pop %v1944
    %v1946 = vmul.f32 %v1941, 1.442695
    %v1947 = vpow.pop %v1946
    %v1948 = vmul.f32 %v1942, 1.442695
    %v1949 = vpow.pop %v1948
    %v1950 = vmul.f32 %v1943, 1.442695
    %v1951 = vpow.pop %v1950
    %v1952 = vsel %vm689, %v1945, 0.0
    %1953 = vadd.xlane.f32.xlu0 %v1952
    %v1954 = vpop.xlane.xlu0 %1953
    %v1955 = vsel %vm689, %v1947, 0.0
    %1956 = vadd.xlane.f32.xlu0 %v1955
    %v1957 = vpop.xlane.xlu0 %1956
    %v1958 = vsel %vm689, %v1949, 0.0
    %1959 = vadd.xlane.f32.xlu0 %v1958
    %v1960 = vpop.xlane.xlu0 %1959
    %v1961 = vsel %vm689, %v1951, 0.0
    %1962 = vadd.xlane.f32.xlu0 %v1961
    %v1963 = vpop.xlane.xlu0 %1962
    %v1964 = vrcp.pop %v1954
    %v1965 = vrcp.pop %v1957
    %v1966 = vrcp.pop %v1960
    %v1967 = vrcp.pop %v1963
    %v1968 = vmul.f32 %v1945, %v1964
    %v1969 = vmul.f32 %v1947, %v1965
    %v1970 = vmul.f32 %v1949, %v1966
    %v1971 = vmul.f32 %v1951, %v1967
    %s1972 = scalar_lea.vmem %s61, 96
    %1973 = vst.msk [vmem:[%s1972] sm:$0xff] %vm689, %v1968
    %1974 = vst.msk [vmem:[%s1972 + $0x8] sm:$0xff] %vm689, %v1969
    %1975 = vst.msk [vmem:[%s1972 + $0x10] sm:$0xff] %vm689, %v1970
    %1976 = vst.msk [vmem:[%s1972 + $0x18] sm:$0xff] %vm689, %v1971
    %1977 = vrot.lane.b32.xlu0 %v472, 40
    %v1978 = vpop.permute.xlu0 %1977
    %1979 = vrot.lane.b32.xlu0 %v477, 40
    %v1980 = vpop.permute.xlu0 %1979
    %v1984 = vsel %vm689, %v1968, 0
    %v1987 = vsel %vm689, %v1969, 0
    %1989 = vmatprep.subr.mxu0 0.0
    %1990 = vmatpush1.msra.mxu0 %v1978
    %1991 = vmatprep.subr.mxu0 0.0
    %1992 = vmatpush1.msra.mxu0 %v1980
    %1993 = vmatprep.subr.mxu0 0.0
    %1994 = vmatpush1.msra.mxu0 0.0
    %1995 = vmatprep.subr.mxu0 0.0
    %1996 = vmatpush1.msra.mxu0 0.0
    %1997 = vmatprep.subr.mxu0 0.0
    %1998 = vmatpush1.msra.mxu0 0.0
    %1999 = vmatprep.subr.mxu0 0.0
    %2000 = vmatpush1.msra.mxu0 0.0
    %2001 = vmatprep.subr.mxu0 0.0
    %2002 = vmatpush1.msra.mxu0 0.0
    %2003 = vmatprep.subr.mxu0 0.0
    %2004 = vmatpush1.msra.mxu0 0.0
    %2005 = vmatprep.subr.mxu0 0.0
    %2006 = vmatpush1.msra.mxu0 0.0
    %2007 = vmatprep.subr.mxu0 0.0
    %2008 = vmatpush1.msra.mxu0 0.0
    %2009 = vmatprep.subr.mxu0 0.0
    %2010 = vmatpush1.msra.mxu0 0.0
    %2011 = vmatprep.subr.mxu0 0.0
    %2012 = vmatpush1.msra.mxu0 0.0
    %2013 = vmatprep.subr.mxu0 0.0
    %2014 = vmatpush1.msra.mxu0 0.0
    %2015 = vmatprep.subr.mxu0 0.0
    %2016 = vmatpush1.msra.mxu0 0.0
    %2017 = vmatprep.subr.mxu0 0.0
    %2018 = vmatpush1.msra.mxu0 0.0
    %2019 = vmatprep.subr.mxu0 0.0
    %2020 = vmatpush1.msra.mxu0 0.0
    %2021 = vmatprep.subr.mxu0 0.0
    %2022 = vmatpush1.msra.mxu0 0.0
    %2023 = vmatprep.subr.mxu0 0.0
    %2024 = vmatpush1.msra.mxu0 0.0
    %2025 = vmatprep.subr.mxu0 0.0
    %2026 = vmatpush1.msra.mxu0 0.0
    %2027 = vmatprep.subr.mxu0 0.0
    %2028 = vmatpush1.msra.mxu0 0.0
    %2029 = vmatprep.subr.mxu0 0.0
    %2030 = vmatpush1.msra.mxu0 0.0
    %2031 = vmatprep.subr.mxu0 0.0
    %2032 = vmatpush1.msra.mxu0 0.0
    %2033 = vmatprep.subr.mxu0 0.0
    %2034 = vmatpush1.msra.mxu0 0.0
    %2035 = vmatprep.subr.mxu0 0.0
    %2036 = vmatpush1.msra.mxu0 0.0
    %2037 = vmatprep.subr.mxu0 0.0
    %2038 = vmatpush1.msra.mxu0 0.0
    %2039 = vmatprep.subr.mxu0 0.0
    %2040 = vmatpush1.msra.mxu0 0.0
    %2041 = vmatprep.subr.mxu0 0.0
    %2042 = vmatpush1.msra.mxu0 0.0
    %2043 = vmatprep.subr.mxu0 0.0
    %2044 = vmatpush1.msra.mxu0 0.0
    %2045 = vmatprep.subr.mxu0 0.0
    %2046 = vmatpush1.msra.mxu0 0.0
    %2047 = vmatprep.subr.mxu0 0.0
    %2048 = vmatpush1.msra.mxu0 0.0
    %2049 = vmatprep.subr.mxu0 0.0
    %2050 = vmatpush1.msra.mxu0 0.0
    %2051 = vmatprep.subr.mxu0 0.0
    %2052 = vmatpush1.msra.mxu0 0.0
    %2053 = vmatprep.mubr.f32.mxu0 0.0
    %2054 = vmatmul.mubr.f32.gmra.mrb[0].mxu0 %v1984
    %v2055 = vpop.f32.mrb[0].mxu0
    %v2056 = vadd.f32 0.0, %v2055
    %v2057 = vpop.f32.mrb[0].mxu0
    %2058 = vmatprep.mubr.f32.mxu0 0.0
    %2059 = vmatmul.mubr.f32.gmra.mrb[0].mxu0 %v1987
    %v2060 = vpop.f32.mrb[0].mxu0
    %v2061 = vadd.f32 0.0, %v2060
    %v2062 = vpop.f32.mrb[0].mxu0
    %2063 = vdwg.mxu0
    %2064 = vrot.lane.b32.xlu0 %v482, 40
    %v2065 = vpop.permute.xlu0 %2064
    %2066 = vrot.lane.b32.xlu0 %v487, 40
    %v2067 = vpop.permute.xlu0 %2066
    %v2071 = vsel %vm689, %v1970, 0
    %v2074 = vsel %vm689, %v1971, 0
    %2076 = vmatprep.subr.mxu0 0.0
    %2077 = vmatpush1.msra.mxu0 %v2065
    %2078 = vmatprep.subr.mxu0 0.0
    %2079 = vmatpush1.msra.mxu0 %v2067
    %2080 = vmatprep.subr.mxu0 0.0
    %2081 = vmatpush1.msra.mxu0 0.0
    %2082 = vmatprep.subr.mxu0 0.0
    %2083 = vmatpush1.msra.mxu0 0.0
    %2084 = vmatprep.subr.mxu0 0.0
    %2085 = vmatpush1.msra.mxu0 0.0
    %2086 = vmatprep.subr.mxu0 0.0
    %2087 = vmatpush1.msra.mxu0 0.0
    %2088 = vmatprep.subr.mxu0 0.0
    %2089 = vmatpush1.msra.mxu0 0.0
    %2090 = vmatprep.subr.mxu0 0.0
    %2091 = vmatpush1.msra.mxu0 0.0
    %2092 = vmatprep.subr.mxu0 0.0
    %2093 = vmatpush1.msra.mxu0 0.0
    %2094 = vmatprep.subr.mxu0 0.0
    %2095 = vmatpush1.msra.mxu0 0.0
    %2096 = vmatprep.subr.mxu0 0.0
    %2097 = vmatpush1.msra.mxu0 0.0
    %2098 = vmatprep.subr.mxu0 0.0
    %2099 = vmatpush1.msra.mxu0 0.0
    %2100 = vmatprep.subr.mxu0 0.0
    %2101 = vmatpush1.msra.mxu0 0.0
    %2102 = vmatprep.subr.mxu0 0.0
    %2103 = vmatpush1.msra.mxu0 0.0
    %2104 = vmatprep.subr.mxu0 0.0
    %2105 = vmatpush1.msra.mxu0 0.0
    %2106 = vmatprep.subr.mxu0 0.0
    %2107 = vmatpush1.msra.mxu0 0.0
    %2108 = vmatprep.subr.mxu0 0.0
    %2109 = vmatpush1.msra.mxu0 0.0
    %2110 = vmatprep.subr.mxu0 0.0
    %2111 = vmatpush1.msra.mxu0 0.0
    %2112 = vmatprep.subr.mxu0 0.0
    %2113 = vmatpush1.msra.mxu0 0.0
    %2114 = vmatprep.subr.mxu0 0.0
    %2115 = vmatpush1.msra.mxu0 0.0
    %2116 = vmatprep.subr.mxu0 0.0
    %2117 = vmatpush1.msra.mxu0 0.0
    %2118 = vmatprep.subr.mxu0 0.0
    %2119 = vmatpush1.msra.mxu0 0.0
    %2120 = vmatprep.subr.mxu0 0.0
    %2121 = vmatpush1.msra.mxu0 0.0
    %2122 = vmatprep.subr.mxu0 0.0
    %2123 = vmatpush1.msra.mxu0 0.0
    %2124 = vmatprep.subr.mxu0 0.0
    %2125 = vmatpush1.msra.mxu0 0.0
    %2126 = vmatprep.subr.mxu0 0.0
    %2127 = vmatpush1.msra.mxu0 0.0
    %2128 = vmatprep.subr.mxu0 0.0
    %2129 = vmatpush1.msra.mxu0 0.0
    %2130 = vmatprep.subr.mxu0 0.0
    %2131 = vmatpush1.msra.mxu0 0.0
    %2132 = vmatprep.subr.mxu0 0.0
    %2133 = vmatpush1.msra.mxu0 0.0
    %2134 = vmatprep.subr.mxu0 0.0
    %2135 = vmatpush1.msra.mxu0 0.0
    %2136 = vmatprep.subr.mxu0 0.0
    %2137 = vmatpush1.msra.mxu0 0.0
    %2138 = vmatprep.subr.mxu0 0.0
    %2139 = vmatpush1.msra.mxu0 0.0
    %2140 = vmatprep.mubr.f32.mxu0 0.0
    %2141 = vmatmul.mubr.f32.gmra.mrb[0].mxu0 %v2071
    %v2142 = vpop.f32.mrb[0].mxu0
    %v2143 = vadd.f32 0.0, %v2142
    %v2144 = vpop.f32.mrb[0].mxu0
    %2145 = vmatprep.mubr.f32.mxu0 0.0
    %2146 = vmatmul.mubr.f32.gmra.mrb[0].mxu0 %v2074
    %v2147 = vpop.f32.mrb[0].mxu0
    %v2148 = vadd.f32 0.0, %v2147
    %v2149 = vpop.f32.mrb[0].mxu0
    %2150 = vdwg.mxu0
    %2155 = vrot.lane.b32.xlu0 %v1230, 8
    %v2156 = vpop.permute.xlu0 %2155
    %2157 = vrot.lane.b32.xlu0 %v1235, 8
    %v2158 = vpop.permute.xlu0 %2157
    %2159 = vrot.lane.b32.xlu0 %v1317, 8
    %v2160 = vpop.permute.xlu0 %2159
    %2161 = vrot.lane.b32.xlu0 %v1322, 8
    %v2162 = vpop.permute.xlu0 %2161
    %2171 = vrot.lane.b32.xlu0 %v1643, 16
    %v2172 = vpop.permute.xlu0 %2171
    %2173 = vrot.lane.b32.xlu0 %v1648, 16
    %v2174 = vpop.permute.xlu0 %2173
    %2175 = vrot.lane.b32.xlu0 %v1730, 16
    %v2176 = vpop.permute.xlu0 %2175
    %2177 = vrot.lane.b32.xlu0 %v1735, 16
    %v2178 = vpop.permute.xlu0 %2177
    %2187 = vrot.lane.b32.xlu0 %v2056, 24
    %v2188 = vpop.permute.xlu0 %2187
    %2189 = vrot.lane.b32.xlu0 %v2061, 24
    %v2190 = vpop.permute.xlu0 %2189
    %2191 = vrot.lane.b32.xlu0 %v2143, 24
    %v2192 = vpop.permute.xlu0 %2191
    %2193 = vrot.lane.b32.xlu0 %v2148, 24
    %v2194 = vpop.permute.xlu0 %2193
    %v2199 = vsel %vm496, %v817, %v2156
    %v2200 = vsel %vm496, %v822, %v2158
    %v2201 = vsel %vm496, %v904, %v2160
    %v2202 = vsel %vm496, %v909, %v2162
    %v2203 = vsel %vm689, %v2199, %v2172
    %v2204 = vsel %vm689, %v2200, %v2174
    %v2205 = vsel %vm689, %v2201, %v2176
    %v2206 = vsel %vm689, %v2202, %v2178
    %vm2207 = vcmask 195584
    %v2208 = vsel %vm2207, %v2203, %v2188
    %v2209 = vsel %vm2207, %v2204, %v2190
    %v2210 = vsel %vm2207, %v2205, %v2192
    %v2211 = vsel %vm2207, %v2206, %v2194
    %v2212 = vld [vmem:[%s27] sm:$0xff]
    %v2213 = vld [vmem:[%s27 + $0x8] sm:$0xff]
    %v2214 = vld [vmem:[%s27 + $0x10] sm:$0xff]
    %v2215 = vld [vmem:[%s27 + $0x18] sm:$0xff]
    %v2216 = vld [vmem:[%s29] sm:$0x1]
    %v2218 = vlaneseq
    %v2219 = vshrl.u32 %v2218, 7
    %v2220 = vsub.s32 0, %v2219
    %v2221 = vrot.slane %v2216, %v2220
    %v2224 = vsel %vm132, %v2208, 0
    %v2227 = vsel %vm132, %v2209, 0
    %v2230 = vsel %vm132, %v2210, 0
    %v2233 = vsel %vm132, %v2211, 0
    %2235 = vmatprep.subr.mxu0 0.0
    %2236 = vmatpush1.msra.mxu0 %v2212
    %2237 = vmatprep.subr.mxu0 0.0
    %2238 = vmatpush1.msra.mxu0 %v2213
    %2239 = vmatprep.subr.mxu0 0.0
    %2240 = vmatpush1.msra.mxu0 %v2214
    %2241 = vmatprep.subr.mxu0 0.0
    %2242 = vmatpush1.msra.mxu0 %v2215
    %2243 = vmatprep.subr.mxu0 0.0
    %2244 = vmatpush1.msra.mxu0 0.0
    %2245 = vmatprep.subr.mxu0 0.0
    %2246 = vmatpush1.msra.mxu0 0.0
    %2247 = vmatprep.subr.mxu0 0.0
    %2248 = vmatpush1.msra.mxu0 0.0
    %2249 = vmatprep.subr.mxu0 0.0
    %2250 = vmatpush1.msra.mxu0 0.0
    %2251 = vmatprep.subr.mxu0 0.0
    %2252 = vmatpush1.msra.mxu0 0.0
    %2253 = vmatprep.subr.mxu0 0.0
    %2254 = vmatpush1.msra.mxu0 0.0
    %2255 = vmatprep.subr.mxu0 0.0
    %2256 = vmatpush1.msra.mxu0 0.0
    %2257 = vmatprep.subr.mxu0 0.0
    %2258 = vmatpush1.msra.mxu0 0.0
    %2259 = vmatprep.subr.mxu0 0.0
    %2260 = vmatpush1.msra.mxu0 0.0
    %2261 = vmatprep.subr.mxu0 0.0
    %2262 = vmatpush1.msra.mxu0 0.0
    %2263 = vmatprep.subr.mxu0 0.0
    %2264 = vmatpush1.msra.mxu0 0.0
    %2265 = vmatprep.subr.mxu0 0.0
    %2266 = vmatpush1.msra.mxu0 0.0
    %2267 = vmatprep.subr.mxu0 0.0
    %2268 = vmatpush1.msra.mxu0 0.0
    %2269 = vmatprep.subr.mxu0 0.0
    %2270 = vmatpush1.msra.mxu0 0.0
    %2271 = vmatprep.subr.mxu0 0.0
    %2272 = vmatpush1.msra.mxu0 0.0
    %2273 = vmatprep.subr.mxu0 0.0
    %2274 = vmatpush1.msra.mxu0 0.0
    %2275 = vmatprep.subr.mxu0 0.0
    %2276 = vmatpush1.msra.mxu0 0.0
    %2277 = vmatprep.subr.mxu0 0.0
    %2278 = vmatpush1.msra.mxu0 0.0
    %2279 = vmatprep.subr.mxu0 0.0
    %2280 = vmatpush1.msra.mxu0 0.0
    %2281 = vmatprep.subr.mxu0 0.0
    %2282 = vmatpush1.msra.mxu0 0.0
    %2283 = vmatprep.subr.mxu0 0.0
    %2284 = vmatpush1.msra.mxu0 0.0
    %2285 = vmatprep.subr.mxu0 0.0
    %2286 = vmatpush1.msra.mxu0 0.0
    %2287 = vmatprep.subr.mxu0 0.0
    %2288 = vmatpush1.msra.mxu0 0.0
    %2289 = vmatprep.subr.mxu0 0.0
    %2290 = vmatpush1.msra.mxu0 0.0
    %2291 = vmatprep.subr.mxu0 0.0
    %2292 = vmatpush1.msra.mxu0 0.0
    %2293 = vmatprep.subr.mxu0 0.0
    %2294 = vmatpush1.msra.mxu0 0.0
    %2295 = vmatprep.subr.mxu0 0.0
    %2296 = vmatpush1.msra.mxu0 0.0
    %2297 = vmatprep.subr.mxu0 0.0
    %2298 = vmatpush1.msra.mxu0 0.0
    %2299 = vmatprep.mubr.f32.mxu0 0.0
    %2300 = vmatmul.mubr.f32.gmra.mrb[0].mxu0 %v2224
    %v2301 = vpop.f32.mrb[0].mxu0
    %v2302 = vadd.f32 %v2221, %v2301
    %v2303 = vpop.f32.mrb[0].mxu0
    %2304 = vmatprep.mubr.f32.mxu0 0.0
    %2305 = vmatmul.mubr.f32.gmra.mrb[0].mxu0 %v2227
    %v2306 = vpop.f32.mrb[0].mxu0
    %v2307 = vadd.f32 %v2221, %v2306
    %v2308 = vpop.f32.mrb[0].mxu0
    %2309 = vmatprep.mubr.f32.mxu0 0.0
    %2310 = vmatmul.mubr.f32.gmra.mrb[0].mxu0 %v2230
    %v2311 = vpop.f32.mrb[0].mxu0
    %v2312 = vadd.f32 %v2221, %v2311
    %v2313 = vpop.f32.mrb[0].mxu0
    %2314 = vmatprep.mubr.f32.mxu0 0.0
    %2315 = vmatmul.mubr.f32.gmra.mrb[0].mxu0 %v2233
    %v2316 = vpop.f32.mrb[0].mxu0
    %v2317 = vadd.f32 %v2221, %v2316
    %v2318 = vpop.f32.mrb[0].mxu0
    %2319 = vdwg.mxu0
    %v2320 = vadd.f32 %v304, %v2302
    %v2321 = vadd.f32 %v305, %v2307
    %v2322 = vadd.f32 %v306, %v2312
    %v2323 = vadd.f32 %v307, %v2317
    %v2324 = vld [vmem:[%s31] sm:$0x1]
    %v2325 = vld [vmem:[%s33] sm:$0x1]
    %v2326 = vsel %vm132, %v2320, 0.0
    %2327 = vadd.xlane.f32.xlu0 %v2326
    %v2328 = vpop.xlane.xlu0 %2327
    %v2329 = vsel %vm132, %v2321, 0.0
    %2330 = vadd.xlane.f32.xlu0 %v2329
    %v2331 = vpop.xlane.xlu0 %2330
    %v2332 = vsel %vm132, %v2322, 0.0
    %2333 = vadd.xlane.f32.xlu0 %v2332
    %v2334 = vpop.xlane.xlu0 %2333
    %v2335 = vsel %vm132, %v2323, 0.0
    %2336 = vadd.xlane.f32.xlu0 %v2335
    %v2337 = vpop.xlane.xlu0 %2336
    %v2338 = vmul.f32 %v2328, %v139
    %v2339 = vmul.f32 %v2331, %v139
    %v2340 = vmul.f32 %v2334, %v139
    %v2341 = vmul.f32 %v2337, %v139
    %v2342 = vsub.f32 %v2320, %v2338
    %v2343 = vsub.f32 %v2321, %v2339
    %v2344 = vsub.f32 %v2322, %v2340
    %v2345 = vsub.f32 %v2323, %v2341
    %v2346 = vmul.f32 %v2342, %v2342
    %v2347 = vmul.f32 %v2343, %v2343
    %v2348 = vmul.f32 %v2344, %v2344
    %v2349 = vmul.f32 %v2345, %v2345
    %v2350 = vsel %vm132, %v2346, 0.0
    %2351 = vadd.xlane.f32.xlu0 %v2350
    %v2352 = vpop.xlane.xlu0 %2351
    %v2353 = vsel %vm132, %v2347, 0.0
    %2354 = vadd.xlane.f32.xlu0 %v2353
    %v2355 = vpop.xlane.xlu0 %2354
    %v2356 = vsel %vm132, %v2348, 0.0
    %2357 = vadd.xlane.f32.xlu0 %v2356
    %v2358 = vpop.xlane.xlu0 %2357
    %v2359 = vsel %vm132, %v2349, 0.0
    %2360 = vadd.xlane.f32.xlu0 %v2359
    %v2361 = vpop.xlane.xlu0 %2360
    %v2362 = vmul.f32 %v2352, %v139
    %v2363 = vmul.f32 %v2355, %v139
    %v2364 = vmul.f32 %v2358, %v139
    %v2365 = vmul.f32 %v2361, %v139
    %v2366 = vadd.f32 %v2362, 1e-12
    %v2367 = vadd.f32 %v2363, 1e-12
    %v2368 = vadd.f32 %v2364, 1e-12
    %v2369 = vadd.f32 %v2365, 1e-12
    %v2370 = vrsqrt.pop %v2366
    %v2371 = vrsqrt.pop %v2367
    %v2372 = vrsqrt.pop %v2368
    %v2373 = vrsqrt.pop %v2369
    %v2374 = vmul.f32 %v2342, %v2370
    %v2375 = vmul.f32 %v2343, %v2371
    %v2376 = vmul.f32 %v2344, %v2372
    %v2377 = vmul.f32 %v2345, %v2373
    %v2379 = vlaneseq
    %v2380 = vshrl.u32 %v2379, 7
    %v2381 = vsub.s32 0, %v2380
    %v2382 = vrot.slane %v2324, %v2381
    %v2384 = vmul.f32 %v2374, %v2382
    %v2385 = vmul.f32 %v2375, %v2382
    %v2386 = vmul.f32 %v2376, %v2382
    %v2387 = vmul.f32 %v2377, %v2382
    %v2389 = vlaneseq
    %v2390 = vshrl.u32 %v2389, 7
    %v2391 = vsub.s32 0, %v2390
    %v2392 = vrot.slane %v2325, %v2391
    %v2394 = vadd.f32 %v2384, %v2392
    %v2395 = vadd.f32 %v2385, %v2392
    %v2396 = vadd.f32 %v2386, %v2392
    %v2397 = vadd.f32 %v2387, %v2392
    %v2398 = vld [vmem:[%s35] sm:$0xff]
    %v2399 = vld [vmem:[%s35 + $0x8] sm:$0xff]
    %v2400 = vld [vmem:[%s35 + $0x10] sm:$0xff]
    %v2401 = vld [vmem:[%s35 + $0x18] sm:$0xff]
    %v2402 = vld [vmem:[%s37] sm:$0x1]
    %v2404 = vlaneseq
    %v2405 = vshrl.u32 %v2404, 7
    %v2406 = vsub.s32 0, %v2405
    %v2407 = vrot.slane %v2402, %v2406
    %v2410 = vsel %vm132, %v2394, 0
    %v2413 = vsel %vm132, %v2395, 0
    %v2416 = vsel %vm132, %v2396, 0
    %v2419 = vsel %vm132, %v2397, 0
    %2421 = vmatprep.subr.mxu0 0.0
    %2422 = vmatpush1.msra.mxu0 %v2398
    %2423 = vmatprep.subr.mxu0 0.0
    %2424 = vmatpush1.msra.mxu0 %v2399
    %2425 = vmatprep.subr.mxu0 0.0
    %2426 = vmatpush1.msra.mxu0 %v2400
    %2427 = vmatprep.subr.mxu0 0.0
    %2428 = vmatpush1.msra.mxu0 %v2401
    %2429 = vmatprep.subr.mxu0 0.0
    %2430 = vmatpush1.msra.mxu0 0.0
    %2431 = vmatprep.subr.mxu0 0.0
    %2432 = vmatpush1.msra.mxu0 0.0
    %2433 = vmatprep.subr.mxu0 0.0
    %2434 = vmatpush1.msra.mxu0 0.0
    %2435 = vmatprep.subr.mxu0 0.0
    %2436 = vmatpush1.msra.mxu0 0.0
    %2437 = vmatprep.subr.mxu0 0.0
    %2438 = vmatpush1.msra.mxu0 0.0
    %2439 = vmatprep.subr.mxu0 0.0
    %2440 = vmatpush1.msra.mxu0 0.0
    %2441 = vmatprep.subr.mxu0 0.0
    %2442 = vmatpush1.msra.mxu0 0.0
    %2443 = vmatprep.subr.mxu0 0.0
    %2444 = vmatpush1.msra.mxu0 0.0
    %2445 = vmatprep.subr.mxu0 0.0
    %2446 = vmatpush1.msra.mxu0 0.0
    %2447 = vmatprep.subr.mxu0 0.0
    %2448 = vmatpush1.msra.mxu0 0.0
    %2449 = vmatprep.subr.mxu0 0.0
    %2450 = vmatpush1.msra.mxu0 0.0
    %2451 = vmatprep.subr.mxu0 0.0
    %2452 = vmatpush1.msra.mxu0 0.0
    %2453 = vmatprep.subr.mxu0 0.0
    %2454 = vmatpush1.msra.mxu0 0.0
    %2455 = vmatprep.subr.mxu0 0.0
    %2456 = vmatpush1.msra.mxu0 0.0
    %2457 = vmatprep.subr.mxu0 0.0
    %2458 = vmatpush1.msra.mxu0 0.0
    %2459 = vmatprep.subr.mxu0 0.0
    %2460 = vmatpush1.msra.mxu0 0.0
    %2461 = vmatprep.subr.mxu0 0.0
    %2462 = vmatpush1.msra.mxu0 0.0
    %2463 = vmatprep.subr.mxu0 0.0
    %2464 = vmatpush1.msra.mxu0 0.0
    %2465 = vmatprep.subr.mxu0 0.0
    %2466 = vmatpush1.msra.mxu0 0.0
    %2467 = vmatprep.subr.mxu0 0.0
    %2468 = vmatpush1.msra.mxu0 0.0
    %2469 = vmatprep.subr.mxu0 0.0
    %2470 = vmatpush1.msra.mxu0 0.0
    %2471 = vmatprep.subr.mxu0 0.0
    %2472 = vmatpush1.msra.mxu0 0.0
    %2473 = vmatprep.subr.mxu0 0.0
    %2474 = vmatpush1.msra.mxu0 0.0
    %2475 = vmatprep.subr.mxu0 0.0
    %2476 = vmatpush1.msra.mxu0 0.0
    %2477 = vmatprep.subr.mxu0 0.0
    %2478 = vmatpush1.msra.mxu0 0.0
    %2479 = vmatprep.subr.mxu0 0.0
    %2480 = vmatpush1.msra.mxu0 0.0
    %2481 = vmatprep.subr.mxu0 0.0
    %2482 = vmatpush1.msra.mxu0 0.0
    %2483 = vmatprep.subr.mxu0 0.0
    %2484 = vmatpush1.msra.mxu0 0.0
    %2485 = vmatprep.mubr.f32.mxu0 0.0
    %2486 = vmatmul.mubr.f32.gmra.mrb[0].mxu0 %v2410
    %v2487 = vpop.f32.mrb[0].mxu0
    %v2488 = vadd.f32 %v2407, %v2487
    %v2489 = vpop.f32.mrb[0].mxu0
    %2490 = vmatprep.mubr.f32.mxu0 0.0
    %2491 = vmatmul.mubr.f32.gmra.mrb[0].mxu0 %v2413
    %v2492 = vpop.f32.mrb[0].mxu0
    %v2493 = vadd.f32 %v2407, %v2492
    %v2494 = vpop.f32.mrb[0].mxu0
    %2495 = vmatprep.mubr.f32.mxu0 0.0
    %2496 = vmatmul.mubr.f32.gmra.mrb[0].mxu0 %v2416
    %v2497 = vpop.f32.mrb[0].mxu0
    %v2498 = vadd.f32 %v2407, %v2497
    %v2499 = vpop.f32.mrb[0].mxu0
    %2500 = vmatprep.mubr.f32.mxu0 0.0
    %2501 = vmatmul.mubr.f32.gmra.mrb[0].mxu0 %v2419
    %v2502 = vpop.f32.mrb[0].mxu0
    %v2503 = vadd.f32 %v2407, %v2502
    %v2504 = vpop.f32.mrb[0].mxu0
    %2505 = vdwg.mxu0
    %v2506 = vmul.f32 %v2488, 0.5
    %v2507 = vmul.f32 %v2493, 0.5
    %v2508 = vmul.f32 %v2498, 0.5
    %v2509 = vmul.f32 %v2503, 0.5
    %v2510 = vmul.f32 %v2488, 0.044715
    %v2511 = vmul.f32 %v2493, 0.044715
    %v2512 = vmul.f32 %v2498, 0.044715
    %v2513 = vmul.f32 %v2503, 0.044715
    %v2514 = vmul.f32 %v2510, %v2488
    %v2515 = vmul.f32 %v2511, %v2493
    %v2516 = vmul.f32 %v2512, %v2498
    %v2517 = vmul.f32 %v2513, %v2503
    %v2518 = vmul.f32 %v2514, %v2488
    %v2519 = vmul.f32 %v2515, %v2493
    %v2520 = vmul.f32 %v2516, %v2498
    %v2521 = vmul.f32 %v2517, %v2503
    %v2522 = vadd.f32 %v2488, %v2518
    %v2523 = vadd.f32 %v2493, %v2519
    %v2524 = vadd.f32 %v2498, %v2520
    %v2525 = vadd.f32 %v2503, %v2521
    %v2526 = vmul.f32 %v2522, 0.7978846
    %v2527 = vmul.f32 %v2523, 0.7978846
    %v2528 = vmul.f32 %v2524, 0.7978846
    %v2529 = vmul.f32 %v2525, 0.7978846
    %v2530 = vtanh.pop %v2526
    %v2531 = vtanh.pop %v2527
    %v2532 = vtanh.pop %v2528
    %v2533 = vtanh.pop %v2529
    %v2534 = vadd.f32 %v2530, 1.0
    %v2535 = vadd.f32 %v2531, 1.0
    %v2536 = vadd.f32 %v2532, 1.0
    %v2537 = vadd.f32 %v2533, 1.0
    %v2538 = vmul.f32 %v2506, %v2534
    %v2539 = vmul.f32 %v2507, %v2535
    %v2540 = vmul.f32 %v2508, %v2536
    %v2541 = vmul.f32 %v2509, %v2537
    %v2542 = vld [vmem:[%s39] sm:$0xff]
    %v2543 = vld [vmem:[%s39 + $0x8] sm:$0xff]
    %v2544 = vld [vmem:[%s39 + $0x10] sm:$0xff]
    %v2545 = vld [vmem:[%s39 + $0x18] sm:$0xff]
    %v2546 = vld [vmem:[%s39 + $0x20] sm:$0xff]
    %v2547 = vld [vmem:[%s39 + $0x28] sm:$0xff]
    %v2548 = vld [vmem:[%s39 + $0x30] sm:$0xff]
    %v2549 = vld [vmem:[%s39 + $0x38] sm:$0xff]
    %v2550 = vld [vmem:[%s41] sm:$0x1]
    %v2552 = vlaneseq
    %v2553 = vshrl.u32 %v2552, 7
    %v2554 = vsub.s32 0, %v2553
    %v2555 = vrot.slane %v2550, %v2554
    %v2558 = vsel %vm209, %v2538, 0
    %v2561 = vsel %vm209, %v2539, 0
    %v2564 = vsel %vm209, %v2540, 0
    %v2567 = vsel %vm209, %v2541, 0
    %2569 = vmatprep.subr.mxu0 0.0
    %2570 = vmatpush1.msra.mxu0 %v2542
    %2571 = vmatprep.subr.mxu0 0.0
    %2572 = vmatpush1.msra.mxu0 %v2543
    %2573 = vmatprep.subr.mxu0 0.0
    %2574 = vmatpush1.msra.mxu0 %v2544
    %2575 = vmatprep.subr.mxu0 0.0
    %2576 = vmatpush1.msra.mxu0 %v2545
    %2577 = vmatprep.subr.mxu0 0.0
    %2578 = vmatpush1.msra.mxu0 %v2546
    %2579 = vmatprep.subr.mxu0 0.0
    %2580 = vmatpush1.msra.mxu0 %v2547
    %2581 = vmatprep.subr.mxu0 0.0
    %2582 = vmatpush1.msra.mxu0 %v2548
    %2583 = vmatprep.subr.mxu0 0.0
    %2584 = vmatpush1.msra.mxu0 %v2549
    %2585 = vmatprep.subr.mxu0 0.0
    %2586 = vmatpush1.msra.mxu0 0.0
    %2587 = vmatprep.subr.mxu0 0.0
    %2588 = vmatpush1.msra.mxu0 0.0
    %2589 = vmatprep.subr.mxu0 0.0
    %2590 = vmatpush1.msra.mxu0 0.0
    %2591 = vmatprep.subr.mxu0 0.0
    %2592 = vmatpush1.msra.mxu0 0.0
    %2593 = vmatprep.subr.mxu0 0.0
    %2594 = vmatpush1.msra.mxu0 0.0
    %2595 = vmatprep.subr.mxu0 0.0
    %2596 = vmatpush1.msra.mxu0 0.0
    %2597 = vmatprep.subr.mxu0 0.0
    %2598 = vmatpush1.msra.mxu0 0.0
    %2599 = vmatprep.subr.mxu0 0.0
    %2600 = vmatpush1.msra.mxu0 0.0
    %2601 = vmatprep.subr.mxu0 0.0
    %2602 = vmatpush1.msra.mxu0 0.0
    %2603 = vmatprep.subr.mxu0 0.0
    %2604 = vmatpush1.msra.mxu0 0.0
    %2605 = vmatprep.subr.mxu0 0.0
    %2606 = vmatpush1.msra.mxu0 0.0
    %2607 = vmatprep.subr.mxu0 0.0
    %2608 = vmatpush1.msra.mxu0 0.0
    %2609 = vmatprep.subr.mxu0 0.0
    %2610 = vmatpush1.msra.mxu0 0.0
    %2611 = vmatprep.subr.mxu0 0.0
    %2612 = vmatpush1.msra.mxu0 0.0
    %2613 = vmatprep.subr.mxu0 0.0
    %2614 = vmatpush1.msra.mxu0 0.0
    %2615 = vmatprep.subr.mxu0 0.0
    %2616 = vmatpush1.msra.mxu0 0.0
    %2617 = vmatprep.subr.mxu0 0.0
    %2618 = vmatpush1.msra.mxu0 0.0
    %2619 = vmatprep.subr.mxu0 0.0
    %2620 = vmatpush1.msra.mxu0 0.0
    %2621 = vmatprep.subr.mxu0 0.0
    %2622 = vmatpush1.msra.mxu0 0.0
    %2623 = vmatprep.subr.mxu0 0.0
    %2624 = vmatpush1.msra.mxu0 0.0
    %2625 = vmatprep.subr.mxu0 0.0
    %2626 = vmatpush1.msra.mxu0 0.0
    %2627 = vmatprep.subr.mxu0 0.0
    %2628 = vmatpush1.msra.mxu0 0.0
    %2629 = vmatprep.subr.mxu0 0.0
    %2630 = vmatpush1.msra.mxu0 0.0
    %2631 = vmatprep.subr.mxu0 0.0
    %2632 = vmatpush1.msra.mxu0 0.0
    %2633 = vmatprep.mubr.f32.mxu0 0.0
    %2634 = vmatmul.mubr.f32.gmra.mrb[0].mxu0 %v2558
    %v2635 = vpop.f32.mrb[0].mxu0
    %v2636 = vadd.f32 %v2555, %v2635
    %v2637 = vpop.f32.mrb[0].mxu0
    %2638 = vmatprep.mubr.f32.mxu0 0.0
    %2639 = vmatmul.mubr.f32.gmra.mrb[0].mxu0 %v2561
    %v2640 = vpop.f32.mrb[0].mxu0
    %v2641 = vadd.f32 %v2555, %v2640
    %v2642 = vpop.f32.mrb[0].mxu0
    %2643 = vmatprep.mubr.f32.mxu0 0.0
    %2644 = vmatmul.mubr.f32.gmra.mrb[0].mxu0 %v2564
    %v2645 = vpop.f32.mrb[0].mxu0
    %v2646 = vadd.f32 %v2555, %v2645
    %v2647 = vpop.f32.mrb[0].mxu0
    %2648 = vmatprep.mubr.f32.mxu0 0.0
    %2649 = vmatmul.mubr.f32.gmra.mrb[0].mxu0 %v2567
    %v2650 = vpop.f32.mrb[0].mxu0
    %v2651 = vadd.f32 %v2555, %v2650
    %v2652 = vpop.f32.mrb[0].mxu0
    %2653 = vdwg.mxu0
    %v2654 = vadd.f32 %v2320, %v2636
    %v2655 = vadd.f32 %v2321, %v2641
    %v2656 = vadd.f32 %v2322, %v2646
    %v2657 = vadd.f32 %v2323, %v2651
    %s2658 = scalar_lea.vmem %s19, 1
    %v2659 = vld [vmem:[%s2658] sm:$0x1]
    %s2660 = scalar_lea.vmem %s21, 1
    %v2661 = vld [vmem:[%s2660] sm:$0x1]
    %v2662 = vsel %vm132, %v2654, 0.0
    %2663 = vadd.xlane.f32.xlu0 %v2662
    %v2664 = vpop.xlane.xlu0 %2663
    %v2665 = vsel %vm132, %v2655, 0.0
    %2666 = vadd.xlane.f32.xlu0 %v2665
    %v2667 = vpop.xlane.xlu0 %2666
    %v2668 = vsel %vm132, %v2656, 0.0
    %2669 = vadd.xlane.f32.xlu0 %v2668
    %v2670 = vpop.xlane.xlu0 %2669
    %v2671 = vsel %vm132, %v2657, 0.0
    %2672 = vadd.xlane.f32.xlu0 %v2671
    %v2673 = vpop.xlane.xlu0 %2672
    %v2674 = vmul.f32 %v2664, %v139
    %v2675 = vmul.f32 %v2667, %v139
    %v2676 = vmul.f32 %v2670, %v139
    %v2677 = vmul.f32 %v2673, %v139
    %v2678 = vsub.f32 %v2654, %v2674
    %v2679 = vsub.f32 %v2655, %v2675
    %v2680 = vsub.f32 %v2656, %v2676
    %v2681 = vsub.f32 %v2657, %v2677
    %v2682 = vmul.f32 %v2678, %v2678
    %v2683 = vmul.f32 %v2679, %v2679
    %v2684 = vmul.f32 %v2680, %v2680
    %v2685 = vmul.f32 %v2681, %v2681
    %v2686 = vsel %vm132, %v2682, 0.0
    %2687 = vadd.xlane.f32.xlu0 %v2686
    %v2688 = vpop.xlane.xlu0 %2687
    %v2689 = vsel %vm132, %v2683, 0.0
    %2690 = vadd.xlane.f32.xlu0 %v2689
    %v2691 = vpop.xlane.xlu0 %2690
    %v2692 = vsel %vm132, %v2684, 0.0
    %2693 = vadd.xlane.f32.xlu0 %v2692
    %v2694 = vpop.xlane.xlu0 %2693
    %v2695 = vsel %vm132, %v2685, 0.0
    %2696 = vadd.xlane.f32.xlu0 %v2695
    %v2697 = vpop.xlane.xlu0 %2696
    %v2698 = vmul.f32 %v2688, %v139
    %v2699 = vmul.f32 %v2691, %v139
    %v2700 = vmul.f32 %v2694, %v139
    %v2701 = vmul.f32 %v2697, %v139
    %v2702 = vadd.f32 %v2698, 1e-12
    %v2703 = vadd.f32 %v2699, 1e-12
    %v2704 = vadd.f32 %v2700, 1e-12
    %v2705 = vadd.f32 %v2701, 1e-12
    %v2706 = vrsqrt.pop %v2702
    %v2707 = vrsqrt.pop %v2703
    %v2708 = vrsqrt.pop %v2704
    %v2709 = vrsqrt.pop %v2705
    %v2710 = vmul.f32 %v2678, %v2706
    %v2711 = vmul.f32 %v2679, %v2707
    %v2712 = vmul.f32 %v2680, %v2708
    %v2713 = vmul.f32 %v2681, %v2709
    %v2715 = vlaneseq
    %v2716 = vshrl.u32 %v2715, 7
    %v2717 = vsub.s32 0, %v2716
    %v2718 = vrot.slane %v2659, %v2717
    %v2720 = vmul.f32 %v2710, %v2718
    %v2721 = vmul.f32 %v2711, %v2718
    %v2722 = vmul.f32 %v2712, %v2718
    %v2723 = vmul.f32 %v2713, %v2718
    %v2725 = vlaneseq
    %v2726 = vshrl.u32 %v2725, 7
    %v2727 = vsub.s32 0, %v2726
    %v2728 = vrot.slane %v2661, %v2727
    %v2730 = vadd.f32 %v2720, %v2728
    %v2731 = vadd.f32 %v2721, %v2728
    %v2732 = vadd.f32 %v2722, %v2728
    %v2733 = vadd.f32 %v2723, %v2728
    %s2734 = scalar_lea.vmem %s23, 32
    %v2735 = vld [vmem:[%s2734] sm:$0xff]
    %v2736 = vld [vmem:[%s2734 + $0x8] sm:$0xff]
    %v2737 = vld [vmem:[%s2734 + $0x10] sm:$0xff]
    %v2738 = vld [vmem:[%s2734 + $0x18] sm:$0xff]
    %s2739 = scalar_lea.vmem %s25, 1
    %v2740 = vld [vmem:[%s2739] sm:$0x1]
    %v2742 = vlaneseq
    %v2743 = vshrl.u32 %v2742, 7
    %v2744 = vsub.s32 0, %v2743
    %v2745 = vrot.slane %v2740, %v2744
    %v2748 = vsel %vm132, %v2730, 0
    %v2751 = vsel %vm132, %v2731, 0
    %v2754 = vsel %vm132, %v2732, 0
    %v2757 = vsel %vm132, %v2733, 0
    %2759 = vmatprep.subr.mxu0 0.0
    %2760 = vmatpush1.msra.mxu0 %v2735
    %2761 = vmatprep.subr.mxu0 0.0
    %2762 = vmatpush1.msra.mxu0 %v2736
    %2763 = vmatprep.subr.mxu0 0.0
    %2764 = vmatpush1.msra.mxu0 %v2737
    %2765 = vmatprep.subr.mxu0 0.0
    %2766 = vmatpush1.msra.mxu0 %v2738
    %2767 = vmatprep.subr.mxu0 0.0
    %2768 = vmatpush1.msra.mxu0 0.0
    %2769 = vmatprep.subr.mxu0 0.0
    %2770 = vmatpush1.msra.mxu0 0.0
    %2771 = vmatprep.subr.mxu0 0.0
    %2772 = vmatpush1.msra.mxu0 0.0
    %2773 = vmatprep.subr.mxu0 0.0
    %2774 = vmatpush1.msra.mxu0 0.0
    %2775 = vmatprep.subr.mxu0 0.0
    %2776 = vmatpush1.msra.mxu0 0.0
    %2777 = vmatprep.subr.mxu0 0.0
    %2778 = vmatpush1.msra.mxu0 0.0
    %2779 = vmatprep.subr.mxu0 0.0
    %2780 = vmatpush1.msra.mxu0 0.0
    %2781 = vmatprep.subr.mxu0 0.0
    %2782 = vmatpush1.msra.mxu0 0.0
    %2783 = vmatprep.subr.mxu0 0.0
    %2784 = vmatpush1.msra.mxu0 0.0
    %2785 = vmatprep.subr.mxu0 0.0
    %2786 = vmatpush1.msra.mxu0 0.0
    %2787 = vmatprep.subr.mxu0 0.0
    %2788 = vmatpush1.msra.mxu0 0.0
    %2789 = vmatprep.subr.mxu0 0.0
    %2790 = vmatpush1.msra.mxu0 0.0
    %2791 = vmatprep.subr.mxu0 0.0
    %2792 = vmatpush1.msra.mxu0 0.0
    %2793 = vmatprep.subr.mxu0 0.0
    %2794 = vmatpush1.msra.mxu0 0.0
    %2795 = vmatprep.subr.mxu0 0.0
    %2796 = vmatpush1.msra.mxu0 0.0
    %2797 = vmatprep.subr.mxu0 0.0
    %2798 = vmatpush1.msra.mxu0 0.0
    %2799 = vmatprep.subr.mxu0 0.0
    %2800 = vmatpush1.msra.mxu0 0.0
    %2801 = vmatprep.subr.mxu0 0.0
    %2802 = vmatpush1.msra.mxu0 0.0
    %2803 = vmatprep.subr.mxu0 0.0
    %2804 = vmatpush1.msra.mxu0 0.0
    %2805 = vmatprep.subr.mxu0 0.0
    %2806 = vmatpush1.msra.mxu0 0.0
    %2807 = vmatprep.subr.mxu0 0.0
    %2808 = vmatpush1.msra.mxu0 0.0
    %2809 = vmatprep.subr.mxu0 0.0
    %2810 = vmatpush1.msra.mxu0 0.0
    %2811 = vmatprep.subr.mxu0 0.0
    %2812 = vmatpush1.msra.mxu0 0.0
    %2813 = vmatprep.subr.mxu0 0.0
    %2814 = vmatpush1.msra.mxu0 0.0
    %2815 = vmatprep.subr.mxu0 0.0
    %2816 = vmatpush1.msra.mxu0 0.0
    %2817 = vmatprep.subr.mxu0 0.0
    %2818 = vmatpush1.msra.mxu0 0.0
    %2819 = vmatprep.subr.mxu0 0.0
    %2820 = vmatpush1.msra.mxu0 0.0
    %2821 = vmatprep.subr.mxu0 0.0
    %2822 = vmatpush1.msra.mxu0 0.0
    %2823 = vmatprep.mubr.f32.mxu0 0.0
    %2824 = vmatmul.mubr.f32.gmra.mrb[0].mxu0 %v2748
    %v2825 = vpop.f32.mrb[0].mxu0
    %v2826 = vadd.f32 %v2745, %v2825
    %v2827 = vpop.f32.mrb[0].mxu0
    %2828 = vmatprep.mubr.f32.mxu0 0.0
    %2829 = vmatmul.mubr.f32.gmra.mrb[0].mxu0 %v2751
    %v2830 = vpop.f32.mrb[0].mxu0
    %v2831 = vadd.f32 %v2745, %v2830
    %v2832 = vpop.f32.mrb[0].mxu0
    %2833 = vmatprep.mubr.f32.mxu0 0.0
    %2834 = vmatmul.mubr.f32.gmra.mrb[0].mxu0 %v2754
    %v2835 = vpop.f32.mrb[0].mxu0
    %v2836 = vadd.f32 %v2745, %v2835
    %v2837 = vpop.f32.mrb[0].mxu0
    %2838 = vmatprep.mubr.f32.mxu0 0.0
    %2839 = vmatmul.mubr.f32.gmra.mrb[0].mxu0 %v2757
    %v2840 = vpop.f32.mrb[0].mxu0
    %v2841 = vadd.f32 %v2745, %v2840
    %v2842 = vpop.f32.mrb[0].mxu0
    %2843 = vdwg.mxu0
    %2846 = vrot.lane.b32.xlu0 %v2826, 96
    %v2847 = vpop.permute.xlu0 %2846
    %2848 = vrot.lane.b32.xlu0 %v2831, 96
    %v2849 = vpop.permute.xlu0 %2848
    %v2850 = vsel %vm496, %v2826, 0
    %v2852 = vsel %vm496, %v2831, 0
    %v2854 = vsel %vm496, %v2847, 0
    %v2856 = vsel %vm496, %v2849, 0
    %2858 = vmatprep.subr.mxu0 0.0
    %2859 = vmatpush1.xpose.msra.mxu0 %v2854
    %2860 = vmatprep.subr.mxu0 0.0
    %2861 = vmatpush1.xpose.msra.mxu0 %v2856
    %2862 = vmatprep.subr.mxu0 0.0
    %2863 = vmatpush1.xpose.msra.mxu0 0.0
    %2864 = vmatprep.subr.mxu0 0.0
    %2865 = vmatpush1.xpose.msra.mxu0 0.0
    %2866 = vmatprep.subr.mxu0 0.0
    %2867 = vmatpush1.xpose.msra.mxu0 0.0
    %2868 = vmatprep.subr.mxu0 0.0
    %2869 = vmatpush1.xpose.msra.mxu0 0.0
    %2870 = vmatprep.subr.mxu0 0.0
    %2871 = vmatpush1.xpose.msra.mxu0 0.0
    %2872 = vmatprep.subr.mxu0 0.0
    %2873 = vmatpush1.xpose.msra.mxu0 0.0
    %2874 = vmatprep.subr.mxu0 0.0
    %2875 = vmatpush1.xpose.msra.mxu0 0.0
    %2876 = vmatprep.subr.mxu0 0.0
    %2877 = vmatpush1.xpose.msra.mxu0 0.0
    %2878 = vmatprep.subr.mxu0 0.0
    %2879 = vmatpush1.xpose.msra.mxu0 0.0
    %2880 = vmatprep.subr.mxu0 0.0
    %2881 = vmatpush1.xpose.msra.mxu0 0.0
    %2882 = vmatprep.subr.mxu0 0.0
    %2883 = vmatpush1.xpose.msra.mxu0 0.0
    %2884 = vmatprep.subr.mxu0 0.0
    %2885 = vmatpush1.xpose.msra.mxu0 0.0
    %2886 = vmatprep.subr.mxu0 0.0
    %2887 = vmatpush1.xpose.msra.mxu0 0.0
    %2888 = vmatprep.subr.mxu0 0.0
    %2889 = vmatpush1.xpose.msra.mxu0 0.0
    %2890 = vmatprep.subr.mxu0 0.0
    %2891 = vmatpush1.xpose.msra.mxu0 0.0
    %2892 = vmatprep.subr.mxu0 0.0
    %2893 = vmatpush1.xpose.msra.mxu0 0.0
    %2894 = vmatprep.subr.mxu0 0.0
    %2895 = vmatpush1.xpose.msra.mxu0 0.0
    %2896 = vmatprep.subr.mxu0 0.0
    %2897 = vmatpush1.xpose.msra.mxu0 0.0
    %2898 = vmatprep.subr.mxu0 0.0
    %2899 = vmatpush1.xpose.msra.mxu0 0.0
    %2900 = vmatprep.subr.mxu0 0.0
    %2901 = vmatpush1.xpose.msra.mxu0 0.0
    %2902 = vmatprep.subr.mxu0 0.0
    %2903 = vmatpush1.xpose.msra.mxu0 0.0
    %2904 = vmatprep.subr.mxu0 0.0
    %2905 = vmatpush1.xpose.msra.mxu0 0.0
    %2906 = vmatprep.subr.mxu0 0.0
    %2907 = vmatpush1.xpose.msra.mxu0 0.0
    %2908 = vmatprep.subr.mxu0 0.0
    %2909 = vmatpush1.xpose.msra.mxu0 0.0
    %2910 = vmatprep.subr.mxu0 0.0
    %2911 = vmatpush1.xpose.msra.mxu0 0.0
    %2912 = vmatprep.subr.mxu0 0.0
    %2913 = vmatpush1.xpose.msra.mxu0 0.0
    %2914 = vmatprep.subr.mxu0 0.0
    %2915 = vmatpush1.xpose.msra.mxu0 0.0
    %2916 = vmatprep.subr.mxu0 0.0
    %2917 = vmatpush1.xpose.msra.mxu0 0.0
    %2918 = vmatprep.subr.mxu0 0.0
    %2919 = vmatpush1.xpose.msra.mxu0 0.0
    %2920 = vmatprep.subr.mxu0 0.0
    %2921 = vmatpush1.xpose.msra.mxu0 0.0
    %2922 = vmatprep.mubr.f32.mxu0 0.0
    %2923 = vmatmul.mubr.f32.gmra.mrb[0].mxu0 %v2850
    %v2924 = vpop.f32.mrb[0].mxu0
    %v2925 = vadd.f32 0.0, %v2924
    %v2926 = vpop.f32.mrb[0].mxu0
    %2927 = vmatprep.mubr.f32.mxu0 0.0
    %2928 = vmatmul.mubr.f32.gmra.mrb[0].mxu0 %v2852
    %v2929 = vpop.f32.mrb[0].mxu0
    %v2930 = vadd.f32 0.0, %v2929
    %v2931 = vpop.f32.mrb[0].mxu0
    %2932 = vdwg.mxu0
    %2935 = vrot.lane.b32.xlu0 %v2836, 96
    %v2936 = vpop.permute.xlu0 %2935
    %2937 = vrot.lane.b32.xlu0 %v2841, 96
    %v2938 = vpop.permute.xlu0 %2937
    %v2939 = vsel %vm496, %v2836, 0
    %v2941 = vsel %vm496, %v2841, 0
    %v2943 = vsel %vm496, %v2936, 0
    %v2945 = vsel %vm496, %v2938, 0
    %2947 = vmatprep.subr.mxu0 0.0
    %2948 = vmatpush1.xpose.msra.mxu0 %v2943
    %2949 = vmatprep.subr.mxu0 0.0
    %2950 = vmatpush1.xpose.msra.mxu0 %v2945
    %2951 = vmatprep.subr.mxu0 0.0
    %2952 = vmatpush1.xpose.msra.mxu0 0.0
    %2953 = vmatprep.subr.mxu0 0.0
    %2954 = vmatpush1.xpose.msra.mxu0 0.0
    %2955 = vmatprep.subr.mxu0 0.0
    %2956 = vmatpush1.xpose.msra.mxu0 0.0
    %2957 = vmatprep.subr.mxu0 0.0
    %2958 = vmatpush1.xpose.msra.mxu0 0.0
    %2959 = vmatprep.subr.mxu0 0.0
    %2960 = vmatpush1.xpose.msra.mxu0 0.0
    %2961 = vmatprep.subr.mxu0 0.0
    %2962 = vmatpush1.xpose.msra.mxu0 0.0
    %2963 = vmatprep.subr.mxu0 0.0
    %2964 = vmatpush1.xpose.msra.mxu0 0.0
    %2965 = vmatprep.subr.mxu0 0.0
    %2966 = vmatpush1.xpose.msra.mxu0 0.0
    %2967 = vmatprep.subr.mxu0 0.0
    %2968 = vmatpush1.xpose.msra.mxu0 0.0
    %2969 = vmatprep.subr.mxu0 0.0
    %2970 = vmatpush1.xpose.msra.mxu0 0.0
    %2971 = vmatprep.subr.mxu0 0.0
    %2972 = vmatpush1.xpose.msra.mxu0 0.0
    %2973 = vmatprep.subr.mxu0 0.0
    %2974 = vmatpush1.xpose.msra.mxu0 0.0
    %2975 = vmatprep.subr.mxu0 0.0
    %2976 = vmatpush1.xpose.msra.mxu0 0.0
    %2977 = vmatprep.subr.mxu0 0.0
    %2978 = vmatpush1.xpose.msra.mxu0 0.0
    %2979 = vmatprep.subr.mxu0 0.0
    %2980 = vmatpush1.xpose.msra.mxu0 0.0
    %2981 = vmatprep.subr.mxu0 0.0
    %2982 = vmatpush1.xpose.msra.mxu0 0.0
    %2983 = vmatprep.subr.mxu0 0.0
    %2984 = vmatpush1.xpose.msra.mxu0 0.0
    %2985 = vmatprep.subr.mxu0 0.0
    %2986 = vmatpush1.xpose.msra.mxu0 0.0
    %2987 = vmatprep.subr.mxu0 0.0
    %2988 = vmatpush1.xpose.msra.mxu0 0.0
    %2989 = vmatprep.subr.mxu0 0.0
    %2990 = vmatpush1.xpose.msra.mxu0 0.0
    %2991 = vmatprep.subr.mxu0 0.0
    %2992 = vmatpush1.xpose.msra.mxu0 0.0
    %2993 = vmatprep.subr.mxu0 0.0
    %2994 = vmatpush1.xpose.msra.mxu0 0.0
    %2995 = vmatprep.subr.mxu0 0.0
    %2996 = vmatpush1.xpose.msra.mxu0 0.0
    %2997 = vmatprep.subr.mxu0 0.0
    %2998 = vmatpush1.xpose.msra.mxu0 0.0
    %2999 = vmatprep.subr.mxu0 0.0
    %3000 = vmatpush1.xpose.msra.mxu0 0.0
    %3001 = vmatprep.subr.mxu0 0.0
    %3002 = vmatpush1.xpose.msra.mxu0 0.0
    %3003 = vmatprep.subr.mxu0 0.0
    %3004 = vmatpush1.xpose.msra.mxu0 0.0
    %3005 = vmatprep.subr.mxu0 0.0
    %3006 = vmatpush1.xpose.msra.mxu0 0.0
    %3007 = vmatprep.subr.mxu0 0.0
    %3008 = vmatpush1.xpose.msra.mxu0 0.0
    %3009 = vmatprep.subr.mxu0 0.0
    %3010 = vmatpush1.xpose.msra.mxu0 0.0
    %3011 = vmatprep.mubr.f32.mxu0 0.0
    %3012 = vmatmul.mubr.f32.gmra.mrb[0].mxu0 %v2939
    %v3013 = vpop.f32.mrb[0].mxu0
    %v3014 = vadd.f32 0.0, %v3013
    %v3015 = vpop.f32.mrb[0].mxu0
    %3016 = vmatprep.mubr.f32.mxu0 0.0
    %3017 = vmatmul.mubr.f32.gmra.mrb[0].mxu0 %v2941
    %v3018 = vpop.f32.mrb[0].mxu0
    %v3019 = vadd.f32 0.0, %v3018
    %v3020 = vpop.f32.mrb[0].mxu0
    %3021 = vdwg.mxu0
    %v3022 = vmul.f32 %v2925, 0.35355338
    %v3023 = vmul.f32 %v2930, 0.35355338
    %v3024 = vmul.f32 %v3014, 0.35355338
    %v3025 = vmul.f32 %v3019, 0.35355338
    %v3026 = vadd.f32 %v3022, %v678
    %v3027 = vadd.f32 %v3023, %v678
    %v3028 = vadd.f32 %v3024, %v682
    %v3029 = vadd.f32 %v3025, %v682
    %v3030 = vsel %vm689, %v3026, -inf
    %3031 = vmax.xlane.f32.xlu0 %v3030
    %v3032 = vpop.xlane.xlu0 %3031
    %v3033 = vsel %vm689, %v3027, -inf
    %3034 = vmax.xlane.f32.xlu0 %v3033
    %v3035 = vpop.xlane.xlu0 %3034
    %v3036 = vsel %vm689, %v3028, -inf
    %3037 = vmax.xlane.f32.xlu0 %v3036
    %v3038 = vpop.xlane.xlu0 %3037
    %v3039 = vsel %vm689, %v3029, -inf
    %3040 = vmax.xlane.f32.xlu0 %v3039
    %v3041 = vpop.xlane.xlu0 %3040
    %v3042 = vsub.f32 %v3026, %v3032
    %v3043 = vsub.f32 %v3027, %v3035
    %v3044 = vsub.f32 %v3028, %v3038
    %v3045 = vsub.f32 %v3029, %v3041
    %v3046 = vmul.f32 %v3042, 1.442695
    %v3047 = vpow.pop %v3046
    %v3048 = vmul.f32 %v3043, 1.442695
    %v3049 = vpow.pop %v3048
    %v3050 = vmul.f32 %v3044, 1.442695
    %v3051 = vpow.pop %v3050
    %v3052 = vmul.f32 %v3045, 1.442695
    %v3053 = vpow.pop %v3052
    %v3054 = vsel %vm689, %v3047, 0.0
    %3055 = vadd.xlane.f32.xlu0 %v3054
    %v3056 = vpop.xlane.xlu0 %3055
    %v3057 = vsel %vm689, %v3049, 0.0
    %3058 = vadd.xlane.f32.xlu0 %v3057
    %v3059 = vpop.xlane.xlu0 %3058
    %v3060 = vsel %vm689, %v3051, 0.0
    %3061 = vadd.xlane.f32.xlu0 %v3060
    %v3062 = vpop.xlane.xlu0 %3061
    %v3063 = vsel %vm689, %v3053, 0.0
    %3064 = vadd.xlane.f32.xlu0 %v3063
    %v3065 = vpop.xlane.xlu0 %3064
    %v3066 = vrcp.pop %v3056
    %v3067 = vrcp.pop %v3059
    %v3068 = vrcp.pop %v3062
    %v3069 = vrcp.pop %v3065
    %v3070 = vmul.f32 %v3047, %v3066
    %v3071 = vmul.f32 %v3049, %v3067
    %v3072 = vmul.f32 %v3051, %v3068
    %v3073 = vmul.f32 %v3053, %v3069
    %3074 = vst.msk [vmem:[%s63] sm:$0xff] %vm689, %v3070
    %3075 = vst.msk [vmem:[%s63 + $0x8] sm:$0xff] %vm689, %v3071
    %3076 = vst.msk [vmem:[%s63 + $0x10] sm:$0xff] %vm689, %v3072
    %3077 = vst.msk [vmem:[%s63 + $0x18] sm:$0xff] %vm689, %v3073
    %3078 = vrot.lane.b32.xlu0 %v2826, 64
    %v3079 = vpop.permute.xlu0 %3078
    %3080 = vrot.lane.b32.xlu0 %v2831, 64
    %v3081 = vpop.permute.xlu0 %3080
    %v3085 = vsel %vm689, %v3070, 0
    %v3088 = vsel %vm689, %v3071, 0
    %3090 = vmatprep.subr.mxu0 0.0
    %3091 = vmatpush1.msra.mxu0 %v3079
    %3092 = vmatprep.subr.mxu0 0.0
    %3093 = vmatpush1.msra.mxu0 %v3081
    %3094 = vmatprep.subr.mxu0 0.0
    %3095 = vmatpush1.msra.mxu0 0.0
    %3096 = vmatprep.subr.mxu0 0.0
    %3097 = vmatpush1.msra.mxu0 0.0
    %3098 = vmatprep.subr.mxu0 0.0
    %3099 = vmatpush1.msra.mxu0 0.0
    %3100 = vmatprep.subr.mxu0 0.0
    %3101 = vmatpush1.msra.mxu0 0.0
    %3102 = vmatprep.subr.mxu0 0.0
    %3103 = vmatpush1.msra.mxu0 0.0
    %3104 = vmatprep.subr.mxu0 0.0
    %3105 = vmatpush1.msra.mxu0 0.0
    %3106 = vmatprep.subr.mxu0 0.0
    %3107 = vmatpush1.msra.mxu0 0.0
    %3108 = vmatprep.subr.mxu0 0.0
    %3109 = vmatpush1.msra.mxu0 0.0
    %3110 = vmatprep.subr.mxu0 0.0
    %3111 = vmatpush1.msra.mxu0 0.0
    %3112 = vmatprep.subr.mxu0 0.0
    %3113 = vmatpush1.msra.mxu0 0.0
    %3114 = vmatprep.subr.mxu0 0.0
    %3115 = vmatpush1.msra.mxu0 0.0
    %3116 = vmatprep.subr.mxu0 0.0
    %3117 = vmatpush1.msra.mxu0 0.0
    %3118 = vmatprep.subr.mxu0 0.0
    %3119 = vmatpush1.msra.mxu0 0.0
    %3120 = vmatprep.subr.mxu0 0.0
    %3121 = vmatpush1.msra.mxu0 0.0
    %3122 = vmatprep.subr.mxu0 0.0
    %3123 = vmatpush1.msra.mxu0 0.0
    %3124 = vmatprep.subr.mxu0 0.0
    %3125 = vmatpush1.msra.mxu0 0.0
    %3126 = vmatprep.subr.mxu0 0.0
    %3127 = vmatpush1.msra.mxu0 0.0
    %3128 = vmatprep.subr.mxu0 0.0
    %3129 = vmatpush1.msra.mxu0 0.0
    %3130 = vmatprep.subr.mxu0 0.0
    %3131 = vmatpush1.msra.mxu0 0.0
    %3132 = vmatprep.subr.mxu0 0.0
    %3133 = vmatpush1.msra.mxu0 0.0
    %3134 = vmatprep.subr.mxu0 0.0
    %3135 = vmatpush1.msra.mxu0 0.0
    %3136 = vmatprep.subr.mxu0 0.0
    %3137 = vmatpush1.msra.mxu0 0.0
    %3138 = vmatprep.subr.mxu0 0.0
    %3139 = vmatpush1.msra.mxu0 0.0
    %3140 = vmatprep.subr.mxu0 0.0
    %3141 = vmatpush1.msra.mxu0 0.0
    %3142 = vmatprep.subr.mxu0 0.0
    %3143 = vmatpush1.msra.mxu0 0.0
    %3144 = vmatprep.subr.mxu0 0.0
    %3145 = vmatpush1.msra.mxu0 0.0
    %3146 = vmatprep.subr.mxu0 0.0
    %3147 = vmatpush1.msra.mxu0 0.0
    %3148 = vmatprep.subr.mxu0 0.0
    %3149 = vmatpush1.msra.mxu0 0.0
    %3150 = vmatprep.subr.mxu0 0.0
    %3151 = vmatpush1.msra.mxu0 0.0
    %3152 = vmatprep.subr.mxu0 0.0
    %3153 = vmatpush1.msra.mxu0 0.0
    %3154 = vmatprep.mubr.f32.mxu0 0.0
    %3155 = vmatmul.mubr.f32.gmra.mrb[0].mxu0 %v3085
    %v3156 = vpop.f32.mrb[0].mxu0
    %v3157 = vadd.f32 0.0, %v3156
    %v3158 = vpop.f32.mrb[0].mxu0
    %3159 = vmatprep.mubr.f32.mxu0 0.0
    %3160 = vmatmul.mubr.f32.gmra.mrb[0].mxu0 %v3088
    %v3161 = vpop.f32.mrb[0].mxu0
    %v3162 = vadd.f32 0.0, %v3161
    %v3163 = vpop.f32.mrb[0].mxu0
    %3164 = vdwg.mxu0
    %3165 = vrot.lane.b32.xlu0 %v2836, 64
    %v3166 = vpop.permute.xlu0 %3165
    %3167 = vrot.lane.b32.xlu0 %v2841, 64
    %v3168 = vpop.permute.xlu0 %3167
    %v3172 = vsel %vm689, %v3072, 0
    %v3175 = vsel %vm689, %v3073, 0
    %3177 = vmatprep.subr.mxu0 0.0
    %3178 = vmatpush1.msra.mxu0 %v3166
    %3179 = vmatprep.subr.mxu0 0.0
    %3180 = vmatpush1.msra.mxu0 %v3168
    %3181 = vmatprep.subr.mxu0 0.0
    %3182 = vmatpush1.msra.mxu0 0.0
    %3183 = vmatprep.subr.mxu0 0.0
    %3184 = vmatpush1.msra.mxu0 0.0
    %3185 = vmatprep.subr.mxu0 0.0
    %3186 = vmatpush1.msra.mxu0 0.0
    %3187 = vmatprep.subr.mxu0 0.0
    %3188 = vmatpush1.msra.mxu0 0.0
    %3189 = vmatprep.subr.mxu0 0.0
    %3190 = vmatpush1.msra.mxu0 0.0
    %3191 = vmatprep.subr.mxu0 0.0
    %3192 = vmatpush1.msra.mxu0 0.0
    %3193 = vmatprep.subr.mxu0 0.0
    %3194 = vmatpush1.msra.mxu0 0.0
    %3195 = vmatprep.subr.mxu0 0.0
    %3196 = vmatpush1.msra.mxu0 0.0
    %3197 = vmatprep.subr.mxu0 0.0
    %3198 = vmatpush1.msra.mxu0 0.0
    %3199 = vmatprep.subr.mxu0 0.0
    %3200 = vmatpush1.msra.mxu0 0.0
    %3201 = vmatprep.subr.mxu0 0.0
    %3202 = vmatpush1.msra.mxu0 0.0
    %3203 = vmatprep.subr.mxu0 0.0
    %3204 = vmatpush1.msra.mxu0 0.0
    %3205 = vmatprep.subr.mxu0 0.0
    %3206 = vmatpush1.msra.mxu0 0.0
    %3207 = vmatprep.subr.mxu0 0.0
    %3208 = vmatpush1.msra.mxu0 0.0
    %3209 = vmatprep.subr.mxu0 0.0
    %3210 = vmatpush1.msra.mxu0 0.0
    %3211 = vmatprep.subr.mxu0 0.0
    %3212 = vmatpush1.msra.mxu0 0.0
    %3213 = vmatprep.subr.mxu0 0.0
    %3214 = vmatpush1.msra.mxu0 0.0
    %3215 = vmatprep.subr.mxu0 0.0
    %3216 = vmatpush1.msra.mxu0 0.0
    %3217 = vmatprep.subr.mxu0 0.0
    %3218 = vmatpush1.msra.mxu0 0.0
    %3219 = vmatprep.subr.mxu0 0.0
    %3220 = vmatpush1.msra.mxu0 0.0
    %3221 = vmatprep.subr.mxu0 0.0
    %3222 = vmatpush1.msra.mxu0 0.0
    %3223 = vmatprep.subr.mxu0 0.0
    %3224 = vmatpush1.msra.mxu0 0.0
    %3225 = vmatprep.subr.mxu0 0.0
    %3226 = vmatpush1.msra.mxu0 0.0
    %3227 = vmatprep.subr.mxu0 0.0
    %3228 = vmatpush1.msra.mxu0 0.0
    %3229 = vmatprep.subr.mxu0 0.0
    %3230 = vmatpush1.msra.mxu0 0.0
    %3231 = vmatprep.subr.mxu0 0.0
    %3232 = vmatpush1.msra.mxu0 0.0
    %3233 = vmatprep.subr.mxu0 0.0
    %3234 = vmatpush1.msra.mxu0 0.0
    %3235 = vmatprep.subr.mxu0 0.0
    %3236 = vmatpush1.msra.mxu0 0.0
    %3237 = vmatprep.subr.mxu0 0.0
    %3238 = vmatpush1.msra.mxu0 0.0
    %3239 = vmatprep.subr.mxu0 0.0
    %3240 = vmatpush1.msra.mxu0 0.0
    %3241 = vmatprep.mubr.f32.mxu0 0.0
    %3242 = vmatmul.mubr.f32.gmra.mrb[0].mxu0 %v3172
    %v3243 = vpop.f32.mrb[0].mxu0
    %v3244 = vadd.f32 0.0, %v3243
    %v3245 = vpop.f32.mrb[0].mxu0
    %3246 = vmatprep.mubr.f32.mxu0 0.0
    %3247 = vmatmul.mubr.f32.gmra.mrb[0].mxu0 %v3175
    %v3248 = vpop.f32.mrb[0].mxu0
    %v3249 = vadd.f32 0.0, %v3248
    %v3250 = vpop.f32.mrb[0].mxu0
    %3251 = vdwg.mxu0
    %3252 = vrot.lane.b32.xlu0 %v2826, 120
    %v3253 = vpop.permute.xlu0 %3252
    %3254 = vrot.lane.b32.xlu0 %v2831, 120
    %v3255 = vpop.permute.xlu0 %3254
    %3256 = vrot.lane.b32.xlu0 %v2826, 88
    %v3257 = vpop.permute.xlu0 %3256
    %3258 = vrot.lane.b32.xlu0 %v2831, 88
    %v3259 = vpop.permute.xlu0 %3258
    %v3260 = vsel %vm496, %v3253, 0
    %v3262 = vsel %vm496, %v3255, 0
    %v3264 = vsel %vm496, %v3257, 0
    %v3266 = vsel %vm496, %v3259, 0
    %3268 = vmatprep.subr.mxu0 0.0
    %3269 = vmatpush1.xpose.msra.mxu0 %v3264
    %3270 = vmatprep.subr.mxu0 0.0
    %3271 = vmatpush1.xpose.msra.mxu0 %v3266
    %3272 = vmatprep.subr.mxu0 0.0
    %3273 = vmatpush1.xpose.msra.mxu0 0.0
    %3274 = vmatprep.subr.mxu0 0.0
    %3275 = vmatpush1.xpose.msra.mxu0 0.0
    %3276 = vmatprep.subr.mxu0 0.0
    %3277 = vmatpush1.xpose.msra.mxu0 0.0
    %3278 = vmatprep.subr.mxu0 0.0
    %3279 = vmatpush1.xpose.msra.mxu0 0.0
    %3280 = vmatprep.subr.mxu0 0.0
    %3281 = vmatpush1.xpose.msra.mxu0 0.0
    %3282 = vmatprep.subr.mxu0 0.0
    %3283 = vmatpush1.xpose.msra.mxu0 0.0
    %3284 = vmatprep.subr.mxu0 0.0
    %3285 = vmatpush1.xpose.msra.mxu0 0.0
    %3286 = vmatprep.subr.mxu0 0.0
    %3287 = vmatpush1.xpose.msra.mxu0 0.0
    %3288 = vmatprep.subr.mxu0 0.0
    %3289 = vmatpush1.xpose.msra.mxu0 0.0
    %3290 = vmatprep.subr.mxu0 0.0
    %3291 = vmatpush1.xpose.msra.mxu0 0.0
    %3292 = vmatprep.subr.mxu0 0.0
    %3293 = vmatpush1.xpose.msra.mxu0 0.0
    %3294 = vmatprep.subr.mxu0 0.0
    %3295 = vmatpush1.xpose.msra.mxu0 0.0
    %3296 = vmatprep.subr.mxu0 0.0
    %3297 = vmatpush1.xpose.msra.mxu0 0.0
    %3298 = vmatprep.subr.mxu0 0.0
    %3299 = vmatpush1.xpose.msra.mxu0 0.0
    %3300 = vmatprep.subr.mxu0 0.0
    %3301 = vmatpush1.xpose.msra.mxu0 0.0
    %3302 = vmatprep.subr.mxu0 0.0
    %3303 = vmatpush1.xpose.msra.mxu0 0.0
    %3304 = vmatprep.subr.mxu0 0.0
    %3305 = vmatpush1.xpose.msra.mxu0 0.0
    %3306 = vmatprep.subr.mxu0 0.0
    %3307 = vmatpush1.xpose.msra.mxu0 0.0
    %3308 = vmatprep.subr.mxu0 0.0
    %3309 = vmatpush1.xpose.msra.mxu0 0.0
    %3310 = vmatprep.subr.mxu0 0.0
    %3311 = vmatpush1.xpose.msra.mxu0 0.0
    %3312 = vmatprep.subr.mxu0 0.0
    %3313 = vmatpush1.xpose.msra.mxu0 0.0
    %3314 = vmatprep.subr.mxu0 0.0
    %3315 = vmatpush1.xpose.msra.mxu0 0.0
    %3316 = vmatprep.subr.mxu0 0.0
    %3317 = vmatpush1.xpose.msra.mxu0 0.0
    %3318 = vmatprep.subr.mxu0 0.0
    %3319 = vmatpush1.xpose.msra.mxu0 0.0
    %3320 = vmatprep.subr.mxu0 0.0
    %3321 = vmatpush1.xpose.msra.mxu0 0.0
    %3322 = vmatprep.subr.mxu0 0.0
    %3323 = vmatpush1.xpose.msra.mxu0 0.0
    %3324 = vmatprep.subr.mxu0 0.0
    %3325 = vmatpush1.xpose.msra.mxu0 0.0
    %3326 = vmatprep.subr.mxu0 0.0
    %3327 = vmatpush1.xpose.msra.mxu0 0.0
    %3328 = vmatprep.subr.mxu0 0.0
    %3329 = vmatpush1.xpose.msra.mxu0 0.0
    %3330 = vmatprep.subr.mxu0 0.0
    %3331 = vmatpush1.xpose.msra.mxu0 0.0
    %3332 = vmatprep.mubr.f32.mxu0 0.0
    %3333 = vmatmul.mubr.f32.gmra.mrb[0].mxu0 %v3260
    %v3334 = vpop.f32.mrb[0].mxu0
    %v3335 = vadd.f32 0.0, %v3334
    %v3336 = vpop.f32.mrb[0].mxu0
    %3337 = vmatprep.mubr.f32.mxu0 0.0
    %3338 = vmatmul.mubr.f32.gmra.mrb[0].mxu0 %v3262
    %v3339 = vpop.f32.mrb[0].mxu0
    %v3340 = vadd.f32 0.0, %v3339
    %v3341 = vpop.f32.mrb[0].mxu0
    %3342 = vdwg.mxu0
    %3343 = vrot.lane.b32.xlu0 %v2836, 120
    %v3344 = vpop.permute.xlu0 %3343
    %3345 = vrot.lane.b32.xlu0 %v2841, 120
    %v3346 = vpop.permute.xlu0 %3345
    %3347 = vrot.lane.b32.xlu0 %v2836, 88
    %v3348 = vpop.permute.xlu0 %3347
    %3349 = vrot.lane.b32.xlu0 %v2841, 88
    %v3350 = vpop.permute.xlu0 %3349
    %v3351 = vsel %vm496, %v3344, 0
    %v3353 = vsel %vm496, %v3346, 0
    %v3355 = vsel %vm496, %v3348, 0
    %v3357 = vsel %vm496, %v3350, 0
    %3359 = vmatprep.subr.mxu0 0.0
    %3360 = vmatpush1.xpose.msra.mxu0 %v3355
    %3361 = vmatprep.subr.mxu0 0.0
    %3362 = vmatpush1.xpose.msra.mxu0 %v3357
    %3363 = vmatprep.subr.mxu0 0.0
    %3364 = vmatpush1.xpose.msra.mxu0 0.0
    %3365 = vmatprep.subr.mxu0 0.0
    %3366 = vmatpush1.xpose.msra.mxu0 0.0
    %3367 = vmatprep.subr.mxu0 0.0
    %3368 = vmatpush1.xpose.msra.mxu0 0.0
    %3369 = vmatprep.subr.mxu0 0.0
    %3370 = vmatpush1.xpose.msra.mxu0 0.0
    %3371 = vmatprep.subr.mxu0 0.0
    %3372 = vmatpush1.xpose.msra.mxu0 0.0
    %3373 = vmatprep.subr.mxu0 0.0
    %3374 = vmatpush1.xpose.msra.mxu0 0.0
    %3375 = vmatprep.subr.mxu0 0.0
    %3376 = vmatpush1.xpose.msra.mxu0 0.0
    %3377 = vmatprep.subr.mxu0 0.0
    %3378 = vmatpush1.xpose.msra.mxu0 0.0
    %3379 = vmatprep.subr.mxu0 0.0
    %3380 = vmatpush1.xpose.msra.mxu0 0.0
    %3381 = vmatprep.subr.mxu0 0.0
    %3382 = vmatpush1.xpose.msra.mxu0 0.0
    %3383 = vmatprep.subr.mxu0 0.0
    %3384 = vmatpush1.xpose.msra.mxu0 0.0
    %3385 = vmatprep.subr.mxu0 0.0
    %3386 = vmatpush1.xpose.msra.mxu0 0.0
    %3387 = vmatprep.subr.mxu0 0.0
    %3388 = vmatpush1.xpose.msra.mxu0 0.0
    %3389 = vmatprep.subr.mxu0 0.0
    %3390 = vmatpush1.xpose.msra.mxu0 0.0
    %3391 = vmatprep.subr.mxu0 0.0
    %3392 = vmatpush1.xpose.msra.mxu0 0.0
    %3393 = vmatprep.subr.mxu0 0.0
    %3394 = vmatpush1.xpose.msra.mxu0 0.0
    %3395 = vmatprep.subr.mxu0 0.0
    %3396 = vmatpush1.xpose.msra.mxu0 0.0
    %3397 = vmatprep.subr.mxu0 0.0
    %3398 = vmatpush1.xpose.msra.mxu0 0.0
    %3399 = vmatprep.subr.mxu0 0.0
    %3400 = vmatpush1.xpose.msra.mxu0 0.0
    %3401 = vmatprep.subr.mxu0 0.0
    %3402 = vmatpush1.xpose.msra.mxu0 0.0
    %3403 = vmatprep.subr.mxu0 0.0
    %3404 = vmatpush1.xpose.msra.mxu0 0.0
    %3405 = vmatprep.subr.mxu0 0.0
    %3406 = vmatpush1.xpose.msra.mxu0 0.0
    %3407 = vmatprep.subr.mxu0 0.0
    %3408 = vmatpush1.xpose.msra.mxu0 0.0
    %3409 = vmatprep.subr.mxu0 0.0
    %3410 = vmatpush1.xpose.msra.mxu0 0.0
    %3411 = vmatprep.subr.mxu0 0.0
    %3412 = vmatpush1.xpose.msra.mxu0 0.0
    %3413 = vmatprep.subr.mxu0 0.0
    %3414 = vmatpush1.xpose.msra.mxu0 0.0
    %3415 = vmatprep.subr.mxu0 0.0
    %3416 = vmatpush1.xpose.msra.mxu0 0.0
    %3417 = vmatprep.subr.mxu0 0.0
    %3418 = vmatpush1.xpose.msra.mxu0 0.0
    %3419 = vmatprep.subr.mxu0 0.0
    %3420 = vmatpush1.xpose.msra.mxu0 0.0
    %3421 = vmatprep.subr.mxu0 0.0
    %3422 = vmatpush1.xpose.msra.mxu0 0.0
    %3423 = vmatprep.mubr.f32.mxu0 0.0
    %3424 = vmatmul.mubr.f32.gmra.mrb[0].mxu0 %v3351
    %v3425 = vpop.f32.mrb[0].mxu0
    %v3426 = vadd.f32 0.0, %v3425
    %v3427 = vpop.f32.mrb[0].mxu0
    %3428 = vmatprep.mubr.f32.mxu0 0.0
    %3429 = vmatmul.mubr.f32.gmra.mrb[0].mxu0 %v3353
    %v3430 = vpop.f32.mrb[0].mxu0
    %v3431 = vadd.f32 0.0, %v3430
    %v3432 = vpop.f32.mrb[0].mxu0
    %3433 = vdwg.mxu0
    %v3434 = vmul.f32 %v3335, 0.35355338
    %v3435 = vmul.f32 %v3340, 0.35355338
    %v3436 = vmul.f32 %v3426, 0.35355338
    %v3437 = vmul.f32 %v3431, 0.35355338
    %v3438 = vadd.f32 %v3434, %v678
    %v3439 = vadd.f32 %v3435, %v678
    %v3440 = vadd.f32 %v3436, %v682
    %v3441 = vadd.f32 %v3437, %v682
    %v3442 = vsel %vm689, %v3438, -inf
    %3443 = vmax.xlane.f32.xlu0 %v3442
    %v3444 = vpop.xlane.xlu0 %3443
    %v3445 = vsel %vm689, %v3439, -inf
    %3446 = vmax.xlane.f32.xlu0 %v3445
    %v3447 = vpop.xlane.xlu0 %3446
    %v3448 = vsel %vm689, %v3440, -inf
    %3449 = vmax.xlane.f32.xlu0 %v3448
    %v3450 = vpop.xlane.xlu0 %3449
    %v3451 = vsel %vm689, %v3441, -inf
    %3452 = vmax.xlane.f32.xlu0 %v3451
    %v3453 = vpop.xlane.xlu0 %3452
    %v3454 = vsub.f32 %v3438, %v3444
    %v3455 = vsub.f32 %v3439, %v3447
    %v3456 = vsub.f32 %v3440, %v3450
    %v3457 = vsub.f32 %v3441, %v3453
    %v3458 = vmul.f32 %v3454, 1.442695
    %v3459 = vpow.pop %v3458
    %v3460 = vmul.f32 %v3455, 1.442695
    %v3461 = vpow.pop %v3460
    %v3462 = vmul.f32 %v3456, 1.442695
    %v3463 = vpow.pop %v3462
    %v3464 = vmul.f32 %v3457, 1.442695
    %v3465 = vpow.pop %v3464
    %v3466 = vsel %vm689, %v3459, 0.0
    %3467 = vadd.xlane.f32.xlu0 %v3466
    %v3468 = vpop.xlane.xlu0 %3467
    %v3469 = vsel %vm689, %v3461, 0.0
    %3470 = vadd.xlane.f32.xlu0 %v3469
    %v3471 = vpop.xlane.xlu0 %3470
    %v3472 = vsel %vm689, %v3463, 0.0
    %3473 = vadd.xlane.f32.xlu0 %v3472
    %v3474 = vpop.xlane.xlu0 %3473
    %v3475 = vsel %vm689, %v3465, 0.0
    %3476 = vadd.xlane.f32.xlu0 %v3475
    %v3477 = vpop.xlane.xlu0 %3476
    %v3478 = vrcp.pop %v3468
    %v3479 = vrcp.pop %v3471
    %v3480 = vrcp.pop %v3474
    %v3481 = vrcp.pop %v3477
    %v3482 = vmul.f32 %v3459, %v3478
    %v3483 = vmul.f32 %v3461, %v3479
    %v3484 = vmul.f32 %v3463, %v3480
    %v3485 = vmul.f32 %v3465, %v3481
    %s3486 = scalar_lea.vmem %s63, 32
    %3487 = vst.msk [vmem:[%s3486] sm:$0xff] %vm689, %v3482
    %3488 = vst.msk [vmem:[%s3486 + $0x8] sm:$0xff] %vm689, %v3483
    %3489 = vst.msk [vmem:[%s3486 + $0x10] sm:$0xff] %vm689, %v3484
    %3490 = vst.msk [vmem:[%s3486 + $0x18] sm:$0xff] %vm689, %v3485
    %3491 = vrot.lane.b32.xlu0 %v2826, 56
    %v3492 = vpop.permute.xlu0 %3491
    %3493 = vrot.lane.b32.xlu0 %v2831, 56
    %v3494 = vpop.permute.xlu0 %3493
    %v3498 = vsel %vm689, %v3482, 0
    %v3501 = vsel %vm689, %v3483, 0
    %3503 = vmatprep.subr.mxu0 0.0
    %3504 = vmatpush1.msra.mxu0 %v3492
    %3505 = vmatprep.subr.mxu0 0.0
    %3506 = vmatpush1.msra.mxu0 %v3494
    %3507 = vmatprep.subr.mxu0 0.0
    %3508 = vmatpush1.msra.mxu0 0.0
    %3509 = vmatprep.subr.mxu0 0.0
    %3510 = vmatpush1.msra.mxu0 0.0
    %3511 = vmatprep.subr.mxu0 0.0
    %3512 = vmatpush1.msra.mxu0 0.0
    %3513 = vmatprep.subr.mxu0 0.0
    %3514 = vmatpush1.msra.mxu0 0.0
    %3515 = vmatprep.subr.mxu0 0.0
    %3516 = vmatpush1.msra.mxu0 0.0
    %3517 = vmatprep.subr.mxu0 0.0
    %3518 = vmatpush1.msra.mxu0 0.0
    %3519 = vmatprep.subr.mxu0 0.0
    %3520 = vmatpush1.msra.mxu0 0.0
    %3521 = vmatprep.subr.mxu0 0.0
    %3522 = vmatpush1.msra.mxu0 0.0
    %3523 = vmatprep.subr.mxu0 0.0
    %3524 = vmatpush1.msra.mxu0 0.0
    %3525 = vmatprep.subr.mxu0 0.0
    %3526 = vmatpush1.msra.mxu0 0.0
    %3527 = vmatprep.subr.mxu0 0.0
    %3528 = vmatpush1.msra.mxu0 0.0
    %3529 = vmatprep.subr.mxu0 0.0
    %3530 = vmatpush1.msra.mxu0 0.0
    %3531 = vmatprep.subr.mxu0 0.0
    %3532 = vmatpush1.msra.mxu0 0.0
    %3533 = vmatprep.subr.mxu0 0.0
    %3534 = vmatpush1.msra.mxu0 0.0
    %3535 = vmatprep.subr.mxu0 0.0
    %3536 = vmatpush1.msra.mxu0 0.0
    %3537 = vmatprep.subr.mxu0 0.0
    %3538 = vmatpush1.msra.mxu0 0.0
    %3539 = vmatprep.subr.mxu0 0.0
    %3540 = vmatpush1.msra.mxu0 0.0
    %3541 = vmatprep.subr.mxu0 0.0
    %3542 = vmatpush1.msra.mxu0 0.0
    %3543 = vmatprep.subr.mxu0 0.0
    %3544 = vmatpush1.msra.mxu0 0.0
    %3545 = vmatprep.subr.mxu0 0.0
    %3546 = vmatpush1.msra.mxu0 0.0
    %3547 = vmatprep.subr.mxu0 0.0
    %3548 = vmatpush1.msra.mxu0 0.0
    %3549 = vmatprep.subr.mxu0 0.0
    %3550 = vmatpush1.msra.mxu0 0.0
    %3551 = vmatprep.subr.mxu0 0.0
    %3552 = vmatpush1.msra.mxu0 0.0
    %3553 = vmatprep.subr.mxu0 0.0
    %3554 = vmatpush1.msra.mxu0 0.0
    %3555 = vmatprep.subr.mxu0 0.0
    %3556 = vmatpush1.msra.mxu0 0.0
    %3557 = vmatprep.subr.mxu0 0.0
    %3558 = vmatpush1.msra.mxu0 0.0
    %3559 = vmatprep.subr.mxu0 0.0
    %3560 = vmatpush1.msra.mxu0 0.0
    %3561 = vmatprep.subr.mxu0 0.0
    %3562 = vmatpush1.msra.mxu0 0.0
    %3563 = vmatprep.subr.mxu0 0.0
    %3564 = vmatpush1.msra.mxu0 0.0
    %3565 = vmatprep.subr.mxu0 0.0
    %3566 = vmatpush1.msra.mxu0 0.0
    %3567 = vmatprep.mubr.f32.mxu0 0.0
    %3568 = vmatmul.mubr.f32.gmra.mrb[0].mxu0 %v3498
    %v3569 = vpop.f32.mrb[0].mxu0
    %v3570 = vadd.f32 0.0, %v3569
    %v3571 = vpop.f32.mrb[0].mxu0
    %3572 = vmatprep.mubr.f32.mxu0 0.0
    %3573 = vmatmul.mubr.f32.gmra.mrb[0].mxu0 %v3501
    %v3574 = vpop.f32.mrb[0].mxu0
    %v3575 = vadd.f32 0.0, %v3574
    %v3576 = vpop.f32.mrb[0].mxu0
    %3577 = vdwg.mxu0
    %3578 = vrot.lane.b32.xlu0 %v2836, 56
    %v3579 = vpop.permute.xlu0 %3578
    %3580 = vrot.lane.b32.xlu0 %v2841, 56
    %v3581 = vpop.permute.xlu0 %3580
    %v3585 = vsel %vm689, %v3484, 0
    %v3588 = vsel %vm689, %v3485, 0
    %3590 = vmatprep.subr.mxu0 0.0
    %3591 = vmatpush1.msra.mxu0 %v3579
    %3592 = vmatprep.subr.mxu0 0.0
    %3593 = vmatpush1.msra.mxu0 %v3581
    %3594 = vmatprep.subr.mxu0 0.0
    %3595 = vmatpush1.msra.mxu0 0.0
    %3596 = vmatprep.subr.mxu0 0.0
    %3597 = vmatpush1.msra.mxu0 0.0
    %3598 = vmatprep.subr.mxu0 0.0
    %3599 = vmatpush1.msra.mxu0 0.0
    %3600 = vmatprep.subr.mxu0 0.0
    %3601 = vmatpush1.msra.mxu0 0.0
    %3602 = vmatprep.subr.mxu0 0.0
    %3603 = vmatpush1.msra.mxu0 0.0
    %3604 = vmatprep.subr.mxu0 0.0
    %3605 = vmatpush1.msra.mxu0 0.0
    %3606 = vmatprep.subr.mxu0 0.0
    %3607 = vmatpush1.msra.mxu0 0.0
    %3608 = vmatprep.subr.mxu0 0.0
    %3609 = vmatpush1.msra.mxu0 0.0
    %3610 = vmatprep.subr.mxu0 0.0
    %3611 = vmatpush1.msra.mxu0 0.0
    %3612 = vmatprep.subr.mxu0 0.0
    %3613 = vmatpush1.msra.mxu0 0.0
    %3614 = vmatprep.subr.mxu0 0.0
    %3615 = vmatpush1.msra.mxu0 0.0
    %3616 = vmatprep.subr.mxu0 0.0
    %3617 = vmatpush1.msra.mxu0 0.0
    %3618 = vmatprep.subr.mxu0 0.0
    %3619 = vmatpush1.msra.mxu0 0.0
    %3620 = vmatprep.subr.mxu0 0.0
    %3621 = vmatpush1.msra.mxu0 0.0
    %3622 = vmatprep.subr.mxu0 0.0
    %3623 = vmatpush1.msra.mxu0 0.0
    %3624 = vmatprep.subr.mxu0 0.0
    %3625 = vmatpush1.msra.mxu0 0.0
    %3626 = vmatprep.subr.mxu0 0.0
    %3627 = vmatpush1.msra.mxu0 0.0
    %3628 = vmatprep.subr.mxu0 0.0
    %3629 = vmatpush1.msra.mxu0 0.0
    %3630 = vmatprep.subr.mxu0 0.0
    %3631 = vmatpush1.msra.mxu0 0.0
    %3632 = vmatprep.subr.mxu0 0.0
    %3633 = vmatpush1.msra.mxu0 0.0
    %3634 = vmatprep.subr.mxu0 0.0
    %3635 = vmatpush1.msra.mxu0 0.0
    %3636 = vmatprep.subr.mxu0 0.0
    %3637 = vmatpush1.msra.mxu0 0.0
    %3638 = vmatprep.subr.mxu0 0.0
    %3639 = vmatpush1.msra.mxu0 0.0
    %3640 = vmatprep.subr.mxu0 0.0
    %3641 = vmatpush1.msra.mxu0 0.0
    %3642 = vmatprep.subr.mxu0 0.0
    %3643 = vmatpush1.msra.mxu0 0.0
    %3644 = vmatprep.subr.mxu0 0.0
    %3645 = vmatpush1.msra.mxu0 0.0
    %3646 = vmatprep.subr.mxu0 0.0
    %3647 = vmatpush1.msra.mxu0 0.0
    %3648 = vmatprep.subr.mxu0 0.0
    %3649 = vmatpush1.msra.mxu0 0.0
    %3650 = vmatprep.subr.mxu0 0.0
    %3651 = vmatpush1.msra.mxu0 0.0
    %3652 = vmatprep.subr.mxu0 0.0
    %3653 = vmatpush1.msra.mxu0 0.0
    %3654 = vmatprep.mubr.f32.mxu0 0.0
    %3655 = vmatmul.mubr.f32.gmra.mrb[0].mxu0 %v3585
    %v3656 = vpop.f32.mrb[0].mxu0
    %v3657 = vadd.f32 0.0, %v3656
    %v3658 = vpop.f32.mrb[0].mxu0
    %3659 = vmatprep.mubr.f32.mxu0 0.0
    %3660 = vmatmul.mubr.f32.gmra.mrb[0].mxu0 %v3588
    %v3661 = vpop.f32.mrb[0].mxu0
    %v3662 = vadd.f32 0.0, %v3661
    %v3663 = vpop.f32.mrb[0].mxu0
    %3664 = vdwg.mxu0
    %3665 = vrot.lane.b32.xlu0 %v2826, 112
    %v3666 = vpop.permute.xlu0 %3665
    %3667 = vrot.lane.b32.xlu0 %v2831, 112
    %v3668 = vpop.permute.xlu0 %3667
    %3669 = vrot.lane.b32.xlu0 %v2826, 80
    %v3670 = vpop.permute.xlu0 %3669
    %3671 = vrot.lane.b32.xlu0 %v2831, 80
    %v3672 = vpop.permute.xlu0 %3671
    %v3673 = vsel %vm496, %v3666, 0
    %v3675 = vsel %vm496, %v3668, 0
    %v3677 = vsel %vm496, %v3670, 0
    %v3679 = vsel %vm496, %v3672, 0
    %3681 = vmatprep.subr.mxu0 0.0
    %3682 = vmatpush1.xpose.msra.mxu0 %v3677
    %3683 = vmatprep.subr.mxu0 0.0
    %3684 = vmatpush1.xpose.msra.mxu0 %v3679
    %3685 = vmatprep.subr.mxu0 0.0
    %3686 = vmatpush1.xpose.msra.mxu0 0.0
    %3687 = vmatprep.subr.mxu0 0.0
    %3688 = vmatpush1.xpose.msra.mxu0 0.0
    %3689 = vmatprep.subr.mxu0 0.0
    %3690 = vmatpush1.xpose.msra.mxu0 0.0
    %3691 = vmatprep.subr.mxu0 0.0
    %3692 = vmatpush1.xpose.msra.mxu0 0.0
    %3693 = vmatprep.subr.mxu0 0.0
    %3694 = vmatpush1.xpose.msra.mxu0 0.0
    %3695 = vmatprep.subr.mxu0 0.0
    %3696 = vmatpush1.xpose.msra.mxu0 0.0
    %3697 = vmatprep.subr.mxu0 0.0
    %3698 = vmatpush1.xpose.msra.mxu0 0.0
    %3699 = vmatprep.subr.mxu0 0.0
    %3700 = vmatpush1.xpose.msra.mxu0 0.0
    %3701 = vmatprep.subr.mxu0 0.0
    %3702 = vmatpush1.xpose.msra.mxu0 0.0
    %3703 = vmatprep.subr.mxu0 0.0
    %3704 = vmatpush1.xpose.msra.mxu0 0.0
    %3705 = vmatprep.subr.mxu0 0.0
    %3706 = vmatpush1.xpose.msra.mxu0 0.0
    %3707 = vmatprep.subr.mxu0 0.0
    %3708 = vmatpush1.xpose.msra.mxu0 0.0
    %3709 = vmatprep.subr.mxu0 0.0
    %3710 = vmatpush1.xpose.msra.mxu0 0.0
    %3711 = vmatprep.subr.mxu0 0.0
    %3712 = vmatpush1.xpose.msra.mxu0 0.0
    %3713 = vmatprep.subr.mxu0 0.0
    %3714 = vmatpush1.xpose.msra.mxu0 0.0
    %3715 = vmatprep.subr.mxu0 0.0
    %3716 = vmatpush1.xpose.msra.mxu0 0.0
    %3717 = vmatprep.subr.mxu0 0.0
    %3718 = vmatpush1.xpose.msra.mxu0 0.0
    %3719 = vmatprep.subr.mxu0 0.0
    %3720 = vmatpush1.xpose.msra.mxu0 0.0
    %3721 = vmatprep.subr.mxu0 0.0
    %3722 = vmatpush1.xpose.msra.mxu0 0.0
    %3723 = vmatprep.subr.mxu0 0.0
    %3724 = vmatpush1.xpose.msra.mxu0 0.0
    %3725 = vmatprep.subr.mxu0 0.0
    %3726 = vmatpush1.xpose.msra.mxu0 0.0
    %3727 = vmatprep.subr.mxu0 0.0
    %3728 = vmatpush1.xpose.msra.mxu0 0.0
    %3729 = vmatprep.subr.mxu0 0.0
    %3730 = vmatpush1.xpose.msra.mxu0 0.0
    %3731 = vmatprep.subr.mxu0 0.0
    %3732 = vmatpush1.xpose.msra.mxu0 0.0
    %3733 = vmatprep.subr.mxu0 0.0
    %3734 = vmatpush1.xpose.msra.mxu0 0.0
    %3735 = vmatprep.subr.mxu0 0.0
    %3736 = vmatpush1.xpose.msra.mxu0 0.0
    %3737 = vmatprep.subr.mxu0 0.0
    %3738 = vmatpush1.xpose.msra.mxu0 0.0
    %3739 = vmatprep.subr.mxu0 0.0
    %3740 = vmatpush1.xpose.msra.mxu0 0.0
    %3741 = vmatprep.subr.mxu0 0.0
    %3742 = vmatpush1.xpose.msra.mxu0 0.0
    %3743 = vmatprep.subr.mxu0 0.0
    %3744 = vmatpush1.xpose.msra.mxu0 0.0
    %3745 = vmatprep.mubr.f32.mxu0 0.0
    %3746 = vmatmul.mubr.f32.gmra.mrb[0].mxu0 %v3673
    %v3747 = vpop.f32.mrb[0].mxu0
    %v3748 = vadd.f32 0.0, %v3747
    %v3749 = vpop.f32.mrb[0].mxu0
    %3750 = vmatprep.mubr.f32.mxu0 0.0
    %3751 = vmatmul.mubr.f32.gmra.mrb[0].mxu0 %v3675
    %v3752 = vpop.f32.mrb[0].mxu0
    %v3753 = vadd.f32 0.0, %v3752
    %v3754 = vpop.f32.mrb[0].mxu0
    %3755 = vdwg.mxu0
    %3756 = vrot.lane.b32.xlu0 %v2836, 112
    %v3757 = vpop.permute.xlu0 %3756
    %3758 = vrot.lane.b32.xlu0 %v2841, 112
    %v3759 = vpop.permute.xlu0 %3758
    %3760 = vrot.lane.b32.xlu0 %v2836, 80
    %v3761 = vpop.permute.xlu0 %3760
    %3762 = vrot.lane.b32.xlu0 %v2841, 80
    %v3763 = vpop.permute.xlu0 %3762
    %v3764 = vsel %vm496, %v3757, 0
    %v3766 = vsel %vm496, %v3759, 0
    %v3768 = vsel %vm496, %v3761, 0
    %v3770 = vsel %vm496, %v3763, 0
    %3772 = vmatprep.subr.mxu0 0.0
    %3773 = vmatpush1.xpose.msra.mxu0 %v3768
    %3774 = vmatprep.subr.mxu0 0.0
    %3775 = vmatpush1.xpose.msra.mxu0 %v3770
    %3776 = vmatprep.subr.mxu0 0.0
    %3777 = vmatpush1.xpose.msra.mxu0 0.0
    %3778 = vmatprep.subr.mxu0 0.0
    %3779 = vmatpush1.xpose.msra.mxu0 0.0
    %3780 = vmatprep.subr.mxu0 0.0
    %3781 = vmatpush1.xpose.msra.mxu0 0.0
    %3782 = vmatprep.subr.mxu0 0.0
    %3783 = vmatpush1.xpose.msra.mxu0 0.0
    %3784 = vmatprep.subr.mxu0 0.0
    %3785 = vmatpush1.xpose.msra.mxu0 0.0
    %3786 = vmatprep.subr.mxu0 0.0
    %3787 = vmatpush1.xpose.msra.mxu0 0.0
    %3788 = vmatprep.subr.mxu0 0.0
    %3789 = vmatpush1.xpose.msra.mxu0 0.0
    %3790 = vmatprep.subr.mxu0 0.0
    %3791 = vmatpush1.xpose.msra.mxu0 0.0
    %3792 = vmatprep.subr.mxu0 0.0
    %3793 = vmatpush1.xpose.msra.mxu0 0.0
    %3794 = vmatprep.subr.mxu0 0.0
    %3795 = vmatpush1.xpose.msra.mxu0 0.0
    %3796 = vmatprep.subr.mxu0 0.0
    %3797 = vmatpush1.xpose.msra.mxu0 0.0
    %3798 = vmatprep.subr.mxu0 0.0
    %3799 = vmatpush1.xpose.msra.mxu0 0.0
    %3800 = vmatprep.subr.mxu0 0.0
    %3801 = vmatpush1.xpose.msra.mxu0 0.0
    %3802 = vmatprep.subr.mxu0 0.0
    %3803 = vmatpush1.xpose.msra.mxu0 0.0
    %3804 = vmatprep.subr.mxu0 0.0
    %3805 = vmatpush1.xpose.msra.mxu0 0.0
    %3806 = vmatprep.subr.mxu0 0.0
    %3807 = vmatpush1.xpose.msra.mxu0 0.0
    %3808 = vmatprep.subr.mxu0 0.0
    %3809 = vmatpush1.xpose.msra.mxu0 0.0
    %3810 = vmatprep.subr.mxu0 0.0
    %3811 = vmatpush1.xpose.msra.mxu0 0.0
    %3812 = vmatprep.subr.mxu0 0.0
    %3813 = vmatpush1.xpose.msra.mxu0 0.0
    %3814 = vmatprep.subr.mxu0 0.0
    %3815 = vmatpush1.xpose.msra.mxu0 0.0
    %3816 = vmatprep.subr.mxu0 0.0
    %3817 = vmatpush1.xpose.msra.mxu0 0.0
    %3818 = vmatprep.subr.mxu0 0.0
    %3819 = vmatpush1.xpose.msra.mxu0 0.0
    %3820 = vmatprep.subr.mxu0 0.0
    %3821 = vmatpush1.xpose.msra.mxu0 0.0
    %3822 = vmatprep.subr.mxu0 0.0
    %3823 = vmatpush1.xpose.msra.mxu0 0.0
    %3824 = vmatprep.subr.mxu0 0.0
    %3825 = vmatpush1.xpose.msra.mxu0 0.0
    %3826 = vmatprep.subr.mxu0 0.0
    %3827 = vmatpush1.xpose.msra.mxu0 0.0
    %3828 = vmatprep.subr.mxu0 0.0
    %3829 = vmatpush1.xpose.msra.mxu0 0.0
    %3830 = vmatprep.subr.mxu0 0.0
    %3831 = vmatpush1.xpose.msra.mxu0 0.0
    %3832 = vmatprep.subr.mxu0 0.0
    %3833 = vmatpush1.xpose.msra.mxu0 0.0
    %3834 = vmatprep.subr.mxu0 0.0
    %3835 = vmatpush1.xpose.msra.mxu0 0.0
    %3836 = vmatprep.mubr.f32.mxu0 0.0
    %3837 = vmatmul.mubr.f32.gmra.mrb[0].mxu0 %v3764
    %v3838 = vpop.f32.mrb[0].mxu0
    %v3839 = vadd.f32 0.0, %v3838
    %v3840 = vpop.f32.mrb[0].mxu0
    %3841 = vmatprep.mubr.f32.mxu0 0.0
    %3842 = vmatmul.mubr.f32.gmra.mrb[0].mxu0 %v3766
    %v3843 = vpop.f32.mrb[0].mxu0
    %v3844 = vadd.f32 0.0, %v3843
    %v3845 = vpop.f32.mrb[0].mxu0
    %3846 = vdwg.mxu0
    %v3847 = vmul.f32 %v3748, 0.35355338
    %v3848 = vmul.f32 %v3753, 0.35355338
    %v3849 = vmul.f32 %v3839, 0.35355338
    %v3850 = vmul.f32 %v3844, 0.35355338
    %v3851 = vadd.f32 %v3847, %v678
    %v3852 = vadd.f32 %v3848, %v678
    %v3853 = vadd.f32 %v3849, %v682
    %v3854 = vadd.f32 %v3850, %v682
    %v3855 = vsel %vm689, %v3851, -inf
    %3856 = vmax.xlane.f32.xlu0 %v3855
    %v3857 = vpop.xlane.xlu0 %3856
    %v3858 = vsel %vm689, %v3852, -inf
    %3859 = vmax.xlane.f32.xlu0 %v3858
    %v3860 = vpop.xlane.xlu0 %3859
    %v3861 = vsel %vm689, %v3853, -inf
    %3862 = vmax.xlane.f32.xlu0 %v3861
    %v3863 = vpop.xlane.xlu0 %3862
    %v3864 = vsel %vm689, %v3854, -inf
    %3865 = vmax.xlane.f32.xlu0 %v3864
    %v3866 = vpop.xlane.xlu0 %3865
    %v3867 = vsub.f32 %v3851, %v3857
    %v3868 = vsub.f32 %v3852, %v3860
    %v3869 = vsub.f32 %v3853, %v3863
    %v3870 = vsub.f32 %v3854, %v3866
    %v3871 = vmul.f32 %v3867, 1.442695
    %v3872 = vpow.pop %v3871
    %v3873 = vmul.f32 %v3868, 1.442695
    %v3874 = vpow.pop %v3873
    %v3875 = vmul.f32 %v3869, 1.442695
    %v3876 = vpow.pop %v3875
    %v3877 = vmul.f32 %v3870, 1.442695
    %v3878 = vpow.pop %v3877
    %v3879 = vsel %vm689, %v3872, 0.0
    %3880 = vadd.xlane.f32.xlu0 %v3879
    %v3881 = vpop.xlane.xlu0 %3880
    %v3882 = vsel %vm689, %v3874, 0.0
    %3883 = vadd.xlane.f32.xlu0 %v3882
    %v3884 = vpop.xlane.xlu0 %3883
    %v3885 = vsel %vm689, %v3876, 0.0
    %3886 = vadd.xlane.f32.xlu0 %v3885
    %v3887 = vpop.xlane.xlu0 %3886
    %v3888 = vsel %vm689, %v3878, 0.0
    %3889 = vadd.xlane.f32.xlu0 %v3888
    %v3890 = vpop.xlane.xlu0 %3889
    %v3891 = vrcp.pop %v3881
    %v3892 = vrcp.pop %v3884
    %v3893 = vrcp.pop %v3887
    %v3894 = vrcp.pop %v3890
    %v3895 = vmul.f32 %v3872, %v3891
    %v3896 = vmul.f32 %v3874, %v3892
    %v3897 = vmul.f32 %v3876, %v3893
    %v3898 = vmul.f32 %v3878, %v3894
    %s3899 = scalar_lea.vmem %s63, 64
    %3900 = vst.msk [vmem:[%s3899] sm:$0xff] %vm689, %v3895
    %3901 = vst.msk [vmem:[%s3899 + $0x8] sm:$0xff] %vm689, %v3896
    %3902 = vst.msk [vmem:[%s3899 + $0x10] sm:$0xff] %vm689, %v3897
    %3903 = vst.msk [vmem:[%s3899 + $0x18] sm:$0xff] %vm689, %v3898
    %3904 = vrot.lane.b32.xlu0 %v2826, 48
    %v3905 = vpop.permute.xlu0 %3904
    %3906 = vrot.lane.b32.xlu0 %v2831, 48
    %v3907 = vpop.permute.xlu0 %3906
    %v3911 = vsel %vm689, %v3895, 0
    %v3914 = vsel %vm689, %v3896, 0
    %3916 = vmatprep.subr.mxu0 0.0
    %3917 = vmatpush1.msra.mxu0 %v3905
    %3918 = vmatprep.subr.mxu0 0.0
    %3919 = vmatpush1.msra.mxu0 %v3907
    %3920 = vmatprep.subr.mxu0 0.0
    %3921 = vmatpush1.msra.mxu0 0.0
    %3922 = vmatprep.subr.mxu0 0.0
    %3923 = vmatpush1.msra.mxu0 0.0
    %3924 = vmatprep.subr.mxu0 0.0
    %3925 = vmatpush1.msra.mxu0 0.0
    %3926 = vmatprep.subr.mxu0 0.0
    %3927 = vmatpush1.msra.mxu0 0.0
    %3928 = vmatprep.subr.mxu0 0.0
    %3929 = vmatpush1.msra.mxu0 0.0
    %3930 = vmatprep.subr.mxu0 0.0
    %3931 = vmatpush1.msra.mxu0 0.0
    %3932 = vmatprep.subr.mxu0 0.0
    %3933 = vmatpush1.msra.mxu0 0.0
    %3934 = vmatprep.subr.mxu0 0.0
    %3935 = vmatpush1.msra.mxu0 0.0
    %3936 = vmatprep.subr.mxu0 0.0
    %3937 = vmatpush1.msra.mxu0 0.0
    %3938 = vmatprep.subr.mxu0 0.0
    %3939 = vmatpush1.msra.mxu0 0.0
    %3940 = vmatprep.subr.mxu0 0.0
    %3941 = vmatpush1.msra.mxu0 0.0
    %3942 = vmatprep.subr.mxu0 0.0
    %3943 = vmatpush1.msra.mxu0 0.0
    %3944 = vmatprep.subr.mxu0 0.0
    %3945 = vmatpush1.msra.mxu0 0.0
    %3946 = vmatprep.subr.mxu0 0.0
    %3947 = vmatpush1.msra.mxu0 0.0
    %3948 = vmatprep.subr.mxu0 0.0
    %3949 = vmatpush1.msra.mxu0 0.0
    %3950 = vmatprep.subr.mxu0 0.0
    %3951 = vmatpush1.msra.mxu0 0.0
    %3952 = vmatprep.subr.mxu0 0.0
    %3953 = vmatpush1.msra.mxu0 0.0
    %3954 = vmatprep.subr.mxu0 0.0
    %3955 = vmatpush1.msra.mxu0 0.0
    %3956 = vmatprep.subr.mxu0 0.0
    %3957 = vmatpush1.msra.mxu0 0.0
    %3958 = vmatprep.subr.mxu0 0.0
    %3959 = vmatpush1.msra.mxu0 0.0
    %3960 = vmatprep.subr.mxu0 0.0
    %3961 = vmatpush1.msra.mxu0 0.0
    %3962 = vmatprep.subr.mxu0 0.0
    %3963 = vmatpush1.msra.mxu0 0.0
    %3964 = vmatprep.subr.mxu0 0.0
    %3965 = vmatpush1.msra.mxu0 0.0
    %3966 = vmatprep.subr.mxu0 0.0
    %3967 = vmatpush1.msra.mxu0 0.0
    %3968 = vmatprep.subr.mxu0 0.0
    %3969 = vmatpush1.msra.mxu0 0.0
    %3970 = vmatprep.subr.mxu0 0.0
    %3971 = vmatpush1.msra.mxu0 0.0
    %3972 = vmatprep.subr.mxu0 0.0
    %3973 = vmatpush1.msra.mxu0 0.0
    %3974 = vmatprep.subr.mxu0 0.0
    %3975 = vmatpush1.msra.mxu0 0.0
    %3976 = vmatprep.subr.mxu0 0.0
    %3977 = vmatpush1.msra.mxu0 0.0
    %3978 = vmatprep.subr.mxu0 0.0
    %3979 = vmatpush1.msra.mxu0 0.0
    %3980 = vmatprep.mubr.f32.mxu0 0.0
    %3981 = vmatmul.mubr.f32.gmra.mrb[0].mxu0 %v3911
    %v3982 = vpop.f32.mrb[0].mxu0
    %v3983 = vadd.f32 0.0, %v3982
    %v3984 = vpop.f32.mrb[0].mxu0
    %3985 = vmatprep.mubr.f32.mxu0 0.0
    %3986 = vmatmul.mubr.f32.gmra.mrb[0].mxu0 %v3914
    %v3987 = vpop.f32.mrb[0].mxu0
    %v3988 = vadd.f32 0.0, %v3987
    %v3989 = vpop.f32.mrb[0].mxu0
    %3990 = vdwg.mxu0
    %3991 = vrot.lane.b32.xlu0 %v2836, 48
    %v3992 = vpop.permute.xlu0 %3991
    %3993 = vrot.lane.b32.xlu0 %v2841, 48
    %v3994 = vpop.permute.xlu0 %3993
    %v3998 = vsel %vm689, %v3897, 0
    %v4001 = vsel %vm689, %v3898, 0
    %4003 = vmatprep.subr.mxu0 0.0
    %4004 = vmatpush1.msra.mxu0 %v3992
    %4005 = vmatprep.subr.mxu0 0.0
    %4006 = vmatpush1.msra.mxu0 %v3994
    %4007 = vmatprep.subr.mxu0 0.0
    %4008 = vmatpush1.msra.mxu0 0.0
    %4009 = vmatprep.subr.mxu0 0.0
    %4010 = vmatpush1.msra.mxu0 0.0
    %4011 = vmatprep.subr.mxu0 0.0
    %4012 = vmatpush1.msra.mxu0 0.0
    %4013 = vmatprep.subr.mxu0 0.0
    %4014 = vmatpush1.msra.mxu0 0.0
    %4015 = vmatprep.subr.mxu0 0.0
    %4016 = vmatpush1.msra.mxu0 0.0
    %4017 = vmatprep.subr.mxu0 0.0
    %4018 = vmatpush1.msra.mxu0 0.0
    %4019 = vmatprep.subr.mxu0 0.0
    %4020 = vmatpush1.msra.mxu0 0.0
    %4021 = vmatprep.subr.mxu0 0.0
    %4022 = vmatpush1.msra.mxu0 0.0
    %4023 = vmatprep.subr.mxu0 0.0
    %4024 = vmatpush1.msra.mxu0 0.0
    %4025 = vmatprep.subr.mxu0 0.0
    %4026 = vmatpush1.msra.mxu0 0.0
    %4027 = vmatprep.subr.mxu0 0.0
    %4028 = vmatpush1.msra.mxu0 0.0
    %4029 = vmatprep.subr.mxu0 0.0
    %4030 = vmatpush1.msra.mxu0 0.0
    %4031 = vmatprep.subr.mxu0 0.0
    %4032 = vmatpush1.msra.mxu0 0.0
    %4033 = vmatprep.subr.mxu0 0.0
    %4034 = vmatpush1.msra.mxu0 0.0
    %4035 = vmatprep.subr.mxu0 0.0
    %4036 = vmatpush1.msra.mxu0 0.0
    %4037 = vmatprep.subr.mxu0 0.0
    %4038 = vmatpush1.msra.mxu0 0.0
    %4039 = vmatprep.subr.mxu0 0.0
    %4040 = vmatpush1.msra.mxu0 0.0
    %4041 = vmatprep.subr.mxu0 0.0
    %4042 = vmatpush1.msra.mxu0 0.0
    %4043 = vmatprep.subr.mxu0 0.0
    %4044 = vmatpush1.msra.mxu0 0.0
    %4045 = vmatprep.subr.mxu0 0.0
    %4046 = vmatpush1.msra.mxu0 0.0
    %4047 = vmatprep.subr.mxu0 0.0
    %4048 = vmatpush1.msra.mxu0 0.0
    %4049 = vmatprep.subr.mxu0 0.0
    %4050 = vmatpush1.msra.mxu0 0.0
    %4051 = vmatprep.subr.mxu0 0.0
    %4052 = vmatpush1.msra.mxu0 0.0
    %4053 = vmatprep.subr.mxu0 0.0
    %4054 = vmatpush1.msra.mxu0 0.0
    %4055 = vmatprep.subr.mxu0 0.0
    %4056 = vmatpush1.msra.mxu0 0.0
    %4057 = vmatprep.subr.mxu0 0.0
    %4058 = vmatpush1.msra.mxu0 0.0
    %4059 = vmatprep.subr.mxu0 0.0
    %4060 = vmatpush1.msra.mxu0 0.0
    %4061 = vmatprep.subr.mxu0 0.0
    %4062 = vmatpush1.msra.mxu0 0.0
    %4063 = vmatprep.subr.mxu0 0.0
    %4064 = vmatpush1.msra.mxu0 0.0
    %4065 = vmatprep.subr.mxu0 0.0
    %4066 = vmatpush1.msra.mxu0 0.0
    %4067 = vmatprep.mubr.f32.mxu0 0.0
    %4068 = vmatmul.mubr.f32.gmra.mrb[0].mxu0 %v3998
    %v4069 = vpop.f32.mrb[0].mxu0
    %v4070 = vadd.f32 0.0, %v4069
    %v4071 = vpop.f32.mrb[0].mxu0
    %4072 = vmatprep.mubr.f32.mxu0 0.0
    %4073 = vmatmul.mubr.f32.gmra.mrb[0].mxu0 %v4001
    %v4074 = vpop.f32.mrb[0].mxu0
    %v4075 = vadd.f32 0.0, %v4074
    %v4076 = vpop.f32.mrb[0].mxu0
    %4077 = vdwg.mxu0
    %4078 = vrot.lane.b32.xlu0 %v2826, 104
    %v4079 = vpop.permute.xlu0 %4078
    %4080 = vrot.lane.b32.xlu0 %v2831, 104
    %v4081 = vpop.permute.xlu0 %4080
    %4082 = vrot.lane.b32.xlu0 %v2826, 72
    %v4083 = vpop.permute.xlu0 %4082
    %4084 = vrot.lane.b32.xlu0 %v2831, 72
    %v4085 = vpop.permute.xlu0 %4084
    %v4086 = vsel %vm496, %v4079, 0
    %v4088 = vsel %vm496, %v4081, 0
    %v4090 = vsel %vm496, %v4083, 0
    %v4092 = vsel %vm496, %v4085, 0
    %4094 = vmatprep.subr.mxu0 0.0
    %4095 = vmatpush1.xpose.msra.mxu0 %v4090
    %4096 = vmatprep.subr.mxu0 0.0
    %4097 = vmatpush1.xpose.msra.mxu0 %v4092
    %4098 = vmatprep.subr.mxu0 0.0
    %4099 = vmatpush1.xpose.msra.mxu0 0.0
    %4100 = vmatprep.subr.mxu0 0.0
    %4101 = vmatpush1.xpose.msra.mxu0 0.0
    %4102 = vmatprep.subr.mxu0 0.0
    %4103 = vmatpush1.xpose.msra.mxu0 0.0
    %4104 = vmatprep.subr.mxu0 0.0
    %4105 = vmatpush1.xpose.msra.mxu0 0.0
    %4106 = vmatprep.subr.mxu0 0.0
    %4107 = vmatpush1.xpose.msra.mxu0 0.0
    %4108 = vmatprep.subr.mxu0 0.0
    %4109 = vmatpush1.xpose.msra.mxu0 0.0
    %4110 = vmatprep.subr.mxu0 0.0
    %4111 = vmatpush1.xpose.msra.mxu0 0.0
    %4112 = vmatprep.subr.mxu0 0.0
    %4113 = vmatpush1.xpose.msra.mxu0 0.0
    %4114 = vmatprep.subr.mxu0 0.0
    %4115 = vmatpush1.xpose.msra.mxu0 0.0
    %4116 = vmatprep.subr.mxu0 0.0
    %4117 = vmatpush1.xpose.msra.mxu0 0.0
    %4118 = vmatprep.subr.mxu0 0.0
    %4119 = vmatpush1.xpose.msra.mxu0 0.0
    %4120 = vmatprep.subr.mxu0 0.0
    %4121 = vmatpush1.xpose.msra.mxu0 0.0
    %4122 = vmatprep.subr.mxu0 0.0
    %4123 = vmatpush1.xpose.msra.mxu0 0.0
    %4124 = vmatprep.subr.mxu0 0.0
    %4125 = vmatpush1.xpose.msra.mxu0 0.0
    %4126 = vmatprep.subr.mxu0 0.0
    %4127 = vmatpush1.xpose.msra.mxu0 0.0
    %4128 = vmatprep.subr.mxu0 0.0
    %4129 = vmatpush1.xpose.msra.mxu0 0.0
    %4130 = vmatprep.subr.mxu0 0.0
    %4131 = vmatpush1.xpose.msra.mxu0 0.0
    %4132 = vmatprep.subr.mxu0 0.0
    %4133 = vmatpush1.xpose.msra.mxu0 0.0
    %4134 = vmatprep.subr.mxu0 0.0
    %4135 = vmatpush1.xpose.msra.mxu0 0.0
    %4136 = vmatprep.subr.mxu0 0.0
    %4137 = vmatpush1.xpose.msra.mxu0 0.0
    %4138 = vmatprep.subr.mxu0 0.0
    %4139 = vmatpush1.xpose.msra.mxu0 0.0
    %4140 = vmatprep.subr.mxu0 0.0
    %4141 = vmatpush1.xpose.msra.mxu0 0.0
    %4142 = vmatprep.subr.mxu0 0.0
    %4143 = vmatpush1.xpose.msra.mxu0 0.0
    %4144 = vmatprep.subr.mxu0 0.0
    %4145 = vmatpush1.xpose.msra.mxu0 0.0
    %4146 = vmatprep.subr.mxu0 0.0
    %4147 = vmatpush1.xpose.msra.mxu0 0.0
    %4148 = vmatprep.subr.mxu0 0.0
    %4149 = vmatpush1.xpose.msra.mxu0 0.0
    %4150 = vmatprep.subr.mxu0 0.0
    %4151 = vmatpush1.xpose.msra.mxu0 0.0
    %4152 = vmatprep.subr.mxu0 0.0
    %4153 = vmatpush1.xpose.msra.mxu0 0.0
    %4154 = vmatprep.subr.mxu0 0.0
    %4155 = vmatpush1.xpose.msra.mxu0 0.0
    %4156 = vmatprep.subr.mxu0 0.0
    %4157 = vmatpush1.xpose.msra.mxu0 0.0
    %4158 = vmatprep.mubr.f32.mxu0 0.0
    %4159 = vmatmul.mubr.f32.gmra.mrb[0].mxu0 %v4086
    %v4160 = vpop.f32.mrb[0].mxu0
    %v4161 = vadd.f32 0.0, %v4160
    %v4162 = vpop.f32.mrb[0].mxu0
    %4163 = vmatprep.mubr.f32.mxu0 0.0
    %4164 = vmatmul.mubr.f32.gmra.mrb[0].mxu0 %v4088
    %v4165 = vpop.f32.mrb[0].mxu0
    %v4166 = vadd.f32 0.0, %v4165
    %v4167 = vpop.f32.mrb[0].mxu0
    %4168 = vdwg.mxu0
    %4169 = vrot.lane.b32.xlu0 %v2836, 104
    %v4170 = vpop.permute.xlu0 %4169
    %4171 = vrot.lane.b32.xlu0 %v2841, 104
    %v4172 = vpop.permute.xlu0 %4171
    %4173 = vrot.lane.b32.xlu0 %v2836, 72
    %v4174 = vpop.permute.xlu0 %4173
    %4175 = vrot.lane.b32.xlu0 %v2841, 72
    %v4176 = vpop.permute.xlu0 %4175
    %v4177 = vsel %vm496, %v4170, 0
    %v4179 = vsel %vm496, %v4172, 0
    %v4181 = vsel %vm496, %v4174, 0
    %v4183 = vsel %vm496, %v4176, 0
    %4185 = vmatprep.subr.mxu0 0.0
    %4186 = vmatpush1.xpose.msra.mxu0 %v4181
    %4187 = vmatprep.subr.mxu0 0.0
    %4188 = vmatpush1.xpose.msra.mxu0 %v4183
    %4189 = vmatprep.subr.mxu0 0.0
    %4190 = vmatpush1.xpose.msra.mxu0 0.0
    %4191 = vmatprep.subr.mxu0 0.0
    %4192 = vmatpush1.xpose.msra.mxu0 0.0
    %4193 = vmatprep.subr.mxu0 0.0
    %4194 = vmatpush1.xpose.msra.mxu0 0.0
    %4195 = vmatprep.subr.mxu0 0.0
    %4196 = vmatpush1.xpose.msra.mxu0 0.0
    %4197 = vmatprep.subr.mxu0 0.0
    %4198 = vmatpush1.xpose.msra.mxu0 0.0
    %4199 = vmatprep.subr.mxu0 0.0
    %4200 = vmatpush1.xpose.msra.mxu0 0.0
    %4201 = vmatprep.subr.mxu0 0.0
    %4202 = vmatpush1.xpose.msra.mxu0 0.0
    %4203 = vmatprep.subr.mxu0 0.0
    %4204 = vmatpush1.xpose.msra.mxu0 0.0
    %4205 = vmatprep.subr.mxu0 0.0
    %4206 = vmatpush1.xpose.msra.mxu0 0.0
    %4207 = vmatprep.subr.mxu0 0.0
    %4208 = vmatpush1.xpose.msra.mxu0 0.0
    %4209 = vmatprep.subr.mxu0 0.0
    %4210 = vmatpush1.xpose.msra.mxu0 0.0
    %4211 = vmatprep.subr.mxu0 0.0
    %4212 = vmatpush1.xpose.msra.mxu0 0.0
    %4213 = vmatprep.subr.mxu0 0.0
    %4214 = vmatpush1.xpose.msra.mxu0 0.0
    %4215 = vmatprep.subr.mxu0 0.0
    %4216 = vmatpush1.xpose.msra.mxu0 0.0
    %4217 = vmatprep.subr.mxu0 0.0
    %4218 = vmatpush1.xpose.msra.mxu0 0.0
    %4219 = vmatprep.subr.mxu0 0.0
    %4220 = vmatpush1.xpose.msra.mxu0 0.0
    %4221 = vmatprep.subr.mxu0 0.0
    %4222 = vmatpush1.xpose.msra.mxu0 0.0
    %4223 = vmatprep.subr.mxu0 0.0
    %4224 = vmatpush1.xpose.msra.mxu0 0.0
    %4225 = vmatprep.subr.mxu0 0.0
    %4226 = vmatpush1.xpose.msra.mxu0 0.0
    %4227 = vmatprep.subr.mxu0 0.0
    %4228 = vmatpush1.xpose.msra.mxu0 0.0
    %4229 = vmatprep.subr.mxu0 0.0
    %4230 = vmatpush1.xpose.msra.mxu0 0.0
    %4231 = vmatprep.subr.mxu0 0.0
    %4232 = vmatpush1.xpose.msra.mxu0 0.0
    %4233 = vmatprep.subr.mxu0 0.0
    %4234 = vmatpush1.xpose.msra.mxu0 0.0
    %4235 = vmatprep.subr.mxu0 0.0
    %4236 = vmatpush1.xpose.msra.mxu0 0.0
    %4237 = vmatprep.subr.mxu0 0.0
    %4238 = vmatpush1.xpose.msra.mxu0 0.0
    %4239 = vmatprep.subr.mxu0 0.0
    %4240 = vmatpush1.xpose.msra.mxu0 0.0
    %4241 = vmatprep.subr.mxu0 0.0
    %4242 = vmatpush1.xpose.msra.mxu0 0.0
    %4243 = vmatprep.subr.mxu0 0.0
    %4244 = vmatpush1.xpose.msra.mxu0 0.0
    %4245 = vmatprep.subr.mxu0 0.0
    %4246 = vmatpush1.xpose.msra.mxu0 0.0
    %4247 = vmatprep.subr.mxu0 0.0
    %4248 = vmatpush1.xpose.msra.mxu0 0.0
    %4249 = vmatprep.mubr.f32.mxu0 0.0
    %4250 = vmatmul.mubr.f32.gmra.mrb[0].mxu0 %v4177
    %v4251 = vpop.f32.mrb[0].mxu0
    %v4252 = vadd.f32 0.0, %v4251
    %v4253 = vpop.f32.mrb[0].mxu0
    %4254 = vmatprep.mubr.f32.mxu0 0.0
    %4255 = vmatmul.mubr.f32.gmra.mrb[0].mxu0 %v4179
    %v4256 = vpop.f32.mrb[0].mxu0
    %v4257 = vadd.f32 0.0, %v4256
    %v4258 = vpop.f32.mrb[0].mxu0
    %4259 = vdwg.mxu0
    %v4260 = vmul.f32 %v4161, 0.35355338
    %v4261 = vmul.f32 %v4166, 0.35355338
    %v4262 = vmul.f32 %v4252, 0.35355338
    %v4263 = vmul.f32 %v4257, 0.35355338
    %v4264 = vadd.f32 %v4260, %v678
    %v4265 = vadd.f32 %v4261, %v678
    %v4266 = vadd.f32 %v4262, %v682
    %v4267 = vadd.f32 %v4263, %v682
    %v4268 = vsel %vm689, %v4264, -inf
    %4269 = vmax.xlane.f32.xlu0 %v4268
    %v4270 = vpop.xlane.xlu0 %4269
    %v4271 = vsel %vm689, %v4265, -inf
    %4272 = vmax.xlane.f32.xlu0 %v4271
    %v4273 = vpop.xlane.xlu0 %4272
    %v4274 = vsel %vm689, %v4266, -inf
    %4275 = vmax.xlane.f32.xlu0 %v4274
    %v4276 = vpop.xlane.xlu0 %4275
    %v4277 = vsel %vm689, %v4267, -inf
    %4278 = vmax.xlane.f32.xlu0 %v4277
    %v4279 = vpop.xlane.xlu0 %4278
    %v4280 = vsub.f32 %v4264, %v4270
    %v4281 = vsub.f32 %v4265, %v4273
    %v4282 = vsub.f32 %v4266, %v4276
    %v4283 = vsub.f32 %v4267, %v4279
    %v4284 = vmul.f32 %v4280, 1.442695
    %v4285 = vpow.pop %v4284
    %v4286 = vmul.f32 %v4281, 1.442695
    %v4287 = vpow.pop %v4286
    %v4288 = vmul.f32 %v4282, 1.442695
    %v4289 = vpow.pop %v4288
    %v4290 = vmul.f32 %v4283, 1.442695
    %v4291 = vpow.pop %v4290
    %v4292 = vsel %vm689, %v4285, 0.0
    %4293 = vadd.xlane.f32.xlu0 %v4292
    %v4294 = vpop.xlane.xlu0 %4293
    %v4295 = vsel %vm689, %v4287, 0.0
    %4296 = vadd.xlane.f32.xlu0 %v4295
    %v4297 = vpop.xlane.xlu0 %4296
    %v4298 = vsel %vm689, %v4289, 0.0
    %4299 = vadd.xlane.f32.xlu0 %v4298
    %v4300 = vpop.xlane.xlu0 %4299
    %v4301 = vsel %vm689, %v4291, 0.0
    %4302 = vadd.xlane.f32.xlu0 %v4301
    %v4303 = vpop.xlane.xlu0 %4302
    %v4304 = vrcp.pop %v4294
    %v4305 = vrcp.pop %v4297
    %v4306 = vrcp.pop %v4300
    %v4307 = vrcp.pop %v4303
    %v4308 = vmul.f32 %v4285, %v4304
    %v4309 = vmul.f32 %v4287, %v4305
    %v4310 = vmul.f32 %v4289, %v4306
    %v4311 = vmul.f32 %v4291, %v4307
    %s4312 = scalar_lea.vmem %s63, 96
    %4313 = vst.msk [vmem:[%s4312] sm:$0xff] %vm689, %v4308
    %4314 = vst.msk [vmem:[%s4312 + $0x8] sm:$0xff] %vm689, %v4309
    %4315 = vst.msk [vmem:[%s4312 + $0x10] sm:$0xff] %vm689, %v4310
    %4316 = vst.msk [vmem:[%s4312 + $0x18] sm:$0xff] %vm689, %v4311
    %4317 = vrot.lane.b32.xlu0 %v2826, 40
    %v4318 = vpop.permute.xlu0 %4317
    %4319 = vrot.lane.b32.xlu0 %v2831, 40
    %v4320 = vpop.permute.xlu0 %4319
    %v4324 = vsel %vm689, %v4308, 0
    %v4327 = vsel %vm689, %v4309, 0
    %4329 = vmatprep.subr.mxu0 0.0
    %4330 = vmatpush1.msra.mxu0 %v4318
    %4331 = vmatprep.subr.mxu0 0.0
    %4332 = vmatpush1.msra.mxu0 %v4320
    %4333 = vmatprep.subr.mxu0 0.0
    %4334 = vmatpush1.msra.mxu0 0.0
    %4335 = vmatprep.subr.mxu0 0.0
    %4336 = vmatpush1.msra.mxu0 0.0
    %4337 = vmatprep.subr.mxu0 0.0
    %4338 = vmatpush1.msra.mxu0 0.0
    %4339 = vmatprep.subr.mxu0 0.0
    %4340 = vmatpush1.msra.mxu0 0.0
    %4341 = vmatprep.subr.mxu0 0.0
    %4342 = vmatpush1.msra.mxu0 0.0
    %4343 = vmatprep.subr.mxu0 0.0
    %4344 = vmatpush1.msra.mxu0 0.0
    %4345 = vmatprep.subr.mxu0 0.0
    %4346 = vmatpush1.msra.mxu0 0.0
    %4347 = vmatprep.subr.mxu0 0.0
    %4348 = vmatpush1.msra.mxu0 0.0
    %4349 = vmatprep.subr.mxu0 0.0
    %4350 = vmatpush1.msra.mxu0 0.0
    %4351 = vmatprep.subr.mxu0 0.0
    %4352 = vmatpush1.msra.mxu0 0.0
    %4353 = vmatprep.subr.mxu0 0.0
    %4354 = vmatpush1.msra.mxu0 0.0
    %4355 = vmatprep.subr.mxu0 0.0
    %4356 = vmatpush1.msra.mxu0 0.0
    %4357 = vmatprep.subr.mxu0 0.0
    %4358 = vmatpush1.msra.mxu0 0.0
    %4359 = vmatprep.subr.mxu0 0.0
    %4360 = vmatpush1.msra.mxu0 0.0
    %4361 = vmatprep.subr.mxu0 0.0
    %4362 = vmatpush1.msra.mxu0 0.0
    %4363 = vmatprep.subr.mxu0 0.0
    %4364 = vmatpush1.msra.mxu0 0.0
    %4365 = vmatprep.subr.mxu0 0.0
    %4366 = vmatpush1.msra.mxu0 0.0
    %4367 = vmatprep.subr.mxu0 0.0
    %4368 = vmatpush1.msra.mxu0 0.0
    %4369 = vmatprep.subr.mxu0 0.0
    %4370 = vmatpush1.msra.mxu0 0.0
    %4371 = vmatprep.subr.mxu0 0.0
    %4372 = vmatpush1.msra.mxu0 0.0
    %4373 = vmatprep.subr.mxu0 0.0
    %4374 = vmatpush1.msra.mxu0 0.0
    %4375 = vmatprep.subr.mxu0 0.0
    %4376 = vmatpush1.msra.mxu0 0.0
    %4377 = vmatprep.subr.mxu0 0.0
    %4378 = vmatpush1.msra.mxu0 0.0
    %4379 = vmatprep.subr.mxu0 0.0
    %4380 = vmatpush1.msra.mxu0 0.0
    %4381 = vmatprep.subr.mxu0 0.0
    %4382 = vmatpush1.msra.mxu0 0.0
    %4383 = vmatprep.subr.mxu0 0.0
    %4384 = vmatpush1.msra.mxu0 0.0
    %4385 = vmatprep.subr.mxu0 0.0
    %4386 = vmatpush1.msra.mxu0 0.0
    %4387 = vmatprep.subr.mxu0 0.0
    %4388 = vmatpush1.msra.mxu0 0.0
    %4389 = vmatprep.subr.mxu0 0.0
    %4390 = vmatpush1.msra.mxu0 0.0
    %4391 = vmatprep.subr.mxu0 0.0
    %4392 = vmatpush1.msra.mxu0 0.0
    %4393 = vmatprep.mubr.f32.mxu0 0.0
    %4394 = vmatmul.mubr.f32.gmra.mrb[0].mxu0 %v4324
    %v4395 = vpop.f32.mrb[0].mxu0
    %v4396 = vadd.f32 0.0, %v4395
    %v4397 = vpop.f32.mrb[0].mxu0
    %4398 = vmatprep.mubr.f32.mxu0 0.0
    %4399 = vmatmul.mubr.f32.gmra.mrb[0].mxu0 %v4327
    %v4400 = vpop.f32.mrb[0].mxu0
    %v4401 = vadd.f32 0.0, %v4400
    %v4402 = vpop.f32.mrb[0].mxu0
    %4403 = vdwg.mxu0
    %4404 = vrot.lane.b32.xlu0 %v2836, 40
    %v4405 = vpop.permute.xlu0 %4404
    %4406 = vrot.lane.b32.xlu0 %v2841, 40
    %v4407 = vpop.permute.xlu0 %4406
    %v4411 = vsel %vm689, %v4310, 0
    %v4414 = vsel %vm689, %v4311, 0
    %4416 = vmatprep.subr.mxu0 0.0
    %4417 = vmatpush1.msra.mxu0 %v4405
    %4418 = vmatprep.subr.mxu0 0.0
    %4419 = vmatpush1.msra.mxu0 %v4407
    %4420 = vmatprep.subr.mxu0 0.0
    %4421 = vmatpush1.msra.mxu0 0.0
    %4422 = vmatprep.subr.mxu0 0.0
    %4423 = vmatpush1.msra.mxu0 0.0
    %4424 = vmatprep.subr.mxu0 0.0
    %4425 = vmatpush1.msra.mxu0 0.0
    %4426 = vmatprep.subr.mxu0 0.0
    %4427 = vmatpush1.msra.mxu0 0.0
    %4428 = vmatprep.subr.mxu0 0.0
    %4429 = vmatpush1.msra.mxu0 0.0
    %4430 = vmatprep.subr.mxu0 0.0
    %4431 = vmatpush1.msra.mxu0 0.0
    %4432 = vmatprep.subr.mxu0 0.0
    %4433 = vmatpush1.msra.mxu0 0.0
    %4434 = vmatprep.subr.mxu0 0.0
    %4435 = vmatpush1.msra.mxu0 0.0
    %4436 = vmatprep.subr.mxu0 0.0
    %4437 = vmatpush1.msra.mxu0 0.0
    %4438 = vmatprep.subr.mxu0 0.0
    %4439 = vmatpush1.msra.mxu0 0.0
    %4440 = vmatprep.subr.mxu0 0.0
    %4441 = vmatpush1.msra.mxu0 0.0
    %4442 = vmatprep.subr.mxu0 0.0
    %4443 = vmatpush1.msra.mxu0 0.0
    %4444 = vmatprep.subr.mxu0 0.0
    %4445 = vmatpush1.msra.mxu0 0.0
    %4446 = vmatprep.subr.mxu0 0.0
    %4447 = vmatpush1.msra.mxu0 0.0
    %4448 = vmatprep.subr.mxu0 0.0
    %4449 = vmatpush1.msra.mxu0 0.0
    %4450 = vmatprep.subr.mxu0 0.0
    %4451 = vmatpush1.msra.mxu0 0.0
    %4452 = vmatprep.subr.mxu0 0.0
    %4453 = vmatpush1.msra.mxu0 0.0
    %4454 = vmatprep.subr.mxu0 0.0
    %4455 = vmatpush1.msra.mxu0 0.0
    %4456 = vmatprep.subr.mxu0 0.0
    %4457 = vmatpush1.msra.mxu0 0.0
    %4458 = vmatprep.subr.mxu0 0.0
    %4459 = vmatpush1.msra.mxu0 0.0
    %4460 = vmatprep.subr.mxu0 0.0
    %4461 = vmatpush1.msra.mxu0 0.0
    %4462 = vmatprep.subr.mxu0 0.0
    %4463 = vmatpush1.msra.mxu0 0.0
    %4464 = vmatprep.subr.mxu0 0.0
    %4465 = vmatpush1.msra.mxu0 0.0
    %4466 = vmatprep.subr.mxu0 0.0
    %4467 = vmatpush1.msra.mxu0 0.0
    %4468 = vmatprep.subr.mxu0 0.0
    %4469 = vmatpush1.msra.mxu0 0.0
    %4470 = vmatprep.subr.mxu0 0.0
    %4471 = vmatpush1.msra.mxu0 0.0
    %4472 = vmatprep.subr.mxu0 0.0
    %4473 = vmatpush1.msra.mxu0 0.0
    %4474 = vmatprep.subr.mxu0 0.0
    %4475 = vmatpush1.msra.mxu0 0.0
    %4476 = vmatprep.subr.mxu0 0.0
    %4477 = vmatpush1.msra.mxu0 0.0
    %4478 = vmatprep.subr.mxu0 0.0
    %4479 = vmatpush1.msra.mxu0 0.0
    %4480 = vmatprep.mubr.f32.mxu0 0.0
    %4481 = vmatmul.mubr.f32.gmra.mrb[0].mxu0 %v4411
    %v4482 = vpop.f32.mrb[0].mxu0
    %v4483 = vadd.f32 0.0, %v4482
    %v4484 = vpop.f32.mrb[0].mxu0
    %4485 = vmatprep.mubr.f32.mxu0 0.0
    %4486 = vmatmul.mubr.f32.gmra.mrb[0].mxu0 %v4414
    %v4487 = vpop.f32.mrb[0].mxu0
    %v4488 = vadd.f32 0.0, %v4487
    %v4489 = vpop.f32.mrb[0].mxu0
    %4490 = vdwg.mxu0
    %4495 = vrot.lane.b32.xlu0 %v3570, 8
    %v4496 = vpop.permute.xlu0 %4495
    %4497 = vrot.lane.b32.xlu0 %v3575, 8
    %v4498 = vpop.permute.xlu0 %4497
    %4499 = vrot.lane.b32.xlu0 %v3657, 8
    %v4500 = vpop.permute.xlu0 %4499
    %4501 = vrot.lane.b32.xlu0 %v3662, 8
    %v4502 = vpop.permute.xlu0 %4501
    %4511 = vrot.lane.b32.xlu0 %v3983, 16
    %v4512 = vpop.permute.xlu0 %4511
    %4513 = vrot.lane.b32.xlu0 %v3988, 16
    %v4514 = vpop.permute.xlu0 %4513
    %4515 = vrot.lane.b32.xlu0 %v4070, 16
    %v4516 = vpop.permute.xlu0 %4515
    %4517 = vrot.lane.b32.xlu0 %v4075, 16
    %v4518 = vpop.permute.xlu0 %4517
    %4527 = vrot.lane.b32.xlu0 %v4396, 24
    %v4528 = vpop.permute.xlu0 %4527
    %4529 = vrot.lane.b32.xlu0 %v4401, 24
    %v4530 = vpop.permute.xlu0 %4529
    %4531 = vrot.lane.b32.xlu0 %v4483, 24
    %v4532 = vpop.permute.xlu0 %4531
    %4533 = vrot.lane.b32.xlu0 %v4488, 24
    %v4534 = vpop.permute.xlu0 %4533
    %v4539 = vsel %vm496, %v3157, %v4496
    %v4540 = vsel %vm496, %v3162, %v4498
    %v4541 = vsel %vm496, %v3244, %v4500
    %v4542 = vsel %vm496, %v3249, %v4502
    %v4543 = vsel %vm689, %v4539, %v4512
    %v4544 = vsel %vm689, %v4540, %v4514
    %v4545 = vsel %vm689, %v4541, %v4516
    %v4546 = vsel %vm689, %v4542, %v4518
    %v4547 = vsel %vm2207, %v4543, %v4528
    %v4548 = vsel %vm2207, %v4544, %v4530
    %v4549 = vsel %vm2207, %v4545, %v4532
    %v4550 = vsel %vm2207, %v4546, %v4534
    %s4551 = scalar_lea.vmem %s27, 32
    %v4552 = vld [vmem:[%s4551] sm:$0xff]
    %v4553 = vld [vmem:[%s4551 + $0x8] sm:$0xff]
    %v4554 = vld [vmem:[%s4551 + $0x10] sm:$0xff]
    %v4555 = vld [vmem:[%s4551 + $0x18] sm:$0xff]
    %s4556 = scalar_lea.vmem %s29, 1
    %v4557 = vld [vmem:[%s4556] sm:$0x1]
    %v4559 = vlaneseq
    %v4560 = vshrl.u32 %v4559, 7
    %v4561 = vsub.s32 0, %v4560
    %v4562 = vrot.slane %v4557, %v4561
    %v4565 = vsel %vm132, %v4547, 0
    %v4568 = vsel %vm132, %v4548, 0
    %v4571 = vsel %vm132, %v4549, 0
    %v4574 = vsel %vm132, %v4550, 0
    %4576 = vmatprep.subr.mxu0 0.0
    %4577 = vmatpush1.msra.mxu0 %v4552
    %4578 = vmatprep.subr.mxu0 0.0
    %4579 = vmatpush1.msra.mxu0 %v4553
    %4580 = vmatprep.subr.mxu0 0.0
    %4581 = vmatpush1.msra.mxu0 %v4554
    %4582 = vmatprep.subr.mxu0 0.0
    %4583 = vmatpush1.msra.mxu0 %v4555
    %4584 = vmatprep.subr.mxu0 0.0
    %4585 = vmatpush1.msra.mxu0 0.0
    %4586 = vmatprep.subr.mxu0 0.0
    %4587 = vmatpush1.msra.mxu0 0.0
    %4588 = vmatprep.subr.mxu0 0.0
    %4589 = vmatpush1.msra.mxu0 0.0
    %4590 = vmatprep.subr.mxu0 0.0
    %4591 = vmatpush1.msra.mxu0 0.0
    %4592 = vmatprep.subr.mxu0 0.0
    %4593 = vmatpush1.msra.mxu0 0.0
    %4594 = vmatprep.subr.mxu0 0.0
    %4595 = vmatpush1.msra.mxu0 0.0
    %4596 = vmatprep.subr.mxu0 0.0
    %4597 = vmatpush1.msra.mxu0 0.0
    %4598 = vmatprep.subr.mxu0 0.0
    %4599 = vmatpush1.msra.mxu0 0.0
    %4600 = vmatprep.subr.mxu0 0.0
    %4601 = vmatpush1.msra.mxu0 0.0
    %4602 = vmatprep.subr.mxu0 0.0
    %4603 = vmatpush1.msra.mxu0 0.0
    %4604 = vmatprep.subr.mxu0 0.0
    %4605 = vmatpush1.msra.mxu0 0.0
    %4606 = vmatprep.subr.mxu0 0.0
    %4607 = vmatpush1.msra.mxu0 0.0
    %4608 = vmatprep.subr.mxu0 0.0
    %4609 = vmatpush1.msra.mxu0 0.0
    %4610 = vmatprep.subr.mxu0 0.0
    %4611 = vmatpush1.msra.mxu0 0.0
    %4612 = vmatprep.subr.mxu0 0.0
    %4613 = vmatpush1.msra.mxu0 0.0
    %4614 = vmatprep.subr.mxu0 0.0
    %4615 = vmatpush1.msra.mxu0 0.0
    %4616 = vmatprep.subr.mxu0 0.0
    %4617 = vmatpush1.msra.mxu0 0.0
    %4618 = vmatprep.subr.mxu0 0.0
    %4619 = vmatpush1.msra.mxu0 0.0
    %4620 = vmatprep.subr.mxu0 0.0
    %4621 = vmatpush1.msra.mxu0 0.0
    %4622 = vmatprep.subr.mxu0 0.0
    %4623 = vmatpush1.msra.mxu0 0.0
    %4624 = vmatprep.subr.mxu0 0.0
    %4625 = vmatpush1.msra.mxu0 0.0
    %4626 = vmatprep.subr.mxu0 0.0
    %4627 = vmatpush1.msra.mxu0 0.0
    %4628 = vmatprep.subr.mxu0 0.0
    %4629 = vmatpush1.msra.mxu0 0.0
    %4630 = vmatprep.subr.mxu0 0.0
    %4631 = vmatpush1.msra.mxu0 0.0
    %4632 = vmatprep.subr.mxu0 0.0
    %4633 = vmatpush1.msra.mxu0 0.0
    %4634 = vmatprep.subr.mxu0 0.0
    %4635 = vmatpush1.msra.mxu0 0.0
    %4636 = vmatprep.subr.mxu0 0.0
    %4637 = vmatpush1.msra.mxu0 0.0
    %4638 = vmatprep.subr.mxu0 0.0
    %4639 = vmatpush1.msra.mxu0 0.0
    %4640 = vmatprep.mubr.f32.mxu0 0.0
    %4641 = vmatmul.mubr.f32.gmra.mrb[0].mxu0 %v4565
    %v4642 = vpop.f32.mrb[0].mxu0
    %v4643 = vadd.f32 %v4562, %v4642
    %v4644 = vpop.f32.mrb[0].mxu0
    %4645 = vmatprep.mubr.f32.mxu0 0.0
    %4646 = vmatmul.mubr.f32.gmra.mrb[0].mxu0 %v4568
    %v4647 = vpop.f32.mrb[0].mxu0
    %v4648 = vadd.f32 %v4562, %v4647
    %v4649 = vpop.f32.mrb[0].mxu0
    %4650 = vmatprep.mubr.f32.mxu0 0.0
    %4651 = vmatmul.mubr.f32.gmra.mrb[0].mxu0 %v4571
    %v4652 = vpop.f32.mrb[0].mxu0
    %v4653 = vadd.f32 %v4562, %v4652
    %v4654 = vpop.f32.mrb[0].mxu0
    %4655 = vmatprep.mubr.f32.mxu0 0.0
    %4656 = vmatmul.mubr.f32.gmra.mrb[0].mxu0 %v4574
    %v4657 = vpop.f32.mrb[0].mxu0
    %v4658 = vadd.f32 %v4562, %v4657
    %v4659 = vpop.f32.mrb[0].mxu0
    %4660 = vdwg.mxu0
    %v4661 = vadd.f32 %v2654, %v4643
    %v4662 = vadd.f32 %v2655, %v4648
    %v4663 = vadd.f32 %v2656, %v4653
    %v4664 = vadd.f32 %v2657, %v4658
    %s4665 = scalar_lea.vmem %s31, 1
    %v4666 = vld [vmem:[%s4665] sm:$0x1]
    %s4667 = scalar_lea.vmem %s33, 1
    %v4668 = vld [vmem:[%s4667] sm:$0x1]
    %v4669 = vsel %vm132, %v4661, 0.0
    %4670 = vadd.xlane.f32.xlu0 %v4669
    %v4671 = vpop.xlane.xlu0 %4670
    %v4672 = vsel %vm132, %v4662, 0.0
    %4673 = vadd.xlane.f32.xlu0 %v4672
    %v4674 = vpop.xlane.xlu0 %4673
    %v4675 = vsel %vm132, %v4663, 0.0
    %4676 = vadd.xlane.f32.xlu0 %v4675
    %v4677 = vpop.xlane.xlu0 %4676
    %v4678 = vsel %vm132, %v4664, 0.0
    %4679 = vadd.xlane.f32.xlu0 %v4678
    %v4680 = vpop.xlane.xlu0 %4679
    %v4681 = vmul.f32 %v4671, %v139
    %v4682 = vmul.f32 %v4674, %v139
    %v4683 = vmul.f32 %v4677, %v139
    %v4684 = vmul.f32 %v4680, %v139
    %v4685 = vsub.f32 %v4661, %v4681
    %v4686 = vsub.f32 %v4662, %v4682
    %v4687 = vsub.f32 %v4663, %v4683
    %v4688 = vsub.f32 %v4664, %v4684
    %v4689 = vmul.f32 %v4685, %v4685
    %v4690 = vmul.f32 %v4686, %v4686
    %v4691 = vmul.f32 %v4687, %v4687
    %v4692 = vmul.f32 %v4688, %v4688
    %v4693 = vsel %vm132, %v4689, 0.0
    %4694 = vadd.xlane.f32.xlu0 %v4693
    %v4695 = vpop.xlane.xlu0 %4694
    %v4696 = vsel %vm132, %v4690, 0.0
    %4697 = vadd.xlane.f32.xlu0 %v4696
    %v4698 = vpop.xlane.xlu0 %4697
    %v4699 = vsel %vm132, %v4691, 0.0
    %4700 = vadd.xlane.f32.xlu0 %v4699
    %v4701 = vpop.xlane.xlu0 %4700
    %v4702 = vsel %vm132, %v4692, 0.0
    %4703 = vadd.xlane.f32.xlu0 %v4702
    %v4704 = vpop.xlane.xlu0 %4703
    %v4705 = vmul.f32 %v4695, %v139
    %v4706 = vmul.f32 %v4698, %v139
    %v4707 = vmul.f32 %v4701, %v139
    %v4708 = vmul.f32 %v4704, %v139
    %v4709 = vadd.f32 %v4705, 1e-12
    %v4710 = vadd.f32 %v4706, 1e-12
    %v4711 = vadd.f32 %v4707, 1e-12
    %v4712 = vadd.f32 %v4708, 1e-12
    %v4713 = vrsqrt.pop %v4709
    %v4714 = vrsqrt.pop %v4710
    %v4715 = vrsqrt.pop %v4711
    %v4716 = vrsqrt.pop %v4712
    %v4717 = vmul.f32 %v4685, %v4713
    %v4718 = vmul.f32 %v4686, %v4714
    %v4719 = vmul.f32 %v4687, %v4715
    %v4720 = vmul.f32 %v4688, %v4716
    %v4722 = vlaneseq
    %v4723 = vshrl.u32 %v4722, 7
    %v4724 = vsub.s32 0, %v4723
    %v4725 = vrot.slane %v4666, %v4724
    %v4727 = vmul.f32 %v4717, %v4725
    %v4728 = vmul.f32 %v4718, %v4725
    %v4729 = vmul.f32 %v4719, %v4725
    %v4730 = vmul.f32 %v4720, %v4725
    %v4732 = vlaneseq
    %v4733 = vshrl.u32 %v4732, 7
    %v4734 = vsub.s32 0, %v4733
    %v4735 = vrot.slane %v4668, %v4734
    %v4737 = vadd.f32 %v4727, %v4735
    %v4738 = vadd.f32 %v4728, %v4735
    %v4739 = vadd.f32 %v4729, %v4735
    %v4740 = vadd.f32 %v4730, %v4735
    %s4741 = scalar_lea.vmem %s35, 32
    %v4742 = vld [vmem:[%s4741] sm:$0xff]
    %v4743 = vld [vmem:[%s4741 + $0x8] sm:$0xff]
    %v4744 = vld [vmem:[%s4741 + $0x10] sm:$0xff]
    %v4745 = vld [vmem:[%s4741 + $0x18] sm:$0xff]
    %s4746 = scalar_lea.vmem %s37, 1
    %v4747 = vld [vmem:[%s4746] sm:$0x1]
    %v4749 = vlaneseq
    %v4750 = vshrl.u32 %v4749, 7
    %v4751 = vsub.s32 0, %v4750
    %v4752 = vrot.slane %v4747, %v4751
    %v4755 = vsel %vm132, %v4737, 0
    %v4758 = vsel %vm132, %v4738, 0
    %v4761 = vsel %vm132, %v4739, 0
    %v4764 = vsel %vm132, %v4740, 0
    %4766 = vmatprep.subr.mxu0 0.0
    %4767 = vmatpush1.msra.mxu0 %v4742
    %4768 = vmatprep.subr.mxu0 0.0
    %4769 = vmatpush1.msra.mxu0 %v4743
    %4770 = vmatprep.subr.mxu0 0.0
    %4771 = vmatpush1.msra.mxu0 %v4744
    %4772 = vmatprep.subr.mxu0 0.0
    %4773 = vmatpush1.msra.mxu0 %v4745
    %4774 = vmatprep.subr.mxu0 0.0
    %4775 = vmatpush1.msra.mxu0 0.0
    %4776 = vmatprep.subr.mxu0 0.0
    %4777 = vmatpush1.msra.mxu0 0.0
    %4778 = vmatprep.subr.mxu0 0.0
    %4779 = vmatpush1.msra.mxu0 0.0
    %4780 = vmatprep.subr.mxu0 0.0
    %4781 = vmatpush1.msra.mxu0 0.0
    %4782 = vmatprep.subr.mxu0 0.0
    %4783 = vmatpush1.msra.mxu0 0.0
    %4784 = vmatprep.subr.mxu0 0.0
    %4785 = vmatpush1.msra.mxu0 0.0
    %4786 = vmatprep.subr.mxu0 0.0
    %4787 = vmatpush1.msra.mxu0 0.0
    %4788 = vmatprep.subr.mxu0 0.0
    %4789 = vmatpush1.msra.mxu0 0.0
    %4790 = vmatprep.subr.mxu0 0.0
    %4791 = vmatpush1.msra.mxu0 0.0
    %4792 = vmatprep.subr.mxu0 0.0
    %4793 = vmatpush1.msra.mxu0 0.0
    %4794 = vmatprep.subr.mxu0 0.0
    %4795 = vmatpush1.msra.mxu0 0.0
    %4796 = vmatprep.subr.mxu0 0.0
    %4797 = vmatpush1.msra.mxu0 0.0
    %4798 = vmatprep.subr.mxu0 0.0
    %4799 = vmatpush1.msra.mxu0 0.0
    %4800 = vmatprep.subr.mxu0 0.0
    %4801 = vmatpush1.msra.mxu0 0.0
    %4802 = vmatprep.subr.mxu0 0.0
    %4803 = vmatpush1.msra.mxu0 0.0
    %4804 = vmatprep.subr.mxu0 0.0
    %4805 = vmatpush1.msra.mxu0 0.0
    %4806 = vmatprep.subr.mxu0 0.0
    %4807 = vmatpush1.msra.mxu0 0.0
    %4808 = vmatprep.subr.mxu0 0.0
    %4809 = vmatpush1.msra.mxu0 0.0
    %4810 = vmatprep.subr.mxu0 0.0
    %4811 = vmatpush1.msra.mxu0 0.0
    %4812 = vmatprep.subr.mxu0 0.0
    %4813 = vmatpush1.msra.mxu0 0.0
    %4814 = vmatprep.subr.mxu0 0.0
    %4815 = vmatpush1.msra.mxu0 0.0
    %4816 = vmatprep.subr.mxu0 0.0
    %4817 = vmatpush1.msra.mxu0 0.0
    %4818 = vmatprep.subr.mxu0 0.0
    %4819 = vmatpush1.msra.mxu0 0.0
    %4820 = vmatprep.subr.mxu0 0.0
    %4821 = vmatpush1.msra.mxu0 0.0
    %4822 = vmatprep.subr.mxu0 0.0
    %4823 = vmatpush1.msra.mxu0 0.0
    %4824 = vmatprep.subr.mxu0 0.0
    %4825 = vmatpush1.msra.mxu0 0.0
    %4826 = vmatprep.subr.mxu0 0.0
    %4827 = vmatpush1.msra.mxu0 0.0
    %4828 = vmatprep.subr.mxu0 0.0
    %4829 = vmatpush1.msra.mxu0 0.0
    %4830 = vmatprep.mubr.f32.mxu0 0.0
    %4831 = vmatmul.mubr.f32.gmra.mrb[0].mxu0 %v4755
    %v4832 = vpop.f32.mrb[0].mxu0
    %v4833 = vadd.f32 %v4752, %v4832
    %v4834 = vpop.f32.mrb[0].mxu0
    %4835 = vmatprep.mubr.f32.mxu0 0.0
    %4836 = vmatmul.mubr.f32.gmra.mrb[0].mxu0 %v4758
    %v4837 = vpop.f32.mrb[0].mxu0
    %v4838 = vadd.f32 %v4752, %v4837
    %v4839 = vpop.f32.mrb[0].mxu0
    %4840 = vmatprep.mubr.f32.mxu0 0.0
    %4841 = vmatmul.mubr.f32.gmra.mrb[0].mxu0 %v4761
    %v4842 = vpop.f32.mrb[0].mxu0
    %v4843 = vadd.f32 %v4752, %v4842
    %v4844 = vpop.f32.mrb[0].mxu0
    %4845 = vmatprep.mubr.f32.mxu0 0.0
    %4846 = vmatmul.mubr.f32.gmra.mrb[0].mxu0 %v4764
    %v4847 = vpop.f32.mrb[0].mxu0
    %v4848 = vadd.f32 %v4752, %v4847
    %v4849 = vpop.f32.mrb[0].mxu0
    %4850 = vdwg.mxu0
    %v4851 = vmul.f32 %v4833, 0.5
    %v4852 = vmul.f32 %v4838, 0.5
    %v4853 = vmul.f32 %v4843, 0.5
    %v4854 = vmul.f32 %v4848, 0.5
    %v4855 = vmul.f32 %v4833, 0.044715
    %v4856 = vmul.f32 %v4838, 0.044715
    %v4857 = vmul.f32 %v4843, 0.044715
    %v4858 = vmul.f32 %v4848, 0.044715
    %v4859 = vmul.f32 %v4855, %v4833
    %v4860 = vmul.f32 %v4856, %v4838
    %v4861 = vmul.f32 %v4857, %v4843
    %v4862 = vmul.f32 %v4858, %v4848
    %v4863 = vmul.f32 %v4859, %v4833
    %v4864 = vmul.f32 %v4860, %v4838
    %v4865 = vmul.f32 %v4861, %v4843
    %v4866 = vmul.f32 %v4862, %v4848
    %v4867 = vadd.f32 %v4833, %v4863
    %v4868 = vadd.f32 %v4838, %v4864
    %v4869 = vadd.f32 %v4843, %v4865
    %v4870 = vadd.f32 %v4848, %v4866
    %v4871 = vmul.f32 %v4867, 0.7978846
    %v4872 = vmul.f32 %v4868, 0.7978846
    %v4873 = vmul.f32 %v4869, 0.7978846
    %v4874 = vmul.f32 %v4870, 0.7978846
    %v4875 = vtanh.pop %v4871
    %v4876 = vtanh.pop %v4872
    %v4877 = vtanh.pop %v4873
    %v4878 = vtanh.pop %v4874
    %v4879 = vadd.f32 %v4875, 1.0
    %v4880 = vadd.f32 %v4876, 1.0
    %v4881 = vadd.f32 %v4877, 1.0
    %v4882 = vadd.f32 %v4878, 1.0
    %v4883 = vmul.f32 %v4851, %v4879
    %v4884 = vmul.f32 %v4852, %v4880
    %v4885 = vmul.f32 %v4853, %v4881
    %v4886 = vmul.f32 %v4854, %v4882
    %s4887 = scalar_lea.vmem %s39, 64
    %v4888 = vld [vmem:[%s4887] sm:$0xff]
    %v4889 = vld [vmem:[%s4887 + $0x8] sm:$0xff]
    %v4890 = vld [vmem:[%s4887 + $0x10] sm:$0xff]
    %v4891 = vld [vmem:[%s4887 + $0x18] sm:$0xff]
    %v4892 = vld [vmem:[%s4887 + $0x20] sm:$0xff]
    %v4893 = vld [vmem:[%s4887 + $0x28] sm:$0xff]
    %v4894 = vld [vmem:[%s4887 + $0x30] sm:$0xff]
    %v4895 = vld [vmem:[%s4887 + $0x38] sm:$0xff]
    %s4896 = scalar_lea.vmem %s41, 1
    %v4897 = vld [vmem:[%s4896] sm:$0x1]
    %v4899 = vlaneseq
    %v4900 = vshrl.u32 %v4899, 7
    %v4901 = vsub.s32 0, %v4900
    %v4902 = vrot.slane %v4897, %v4901
    %v4905 = vsel %vm209, %v4883, 0
    %v4908 = vsel %vm209, %v4884, 0
    %v4911 = vsel %vm209, %v4885, 0
    %v4914 = vsel %vm209, %v4886, 0
    %4916 = vmatprep.subr.mxu0 0.0
    %4917 = vmatpush1.msra.mxu0 %v4888
    %4918 = vmatprep.subr.mxu0 0.0
    %4919 = vmatpush1.msra.mxu0 %v4889
    %4920 = vmatprep.subr.mxu0 0.0
    %4921 = vmatpush1.msra.mxu0 %v4890
    %4922 = vmatprep.subr.mxu0 0.0
    %4923 = vmatpush1.msra.mxu0 %v4891
    %4924 = vmatprep.subr.mxu0 0.0
    %4925 = vmatpush1.msra.mxu0 %v4892
    %4926 = vmatprep.subr.mxu0 0.0
    %4927 = vmatpush1.msra.mxu0 %v4893
    %4928 = vmatprep.subr.mxu0 0.0
    %4929 = vmatpush1.msra.mxu0 %v4894
    %4930 = vmatprep.subr.mxu0 0.0
    %4931 = vmatpush1.msra.mxu0 %v4895
    %4932 = vmatprep.subr.mxu0 0.0
    %4933 = vmatpush1.msra.mxu0 0.0
    %4934 = vmatprep.subr.mxu0 0.0
    %4935 = vmatpush1.msra.mxu0 0.0
    %4936 = vmatprep.subr.mxu0 0.0
    %4937 = vmatpush1.msra.mxu0 0.0
    %4938 = vmatprep.subr.mxu0 0.0
    %4939 = vmatpush1.msra.mxu0 0.0
    %4940 = vmatprep.subr.mxu0 0.0
    %4941 = vmatpush1.msra.mxu0 0.0
    %4942 = vmatprep.subr.mxu0 0.0
    %4943 = vmatpush1.msra.mxu0 0.0
    %4944 = vmatprep.subr.mxu0 0.0
    %4945 = vmatpush1.msra.mxu0 0.0
    %4946 = vmatprep.subr.mxu0 0.0
    %4947 = vmatpush1.msra.mxu0 0.0
    %4948 = vmatprep.subr.mxu0 0.0
    %4949 = vmatpush1.msra.mxu0 0.0
    %4950 = vmatprep.subr.mxu0 0.0
    %4951 = vmatpush1.msra.mxu0 0.0
    %4952 = vmatprep.subr.mxu0 0.0
    %4953 = vmatpush1.msra.mxu0 0.0
    %4954 = vmatprep.subr.mxu0 0.0
    %4955 = vmatpush1.msra.mxu0 0.0
    %4956 = vmatprep.subr.mxu0 0.0
    %4957 = vmatpush1.msra.mxu0 0.0
    %4958 = vmatprep.subr.mxu0 0.0
    %4959 = vmatpush1.msra.mxu0 0.0
    %4960 = vmatprep.subr.mxu0 0.0
    %4961 = vmatpush1.msra.mxu0 0.0
    %4962 = vmatprep.subr.mxu0 0.0
    %4963 = vmatpush1.msra.mxu0 0.0
    %4964 = vmatprep.subr.mxu0 0.0
    %4965 = vmatpush1.msra.mxu0 0.0
    %4966 = vmatprep.subr.mxu0 0.0
    %4967 = vmatpush1.msra.mxu0 0.0
    %4968 = vmatprep.subr.mxu0 0.0
    %4969 = vmatpush1.msra.mxu0 0.0
    %4970 = vmatprep.subr.mxu0 0.0
    %4971 = vmatpush1.msra.mxu0 0.0
    %4972 = vmatprep.subr.mxu0 0.0
    %4973 = vmatpush1.msra.mxu0 0.0
    %4974 = vmatprep.subr.mxu0 0.0
    %4975 = vmatpush1.msra.mxu0 0.0
    %4976 = vmatprep.subr.mxu0 0.0
    %4977 = vmatpush1.msra.mxu0 0.0
    %4978 = vmatprep.subr.mxu0 0.0
    %4979 = vmatpush1.msra.mxu0 0.0
    %4980 = vmatprep.mubr.f32.mxu0 0.0
    %4981 = vmatmul.mubr.f32.gmra.mrb[0].mxu0 %v4905
    %v4982 = vpop.f32.mrb[0].mxu0
    %v4983 = vadd.f32 %v4902, %v4982
    %v4984 = vpop.f32.mrb[0].mxu0
    %4985 = vmatprep.mubr.f32.mxu0 0.0
    %4986 = vmatmul.mubr.f32.gmra.mrb[0].mxu0 %v4908
    %v4987 = vpop.f32.mrb[0].mxu0
    %v4988 = vpop.f32.mrb[0].mxu0
    %4989 = vmatprep.mubr.f32.mxu0 0.0
    %4990 = vmatmul.mubr.f32.gmra.mrb[0].mxu0 %v4911
    %v4991 = vpop.f32.mrb[0].mxu0
    %v4992 = vadd.f32 %v4902, %v4991
    %v4993 = vpop.f32.mrb[0].mxu0
    %4994 = vmatprep.mubr.f32.mxu0 0.0
    %4995 = vmatmul.mubr.f32.gmra.mrb[0].mxu0 %v4914
    %v4996 = vpop.f32.mrb[0].mxu0
    %v4997 = vpop.f32.mrb[0].mxu0
    %4998 = vdwg.mxu0
    %v4999 = vadd.f32 %v4661, %v4983
    %v5000 = vadd.f32 %v4663, %v4992
    %v5001 = vld [vmem:[%s43] sm:$0x1]
    %v5002 = vld [vmem:[%s45] sm:$0x1]
    %v5005 = vrot.slane %v5000, 7
    %vm5006 = vcmask 1041409
    %v5007 = vsel %vm5006, %v5005, %v4999
    %vm5009 = vcmask 254976
    %v5010 = vsel %vm5009, %v5007, 0.0
    %5011 = vadd.xlane.f32.xlu0 %v5010
    %v5012 = vpop.xlane.xlu0 %5011
    %v5013 = vmul.f32 %v5012, %v139
    %v5015 = vrot.slane %v5013, 1
    %v5018 = vsub.f32 %v4999, %v5013
    %v5019 = vsub.f32 %v5000, %v5015
    %v5020 = vmul.f32 %v5018, %v5018
    %v5021 = vmul.f32 %v5019, %v5019
    %v5024 = vrot.slane %v5021, 7
    %v5025 = vsel %vm5006, %v5024, %v5020
    %v5027 = vsel %vm5009, %v5025, 0.0
    %5028 = vadd.xlane.f32.xlu0 %v5027
    %v5029 = vpop.xlane.xlu0 %5028
    %v5030 = vmul.f32 %v5029, %v139
    %v5031 = vadd.f32 %v5030, 1e-12
    %v5032 = vrsqrt.pop %v5031
    %v5034 = vrot.slane %v5032, 1
    %v5037 = vmul.f32 %v5018, %v5032
    %v5038 = vmul.f32 %v5019, %v5034
    %v5040 = vlaneseq
    %v5041 = vshrl.u32 %v5040, 7
    %v5042 = vsub.s32 0, %v5041
    %v5043 = vrot.slane %v5001, %v5042
    %v5045 = vmul.f32 %v5037, %v5043
    %v5046 = vmul.f32 %v5038, %v5043
    %v5048 = vlaneseq
    %v5049 = vshrl.u32 %v5048, 7
    %v5050 = vsub.s32 0, %v5049
    %v5051 = vrot.slane %v5002, %v5050
    %v5053 = vadd.f32 %v5045, %v5051
    %v5054 = vadd.f32 %v5046, %v5051
    %v5055 = vld [vmem:[%s47] sm:$0xff]
    %v5056 = vld [vmem:[%s47 + $0x8] sm:$0xff]
    %v5057 = vld [vmem:[%s47 + $0x10] sm:$0xff]
    %v5058 = vld [vmem:[%s47 + $0x18] sm:$0xff]
    %v5059 = vld [vmem:[%s49] sm:$0x1]
    %v5061 = vlaneseq
    %v5062 = vshrl.u32 %v5061, 7
    %v5063 = vsub.s32 0, %v5062
    %v5064 = vrot.slane %v5059, %v5063
    %v5068 = vrot.slane %v5054, 7
    %v5069 = vsel %vm5006, %v5068, %v5053
    %v5070 = vsel %vm132, %v5069, 0
    %5072 = vmatprep.subr.mxu0 0.0
    %5073 = vmatpush1.msra.mxu0 %v5055
    %5074 = vmatprep.subr.mxu0 0.0
    %5075 = vmatpush1.msra.mxu0 %v5056
    %5076 = vmatprep.subr.mxu0 0.0
    %5077 = vmatpush1.msra.mxu0 %v5057
    %5078 = vmatprep.subr.mxu0 0.0
    %5079 = vmatpush1.msra.mxu0 %v5058
    %5080 = vmatprep.subr.mxu0 0.0
    %5081 = vmatpush1.msra.mxu0 0.0
    %5082 = vmatprep.subr.mxu0 0.0
    %5083 = vmatpush1.msra.mxu0 0.0
    %5084 = vmatprep.subr.mxu0 0.0
    %5085 = vmatpush1.msra.mxu0 0.0
    %5086 = vmatprep.subr.mxu0 0.0
    %5087 = vmatpush1.msra.mxu0 0.0
    %5088 = vmatprep.subr.mxu0 0.0
    %5089 = vmatpush1.msra.mxu0 0.0
    %5090 = vmatprep.subr.mxu0 0.0
    %5091 = vmatpush1.msra.mxu0 0.0
    %5092 = vmatprep.subr.mxu0 0.0
    %5093 = vmatpush1.msra.mxu0 0.0
    %5094 = vmatprep.subr.mxu0 0.0
    %5095 = vmatpush1.msra.mxu0 0.0
    %5096 = vmatprep.subr.mxu0 0.0
    %5097 = vmatpush1.msra.mxu0 0.0
    %5098 = vmatprep.subr.mxu0 0.0
    %5099 = vmatpush1.msra.mxu0 0.0
    %5100 = vmatprep.subr.mxu0 0.0
    %5101 = vmatpush1.msra.mxu0 0.0
    %5102 = vmatprep.subr.mxu0 0.0
    %5103 = vmatpush1.msra.mxu0 0.0
    %5104 = vmatprep.subr.mxu0 0.0
    %5105 = vmatpush1.msra.mxu0 0.0
    %5106 = vmatprep.subr.mxu0 0.0
    %5107 = vmatpush1.msra.mxu0 0.0
    %5108 = vmatprep.subr.mxu0 0.0
    %5109 = vmatpush1.msra.mxu0 0.0
    %5110 = vmatprep.subr.mxu0 0.0
    %5111 = vmatpush1.msra.mxu0 0.0
    %5112 = vmatprep.subr.mxu0 0.0
    %5113 = vmatpush1.msra.mxu0 0.0
    %5114 = vmatprep.subr.mxu0 0.0
    %5115 = vmatpush1.msra.mxu0 0.0
    %5116 = vmatprep.subr.mxu0 0.0
    %5117 = vmatpush1.msra.mxu0 0.0
    %5118 = vmatprep.subr.mxu0 0.0
    %5119 = vmatpush1.msra.mxu0 0.0
    %5120 = vmatprep.subr.mxu0 0.0
    %5121 = vmatpush1.msra.mxu0 0.0
    %5122 = vmatprep.subr.mxu0 0.0
    %5123 = vmatpush1.msra.mxu0 0.0
    %5124 = vmatprep.subr.mxu0 0.0
    %5125 = vmatpush1.msra.mxu0 0.0
    %5126 = vmatprep.subr.mxu0 0.0
    %5127 = vmatpush1.msra.mxu0 0.0
    %5128 = vmatprep.subr.mxu0 0.0
    %5129 = vmatpush1.msra.mxu0 0.0
    %5130 = vmatprep.subr.mxu0 0.0
    %5131 = vmatpush1.msra.mxu0 0.0
    %5132 = vmatprep.subr.mxu0 0.0
    %5133 = vmatpush1.msra.mxu0 0.0
    %5134 = vmatprep.subr.mxu0 0.0
    %5135 = vmatpush1.msra.mxu0 0.0
    %5136 = vmatprep.mubr.f32.mxu0 0.0
    %5137 = vmatmul.mubr.f32.gmra.mrb[0].mxu0 %v5070
    %v5138 = vpop.f32.mrb[0].mxu0
    %v5139 = vadd.f32 %v5064, %v5138
    %v5140 = vpop.f32.mrb[0].mxu0
    %5141 = vdwg.mxu0
    %v5142 = vtanh.pop %v5139
    %v5143 = vld [vmem:[%s51] sm:$0xff]
    %v5144 = vld [vmem:[%s51 + $0x8] sm:$0xff]
    %v5145 = vld [vmem:[%s51 + $0x10] sm:$0xff]
    %v5146 = vld [vmem:[%s51 + $0x18] sm:$0xff]
    %v5147 = vld [vmem:[%s53] sm:$0x1]
    %v5149 = vlaneseq
    %v5150 = vshrl.u32 %v5149, 7
    %v5151 = vsub.s32 0, %v5150
    %v5152 = vrot.slane %v5147, %v5151
    %v5155 = vsel %vm132, %v5142, 0
    %5157 = vmatprep.subr.mxu0 0.0
    %5158 = vmatpush1.msra.mxu0 %v5143
    %5159 = vmatprep.subr.mxu0 0.0
    %5160 = vmatpush1.msra.mxu0 %v5144
    %5161 = vmatprep.subr.mxu0 0.0
    %5162 = vmatpush1.msra.mxu0 %v5145
    %5163 = vmatprep.subr.mxu0 0.0
    %5164 = vmatpush1.msra.mxu0 %v5146
    %5165 = vmatprep.subr.mxu0 0.0
    %5166 = vmatpush1.msra.mxu0 0.0
    %5167 = vmatprep.subr.mxu0 0.0
    %5168 = vmatpush1.msra.mxu0 0.0
    %5169 = vmatprep.subr.mxu0 0.0
    %5170 = vmatpush1.msra.mxu0 0.0
    %5171 = vmatprep.subr.mxu0 0.0
    %5172 = vmatpush1.msra.mxu0 0.0
    %5173 = vmatprep.subr.mxu0 0.0
    %5174 = vmatpush1.msra.mxu0 0.0
    %5175 = vmatprep.subr.mxu0 0.0
    %5176 = vmatpush1.msra.mxu0 0.0
    %5177 = vmatprep.subr.mxu0 0.0
    %5178 = vmatpush1.msra.mxu0 0.0
    %5179 = vmatprep.subr.mxu0 0.0
    %5180 = vmatpush1.msra.mxu0 0.0
    %5181 = vmatprep.subr.mxu0 0.0
    %5182 = vmatpush1.msra.mxu0 0.0
    %5183 = vmatprep.subr.mxu0 0.0
    %5184 = vmatpush1.msra.mxu0 0.0
    %5185 = vmatprep.subr.mxu0 0.0
    %5186 = vmatpush1.msra.mxu0 0.0
    %5187 = vmatprep.subr.mxu0 0.0
    %5188 = vmatpush1.msra.mxu0 0.0
    %5189 = vmatprep.subr.mxu0 0.0
    %5190 = vmatpush1.msra.mxu0 0.0
    %5191 = vmatprep.subr.mxu0 0.0
    %5192 = vmatpush1.msra.mxu0 0.0
    %5193 = vmatprep.subr.mxu0 0.0
    %5194 = vmatpush1.msra.mxu0 0.0
    %5195 = vmatprep.subr.mxu0 0.0
    %5196 = vmatpush1.msra.mxu0 0.0
    %5197 = vmatprep.subr.mxu0 0.0
    %5198 = vmatpush1.msra.mxu0 0.0
    %5199 = vmatprep.subr.mxu0 0.0
    %5200 = vmatpush1.msra.mxu0 0.0
    %5201 = vmatprep.subr.mxu0 0.0
    %5202 = vmatpush1.msra.mxu0 0.0
    %5203 = vmatprep.subr.mxu0 0.0
    %5204 = vmatpush1.msra.mxu0 0.0
    %5205 = vmatprep.subr.mxu0 0.0
    %5206 = vmatpush1.msra.mxu0 0.0
    %5207 = vmatprep.subr.mxu0 0.0
    %5208 = vmatpush1.msra.mxu0 0.0
    %5209 = vmatprep.subr.mxu0 0.0
    %5210 = vmatpush1.msra.mxu0 0.0
    %5211 = vmatprep.subr.mxu0 0.0
    %5212 = vmatpush1.msra.mxu0 0.0
    %5213 = vmatprep.subr.mxu0 0.0
    %5214 = vmatpush1.msra.mxu0 0.0
    %5215 = vmatprep.subr.mxu0 0.0
    %5216 = vmatpush1.msra.mxu0 0.0
    %5217 = vmatprep.subr.mxu0 0.0
    %5218 = vmatpush1.msra.mxu0 0.0
    %5219 = vmatprep.subr.mxu0 0.0
    %5220 = vmatpush1.msra.mxu0 0.0
    %5221 = vmatprep.mubr.f32.mxu0 0.0
    %5222 = vmatmul.mubr.f32.gmra.mrb[0].mxu0 %v5155
    %v5223 = vpop.f32.mrb[0].mxu0
    %v5224 = vadd.f32 %v5152, %v5223
    %v5225 = vpop.f32.mrb[0].mxu0
    %5226 = vdwg.mxu0
    %v5227 = vmul.f32 %v5224, 0.5
    %v5228 = vmul.f32 %v5224, 0.044715
    %v5229 = vmul.f32 %v5228, %v5224
    %v5230 = vmul.f32 %v5229, %v5224
    %v5231 = vadd.f32 %v5224, %v5230
    %v5232 = vmul.f32 %v5231, 0.7978846
    %v5233 = vtanh.pop %v5232
    %v5234 = vadd.f32 %v5233, 1.0
    %v5235 = vmul.f32 %v5227, %v5234
    %v5236 = vld [vmem:[%s55] sm:$0xff]
    %v5237 = vld [vmem:[%s55 + $0x8] sm:$0xff]
    %v5238 = vld [vmem:[%s55 + $0x10] sm:$0xff]
    %v5239 = vld [vmem:[%s55 + $0x18] sm:$0xff]
    %v5240 = vld [vmem:[%s55 + $0x20] sm:$0xff]
    %v5241 = vld [vmem:[%s55 + $0x28] sm:$0xff]
    %v5242 = vld [vmem:[%s55 + $0x30] sm:$0xff]
    %v5243 = vld [vmem:[%s55 + $0x38] sm:$0xff]
    %v5244 = vld [vmem:[%s57] sm:$0x1]
    %v5246 = vlaneseq
    %v5247 = vshrl.u32 %v5246, 7
    %v5248 = vsub.s32 0, %v5247
    %v5249 = vrot.slane %v5244, %v5248
    %v5252 = vsel %vm209, %v5235, 0
    %5254 = vmatprep.subr.mxu0 0.0
    %5255 = vmatpush1.msra.mxu0 %v5236
    %5256 = vmatprep.subr.mxu0 0.0
    %5257 = vmatpush1.msra.mxu0 %v5237
    %5258 = vmatprep.subr.mxu0 0.0
    %5259 = vmatpush1.msra.mxu0 %v5238
    %5260 = vmatprep.subr.mxu0 0.0
    %5261 = vmatpush1.msra.mxu0 %v5239
    %5262 = vmatprep.subr.mxu0 0.0
    %5263 = vmatpush1.msra.mxu0 %v5240
    %5264 = vmatprep.subr.mxu0 0.0
    %5265 = vmatpush1.msra.mxu0 %v5241
    %5266 = vmatprep.subr.mxu0 0.0
    %5267 = vmatpush1.msra.mxu0 %v5242
    %5268 = vmatprep.subr.mxu0 0.0
    %5269 = vmatpush1.msra.mxu0 %v5243
    %5270 = vmatprep.subr.mxu0 0.0
    %5271 = vmatpush1.msra.mxu0 0.0
    %5272 = vmatprep.subr.mxu0 0.0
    %5273 = vmatpush1.msra.mxu0 0.0
    %5274 = vmatprep.subr.mxu0 0.0
    %5275 = vmatpush1.msra.mxu0 0.0
    %5276 = vmatprep.subr.mxu0 0.0
    %5277 = vmatpush1.msra.mxu0 0.0
    %5278 = vmatprep.subr.mxu0 0.0
    %5279 = vmatpush1.msra.mxu0 0.0
    %5280 = vmatprep.subr.mxu0 0.0
    %5281 = vmatpush1.msra.mxu0 0.0
    %5282 = vmatprep.subr.mxu0 0.0
    %5283 = vmatpush1.msra.mxu0 0.0
    %5284 = vmatprep.subr.mxu0 0.0
    %5285 = vmatpush1.msra.mxu0 0.0
    %5286 = vmatprep.subr.mxu0 0.0
    %5287 = vmatpush1.msra.mxu0 0.0
    %5288 = vmatprep.subr.mxu0 0.0
    %5289 = vmatpush1.msra.mxu0 0.0
    %5290 = vmatprep.subr.mxu0 0.0
    %5291 = vmatpush1.msra.mxu0 0.0
    %5292 = vmatprep.subr.mxu0 0.0
    %5293 = vmatpush1.msra.mxu0 0.0
    %5294 = vmatprep.subr.mxu0 0.0
    %5295 = vmatpush1.msra.mxu0 0.0
    %5296 = vmatprep.subr.mxu0 0.0
    %5297 = vmatpush1.msra.mxu0 0.0
    %5298 = vmatprep.subr.mxu0 0.0
    %5299 = vmatpush1.msra.mxu0 0.0
    %5300 = vmatprep.subr.mxu0 0.0
    %5301 = vmatpush1.msra.mxu0 0.0
    %5302 = vmatprep.subr.mxu0 0.0
    %5303 = vmatpush1.msra.mxu0 0.0
    %5304 = vmatprep.subr.mxu0 0.0
    %5305 = vmatpush1.msra.mxu0 0.0
    %5306 = vmatprep.subr.mxu0 0.0
    %5307 = vmatpush1.msra.mxu0 0.0
    %5308 = vmatprep.subr.mxu0 0.0
    %5309 = vmatpush1.msra.mxu0 0.0
    %5310 = vmatprep.subr.mxu0 0.0
    %5311 = vmatpush1.msra.mxu0 0.0
    %5312 = vmatprep.subr.mxu0 0.0
    %5313 = vmatpush1.msra.mxu0 0.0
    %5314 = vmatprep.subr.mxu0 0.0
    %5315 = vmatpush1.msra.mxu0 0.0
    %5316 = vmatprep.subr.mxu0 0.0
    %5317 = vmatpush1.msra.mxu0 0.0
    %5318 = vmatprep.mubr.f32.mxu0 0.0
    %5319 = vmatmul.mubr.f32.gmra.mrb[0].mxu0 %v5252
    %v5320 = vpop.f32.mrb[0].mxu0
    %v5321 = vadd.f32 %v5249, %v5320
    %v5322 = vpop.f32.mrb[0].mxu0
    %5323 = vdwg.mxu0
    %vm5324 = vcmask 33792
    %5325 = vst.msk [vmem:[#allocation3] sm:$0x3] %vm5324, %v5321
    // Predicated region
    $region118: #{vilt_forward.1} parent=1 // pred_check
      _
    $region119: #{vilt_forward.1} parent=1 // pred_check_branch
      %5327 = sbr.rel (0) target = $region121
    $region120: #{vilt_forward.1} parent=1 // pred_region
      %s5329 = ssub.s32 32, 32
      %5330 = vsyncadd [#allocation4], %s5329
      %s5332 = sshll.u32 [#allocation3], 4
      %s5333 = int_to_ptr.vmem [resolvable:$true] %s5332
      %5335 = dma.vmem_to_hbm [thread:$0]  %s5333, 32, %s59, [#allocation4]
    $region121: #{vilt_forward.1} parent=1 // pred_fallthru
      _
    // Predicated region
    $region122: #{vilt_forward.1} parent=1 // pred_check
      _
    $region123: #{vilt_forward.1} parent=1 // pred_check_branch
      %5337 = sbr.rel (0) target = $region125
    $region124: #{vilt_forward.1} parent=1 // pred_region
      _
    $region125: #{vilt_forward.1} parent=1 // pred_fallthru
      _
    // Predicated region
    $region126: #{vilt_forward.1} parent=1 // pred_check
      _
    $region127: #{vilt_forward.1} parent=1 // pred_check_branch
      %5339 = sbr.rel (0) target = $region129
    $region128: #{vilt_forward.1} parent=1 // pred_region
      _
    $region129: #{vilt_forward.1} parent=1 // pred_fallthru
      _
    // Predicated region
    $region130: #{vilt_forward.1} parent=1 // pred_check
      _
    $region131: #{vilt_forward.1} parent=1 // pred_check_branch
      %5341 = sbr.rel (0) target = $region133
    $region132: #{vilt_forward.1} parent=1 // pred_region
      %5342 = dma.done [#allocation4], 32
    $region133: #{vilt_forward.1} parent=1 // pred_fallthru
      _
    // Predicated region
    $region134: #{vilt_forward.1} parent=1 // pred_check
      _
    $region135: #{vilt_forward.1} parent=1 // pred_check_branch
      %5344 = sbr.rel (0) target = $region137
    $region136: #{vilt_forward.1} parent=1 // pred_region
      _
    $region137: #{vilt_forward.1} parent=1 // pred_fallthru
      _
    // Predicated region
    $region138: #{vilt_forward.1} parent=1 // pred_check
      _
    $region139: #{vilt_forward.1} parent=1 // pred_check_branch
      %5346 = sbr.rel (0) target = $region141
    $region140: #{vilt_forward.1} parent=1 // pred_region
      _
    $region141: #{vilt_forward.1} parent=1 // pred_fallthru
      _
    %5347 = vsyncpa [#allocation4], 1

</llo_original>
